<compile_context>
chip_gen: v6e
topology: v6e:2x2x1
jax: 0.10.0
libtpu: 0.0.40
codegen_flags: <defaults>
</compile_context>

<pallas_src>
import functools
import math

import jax
import jax.numpy as jnp
from jax.experimental import pallas as pl
from jax.experimental.pallas import tpu as pltpu

HIDDEN = 512
_MAX_NETS_PER_BLOCK = 4  # ~1.2 MiB bf16 weights per net -> keep block modest


def _round_up(x, m):
    return ((x + m - 1) // m) * m


def _choose_blocking(n_nets):
    """Pick (nets_per_block, n_grid_blocks).

    Prefer exactly two fat grid steps: keeps the ~0.35us/step fixed grid
    overhead tiny and gives a balanced 1/1 split across v7x's 2 TensorCores
    (irrelevant on single-TC v5e/v6e). Capped so the double-buffered bf16
    weight block stays well inside default scoped VMEM.
    """
    nets_per_block = min(max(1, math.ceil(n_nets / 2)), _MAX_NETS_PER_BLOCK)
    n_blocks = math.ceil(n_nets / nets_per_block)
    return nets_per_block, n_blocks


def _qnet_kernel(sa_ref, w1_ref, w2_ref, w3_ref, w4_ref, b_ref, out_ref, *,
                 nets_per_block, hidden, q_pad):
    # sa_ref : (B_pad, in_pad)              bf16   (shared across all nets)
    # w1_ref : (NB, in_pad, H)              bf16
    # w2_ref : (NB, H, H)                   bf16
    # w3_ref : (NB, H, H)                   bf16
    # w4_ref : (NB, H, q_pad)               bf16
    # b_ref  : (NB, 1, 3H + q_pad)          f32    (b1|b2|b3|b4 packed)
    # out_ref: (NB, B_pad, q_pad)           f32
    sa = sa_ref[...]
    for n in range(nets_per_block):  # static unroll over nets in this block
        b1 = b_ref[n, :, 0:hidden]
        b2 = b_ref[n, :, hidden:2 * hidden]
        b3 = b_ref[n, :, 2 * hidden:3 * hidden]
        b4 = b_ref[n, :, 3 * hidden:3 * hidden + q_pad]

        h = jnp.dot(sa, w1_ref[n], preferred_element_type=jnp.float32) + b1
        h = jnp.maximum(h, 0.0).astype(jnp.bfloat16)
        h = jnp.dot(h, w2_ref[n], preferred_element_type=jnp.float32) + b2
        h = jnp.maximum(h, 0.0).astype(jnp.bfloat16)
        h = jnp.dot(h, w3_ref[n], preferred_element_type=jnp.float32) + b3
        h = jnp.maximum(h, 0.0).astype(jnp.bfloat16)
        q = jnp.dot(h, w4_ref[n], preferred_element_type=jnp.float32) + b4
        out_ref[n] = q.astype(out_ref.dtype)


def pack_params(params, n_quantiles, n_nets):
    """One-time packing: bf16 weights, padded dims, biases fused into one array.

    Done outside the hot path so the per-call kernel streams the minimal bytes.
    """
    in_dim = params["w1"].shape[1]
    in_pad = _round_up(in_dim, 32)          # bf16 sublane-friendly contraction dim
    q_pad = _round_up(n_quantiles, 128)     # lane-dense last matmul / output store
    nets_per_block, n_blocks = _choose_blocking(n_nets)
    n_pad = nets_per_block * n_blocks       # even grid -> balanced megacore split

    def pad_w(w, rows_to, cols_to):
        n, r, c = w.shape
        w = jnp.pad(w, ((0, n_pad - n), (0, rows_to - r), (0, cols_to - c)))
        return w.astype(jnp.bfloat16)

    w1 = pad_w(params["w1"], in_pad, HIDDEN)
    w2 = pad_w(params["w2"], HIDDEN, HIDDEN)
    w3 = pad_w(params["w3"], HIDDEN, HIDDEN)
    w4 = pad_w(params["w4"], HIDDEN, q_pad)

    b4 = jnp.pad(params["b4"], ((0, 0), (0, 0), (0, q_pad - n_quantiles)))
    b = jnp.concatenate([params["b1"], params["b2"], params["b3"], b4], axis=-1)
    b = jnp.pad(b, ((0, n_pad - n_nets), (0, 0), (0, 0))).astype(jnp.float32)

    return {"w1": w1, "w2": w2, "w3": w3, "w4": w4, "b": b}


def quantile_critic_forward(state, action, packed, n_quantiles, n_nets):
    """Pallas implementation of QuantileQritic.forward.

    state:  (B, state_dim) f32
    action: (B, action_dim) f32
    packed: output of pack_params (bf16 weights, fused f32 biases)
    returns (B, n_nets, n_quantiles) f32
    """
    sa = jnp.concatenate((state, action), axis=1)
    B, in_dim = sa.shape

    n_pad, in_pad, _ = packed["w1"].shape
    q_pad = packed["w4"].shape[2]
    nets_per_block, n_blocks = _choose_blocking(n_nets)
    assert nets_per_block * n_blocks == n_pad

    b_pad = _round_up(B, 8)
    sa = jnp.pad(sa, ((0, b_pad - B), (0, in_pad - in_dim))).astype(jnp.bfloat16)

    kernel = functools.partial(
        _qnet_kernel, nets_per_block=nets_per_block, hidden=HIDDEN, q_pad=q_pad)

    out = pl.pallas_call(
        kernel,
        out_shape=jax.ShapeDtypeStruct((n_pad, b_pad, q_pad), jnp.float32),
        grid_spec=pltpu.PrefetchScalarGridSpec(
            num_scalar_prefetch=0,
            grid=(n_blocks,),
            in_specs=[
                pl.BlockSpec((b_pad, in_pad), lambda i: (0, 0)),                 # sa (shared)
                pl.BlockSpec((nets_per_block, in_pad, HIDDEN), lambda i: (i, 0, 0)),
                pl.BlockSpec((nets_per_block, HIDDEN, HIDDEN), lambda i: (i, 0, 0)),
                pl.BlockSpec((nets_per_block, HIDDEN, HIDDEN), lambda i: (i, 0, 0)),
                pl.BlockSpec((nets_per_block, HIDDEN, q_pad), lambda i: (i, 0, 0)),
                pl.BlockSpec((nets_per_block, 1, 3 * HIDDEN + q_pad), lambda i: (i, 0, 0)),
            ],
            out_specs=pl.BlockSpec((nets_per_block, b_pad, q_pad), lambda i: (i, 0, 0)),
        ),
        compiler_params=pltpu.CompilerParams(
            dimension_semantics=("parallel",),
        ),
    )(sa, packed["w1"], packed["w2"], packed["w3"], packed["w4"], packed["b"])

    # torch.stack(..., dim=1): (B, n_nets, n_quantiles); strip all padding.
    return jnp.transpose(out[:n_nets, :B, :n_quantiles], (1, 0, 2))
    # TODO(synk): cross-call weight residency / prefetch (P10) when this forward
    # is invoked repeatedly per training step is left to the training loop.


def init_params(key, state_dim, action_dim, n_quantiles, n_nets):
    """Deterministic synthetic parameter init (shapes match the PyTorch module)."""
    in_dim = state_dim + action_dim
    shapes = [
        ("w1", (n_nets, in_dim, HIDDEN)), ("b1", (n_nets, 1, HIDDEN)),
        ("w2", (n_nets, HIDDEN, HIDDEN)), ("b2", (n_nets, 1, HIDDEN)),
        ("w3", (n_nets, HIDDEN, HIDDEN)), ("b3", (n_nets, 1, HIDDEN)),
        ("w4", (n_nets, HIDDEN, n_quantiles)), ("b4", (n_nets, 1, n_quantiles)),
    ]
    params = {}
    keys = jax.random.split(key, len(shapes))
    for (name, shape), k in zip(shapes, keys):
        fan_in = shape[1] if name.startswith("w") else shape[-1]
        scale = 1.0 / jnp.sqrt(jnp.float32(fan_in))
        params[name] = (scale * jax.random.normal(k, shape, jnp.float32)).astype(jnp.float32)
    return params


def reference_forward(state, action, packed, n_quantiles, n_nets):
    """Pure-JAX reference of the same (bf16-weight) math for a sanity check."""
    sa = jnp.concatenate((state, action), axis=1)
    in_dim = sa.shape[1]
    in_pad = packed["w1"].shape[1]
    q_pad = packed["w4"].shape[2]
    sa = jnp.pad(sa, ((0, 0), (0, in_pad - in_dim))).astype(jnp.bfloat16)
    outs = []
    for i in range(n_nets):
        b = packed["b"][i]
        h = jnp.dot(sa, packed["w1"][i], preferred_element_type=jnp.float32) + b[:, 0:HIDDEN]
        h = jnp.maximum(h, 0.0).astype(jnp.bfloat16)
        h = jnp.dot(h, packed["w2"][i], preferred_element_type=jnp.float32) + b[:, HIDDEN:2 * HIDDEN]
        h = jnp.maximum(h, 0.0).astype(jnp.bfloat16)
        h = jnp.dot(h, packed["w3"][i], preferred_element_type=jnp.float32) + b[:, 2 * HIDDEN:3 * HIDDEN]
        h = jnp.maximum(h, 0.0).astype(jnp.bfloat16)
        q = jnp.dot(h, packed["w4"][i], preferred_element_type=jnp.float32) + b[:, 3 * HIDDEN:3 * HIDDEN + q_pad]
        outs.append(q[:, :n_quantiles])
    return jnp.stack(outs, axis=1)


if __name__ == "__main__":
    # Small TQC-like configuration (batch kept modest but MXU/lane friendly).
    state_dim, action_dim = 17, 6
    n_quantiles, n_nets = 25, 5
    batch = 32

    key = jax.random.PRNGKey(0)
    k_s, k_a, k_p = jax.random.split(key, 3)
    state = jax.random.normal(k_s, (batch, state_dim), jnp.float32)
    action = jax.random.normal(k_a, (batch, action_dim), jnp.float32)
    params = init_params(k_p, state_dim, action_dim, n_quantiles, n_nets)
    packed = pack_params(params, n_quantiles, n_nets)

    quantiles = quantile_critic_forward(state, action, packed, n_quantiles, n_nets)
    quantiles = jax.block_until_ready(quantiles)

    assert quantiles.shape == (batch, n_nets, n_quantiles), quantiles.shape
    ref = reference_forward(state, action, packed, n_quantiles, n_nets)
    assert jnp.allclose(quantiles, ref, atol=1e-2, rtol=1e-2)
    assert bool(jnp.all(jnp.isfinite(quantiles)))

    print("KERNEL_OK")
</pallas_src>

<mosaic_0001>
module attributes {stable_mosaic.version = 11 : i64} {
  func.func @_qnet_kernel(%arg0: i32, %arg1: memref<32x32xbf16, #tpu.memory_space<vmem>>, %arg2: memref<3x32x512xbf16, #tpu.memory_space<vmem>>, %arg3: memref<3x512x512xbf16, #tpu.memory_space<vmem>>, %arg4: memref<3x512x512xbf16, #tpu.memory_space<vmem>>, %arg5: memref<3x512x128xbf16, #tpu.memory_space<vmem>>, %arg6: memref<3x1x1664xf32, #tpu.memory_space<vmem>>, %arg7: memref<3x32x128xf32, #tpu.memory_space<vmem>>) attributes {dimension_semantics = [#tpu.dimension_semantics<parallel>], iteration_bounds = array<i64: 2>, scalar_prefetch = 0 : i64, scratch_operands = 0 : i64, tpu.core_type = #tpu.core_type<tc>, window_params = [{pipeline_mode = #tpu.pipeline_mode<synchronous>, transform_indices = @transform_0, window_bounds = array<i64: 32, 32>}, {transform_indices = @transform_1, window_bounds = array<i64: 3, 32, 512>}, {transform_indices = @transform_2, window_bounds = array<i64: 3, 512, 512>}, {transform_indices = @transform_3, window_bounds = array<i64: 3, 512, 512>}, {transform_indices = @transform_4, window_bounds = array<i64: 3, 512, 128>}, {transform_indices = @transform_5, window_bounds = array<i64: 3, 1, 1664>}, {transform_indices = @transform_6, window_bounds = array<i64: 3, 32, 128>}]} {
    %c0 = arith.constant 0 : index
    %c0_0 = arith.constant 0 : index
    %0 = vector.load %arg1[%c0, %c0_0] : memref<32x32xbf16, #tpu.memory_space<vmem>>, vector<32x32xbf16>
    %c0_1 = arith.constant 0 : index
    %c0_2 = arith.constant 0 : index
    %c0_3 = arith.constant 0 : index
    %1 = vector.load %arg6[%c0_1, %c0_2, %c0_3] : memref<3x1x1664xf32, #tpu.memory_space<vmem>>, vector<1x1x512xf32>
    %2 = vector.shape_cast %1 : vector<1x1x512xf32> to vector<1x512xf32>
    %c0_4 = arith.constant 0 : index
    %c0_5 = arith.constant 0 : index
    %c512 = arith.constant 512 : index
    %3 = vector.load %arg6[%c0_4, %c0_5, %c512] : memref<3x1x1664xf32, #tpu.memory_space<vmem>>, vector<1x1x512xf32>
    %4 = vector.shape_cast %3 : vector<1x1x512xf32> to vector<1x512xf32>
    %c0_6 = arith.constant 0 : index
    %c0_7 = arith.constant 0 : index
    %c1024 = arith.constant 1024 : index
    %5 = vector.load %arg6[%c0_6, %c0_7, %c1024] : memref<3x1x1664xf32, #tpu.memory_space<vmem>>, vector<1x1x512xf32>
    %6 = vector.shape_cast %5 : vector<1x1x512xf32> to vector<1x512xf32>
    %c0_8 = arith.constant 0 : index
    %c0_9 = arith.constant 0 : index
    %c1536 = arith.constant 1536 : index
    %7 = vector.load %arg6[%c0_8, %c0_9, %c1536] : memref<3x1x1664xf32, #tpu.memory_space<vmem>>, vector<1x1x128xf32>
    %8 = vector.shape_cast %7 : vector<1x1x128xf32> to vector<1x128xf32>
    %c0_10 = arith.constant 0 : index
    %c0_11 = arith.constant 0 : index
    %c0_12 = arith.constant 0 : index
    %9 = vector.load %arg2[%c0_10, %c0_11, %c0_12] : memref<3x32x512xbf16, #tpu.memory_space<vmem>>, vector<1x32x512xbf16>
    %10 = vector.shape_cast %9 : vector<1x32x512xbf16> to vector<32x512xbf16>
    %cst = arith.constant dense<0.000000e+00> : vector<32x512xf32>
    %11 = tpu.matmul %0, %10, %cst {dimension_numbers = #tpu.dot_dimension_numbers<[1], [0], [0], [1], [0, 0, 1, 1], [], []>} : vector<32x32xbf16>, vector<32x512xbf16>, vector<32x512xf32> -> vector<32x512xf32>
    %12 = vector.broadcast %2 : vector<1x512xf32> to vector<32x512xf32>
    %13 = arith.addf %11, %12 : vector<32x512xf32>
    %cst_13 = arith.constant 0.000000e+00 : f32
    %14 = vector.broadcast %cst_13 : f32 to vector<32x512xf32>
    %15 = arith.maximumf %13, %14 : vector<32x512xf32>
    %16 = arith.truncf %15 : vector<32x512xf32> to vector<32x512xbf16>
    %c0_14 = arith.constant 0 : index
    %c0_15 = arith.constant 0 : index
    %c0_16 = arith.constant 0 : index
    %17 = vector.load %arg3[%c0_14, %c0_15, %c0_16] : memref<3x512x512xbf16, #tpu.memory_space<vmem>>, vector<1x512x512xbf16>
    %18 = vector.shape_cast %17 : vector<1x512x512xbf16> to vector<512x512xbf16>
    %cst_17 = arith.constant dense<0.000000e+00> : vector<32x512xf32>
    %19 = tpu.matmul %16, %18, %cst_17 {dimension_numbers = #tpu.dot_dimension_numbers<[1], [0], [0], [1], [0, 0, 1, 1], [], []>} : vector<32x512xbf16>, vector<512x512xbf16>, vector<32x512xf32> -> vector<32x512xf32>
    %20 = vector.broadcast %4 : vector<1x512xf32> to vector<32x512xf32>
    %21 = arith.addf %19, %20 : vector<32x512xf32>
    %cst_18 = arith.constant 0.000000e+00 : f32
    %22 = vector.broadcast %cst_18 : f32 to vector<32x512xf32>
    %23 = arith.maximumf %21, %22 : vector<32x512xf32>
    %24 = arith.truncf %23 : vector<32x512xf32> to vector<32x512xbf16>
    %c0_19 = arith.constant 0 : index
    %c0_20 = arith.constant 0 : index
    %c0_21 = arith.constant 0 : index
    %25 = vector.load %arg4[%c0_19, %c0_20, %c0_21] : memref<3x512x512xbf16, #tpu.memory_space<vmem>>, vector<1x512x512xbf16>
    %26 = vector.shape_cast %25 : vector<1x512x512xbf16> to vector<512x512xbf16>
    %cst_22 = arith.constant dense<0.000000e+00> : vector<32x512xf32>
    %27 = tpu.matmul %24, %26, %cst_22 {dimension_numbers = #tpu.dot_dimension_numbers<[1], [0], [0], [1], [0, 0, 1, 1], [], []>} : vector<32x512xbf16>, vector<512x512xbf16>, vector<32x512xf32> -> vector<32x512xf32>
    %28 = vector.broadcast %6 : vector<1x512xf32> to vector<32x512xf32>
    %29 = arith.addf %27, %28 : vector<32x512xf32>
    %cst_23 = arith.constant 0.000000e+00 : f32
    %30 = vector.broadcast %cst_23 : f32 to vector<32x512xf32>
    %31 = arith.maximumf %29, %30 : vector<32x512xf32>
    %32 = arith.truncf %31 : vector<32x512xf32> to vector<32x512xbf16>
    %c0_24 = arith.constant 0 : index
    %c0_25 = arith.constant 0 : index
    %c0_26 = arith.constant 0 : index
    %33 = vector.load %arg5[%c0_24, %c0_25, %c0_26] : memref<3x512x128xbf16, #tpu.memory_space<vmem>>, vector<1x512x128xbf16>
    %34 = vector.shape_cast %33 : vector<1x512x128xbf16> to vector<512x128xbf16>
    %cst_27 = arith.constant dense<0.000000e+00> : vector<32x128xf32>
    %35 = tpu.matmul %32, %34, %cst_27 {dimension_numbers = #tpu.dot_dimension_numbers<[1], [0], [0], [1], [0, 0, 1, 1], [], []>} : vector<32x512xbf16>, vector<512x128xbf16>, vector<32x128xf32> -> vector<32x128xf32>
    %36 = vector.broadcast %8 : vector<1x128xf32> to vector<32x128xf32>
    %37 = arith.addf %35, %36 : vector<32x128xf32>
    %c0_28 = arith.constant 0 : index
    %c0_29 = arith.constant 0 : index
    %c0_30 = arith.constant 0 : index
    %38 = vector.load %arg7[%c0_28, %c0_29, %c0_30] : memref<3x32x128xf32, #tpu.memory_space<vmem>>, vector<1x32x128xf32>
    %39 = vector.shape_cast %38 : vector<1x32x128xf32> to vector<32x128xf32>
    %40 = vector.shape_cast %37 : vector<32x128xf32> to vector<1x32x128xf32>
    tpu.vector_store %arg7[%c0_28, %c0_29, %c0_30], %40 {strides = array<i32>} : memref<3x32x128xf32, #tpu.memory_space<vmem>>, vector<1x32x128xf32>,
    %c1 = arith.constant 1 : index
    %c0_31 = arith.constant 0 : index
    %c0_32 = arith.constant 0 : index
    %41 = vector.load %arg6[%c1, %c0_31, %c0_32] : memref<3x1x1664xf32, #tpu.memory_space<vmem>>, vector<1x1x512xf32>
    %42 = vector.shape_cast %41 : vector<1x1x512xf32> to vector<1x512xf32>
    %c1_33 = arith.constant 1 : index
    %c0_34 = arith.constant 0 : index
    %c512_35 = arith.constant 512 : index
    %43 = vector.load %arg6[%c1_33, %c0_34, %c512_35] : memref<3x1x1664xf32, #tpu.memory_space<vmem>>, vector<1x1x512xf32>
    %44 = vector.shape_cast %43 : vector<1x1x512xf32> to vector<1x512xf32>
    %c1_36 = arith.constant 1 : index
    %c0_37 = arith.constant 0 : index
    %c1024_38 = arith.constant 1024 : index
    %45 = vector.load %arg6[%c1_36, %c0_37, %c1024_38] : memref<3x1x1664xf32, #tpu.memory_space<vmem>>, vector<1x1x512xf32>
    %46 = vector.shape_cast %45 : vector<1x1x512xf32> to vector<1x512xf32>
    %c1_39 = arith.constant 1 : index
    %c0_40 = arith.constant 0 : index
    %c1536_41 = arith.constant 1536 : index
    %47 = vector.load %arg6[%c1_39, %c0_40, %c1536_41] : memref<3x1x1664xf32, #tpu.memory_space<vmem>>, vector<1x1x128xf32>
    %48 = vector.shape_cast %47 : vector<1x1x128xf32> to vector<1x128xf32>
    %c1_42 = arith.constant 1 : index
    %c0_43 = arith.constant 0 : index
    %c0_44 = arith.constant 0 : index
    %49 = vector.load %arg2[%c1_42, %c0_43, %c0_44] : memref<3x32x512xbf16, #tpu.memory_space<vmem>>, vector<1x32x512xbf16>
    %50 = vector.shape_cast %49 : vector<1x32x512xbf16> to vector<32x512xbf16>
    %cst_45 = arith.constant dense<0.000000e+00> : vector<32x512xf32>
    %51 = tpu.matmul %0, %50, %cst_45 {dimension_numbers = #tpu.dot_dimension_numbers<[1], [0], [0], [1], [0, 0, 1, 1], [], []>} : vector<32x32xbf16>, vector<32x512xbf16>, vector<32x512xf32> -> vector<32x512xf32>
    %52 = vector.broadcast %42 : vector<1x512xf32> to vector<32x512xf32>
    %53 = arith.addf %51, %52 : vector<32x512xf32>
    %cst_46 = arith.constant 0.000000e+00 : f32
    %54 = vector.broadcast %cst_46 : f32 to vector<32x512xf32>
    %55 = arith.maximumf %53, %54 : vector<32x512xf32>
    %56 = arith.truncf %55 : vector<32x512xf32> to vector<32x512xbf16>
    %c1_47 = arith.constant 1 : index
    %c0_48 = arith.constant 0 : index
    %c0_49 = arith.constant 0 : index
    %57 = vector.load %arg3[%c1_47, %c0_48, %c0_49] : memref<3x512x512xbf16, #tpu.memory_space<vmem>>, vector<1x512x512xbf16>
    %58 = vector.shape_cast %57 : vector<1x512x512xbf16> to vector<512x512xbf16>
    %cst_50 = arith.constant dense<0.000000e+00> : vector<32x512xf32>
    %59 = tpu.matmul %56, %58, %cst_50 {dimension_numbers = #tpu.dot_dimension_numbers<[1], [0], [0], [1], [0, 0, 1, 1], [], []>} : vector<32x512xbf16>, vector<512x512xbf16>, vector<32x512xf32> -> vector<32x512xf32>
    %60 = vector.broadcast %44 : vector<1x512xf32> to vector<32x512xf32>
    %61 = arith.addf %59, %60 : vector<32x512xf32>
    %cst_51 = arith.constant 0.000000e+00 : f32
    %62 = vector.broadcast %cst_51 : f32 to vector<32x512xf32>
    %63 = arith.maximumf %61, %62 : vector<32x512xf32>
    %64 = arith.truncf %63 : vector<32x512xf32> to vector<32x512xbf16>
    %c1_52 = arith.constant 1 : index
    %c0_53 = arith.constant 0 : index
    %c0_54 = arith.constant 0 : index
    %65 = vector.load %arg4[%c1_52, %c0_53, %c0_54] : memref<3x512x512xbf16, #tpu.memory_space<vmem>>, vector<1x512x512xbf16>
    %66 = vector.shape_cast %65 : vector<1x512x512xbf16> to vector<512x512xbf16>
    %cst_55 = arith.constant dense<0.000000e+00> : vector<32x512xf32>
    %67 = tpu.matmul %64, %66, %cst_55 {dimension_numbers = #tpu.dot_dimension_numbers<[1], [0], [0], [1], [0, 0, 1, 1], [], []>} : vector<32x512xbf16>, vector<512x512xbf16>, vector<32x512xf32> -> vector<32x512xf32>
    %68 = vector.broadcast %46 : vector<1x512xf32> to vector<32x512xf32>
    %69 = arith.addf %67, %68 : vector<32x512xf32>
    %cst_56 = arith.constant 0.000000e+00 : f32
    %70 = vector.broadcast %cst_56 : f32 to vector<32x512xf32>
    %71 = arith.maximumf %69, %70 : vector<32x512xf32>
    %72 = arith.truncf %71 : vector<32x512xf32> to vector<32x512xbf16>
    %c1_57 = arith.constant 1 : index
    %c0_58 = arith.constant 0 : index
    %c0_59 = arith.constant 0 : index
    %73 = vector.load %arg5[%c1_57, %c0_58, %c0_59] : memref<3x512x128xbf16, #tpu.memory_space<vmem>>, vector<1x512x128xbf16>
    %74 = vector.shape_cast %73 : vector<1x512x128xbf16> to vector<512x128xbf16>
    %cst_60 = arith.constant dense<0.000000e+00> : vector<32x128xf32>
    %75 = tpu.matmul %72, %74, %cst_60 {dimension_numbers = #tpu.dot_dimension_numbers<[1], [0], [0], [1], [0, 0, 1, 1], [], []>} : vector<32x512xbf16>, vector<512x128xbf16>, vector<32x128xf32> -> vector<32x128xf32>
    %76 = vector.broadcast %48 : vector<1x128xf32> to vector<32x128xf32>
    %77 = arith.addf %75, %76 : vector<32x128xf32>
    %c1_61 = arith.constant 1 : index
    %c0_62 = arith.constant 0 : index
    %c0_63 = arith.constant 0 : index
    %78 = vector.load %arg7[%c1_61, %c0_62, %c0_63] : memref<3x32x128xf32, #tpu.memory_space<vmem>>, vector<1x32x128xf32>
    %79 = vector.shape_cast %78 : vector<1x32x128xf32> to vector<32x128xf32>
    %80 = vector.shape_cast %77 : vector<32x128xf32> to vector<1x32x128xf32>
    tpu.vector_store %arg7[%c1_61, %c0_62, %c0_63], %80 {strides = array<i32>} : memref<3x32x128xf32, #tpu.memory_space<vmem>>, vector<1x32x128xf32>,
    %c2 = arith.constant 2 : index
    %c0_64 = arith.constant 0 : index
    %c0_65 = arith.constant 0 : index
    %81 = vector.load %arg6[%c2, %c0_64, %c0_65] : memref<3x1x1664xf32, #tpu.memory_space<vmem>>, vector<1x1x512xf32>
    %82 = vector.shape_cast %81 : vector<1x1x512xf32> to vector<1x512xf32>
    %c2_66 = arith.constant 2 : index
    %c0_67 = arith.constant 0 : index
    %c512_68 = arith.constant 512 : index
    %83 = vector.load %arg6[%c2_66, %c0_67, %c512_68] : memref<3x1x1664xf32, #tpu.memory_space<vmem>>, vector<1x1x512xf32>
    %84 = vector.shape_cast %83 : vector<1x1x512xf32> to vector<1x512xf32>
    %c2_69 = arith.constant 2 : index
    %c0_70 = arith.constant 0 : index
    %c1024_71 = arith.constant 1024 : index
    %85 = vector.load %arg6[%c2_69, %c0_70, %c1024_71] : memref<3x1x1664xf32, #tpu.memory_space<vmem>>, vector<1x1x512xf32>
    %86 = vector.shape_cast %85 : vector<1x1x512xf32> to vector<1x512xf32>
    %c2_72 = arith.constant 2 : index
    %c0_73 = arith.constant 0 : index
    %c1536_74 = arith.constant 1536 : index
    %87 = vector.load %arg6[%c2_72, %c0_73, %c1536_74] : memref<3x1x1664xf32, #tpu.memory_space<vmem>>, vector<1x1x128xf32>
    %88 = vector.shape_cast %87 : vector<1x1x128xf32> to vector<1x128xf32>
    %c2_75 = arith.constant 2 : index
    %c0_76 = arith.constant 0 : index
    %c0_77 = arith.constant 0 : index
    %89 = vector.load %arg2[%c2_75, %c0_76, %c0_77] : memref<3x32x512xbf16, #tpu.memory_space<vmem>>, vector<1x32x512xbf16>
    %90 = vector.shape_cast %89 : vector<1x32x512xbf16> to vector<32x512xbf16>
    %cst_78 = arith.constant dense<0.000000e+00> : vector<32x512xf32>
    %91 = tpu.matmul %0, %90, %cst_78 {dimension_numbers = #tpu.dot_dimension_numbers<[1], [0], [0], [1], [0, 0, 1, 1], [], []>} : vector<32x32xbf16>, vector<32x512xbf16>, vector<32x512xf32> -> vector<32x512xf32>
    %92 = vector.broadcast %82 : vector<1x512xf32> to vector<32x512xf32>
    %93 = arith.addf %91, %92 : vector<32x512xf32>
    %cst_79 = arith.constant 0.000000e+00 : f32
    %94 = vector.broadcast %cst_79 : f32 to vector<32x512xf32>
    %95 = arith.maximumf %93, %94 : vector<32x512xf32>
    %96 = arith.truncf %95 : vector<32x512xf32> to vector<32x512xbf16>
    %c2_80 = arith.constant 2 : index
    %c0_81 = arith.constant 0 : index
    %c0_82 = arith.constant 0 : index
    %97 = vector.load %arg3[%c2_80, %c0_81, %c0_82] : memref<3x512x512xbf16, #tpu.memory_space<vmem>>, vector<1x512x512xbf16>
    %98 = vector.shape_cast %97 : vector<1x512x512xbf16> to vector<512x512xbf16>
    %cst_83 = arith.constant dense<0.000000e+00> : vector<32x512xf32>
    %99 = tpu.matmul %96, %98, %cst_83 {dimension_numbers = #tpu.dot_dimension_numbers<[1], [0], [0], [1], [0, 0, 1, 1], [], []>} : vector<32x512xbf16>, vector<512x512xbf16>, vector<32x512xf32> -> vector<32x512xf32>
    %100 = vector.broadcast %84 : vector<1x512xf32> to vector<32x512xf32>
    %101 = arith.addf %99, %100 : vector<32x512xf32>
    %cst_84 = arith.constant 0.000000e+00 : f32
    %102 = vector.broadcast %cst_84 : f32 to vector<32x512xf32>
    %103 = arith.maximumf %101, %102 : vector<32x512xf32>
    %104 = arith.truncf %103 : vector<32x512xf32> to vector<32x512xbf16>
    %c2_85 = arith.constant 2 : index
    %c0_86 = arith.constant 0 : index
    %c0_87 = arith.constant 0 : index
    %105 = vector.load %arg4[%c2_85, %c0_86, %c0_87] : memref<3x512x512xbf16, #tpu.memory_space<vmem>>, vector<1x512x512xbf16>
    %106 = vector.shape_cast %105 : vector<1x512x512xbf16> to vector<512x512xbf16>
    %cst_88 = arith.constant dense<0.000000e+00> : vector<32x512xf32>
    %107 = tpu.matmul %104, %106, %cst_88 {dimension_numbers = #tpu.dot_dimension_numbers<[1], [0], [0], [1], [0, 0, 1, 1], [], []>} : vector<32x512xbf16>, vector<512x512xbf16>, vector<32x512xf32> -> vector<32x512xf32>
    %108 = vector.broadcast %86 : vector<1x512xf32> to vector<32x512xf32>
    %109 = arith.addf %107, %108 : vector<32x512xf32>
    %cst_89 = arith.constant 0.000000e+00 : f32
    %110 = vector.broadcast %cst_89 : f32 to vector<32x512xf32>
    %111 = arith.maximumf %109, %110 : vector<32x512xf32>
    %112 = arith.truncf %111 : vector<32x512xf32> to vector<32x512xbf16>
    %c2_90 = arith.constant 2 : index
    %c0_91 = arith.constant 0 : index
    %c0_92 = arith.constant 0 : index
    %113 = vector.load %arg5[%c2_90, %c0_91, %c0_92] : memref<3x512x128xbf16, #tpu.memory_space<vmem>>, vector<1x512x128xbf16>
    %114 = vector.shape_cast %113 : vector<1x512x128xbf16> to vector<512x128xbf16>
    %cst_93 = arith.constant dense<0.000000e+00> : vector<32x128xf32>
    %115 = tpu.matmul %112, %114, %cst_93 {dimension_numbers = #tpu.dot_dimension_numbers<[1], [0], [0], [1], [0, 0, 1, 1], [], []>} : vector<32x512xbf16>, vector<512x128xbf16>, vector<32x128xf32> -> vector<32x128xf32>
    %116 = vector.broadcast %88 : vector<1x128xf32> to vector<32x128xf32>
    %117 = arith.addf %115, %116 : vector<32x128xf32>
    %c2_94 = arith.constant 2 : index
    %c0_95 = arith.constant 0 : index
    %c0_96 = arith.constant 0 : index
    %118 = vector.load %arg7[%c2_94, %c0_95, %c0_96] : memref<3x32x128xf32, #tpu.memory_space<vmem>>, vector<1x32x128xf32>
    %119 = vector.shape_cast %118 : vector<1x32x128xf32> to vector<32x128xf32>
    %120 = vector.shape_cast %117 : vector<32x128xf32> to vector<1x32x128xf32>
    tpu.vector_store %arg7[%c2_94, %c0_95, %c0_96], %120 {strides = array<i32>} : memref<3x32x128xf32, #tpu.memory_space<vmem>>, vector<1x32x128xf32>,
    return
  }
  func.func @transform_0(%arg0: i32) -> (i32, i32) {
    %c0_i32 = arith.constant 0 : i32
    %c0_i32_0 = arith.constant 0 : i32
    %c0_i32_1 = arith.constant 0 : i32
    return %c0_i32, %c0_i32_0 : i32, i32
  }
  func.func @transform_1(%arg0: i32) -> (i32, i32, i32) {
    %c0_i32 = arith.constant 0 : i32
    %c0_i32_0 = arith.constant 0 : i32
    %c0_i32_1 = arith.constant 0 : i32
    return %arg0, %c0_i32, %c0_i32_0 : i32, i32, i32
  }
  func.func @transform_2(%arg0: i32) -> (i32, i32, i32) {
    %c0_i32 = arith.constant 0 : i32
    %c0_i32_0 = arith.constant 0 : i32
    %c0_i32_1 = arith.constant 0 : i32
    return %arg0, %c0_i32, %c0_i32_0 : i32, i32, i32
  }
  func.func @transform_3(%arg0: i32) -> (i32, i32, i32) {
    %c0_i32 = arith.constant 0 : i32
    %c0_i32_0 = arith.constant 0 : i32
    %c0_i32_1 = arith.constant 0 : i32
    return %arg0, %c0_i32, %c0_i32_0 : i32, i32, i32
  }
  func.func @transform_4(%arg0: i32) -> (i32, i32, i32) {
    %c0_i32 = arith.constant 0 : i32
    %c0_i32_0 = arith.constant 0 : i32
    %c0_i32_1 = arith.constant 0 : i32
    return %arg0, %c0_i32, %c0_i32_0 : i32, i32, i32
  }
  func.func @transform_5(%arg0: i32) -> (i32, i32, i32) {
    %c0_i32 = arith.constant 0 : i32
    %c0_i32_0 = arith.constant 0 : i32
    %c0_i32_1 = arith.constant 0 : i32
    return %arg0, %c0_i32, %c0_i32_0 : i32, i32, i32
  }
  func.func @transform_6(%arg0: i32) -> (i32, i32, i32) {
    %c0_i32 = arith.constant 0 : i32
    %c0_i32_0 = arith.constant 0 : i32
    %c0_i32_1 = arith.constant 0 : i32
    return %arg0, %c0_i32, %c0_i32_0 : i32, i32, i32
  }
}

</mosaic_0001>

<llo_original>
// kernel: tpu_custom_call.1
$region0: #{tpu_custom_call.1}
  #allocation0 [shape = 'u32[]', space=smem, size = 0x4, offset = 0x4, fixed_abs, tag = 'smem constant byte address 0x4 - core index']
  #allocation1 [shape = 'u32[144,128]{1,0:T(1,128)}', space=vmem, size = 0x12000, scoped, tag = 'internal scratch']
  %s0 = inlined_call_operand.hbm [shape: bf16[32,32], index: 0, kind: input, shape index: {}]
  %s1 = inlined_call_operand.hbm [shape: bf16[6,32,512], index: 1, kind: input, shape index: {}]
  %s2 = inlined_call_operand.hbm [shape: bf16[6,512,512], index: 2, kind: input, shape index: {}]
  %s3 = inlined_call_operand.hbm [shape: bf16[6,512,512], index: 3, kind: input, shape index: {}]
  %s4 = inlined_call_operand.hbm [shape: bf16[6,512,128], index: 4, kind: input, shape index: {}]
  %s5 = inlined_call_operand.hbm [shape: f32[6,1,1664], index: 5, kind: input, shape index: {}]
  %s6 = inlined_call_operand.hbm [shape: f32[6,32,128], index: 6, kind: output, shape index: {}]
  %s7 = sld [smem:[#allocation0]]
  $region81: #{tpu_custom_call.1} parent=0
    _
  %s9 = ssub.s32 1, %s7
  %s10 = scalar_select 0, %s9, %s7
  $region1: #{tpu_custom_call.1} parent=0
    #allocation2 [shape = 'u8[8192]{0}', space=vmem, size = 0x2000, scoped, tag = 'input window, operand 0, single buffered']
    #allocation3 [shape = 's32[2]{0}', space=sflag, size = 0x8, scoped, tag = 'scoped memory for tpu_custom_call.1']
    #allocation4 [shape = 's32[2]{0}', space=sflag, size = 0x8, scoped, tag = 'scoped memory for tpu_custom_call.1']
    #allocation5 [shape = 'u8[196608]{0}', space=vmem, size = 0x30000, scoped, tag = 'input window, operand 1']
    #allocation6 [shape = 's32[2]{0}', space=sflag, size = 0x8, scoped, tag = 'scoped memory for tpu_custom_call.1']
    #allocation7 [shape = 'u8[3145728]{0}', space=vmem, size = 0x300000, scoped, tag = 'input window, operand 2']
    #allocation8 [shape = 'u8[3145728]{0}', space=vmem, size = 0x300000, scoped, tag = 'input window, operand 3']
    #allocation9 [shape = 's32[2]{0}', space=sflag, size = 0x8, scoped, tag = 'scoped memory for tpu_custom_call.1']
    #allocation10 [shape = 'u8[786432]{0}', space=vmem, size = 0xc0000, scoped, tag = 'input window, operand 4']
    #allocation11 [shape = 'u8[39936]{0}', space=vmem, size = 0x9c00, scoped, tag = 'input window, operand 5']
    #allocation12 [shape = 's32[2]{0}', space=sflag, size = 0x8, scoped, tag = 'scoped memory for tpu_custom_call.1']
    #allocation13 [shape = 'u8[98304]{0}', space=vmem, size = 0x18000, scoped, tag = 'output window, operand 0']
    %11 = vsyncpa [#allocation3], 0
    %12 = vsyncpa [#allocation6], 0
    %s13 = scalar_lea.sflag [#allocation6], 1
    %14 = vsyncpa %s13, 0
    %15 = vsyncpa [#allocation9], 0
    %s16 = scalar_lea.sflag [#allocation9], 1
    %17 = vsyncpa %s16, 0
    %18 = vsyncpa [#allocation12], 0
    %s19 = scalar_lea.sflag [#allocation12], 1
    %20 = vsyncpa %s19, 0
    %21 = vsyncpa [#allocation4], 0
    %s22 = scalar_lea.sflag [#allocation4], 1
    %23 = vsyncpa %s22, 0
    loop: start=0, step=1, limit=4
    $region2: #{tpu_custom_call.1} parent=1 // loop_pre_header
      _
    $region3: #{tpu_custom_call.1} parent=1 // loop_header
      %s25 = sphi 0, %s29
      %p26 = scmp.ge.s32.totalorder %s25, 4
      %s33 = sphi 0, %s33
      %s35 = sphi 0, %s33
      %s36 = sphi 0, %s35
      %s50 = sphi 0, %s36
      %s56 = sphi 0, %s58
      %s59 = sphi 0, %s56
      %s60 = sphi 0, %s59
      %s76 = sphi 0, %s60
      %s82 = sphi 0, %s84
      %s85 = sphi 0, %s82
      %s86 = sphi 0, %s85
      %s102 = sphi 0, %s86
      %s108 = sphi 0, %s110
      %s111 = sphi 0, %s108
      %s112 = sphi 0, %s111
      %s128 = sphi 0, %s112
      %s134 = sphi 0, %s136
      %s137 = sphi 0, %s134
      %s138 = sphi 0, %s137
      %s154 = sphi 0, %s138
      %s160 = sphi 0, %s162
      %s163 = sphi 0, %s160
      %s164 = sphi 0, %s163
      %s180 = sphi 0, %s164
      %s186 = sphi 0, %s188
      %s189 = sphi 0, %s186
      %s190 = sphi 0, %s189
      %s206 = sphi 0, %s190
    $region4: #{tpu_custom_call.1} parent=1 // loop_header_branch
      %28 = sbr.rel (%p26) target = $region8
    $region5: #{tpu_custom_call.1} parent=1 // loop_body
      %s30 = ssub.s32 %s25, 1
      %s31 = ssub.s32 %s25, 2
      %s32 = sadd.s32 %s25, 1
      %s34 = sadd.s32 %s33, 1
      %p37 = scmp.eq.s32.totalorder %s25, 1
      %p38 = scmp.ne.s32.totalorder %s33, %s35
      %p39 = scmp.eq.s32.totalorder %s25, 0
      %p40 = por %p38, %p39
      %p41 = scmp.ne.s32.totalorder %s33, %s35
      %p42 = scmp.eq.s32.totalorder %s30, 1
      %p43 = por %p41, %p42
      %p44 = scmp.ne.s32.totalorder %s35, %s36
      %p45 = scmp.eq.s32.totalorder %s30, 0
      %p46 = por %p44, %p45
      %p47 = scmp.ne.s32.totalorder %s35, %s36
      %p48 = scmp.eq.s32.totalorder %s31, 1
      %p49 = por %p47, %p48
      %p51 = scmp.ne.s32.totalorder %s36, %s50
      %p52 = scmp.eq.s32.totalorder %s31, 0
      %p53 = por %p51, %p52
      %s54 = ssub.s32 %s25, %s32
      %p55 = scmp.eq.s32.totalorder %s54, 0
      %s57 = sadd.s32 %s56, 1
      %s58 = scalar_select %p55, %s56, %s57
      %p61 = pneg %p55
      %p62 = scmp.eq.s32.totalorder %s25, 1
      %p63 = por %p61, %p62
      %p64 = scmp.ne.s32.totalorder %s56, %s59
      %p65 = scmp.eq.s32.totalorder %s25, 0
      %p66 = por %p64, %p65
      %p67 = scmp.ne.s32.totalorder %s56, %s59
      %p68 = scmp.eq.s32.totalorder %s30, 1
      %p69 = por %p67, %p68
      %p70 = scmp.ne.s32.totalorder %s59, %s60
      %p71 = scmp.eq.s32.totalorder %s30, 0
      %p72 = por %p70, %p71
      %p73 = scmp.ne.s32.totalorder %s59, %s60
      %p74 = scmp.eq.s32.totalorder %s31, 1
      %p75 = por %p73, %p74
      %p77 = scmp.ne.s32.totalorder %s60, %s76
      %p78 = scmp.eq.s32.totalorder %s31, 0
      %p79 = por %p77, %p78
      %s80 = ssub.s32 %s25, %s32
      %p81 = scmp.eq.s32.totalorder %s80, 0
      %s83 = sadd.s32 %s82, 1
      %s84 = scalar_select %p81, %s82, %s83
      %p87 = pneg %p81
      %p88 = scmp.eq.s32.totalorder %s25, 1
      %p89 = por %p87, %p88
      %p90 = scmp.ne.s32.totalorder %s82, %s85
      %p91 = scmp.eq.s32.totalorder %s25, 0
      %p92 = por %p90, %p91
      %p93 = scmp.ne.s32.totalorder %s82, %s85
      %p94 = scmp.eq.s32.totalorder %s30, 1
      %p95 = por %p93, %p94
      %p96 = scmp.ne.s32.totalorder %s85, %s86
      %p97 = scmp.eq.s32.totalorder %s30, 0
      %p98 = por %p96, %p97
      %p99 = scmp.ne.s32.totalorder %s85, %s86
      %p100 = scmp.eq.s32.totalorder %s31, 1
      %p101 = por %p99, %p100
      %p103 = scmp.ne.s32.totalorder %s86, %s102
      %p104 = scmp.eq.s32.totalorder %s31, 0
      %p105 = por %p103, %p104
      %s106 = ssub.s32 %s25, %s32
      %p107 = scmp.eq.s32.totalorder %s106, 0
      %s109 = sadd.s32 %s108, 1
      %s110 = scalar_select %p107, %s108, %s109
      %p113 = pneg %p107
      %p114 = scmp.eq.s32.totalorder %s25, 1
      %p115 = por %p113, %p114
      %p116 = scmp.ne.s32.totalorder %s108, %s111
      %p117 = scmp.eq.s32.totalorder %s25, 0
      %p118 = por %p116, %p117
      %p119 = scmp.ne.s32.totalorder %s108, %s111
      %p120 = scmp.eq.s32.totalorder %s30, 1
      %p121 = por %p119, %p120
      %p122 = scmp.ne.s32.totalorder %s111, %s112
      %p123 = scmp.eq.s32.totalorder %s30, 0
      %p124 = por %p122, %p123
      %p125 = scmp.ne.s32.totalorder %s111, %s112
      %p126 = scmp.eq.s32.totalorder %s31, 1
      %p127 = por %p125, %p126
      %p129 = scmp.ne.s32.totalorder %s112, %s128
      %p130 = scmp.eq.s32.totalorder %s31, 0
      %p131 = por %p129, %p130
      %s132 = ssub.s32 %s25, %s32
      %p133 = scmp.eq.s32.totalorder %s132, 0
      %s135 = sadd.s32 %s134, 1
      %s136 = scalar_select %p133, %s134, %s135
      %p139 = pneg %p133
      %p140 = scmp.eq.s32.totalorder %s25, 1
      %p141 = por %p139, %p140
      %p142 = scmp.ne.s32.totalorder %s134, %s137
      %p143 = scmp.eq.s32.totalorder %s25, 0
      %p144 = por %p142, %p143
      %p145 = scmp.ne.s32.totalorder %s134, %s137
      %p146 = scmp.eq.s32.totalorder %s30, 1
      %p147 = por %p145, %p146
      %p148 = scmp.ne.s32.totalorder %s137, %s138
      %p149 = scmp.eq.s32.totalorder %s30, 0
      %p150 = por %p148, %p149
      %p151 = scmp.ne.s32.totalorder %s137, %s138
      %p152 = scmp.eq.s32.totalorder %s31, 1
      %p153 = por %p151, %p152
      %p155 = scmp.ne.s32.totalorder %s138, %s154
      %p156 = scmp.eq.s32.totalorder %s31, 0
      %p157 = por %p155, %p156
      %s158 = ssub.s32 %s25, %s32
      %p159 = scmp.eq.s32.totalorder %s158, 0
      %s161 = sadd.s32 %s160, 1
      %s162 = scalar_select %p159, %s160, %s161
      %p165 = pneg %p159
      %p166 = scmp.eq.s32.totalorder %s25, 1
      %p167 = por %p165, %p166
      %p168 = scmp.ne.s32.totalorder %s160, %s163
      %p169 = scmp.eq.s32.totalorder %s25, 0
      %p170 = por %p168, %p169
      %p171 = scmp.ne.s32.totalorder %s160, %s163
      %p172 = scmp.eq.s32.totalorder %s30, 1
      %p173 = por %p171, %p172
      %p174 = scmp.ne.s32.totalorder %s163, %s164
      %p175 = scmp.eq.s32.totalorder %s30, 0
      %p176 = por %p174, %p175
      %p177 = scmp.ne.s32.totalorder %s163, %s164
      %p178 = scmp.eq.s32.totalorder %s31, 1
      %p179 = por %p177, %p178
      %p181 = scmp.ne.s32.totalorder %s164, %s180
      %p182 = scmp.eq.s32.totalorder %s31, 0
      %p183 = por %p181, %p182
      %s184 = ssub.s32 %s25, %s32
      %p185 = scmp.eq.s32.totalorder %s184, 0
      %s187 = sadd.s32 %s186, 1
      %s188 = scalar_select %p185, %s186, %s187
      %p191 = pneg %p185
      %p192 = scmp.eq.s32.totalorder %s25, 1
      %p193 = por %p191, %p192
      %p194 = scmp.ne.s32.totalorder %s186, %s189
      %p195 = scmp.eq.s32.totalorder %s25, 0
      %p196 = por %p194, %p195
      %p197 = scmp.ne.s32.totalorder %s186, %s189
      %p198 = scmp.eq.s32.totalorder %s30, 1
      %p199 = por %p197, %p198
      %p200 = scmp.ne.s32.totalorder %s189, %s190
      %p201 = scmp.eq.s32.totalorder %s30, 0
      %p202 = por %p200, %p201
      %p203 = scmp.ne.s32.totalorder %s189, %s190
      %p204 = scmp.eq.s32.totalorder %s31, 1
      %p205 = por %p203, %p204
      %p207 = scmp.ne.s32.totalorder %s190, %s206
      %p208 = scmp.eq.s32.totalorder %s31, 0
      %p209 = por %p207, %p208
      %p210 = scmp.le.s32.totalorder 1, %s25
      %p211 = scmp.lt.s32.totalorder %s25, 3
      %p212 = pnand %p210, %p211
      %p213 = pneg %p212
      // Predicated region
      $region9: #{tpu_custom_call.1} parent=5 // pred_check
        _
      $region10: #{tpu_custom_call.1} parent=5 // pred_check_branch
        %215 = sbr.rel (%p212) target = $region12
      $region11: #{tpu_custom_call.1} parent=5 // pred_region
        %s216 = ssub.s32 %s25, 1
        // Predicated region
        $region13: #{tpu_custom_call.1} parent=11 // pred_check
          %p217 = pneg %p46
        $region14: #{tpu_custom_call.1} parent=11 // pred_check_branch
          %219 = sbr.rel (%p217) target = $region16
        $region15: #{tpu_custom_call.1} parent=11 // pred_region
          %s221 = ssub.s32 256, 256
          %222 = vsyncadd [#allocation3], %s221
          %s223 = sshll.u32 [#allocation2], 4
          %s224 = int_to_ptr.vmem [resolvable:$true] %s223
          %229 = dma.hbm_to_vmem [thread:$0]  %s0, 256, %s224, [#allocation3], 64, 64, 4
        $region16: #{tpu_custom_call.1} parent=11 // pred_fallthru
          _
      $region12: #{tpu_custom_call.1} parent=5 // pred_fallthru
        _
      %p230 = scmp.lt.s32.totalorder %s25, 2
      // Predicated region
      $region17: #{tpu_custom_call.1} parent=5 // pred_check
        %p231 = pneg %p230
      $region18: #{tpu_custom_call.1} parent=5 // pred_check_branch
        %233 = sbr.rel (%p231) target = $region20
      $region19: #{tpu_custom_call.1} parent=5 // pred_region
        // Predicated region
        $region21: #{tpu_custom_call.1} parent=19 // pred_check
          %p234 = pneg %p66
        $region22: #{tpu_custom_call.1} parent=19 // pred_check_branch
          %236 = sbr.rel (%p234) target = $region24
        $region23: #{tpu_custom_call.1} parent=19 // pred_region
          %s237 = sand.u32 %s25, 1
          %s238 = scalar_lea.sflag [#allocation6], %s237
          %s239 = sand.u32 %s56, 1
          %s240 = smul.addr %s239, 192
          %s241 = scalar_lea.vmem [#allocation5], %s240
          %s242 = smul.u32 3, %s25
          %s244 = ssub.s32 3072, 3072
          %245 = vsyncadd %s238, %s244
          %s246 = smul.addr %s242, 16
          %s247 = smul.addr %s246, 64
          %s248 = scalar_lea.hbm %s1, %s247
          %s249 = sshll.u32 %s241, 4
          %s250 = int_to_ptr.vmem [resolvable:$true] %s249
          %255 = dma.hbm_to_vmem [thread:$0]  %s248, 3072, %s250, %s238, 256, 256, 16
        $region24: #{tpu_custom_call.1} parent=19 // pred_fallthru
          _
        // Predicated region
        $region25: #{tpu_custom_call.1} parent=19 // pred_check
          %p256 = pneg %p92
        $region26: #{tpu_custom_call.1} parent=19 // pred_check_branch
          %258 = sbr.rel (%p256) target = $region28
        $region27: #{tpu_custom_call.1} parent=19 // pred_region
          %s259 = sand.u32 %s25, 1
          %s260 = scalar_lea.sflag [#allocation6], %s259
          %s261 = sand.u32 %s82, 1
          %s262 = smul.addr %s261, 3072
          %s263 = scalar_lea.vmem [#allocation7], %s262
          %s264 = smul.u32 3, %s25
          %s266 = ssub.s32 49152, 49152
          %267 = vsyncadd %s260, %s266
          %s268 = smul.addr %s264, 256
          %s269 = smul.addr %s268, 64
          %s270 = scalar_lea.hbm %s2, %s269
          %s271 = sshll.u32 %s263, 4
          %s272 = int_to_ptr.vmem [resolvable:$true] %s271
          %277 = dma.hbm_to_vmem [thread:$0]  %s270, 49152, %s272, %s260, 256, 256, 16
        $region28: #{tpu_custom_call.1} parent=19 // pred_fallthru
          _
        // Predicated region
        $region29: #{tpu_custom_call.1} parent=19 // pred_check
          %p278 = pneg %p118
        $region30: #{tpu_custom_call.1} parent=19 // pred_check_branch
          %280 = sbr.rel (%p278) target = $region32
        $region31: #{tpu_custom_call.1} parent=19 // pred_region
          %s281 = sand.u32 %s25, 1
          %s282 = scalar_lea.sflag [#allocation9], %s281
          %s283 = sand.u32 %s108, 1
          %s284 = smul.addr %s283, 3072
          %s285 = scalar_lea.vmem [#allocation8], %s284
          %s286 = smul.u32 3, %s25
          %s288 = ssub.s32 49152, 49152
          %289 = vsyncadd %s282, %s288
          %s290 = smul.addr %s286, 256
          %s291 = smul.addr %s290, 64
          %s292 = scalar_lea.hbm %s3, %s291
          %s293 = sshll.u32 %s285, 4
          %s294 = int_to_ptr.vmem [resolvable:$true] %s293
          %299 = dma.hbm_to_vmem [thread:$0]  %s292, 49152, %s294, %s282, 256, 256, 16
        $region32: #{tpu_custom_call.1} parent=19 // pred_fallthru
          _
        // Predicated region
        $region33: #{tpu_custom_call.1} parent=19 // pred_check
          %p300 = pneg %p144
        $region34: #{tpu_custom_call.1} parent=19 // pred_check_branch
          %302 = sbr.rel (%p300) target = $region36
        $region35: #{tpu_custom_call.1} parent=19 // pred_region
          %s303 = sand.u32 %s25, 1
          %s304 = scalar_lea.sflag [#allocation9], %s303
          %s305 = sand.u32 %s134, 1
          %s306 = smul.addr %s305, 768
          %s307 = scalar_lea.vmem [#allocation10], %s306
          %s308 = smul.u32 3, %s25
          %s310 = ssub.s32 12288, 12288
          %311 = vsyncadd %s304, %s310
          %s312 = smul.addr %s308, 64
          %s313 = smul.addr %s312, 64
          %s314 = scalar_lea.hbm %s4, %s313
          %s315 = sshll.u32 %s307, 4
          %s316 = int_to_ptr.vmem [resolvable:$true] %s315
          %321 = dma.hbm_to_vmem [thread:$0]  %s314, 12288, %s316, %s304, 64, 64, 4
        $region36: #{tpu_custom_call.1} parent=19 // pred_fallthru
          _
        // Predicated region
        $region37: #{tpu_custom_call.1} parent=19 // pred_check
          %p322 = pneg %p170
        $region38: #{tpu_custom_call.1} parent=19 // pred_check_branch
          %324 = sbr.rel (%p322) target = $region40
        $region39: #{tpu_custom_call.1} parent=19 // pred_region
          %s325 = sand.u32 %s160, 1
          %s326 = scalar_lea.sflag [#allocation12], %s325
          %s327 = sand.u32 %s160, 1
          %s328 = smul.addr %s327, 39
          %s329 = scalar_lea.vmem [#allocation11], %s328
          %s330 = smul.u32 3, %s25
          %s332 = ssub.s32 624, 624
          %333 = vsyncadd %s326, %s332
          %s334 = smul.addr %s330, 13
          %s335 = smul.addr %s334, 16
          %s336 = scalar_lea.hbm %s5, %s335
          %s337 = sshll.u32 %s329, 4
          %s338 = int_to_ptr.vmem [resolvable:$true] %s337
          %343 = dma.hbm_to_vmem [thread:$0]  %s336, 624, %s338, %s326, 208, 208, 13
        $region40: #{tpu_custom_call.1} parent=19 // pred_fallthru
          _
      $region20: #{tpu_custom_call.1} parent=5 // pred_fallthru
        _
      %p344 = scmp.le.s32.totalorder 1, %s25
      %p345 = scmp.lt.s32.totalorder %s25, 3
      %p346 = pnand %p344, %p345
      %p347 = pneg %p346
      // Predicated region
      $region41: #{tpu_custom_call.1} parent=5 // pred_check
        _
      $region42: #{tpu_custom_call.1} parent=5 // pred_check_branch
        %349 = sbr.rel (%p346) target = $region44
      $region43: #{tpu_custom_call.1} parent=5 // pred_region
        %s350 = ssub.s32 %s25, 1
        // Predicated region
        $region45: #{tpu_custom_call.1} parent=43 // pred_check
          %p351 = pneg %p46
        $region46: #{tpu_custom_call.1} parent=43 // pred_check_branch
          %353 = sbr.rel (%p351) target = $region48
        $region47: #{tpu_custom_call.1} parent=43 // pred_region
          %354 = dma.done [#allocation3], 256
        $region48: #{tpu_custom_call.1} parent=43 // pred_fallthru
          _
        %s355 = sand.u32 %s30, 1
        %s356 = scalar_lea.sflag [#allocation6], %s355
        %s357 = sand.u32 %s59, 1
        %s358 = smul.addr %s357, 192
        %s359 = scalar_lea.vmem [#allocation5], %s358
        // Predicated region
        $region49: #{tpu_custom_call.1} parent=43 // pred_check
          %p360 = pneg %p72
        $region50: #{tpu_custom_call.1} parent=43 // pred_check_branch
          %362 = sbr.rel (%p360) target = $region52
        $region51: #{tpu_custom_call.1} parent=43 // pred_region
          %363 = dma.done %s356, 3072
        $region52: #{tpu_custom_call.1} parent=43 // pred_fallthru
          _
        %s364 = sand.u32 %s30, 1
        %s365 = scalar_lea.sflag [#allocation6], %s364
        %s366 = sand.u32 %s85, 1
        %s367 = smul.addr %s366, 3072
        %s368 = scalar_lea.vmem [#allocation7], %s367
        // Predicated region
        $region53: #{tpu_custom_call.1} parent=43 // pred_check
          %p369 = pneg %p98
        $region54: #{tpu_custom_call.1} parent=43 // pred_check_branch
          %371 = sbr.rel (%p369) target = $region56
        $region55: #{tpu_custom_call.1} parent=43 // pred_region
          %372 = dma.done %s365, 49152
        $region56: #{tpu_custom_call.1} parent=43 // pred_fallthru
          _
        %s373 = sand.u32 %s30, 1
        %s374 = scalar_lea.sflag [#allocation9], %s373
        %s375 = sand.u32 %s111, 1
        %s376 = smul.addr %s375, 3072
        %s377 = scalar_lea.vmem [#allocation8], %s376
        // Predicated region
        $region57: #{tpu_custom_call.1} parent=43 // pred_check
          %p378 = pneg %p124
        $region58: #{tpu_custom_call.1} parent=43 // pred_check_branch
          %380 = sbr.rel (%p378) target = $region60
        $region59: #{tpu_custom_call.1} parent=43 // pred_region
          %381 = dma.done %s374, 49152
        $region60: #{tpu_custom_call.1} parent=43 // pred_fallthru
          _
        %s382 = sand.u32 %s30, 1
        %s383 = scalar_lea.sflag [#allocation9], %s382
        %s384 = sand.u32 %s137, 1
        %s385 = smul.addr %s384, 768
        %s386 = scalar_lea.vmem [#allocation10], %s385
        // Predicated region
        $region61: #{tpu_custom_call.1} parent=43 // pred_check
          %p387 = pneg %p150
        $region62: #{tpu_custom_call.1} parent=43 // pred_check_branch
          %389 = sbr.rel (%p387) target = $region64
        $region63: #{tpu_custom_call.1} parent=43 // pred_region
          %390 = dma.done %s383, 12288
        $region64: #{tpu_custom_call.1} parent=43 // pred_fallthru
          _
        %s391 = sand.u32 %s163, 1
        %s392 = scalar_lea.sflag [#allocation12], %s391
        %s393 = sand.u32 %s163, 1
        %s394 = smul.addr %s393, 39
        %s395 = scalar_lea.vmem [#allocation11], %s394
        // Predicated region
        $region65: #{tpu_custom_call.1} parent=43 // pred_check
          %p396 = pneg %p176
        $region66: #{tpu_custom_call.1} parent=43 // pred_check_branch
          %398 = sbr.rel (%p396) target = $region68
        $region67: #{tpu_custom_call.1} parent=43 // pred_region
          %399 = dma.done %s392, 624
        $region68: #{tpu_custom_call.1} parent=43 // pred_fallthru
          _
        %p400 = pneg %p46
        %p401 = pneg %p43
        %s402 = sand.u32 %s30, 1
        %s403 = scalar_lea.sflag [#allocation6], %s402
        %s404 = sand.u32 %s59, 1
        %s405 = smul.addr %s404, 192
        %s406 = scalar_lea.vmem [#allocation5], %s405
        %p407 = pneg %p72
        %p408 = pneg %p69
        %s409 = sand.u32 %s30, 1
        %s410 = scalar_lea.sflag [#allocation6], %s409
        %s411 = sand.u32 %s85, 1
        %s412 = smul.addr %s411, 3072
        %s413 = scalar_lea.vmem [#allocation7], %s412
        %p414 = pneg %p98
        %p415 = pneg %p95
        %s416 = sand.u32 %s30, 1
        %s417 = scalar_lea.sflag [#allocation9], %s416
        %s418 = sand.u32 %s111, 1
        %s419 = smul.addr %s418, 3072
        %s420 = scalar_lea.vmem [#allocation8], %s419
        %p421 = pneg %p124
        %p422 = pneg %p121
        %s423 = sand.u32 %s30, 1
        %s424 = scalar_lea.sflag [#allocation9], %s423
        %s425 = sand.u32 %s137, 1
        %s426 = smul.addr %s425, 768
        %s427 = scalar_lea.vmem [#allocation10], %s426
        %p428 = pneg %p150
        %p429 = pneg %p147
        %s430 = sand.u32 %s163, 1
        %s431 = scalar_lea.sflag [#allocation12], %s430
        %s432 = sand.u32 %s163, 1
        %s433 = smul.addr %s432, 39
        %s434 = scalar_lea.vmem [#allocation11], %s433
        %p435 = pneg %p176
        %p436 = pneg %p173
        %p437 = pneg %p202
        %p438 = pneg %p199
        %s439 = sand.u32 %s189, 1
        %s440 = scalar_lea.sflag [#allocation4], %s439
        %s441 = sand.u32 %s189, 1
        %s442 = smul.addr %s441, 96
        %s443 = scalar_lea.vmem [#allocation13], %s442
        %s444 = smul.u32 3, %s30
        %s445 = smul.u32 3, %s30
        %s446 = smul.u32 3, %s30
        %s447 = smul.u32 3, %s30
        %s448 = smul.u32 3, %s30
        %s449 = smul.u32 3, %s30
        %v451 = vld [vmem:[#allocation2] sm:$0xf]
        %v452 = vld [vmem:[#allocation2 + $0x4] sm:$0xf]
        %v453 = vld [vmem:[#allocation2 + $0x8] sm:$0xf]
        %v454 = vld [vmem:[#allocation2 + $0xc] sm:$0xf]
        %v455 = vld [vmem:[%s395] sm:$0xf]
        %v456 = vld [vmem:[%s395 + $0x4] sm:$0xf]
        %v457 = vld [vmem:[%s395 + $0x8] sm:$0xf]
        %v458 = vld [vmem:[%s395 + $0xc] sm:$0x1]
        %v459 = vld [vmem:[%s359] sm:$0xff]
        %v460 = vld [vmem:[%s359 + $0x8] sm:$0xff]
        %v461 = vld [vmem:[%s359 + $0x10] sm:$0xff]
        %v462 = vld [vmem:[%s359 + $0x18] sm:$0xff]
        %v463 = vld [vmem:[%s359 + $0x20] sm:$0xff]
        %v464 = vld [vmem:[%s359 + $0x28] sm:$0xff]
        %v465 = vld [vmem:[%s359 + $0x30] sm:$0xff]
        %v466 = vld [vmem:[%s359 + $0x38] sm:$0xff]
        %v468 = vlaneseq
        %v469 = vshrl.u32 %v468, 7
        %v470 = vsub.s32 0, %v469
        %v471 = vrot.slane %v455, %v470
        %v472 = vlaneseq
        %v473 = vshrl.u32 %v472, 7
        %v474 = vsub.s32 1, %v473
        %v475 = vrot.slane %v455, %v474
        %v476 = vlaneseq
        %v477 = vshrl.u32 %v476, 7
        %v478 = vsub.s32 2, %v477
        %v479 = vrot.slane %v455, %v478
        %v480 = vlaneseq
        %v481 = vshrl.u32 %v480, 7
        %v482 = vsub.s32 3, %v481
        %v483 = vrot.slane %v455, %v482
        %v492 = vunpack.c.l.b16 %v451
        %v493 = vunpack.c.l.b16 %v452
        %v494 = vunpack.c.l.b16 %v453
        %v495 = vunpack.c.l.b16 %v454
        %v496 = vpack.c.b16 %v493, %v492
        %v497 = vpack.c.b16 %v495, %v494
        %v506 = vunpack.c.l.b16 %v459
        %v507 = vunpack.c.h.b16 %v459
        %v508 = vunpack.c.l.b16 %v460
        %v509 = vunpack.c.h.b16 %v460
        %v510 = vunpack.c.l.b16 %v461
        %v511 = vunpack.c.h.b16 %v461
        %v512 = vunpack.c.l.b16 %v462
        %v513 = vunpack.c.h.b16 %v462
        %v514 = vunpack.c.l.b16 %v463
        %v515 = vunpack.c.h.b16 %v463
        %v516 = vunpack.c.l.b16 %v464
        %v517 = vunpack.c.h.b16 %v464
        %v518 = vunpack.c.l.b16 %v465
        %v519 = vunpack.c.h.b16 %v465
        %v520 = vunpack.c.l.b16 %v466
        %v521 = vunpack.c.h.b16 %v466
        %v522 = vpack.c.b16 %v510, %v506
        %v523 = vpack.c.b16 %v511, %v507
        %v524 = vpack.c.b16 %v512, %v508
        %v525 = vpack.c.b16 %v513, %v509
        %v526 = vpack.c.b16 %v518, %v514
        %v527 = vpack.c.b16 %v519, %v515
        %v528 = vpack.c.b16 %v520, %v516
        %v529 = vpack.c.b16 %v521, %v517
        %vm538 = vcmask 261120
        %v540 = vsel %vm538, %v496, 0
        %v543 = vsel %vm538, %v497, 0
        %545 = vmatprep.subr.bf16.mxu0 0
        %546 = vmatpush1.bf16.msra.mxu0 0
        %547 = vmatprep.subr.bf16.mxu0 0
        %548 = vmatpush1.bf16.msra.mxu0 0
        %549 = vmatprep.subr.bf16.mxu0 0
        %550 = vmatpush1.bf16.msra.mxu0 0
        %551 = vmatprep.subr.bf16.mxu0 0
        %552 = vmatpush1.bf16.msra.mxu0 0
        %553 = vmatprep.subr.bf16.mxu0 0
        %554 = vmatpush1.bf16.msra.mxu0 0
        %555 = vmatprep.subr.bf16.mxu0 0
        %556 = vmatpush1.bf16.msra.mxu0 0
        %557 = vmatprep.subr.bf16.mxu0 %v527
        %558 = vmatpush1.bf16.msra.mxu0 %v526
        %559 = vmatprep.subr.bf16.mxu0 %v523
        %560 = vmatpush1.bf16.msra.mxu0 %v522
        %561 = vmatprep.subr.bf16.mxu0 0
        %562 = vmatpush2.bf16.msra.mxu0 0
        %563 = vmatprep.subr.bf16.mxu0 0
        %564 = vmatpush2.bf16.msra.mxu0 0
        %565 = vmatprep.subr.bf16.mxu0 0
        %566 = vmatpush2.bf16.msra.mxu0 0
        %567 = vmatprep.subr.bf16.mxu0 0
        %568 = vmatpush2.bf16.msra.mxu0 0
        %569 = vmatprep.subr.bf16.mxu0 0
        %570 = vmatpush2.bf16.msra.mxu0 0
        %571 = vmatprep.subr.bf16.mxu0 0
        %572 = vmatpush2.bf16.msra.mxu0 0
        %573 = vmatprep.subr.bf16.mxu0 0
        %574 = vmatpush2.bf16.msra.mxu0 0
        %575 = vmatprep.subr.bf16.mxu0 0
        %576 = vmatpush2.bf16.msra.mxu0 0
        %577 = vmatprep.mubr.bf16.mxu0 0
        %578 = vmatmul.mubr.bf16.gmra.mxu0 %v540
        %v579 = vpop.f32.mrf.mxu0
        %v580 = vadd.f32 %v471, %v579
        %v581 = vpop.f32.mrf.mxu0
        %v582 = vadd.f32 %v475, %v581
        %v583 = vpop.f32.mrf.mxu0
        %v584 = vadd.f32 %v471, %v583
        %v585 = vpop.f32.mrf.mxu0
        %v586 = vadd.f32 %v475, %v585
        %587 = vmatprep.mubr.bf16.mxu0 0
        %588 = vmatmul.mubr.bf16.gmra.mxu0 %v543
        %v589 = vpop.f32.mrf.mxu0
        %v590 = vadd.f32 %v471, %v589
        %v591 = vpop.f32.mrf.mxu0
        %v592 = vadd.f32 %v475, %v591
        %v593 = vpop.f32.mrf.mxu0
        %v594 = vadd.f32 %v471, %v593
        %v595 = vpop.f32.mrf.mxu0
        %v596 = vadd.f32 %v475, %v595
        %597 = vdwg.mxu0
        %598 = vmatprep.subr.bf16.mxu0 0
        %599 = vmatpush1.bf16.msra.mxu0 0
        %600 = vmatprep.subr.bf16.mxu0 0
        %601 = vmatpush1.bf16.msra.mxu0 0
        %602 = vmatprep.subr.bf16.mxu0 0
        %603 = vmatpush1.bf16.msra.mxu0 0
        %604 = vmatprep.subr.bf16.mxu0 0
        %605 = vmatpush1.bf16.msra.mxu0 0
        %606 = vmatprep.subr.bf16.mxu0 0
        %607 = vmatpush1.bf16.msra.mxu0 0
        %608 = vmatprep.subr.bf16.mxu0 0
        %609 = vmatpush1.bf16.msra.mxu0 0
        %610 = vmatprep.subr.bf16.mxu0 %v529
        %611 = vmatpush1.bf16.msra.mxu0 %v528
        %612 = vmatprep.subr.bf16.mxu0 %v525
        %613 = vmatpush1.bf16.msra.mxu0 %v524
        %614 = vmatprep.subr.bf16.mxu0 0
        %615 = vmatpush2.bf16.msra.mxu0 0
        %616 = vmatprep.subr.bf16.mxu0 0
        %617 = vmatpush2.bf16.msra.mxu0 0
        %618 = vmatprep.subr.bf16.mxu0 0
        %619 = vmatpush2.bf16.msra.mxu0 0
        %620 = vmatprep.subr.bf16.mxu0 0
        %621 = vmatpush2.bf16.msra.mxu0 0
        %622 = vmatprep.subr.bf16.mxu0 0
        %623 = vmatpush2.bf16.msra.mxu0 0
        %624 = vmatprep.subr.bf16.mxu0 0
        %625 = vmatpush2.bf16.msra.mxu0 0
        %626 = vmatprep.subr.bf16.mxu0 0
        %627 = vmatpush2.bf16.msra.mxu0 0
        %628 = vmatprep.subr.bf16.mxu0 0
        %629 = vmatpush2.bf16.msra.mxu0 0
        %630 = vmatprep.mubr.bf16.mxu0 0
        %631 = vmatmul.mubr.bf16.gmra.mxu0 %v540
        %v632 = vpop.f32.mrf.mxu0
        %v633 = vadd.f32 %v479, %v632
        %v634 = vpop.f32.mrf.mxu0
        %v635 = vadd.f32 %v483, %v634
        %v636 = vpop.f32.mrf.mxu0
        %v637 = vadd.f32 %v479, %v636
        %v638 = vpop.f32.mrf.mxu0
        %v639 = vadd.f32 %v483, %v638
        %640 = vmatprep.mubr.bf16.mxu0 0
        %641 = vmatmul.mubr.bf16.gmra.mxu0 %v543
        %v642 = vpop.f32.mrf.mxu0
        %v643 = vadd.f32 %v479, %v642
        %v644 = vpop.f32.mrf.mxu0
        %v645 = vadd.f32 %v483, %v644
        %v646 = vpop.f32.mrf.mxu0
        %v647 = vadd.f32 %v479, %v646
        %v648 = vpop.f32.mrf.mxu0
        %v649 = vadd.f32 %v483, %v648
        %650 = vdwg.mxu0
        %v651 = vmax.f32 %v580, 0.0
        %v652 = vmax.f32 %v582, 0.0
        %v653 = vmax.f32 %v633, 0.0
        %v654 = vmax.f32 %v635, 0.0
        %v655 = vmax.f32 %v584, 0.0
        %v656 = vmax.f32 %v586, 0.0
        %v657 = vmax.f32 %v637, 0.0
        %v658 = vmax.f32 %v639, 0.0
        %v659 = vmax.f32 %v590, 0.0
        %v660 = vmax.f32 %v592, 0.0
        %v661 = vmax.f32 %v643, 0.0
        %v662 = vmax.f32 %v645, 0.0
        %v663 = vmax.f32 %v594, 0.0
        %v664 = vmax.f32 %v596, 0.0
        %v665 = vmax.f32 %v647, 0.0
        %v666 = vmax.f32 %v649, 0.0
        %v667 = vpack.c.bf16 %v655, %v651
        %v668 = vpack.c.bf16 %v656, %v652
        %v669 = vpack.c.bf16 %v657, %v653
        %v670 = vpack.c.bf16 %v658, %v654
        %v671 = vpack.c.bf16 %v663, %v659
        %v672 = vpack.c.bf16 %v664, %v660
        %v673 = vpack.c.bf16 %v665, %v661
        %v674 = vpack.c.bf16 %v666, %v662
        %v675 = vld [vmem:[%s368] sm:$0xff]
        %v676 = vld [vmem:[%s368 + $0x8] sm:$0xff]
        %v677 = vld [vmem:[%s368 + $0x10] sm:$0xff]
        %v678 = vld [vmem:[%s368 + $0x18] sm:$0xff]
        %v679 = vld [vmem:[%s368 + $0x20] sm:$0xff]
        %v680 = vld [vmem:[%s368 + $0x28] sm:$0xff]
        %v681 = vld [vmem:[%s368 + $0x30] sm:$0xff]
        %v682 = vld [vmem:[%s368 + $0x38] sm:$0xff]
        %v683 = vld [vmem:[%s368 + $0x40] sm:$0xff]
        %v684 = vld [vmem:[%s368 + $0x48] sm:$0xff]
        %v685 = vld [vmem:[%s368 + $0x50] sm:$0xff]
        %v686 = vld [vmem:[%s368 + $0x58] sm:$0xff]
        %v687 = vld [vmem:[%s368 + $0x60] sm:$0xff]
        %v688 = vld [vmem:[%s368 + $0x68] sm:$0xff]
        %v689 = vld [vmem:[%s368 + $0x70] sm:$0xff]
        %v690 = vld [vmem:[%s368 + $0x78] sm:$0xff]
        %v691 = vld [vmem:[%s368 + $0x80] sm:$0xff]
        %v692 = vld [vmem:[%s368 + $0x88] sm:$0xff]
        %v693 = vld [vmem:[%s368 + $0x90] sm:$0xff]
        %v694 = vld [vmem:[%s368 + $0x98] sm:$0xff]
        %v695 = vld [vmem:[%s368 + $0xa0] sm:$0xff]
        %v696 = vld [vmem:[%s368 + $0xa8] sm:$0xff]
        %v697 = vld [vmem:[%s368 + $0xb0] sm:$0xff]
        %v698 = vld [vmem:[%s368 + $0xb8] sm:$0xff]
        %v699 = vld [vmem:[%s368 + $0xc0] sm:$0xff]
        %v700 = vld [vmem:[%s368 + $0xc8] sm:$0xff]
        %v701 = vld [vmem:[%s368 + $0xd0] sm:$0xff]
        %v702 = vld [vmem:[%s368 + $0xd8] sm:$0xff]
        %v703 = vld [vmem:[%s368 + $0xe0] sm:$0xff]
        %v704 = vld [vmem:[%s368 + $0xe8] sm:$0xff]
        %v705 = vld [vmem:[%s368 + $0xf0] sm:$0xff]
        %v706 = vld [vmem:[%s368 + $0xf8] sm:$0xff]
        %v707 = vld [vmem:[%s368 + $0x100] sm:$0xff]
        %v708 = vld [vmem:[%s368 + $0x108] sm:$0xff]
        %v709 = vld [vmem:[%s368 + $0x110] sm:$0xff]
        %v710 = vld [vmem:[%s368 + $0x118] sm:$0xff]
        %v711 = vld [vmem:[%s368 + $0x120] sm:$0xff]
        %v712 = vld [vmem:[%s368 + $0x128] sm:$0xff]
        %v713 = vld [vmem:[%s368 + $0x130] sm:$0xff]
        %v714 = vld [vmem:[%s368 + $0x138] sm:$0xff]
        %v715 = vld [vmem:[%s368 + $0x140] sm:$0xff]
        %v716 = vld [vmem:[%s368 + $0x148] sm:$0xff]
        %v717 = vld [vmem:[%s368 + $0x150] sm:$0xff]
        %v718 = vld [vmem:[%s368 + $0x158] sm:$0xff]
        %v719 = vld [vmem:[%s368 + $0x160] sm:$0xff]
        %v720 = vld [vmem:[%s368 + $0x168] sm:$0xff]
        %v721 = vld [vmem:[%s368 + $0x170] sm:$0xff]
        %v722 = vld [vmem:[%s368 + $0x178] sm:$0xff]
        %v723 = vld [vmem:[%s368 + $0x180] sm:$0xff]
        %v724 = vld [vmem:[%s368 + $0x188] sm:$0xff]
        %v725 = vld [vmem:[%s368 + $0x190] sm:$0xff]
        %v726 = vld [vmem:[%s368 + $0x198] sm:$0xff]
        %v727 = vld [vmem:[%s368 + $0x1a0] sm:$0xff]
        %v728 = vld [vmem:[%s368 + $0x1a8] sm:$0xff]
        %v729 = vld [vmem:[%s368 + $0x1b0] sm:$0xff]
        %v730 = vld [vmem:[%s368 + $0x1b8] sm:$0xff]
        %v731 = vld [vmem:[%s368 + $0x1c0] sm:$0xff]
        %v732 = vld [vmem:[%s368 + $0x1c8] sm:$0xff]
        %v733 = vld [vmem:[%s368 + $0x1d0] sm:$0xff]
        %v734 = vld [vmem:[%s368 + $0x1d8] sm:$0xff]
        %v735 = vld [vmem:[%s368 + $0x1e0] sm:$0xff]
        %v736 = vld [vmem:[%s368 + $0x1e8] sm:$0xff]
        %v737 = vld [vmem:[%s368 + $0x1f0] sm:$0xff]
        %v738 = vld [vmem:[%s368 + $0x1f8] sm:$0xff]
        %v739 = vld [vmem:[%s368 + $0x200] sm:$0xff]
        %v740 = vld [vmem:[%s368 + $0x208] sm:$0xff]
        %v741 = vld [vmem:[%s368 + $0x210] sm:$0xff]
        %v742 = vld [vmem:[%s368 + $0x218] sm:$0xff]
        %v743 = vld [vmem:[%s368 + $0x220] sm:$0xff]
        %v744 = vld [vmem:[%s368 + $0x228] sm:$0xff]
        %v745 = vld [vmem:[%s368 + $0x230] sm:$0xff]
        %v746 = vld [vmem:[%s368 + $0x238] sm:$0xff]
        %v747 = vld [vmem:[%s368 + $0x240] sm:$0xff]
        %v748 = vld [vmem:[%s368 + $0x248] sm:$0xff]
        %v749 = vld [vmem:[%s368 + $0x250] sm:$0xff]
        %v750 = vld [vmem:[%s368 + $0x258] sm:$0xff]
        %v751 = vld [vmem:[%s368 + $0x260] sm:$0xff]
        %v752 = vld [vmem:[%s368 + $0x268] sm:$0xff]
        %v753 = vld [vmem:[%s368 + $0x270] sm:$0xff]
        %v754 = vld [vmem:[%s368 + $0x278] sm:$0xff]
        %v755 = vld [vmem:[%s368 + $0x280] sm:$0xff]
        %v756 = vld [vmem:[%s368 + $0x288] sm:$0xff]
        %v757 = vld [vmem:[%s368 + $0x290] sm:$0xff]
        %v758 = vld [vmem:[%s368 + $0x298] sm:$0xff]
        %v759 = vld [vmem:[%s368 + $0x2a0] sm:$0xff]
        %v760 = vld [vmem:[%s368 + $0x2a8] sm:$0xff]
        %v761 = vld [vmem:[%s368 + $0x2b0] sm:$0xff]
        %v762 = vld [vmem:[%s368 + $0x2b8] sm:$0xff]
        %v763 = vld [vmem:[%s368 + $0x2c0] sm:$0xff]
        %v764 = vld [vmem:[%s368 + $0x2c8] sm:$0xff]
        %v765 = vld [vmem:[%s368 + $0x2d0] sm:$0xff]
        %v766 = vld [vmem:[%s368 + $0x2d8] sm:$0xff]
        %v767 = vld [vmem:[%s368 + $0x2e0] sm:$0xff]
        %v768 = vld [vmem:[%s368 + $0x2e8] sm:$0xff]
        %v769 = vld [vmem:[%s368 + $0x2f0] sm:$0xff]
        %v770 = vld [vmem:[%s368 + $0x2f8] sm:$0xff]
        %v771 = vld [vmem:[%s368 + $0x300] sm:$0xff]
        %v772 = vld [vmem:[%s368 + $0x308] sm:$0xff]
        %v773 = vld [vmem:[%s368 + $0x310] sm:$0xff]
        %v774 = vld [vmem:[%s368 + $0x318] sm:$0xff]
        %v775 = vld [vmem:[%s368 + $0x320] sm:$0xff]
        %v776 = vld [vmem:[%s368 + $0x328] sm:$0xff]
        %v777 = vld [vmem:[%s368 + $0x330] sm:$0xff]
        %v778 = vld [vmem:[%s368 + $0x338] sm:$0xff]
        %v779 = vld [vmem:[%s368 + $0x340] sm:$0xff]
        %v780 = vld [vmem:[%s368 + $0x348] sm:$0xff]
        %v781 = vld [vmem:[%s368 + $0x350] sm:$0xff]
        %v782 = vld [vmem:[%s368 + $0x358] sm:$0xff]
        %v783 = vld [vmem:[%s368 + $0x360] sm:$0xff]
        %v784 = vld [vmem:[%s368 + $0x368] sm:$0xff]
        %v785 = vld [vmem:[%s368 + $0x370] sm:$0xff]
        %v786 = vld [vmem:[%s368 + $0x378] sm:$0xff]
        %v787 = vld [vmem:[%s368 + $0x380] sm:$0xff]
        %v788 = vld [vmem:[%s368 + $0x388] sm:$0xff]
        %v789 = vld [vmem:[%s368 + $0x390] sm:$0xff]
        %v790 = vld [vmem:[%s368 + $0x398] sm:$0xff]
        %v791 = vld [vmem:[%s368 + $0x3a0] sm:$0xff]
        %v792 = vld [vmem:[%s368 + $0x3a8] sm:$0xff]
        %v793 = vld [vmem:[%s368 + $0x3b0] sm:$0xff]
        %v794 = vld [vmem:[%s368 + $0x3b8] sm:$0xff]
        %v795 = vld [vmem:[%s368 + $0x3c0] sm:$0xff]
        %v796 = vld [vmem:[%s368 + $0x3c8] sm:$0xff]
        %v797 = vld [vmem:[%s368 + $0x3d0] sm:$0xff]
        %v798 = vld [vmem:[%s368 + $0x3d8] sm:$0xff]
        %v799 = vld [vmem:[%s368 + $0x3e0] sm:$0xff]
        %v800 = vld [vmem:[%s368 + $0x3e8] sm:$0xff]
        %v801 = vld [vmem:[%s368 + $0x3f0] sm:$0xff]
        %v802 = vld [vmem:[%s368 + $0x3f8] sm:$0xff]
        %v804 = vlaneseq
        %v805 = vshrl.u32 %v804, 7
        %v806 = vsub.s32 0, %v805
        %v807 = vrot.slane %v456, %v806
        %v808 = vlaneseq
        %v809 = vshrl.u32 %v808, 7
        %v810 = vsub.s32 1, %v809
        %v811 = vrot.slane %v456, %v810
        %v812 = vlaneseq
        %v813 = vshrl.u32 %v812, 7
        %v814 = vsub.s32 2, %v813
        %v815 = vrot.slane %v456, %v814
        %v816 = vlaneseq
        %v817 = vshrl.u32 %v816, 7
        %v818 = vsub.s32 3, %v817
        %v819 = vrot.slane %v456, %v818
        %v952 = vunpack.c.l.b16 %v675
        %v953 = vunpack.c.h.b16 %v675
        %v954 = vunpack.c.l.b16 %v676
        %v955 = vunpack.c.h.b16 %v676
        %v956 = vunpack.c.l.b16 %v677
        %v957 = vunpack.c.h.b16 %v677
        %v958 = vunpack.c.l.b16 %v678
        %v959 = vunpack.c.h.b16 %v678
        %v960 = vunpack.c.l.b16 %v679
        %v961 = vunpack.c.h.b16 %v679
        %v962 = vunpack.c.l.b16 %v680
        %v963 = vunpack.c.h.b16 %v680
        %v964 = vunpack.c.l.b16 %v681
        %v965 = vunpack.c.h.b16 %v681
        %v966 = vunpack.c.l.b16 %v682
        %v967 = vunpack.c.h.b16 %v682
        %v968 = vunpack.c.l.b16 %v683
        %v969 = vunpack.c.h.b16 %v683
        %v970 = vunpack.c.l.b16 %v684
        %v971 = vunpack.c.h.b16 %v684
        %v972 = vunpack.c.l.b16 %v685
        %v973 = vunpack.c.h.b16 %v685
        %v974 = vunpack.c.l.b16 %v686
        %v975 = vunpack.c.h.b16 %v686
        %v976 = vunpack.c.l.b16 %v687
        %v977 = vunpack.c.h.b16 %v687
        %v978 = vunpack.c.l.b16 %v688
        %v979 = vunpack.c.h.b16 %v688
        %v980 = vunpack.c.l.b16 %v689
        %v981 = vunpack.c.h.b16 %v689
        %v982 = vunpack.c.l.b16 %v690
        %v983 = vunpack.c.h.b16 %v690
        %v984 = vunpack.c.l.b16 %v691
        %v985 = vunpack.c.h.b16 %v691
        %v986 = vunpack.c.l.b16 %v692
        %v987 = vunpack.c.h.b16 %v692
        %v988 = vunpack.c.l.b16 %v693
        %v989 = vunpack.c.h.b16 %v693
        %v990 = vunpack.c.l.b16 %v694
        %v991 = vunpack.c.h.b16 %v694
        %v992 = vunpack.c.l.b16 %v695
        %v993 = vunpack.c.h.b16 %v695
        %v994 = vunpack.c.l.b16 %v696
        %v995 = vunpack.c.h.b16 %v696
        %v996 = vunpack.c.l.b16 %v697
        %v997 = vunpack.c.h.b16 %v697
        %v998 = vunpack.c.l.b16 %v698
        %v999 = vunpack.c.h.b16 %v698
        %v1000 = vunpack.c.l.b16 %v699
        %v1001 = vunpack.c.h.b16 %v699
        %v1002 = vunpack.c.l.b16 %v700
        %v1003 = vunpack.c.h.b16 %v700
        %v1004 = vunpack.c.l.b16 %v701
        %v1005 = vunpack.c.h.b16 %v701
        %v1006 = vunpack.c.l.b16 %v702
        %v1007 = vunpack.c.h.b16 %v702
        %v1008 = vunpack.c.l.b16 %v703
        %v1009 = vunpack.c.h.b16 %v703
        %v1010 = vunpack.c.l.b16 %v704
        %v1011 = vunpack.c.h.b16 %v704
        %v1012 = vunpack.c.l.b16 %v705
        %v1013 = vunpack.c.h.b16 %v705
        %v1014 = vunpack.c.l.b16 %v706
        %v1015 = vunpack.c.h.b16 %v706
        %v1016 = vunpack.c.l.b16 %v707
        %v1017 = vunpack.c.h.b16 %v707
        %v1018 = vunpack.c.l.b16 %v708
        %v1019 = vunpack.c.h.b16 %v708
        %v1020 = vunpack.c.l.b16 %v709
        %v1021 = vunpack.c.h.b16 %v709
        %v1022 = vunpack.c.l.b16 %v710
        %v1023 = vunpack.c.h.b16 %v710
        %v1024 = vunpack.c.l.b16 %v711
        %v1025 = vunpack.c.h.b16 %v711
        %v1026 = vunpack.c.l.b16 %v712
        %v1027 = vunpack.c.h.b16 %v712
        %v1028 = vunpack.c.l.b16 %v713
        %v1029 = vunpack.c.h.b16 %v713
        %v1030 = vunpack.c.l.b16 %v714
        %v1031 = vunpack.c.h.b16 %v714
        %v1032 = vunpack.c.l.b16 %v715
        %v1033 = vunpack.c.h.b16 %v715
        %v1034 = vunpack.c.l.b16 %v716
        %v1035 = vunpack.c.h.b16 %v716
        %v1036 = vunpack.c.l.b16 %v717
        %v1037 = vunpack.c.h.b16 %v717
        %v1038 = vunpack.c.l.b16 %v718
        %v1039 = vunpack.c.h.b16 %v718
        %v1040 = vunpack.c.l.b16 %v719
        %v1041 = vunpack.c.h.b16 %v719
        %v1042 = vunpack.c.l.b16 %v720
        %v1043 = vunpack.c.h.b16 %v720
        %v1044 = vunpack.c.l.b16 %v721
        %v1045 = vunpack.c.h.b16 %v721
        %v1046 = vunpack.c.l.b16 %v722
        %v1047 = vunpack.c.h.b16 %v722
        %v1048 = vunpack.c.l.b16 %v723
        %v1049 = vunpack.c.h.b16 %v723
        %v1050 = vunpack.c.l.b16 %v724
        %v1051 = vunpack.c.h.b16 %v724
        %v1052 = vunpack.c.l.b16 %v725
        %v1053 = vunpack.c.h.b16 %v725
        %v1054 = vunpack.c.l.b16 %v726
        %v1055 = vunpack.c.h.b16 %v726
        %v1056 = vunpack.c.l.b16 %v727
        %v1057 = vunpack.c.h.b16 %v727
        %v1058 = vunpack.c.l.b16 %v728
        %v1059 = vunpack.c.h.b16 %v728
        %v1060 = vunpack.c.l.b16 %v729
        %v1061 = vunpack.c.h.b16 %v729
        %v1062 = vunpack.c.l.b16 %v730
        %v1063 = vunpack.c.h.b16 %v730
        %v1064 = vunpack.c.l.b16 %v731
        %v1065 = vunpack.c.h.b16 %v731
        %v1066 = vunpack.c.l.b16 %v732
        %v1067 = vunpack.c.h.b16 %v732
        %v1068 = vunpack.c.l.b16 %v733
        %v1069 = vunpack.c.h.b16 %v733
        %v1070 = vunpack.c.l.b16 %v734
        %v1071 = vunpack.c.h.b16 %v734
        %v1072 = vunpack.c.l.b16 %v735
        %v1073 = vunpack.c.h.b16 %v735
        %v1074 = vunpack.c.l.b16 %v736
        %v1075 = vunpack.c.h.b16 %v736
        %v1076 = vunpack.c.l.b16 %v737
        %v1077 = vunpack.c.h.b16 %v737
        %v1078 = vunpack.c.l.b16 %v738
        %v1079 = vunpack.c.h.b16 %v738
        %v1080 = vunpack.c.l.b16 %v739
        %v1081 = vunpack.c.h.b16 %v739
        %v1082 = vunpack.c.l.b16 %v740
        %v1083 = vunpack.c.h.b16 %v740
        %v1084 = vunpack.c.l.b16 %v741
        %v1085 = vunpack.c.h.b16 %v741
        %v1086 = vunpack.c.l.b16 %v742
        %v1087 = vunpack.c.h.b16 %v742
        %v1088 = vunpack.c.l.b16 %v743
        %v1089 = vunpack.c.h.b16 %v743
        %v1090 = vunpack.c.l.b16 %v744
        %v1091 = vunpack.c.h.b16 %v744
        %v1092 = vunpack.c.l.b16 %v745
        %v1093 = vunpack.c.h.b16 %v745
        %v1094 = vunpack.c.l.b16 %v746
        %v1095 = vunpack.c.h.b16 %v746
        %v1096 = vunpack.c.l.b16 %v747
        %v1097 = vunpack.c.h.b16 %v747
        %v1098 = vunpack.c.l.b16 %v748
        %v1099 = vunpack.c.h.b16 %v748
        %v1100 = vunpack.c.l.b16 %v749
        %v1101 = vunpack.c.h.b16 %v749
        %v1102 = vunpack.c.l.b16 %v750
        %v1103 = vunpack.c.h.b16 %v750
        %v1104 = vunpack.c.l.b16 %v751
        %v1105 = vunpack.c.h.b16 %v751
        %v1106 = vunpack.c.l.b16 %v752
        %v1107 = vunpack.c.h.b16 %v752
        %v1108 = vunpack.c.l.b16 %v753
        %v1109 = vunpack.c.h.b16 %v753
        %v1110 = vunpack.c.l.b16 %v754
        %v1111 = vunpack.c.h.b16 %v754
        %v1112 = vunpack.c.l.b16 %v755
        %v1113 = vunpack.c.h.b16 %v755
        %v1114 = vunpack.c.l.b16 %v756
        %v1115 = vunpack.c.h.b16 %v756
        %v1116 = vunpack.c.l.b16 %v757
        %v1117 = vunpack.c.h.b16 %v757
        %v1118 = vunpack.c.l.b16 %v758
        %v1119 = vunpack.c.h.b16 %v758
        %v1120 = vunpack.c.l.b16 %v759
        %v1121 = vunpack.c.h.b16 %v759
        %v1122 = vunpack.c.l.b16 %v760
        %v1123 = vunpack.c.h.b16 %v760
        %v1124 = vunpack.c.l.b16 %v761
        %v1125 = vunpack.c.h.b16 %v761
        %v1126 = vunpack.c.l.b16 %v762
        %v1127 = vunpack.c.h.b16 %v762
        %v1128 = vunpack.c.l.b16 %v763
        %v1129 = vunpack.c.h.b16 %v763
        %v1130 = vunpack.c.l.b16 %v764
        %v1131 = vunpack.c.h.b16 %v764
        %v1132 = vunpack.c.l.b16 %v765
        %v1133 = vunpack.c.h.b16 %v765
        %v1134 = vunpack.c.l.b16 %v766
        %v1135 = vunpack.c.h.b16 %v766
        %v1136 = vunpack.c.l.b16 %v767
        %v1137 = vunpack.c.h.b16 %v767
        %v1138 = vunpack.c.l.b16 %v768
        %v1139 = vunpack.c.h.b16 %v768
        %v1140 = vunpack.c.l.b16 %v769
        %v1141 = vunpack.c.h.b16 %v769
        %v1142 = vunpack.c.l.b16 %v770
        %v1143 = vunpack.c.h.b16 %v770
        %v1144 = vunpack.c.l.b16 %v771
        %v1145 = vunpack.c.h.b16 %v771
        %v1146 = vunpack.c.l.b16 %v772
        %v1147 = vunpack.c.h.b16 %v772
        %v1148 = vunpack.c.l.b16 %v773
        %v1149 = vunpack.c.h.b16 %v773
        %v1150 = vunpack.c.l.b16 %v774
        %v1151 = vunpack.c.h.b16 %v774
        %v1152 = vunpack.c.l.b16 %v775
        %v1153 = vunpack.c.h.b16 %v775
        %v1154 = vunpack.c.l.b16 %v776
        %v1155 = vunpack.c.h.b16 %v776
        %v1156 = vunpack.c.l.b16 %v777
        %v1157 = vunpack.c.h.b16 %v777
        %v1158 = vunpack.c.l.b16 %v778
        %v1159 = vunpack.c.h.b16 %v778
        %v1160 = vunpack.c.l.b16 %v779
        %v1161 = vunpack.c.h.b16 %v779
        %v1162 = vunpack.c.l.b16 %v780
        %v1163 = vunpack.c.h.b16 %v780
        %v1164 = vunpack.c.l.b16 %v781
        %v1165 = vunpack.c.h.b16 %v781
        %v1166 = vunpack.c.l.b16 %v782
        %v1167 = vunpack.c.h.b16 %v782
        %v1168 = vunpack.c.l.b16 %v783
        %v1169 = vunpack.c.h.b16 %v783
        %v1170 = vunpack.c.l.b16 %v784
        %v1171 = vunpack.c.h.b16 %v784
        %v1172 = vunpack.c.l.b16 %v785
        %v1173 = vunpack.c.h.b16 %v785
        %v1174 = vunpack.c.l.b16 %v786
        %v1175 = vunpack.c.h.b16 %v786
        %v1176 = vunpack.c.l.b16 %v787
        %v1177 = vunpack.c.h.b16 %v787
        %v1178 = vunpack.c.l.b16 %v788
        %v1179 = vunpack.c.h.b16 %v788
        %v1180 = vunpack.c.l.b16 %v789
        %v1181 = vunpack.c.h.b16 %v789
        %v1182 = vunpack.c.l.b16 %v790
        %v1183 = vunpack.c.h.b16 %v790
        %v1184 = vunpack.c.l.b16 %v791
        %v1185 = vunpack.c.h.b16 %v791
        %v1186 = vunpack.c.l.b16 %v792
        %v1187 = vunpack.c.h.b16 %v792
        %v1188 = vunpack.c.l.b16 %v793
        %v1189 = vunpack.c.h.b16 %v793
        %v1190 = vunpack.c.l.b16 %v794
        %v1191 = vunpack.c.h.b16 %v794
        %v1192 = vunpack.c.l.b16 %v795
        %v1193 = vunpack.c.h.b16 %v795
        %v1194 = vunpack.c.l.b16 %v796
        %v1195 = vunpack.c.h.b16 %v796
        %v1196 = vunpack.c.l.b16 %v797
        %v1197 = vunpack.c.h.b16 %v797
        %v1198 = vunpack.c.l.b16 %v798
        %v1199 = vunpack.c.h.b16 %v798
        %v1200 = vunpack.c.l.b16 %v799
        %v1201 = vunpack.c.h.b16 %v799
        %v1202 = vunpack.c.l.b16 %v800
        %v1203 = vunpack.c.h.b16 %v800
        %v1204 = vunpack.c.l.b16 %v801
        %v1205 = vunpack.c.h.b16 %v801
        %v1206 = vunpack.c.l.b16 %v802
        %v1207 = vunpack.c.h.b16 %v802
        %v1208 = vpack.c.b16 %v956, %v952
        %v1209 = vpack.c.b16 %v957, %v953
        %v1210 = vpack.c.b16 %v958, %v954
        %v1211 = vpack.c.b16 %v959, %v955
        %v1212 = vpack.c.b16 %v964, %v960
        %v1213 = vpack.c.b16 %v965, %v961
        %v1214 = vpack.c.b16 %v966, %v962
        %v1215 = vpack.c.b16 %v967, %v963
        %v1216 = vpack.c.b16 %v972, %v968
        %v1217 = vpack.c.b16 %v973, %v969
        %v1218 = vpack.c.b16 %v974, %v970
        %v1219 = vpack.c.b16 %v975, %v971
        %v1220 = vpack.c.b16 %v980, %v976
        %v1221 = vpack.c.b16 %v981, %v977
        %v1222 = vpack.c.b16 %v982, %v978
        %v1223 = vpack.c.b16 %v983, %v979
        %v1224 = vpack.c.b16 %v988, %v984
        %v1225 = vpack.c.b16 %v989, %v985
        %v1226 = vpack.c.b16 %v990, %v986
        %v1227 = vpack.c.b16 %v991, %v987
        %v1228 = vpack.c.b16 %v996, %v992
        %v1229 = vpack.c.b16 %v997, %v993
        %v1230 = vpack.c.b16 %v998, %v994
        %v1231 = vpack.c.b16 %v999, %v995
        %v1232 = vpack.c.b16 %v1004, %v1000
        %v1233 = vpack.c.b16 %v1005, %v1001
        %v1234 = vpack.c.b16 %v1006, %v1002
        %v1235 = vpack.c.b16 %v1007, %v1003
        %v1236 = vpack.c.b16 %v1012, %v1008
        %v1237 = vpack.c.b16 %v1013, %v1009
        %v1238 = vpack.c.b16 %v1014, %v1010
        %v1239 = vpack.c.b16 %v1015, %v1011
        %v1240 = vpack.c.b16 %v1020, %v1016
        %v1241 = vpack.c.b16 %v1021, %v1017
        %v1242 = vpack.c.b16 %v1022, %v1018
        %v1243 = vpack.c.b16 %v1023, %v1019
        %v1244 = vpack.c.b16 %v1028, %v1024
        %v1245 = vpack.c.b16 %v1029, %v1025
        %v1246 = vpack.c.b16 %v1030, %v1026
        %v1247 = vpack.c.b16 %v1031, %v1027
        %v1248 = vpack.c.b16 %v1036, %v1032
        %v1249 = vpack.c.b16 %v1037, %v1033
        %v1250 = vpack.c.b16 %v1038, %v1034
        %v1251 = vpack.c.b16 %v1039, %v1035
        %v1252 = vpack.c.b16 %v1044, %v1040
        %v1253 = vpack.c.b16 %v1045, %v1041
        %v1254 = vpack.c.b16 %v1046, %v1042
        %v1255 = vpack.c.b16 %v1047, %v1043
        %v1256 = vpack.c.b16 %v1052, %v1048
        %v1257 = vpack.c.b16 %v1053, %v1049
        %v1258 = vpack.c.b16 %v1054, %v1050
        %v1259 = vpack.c.b16 %v1055, %v1051
        %v1260 = vpack.c.b16 %v1060, %v1056
        %v1261 = vpack.c.b16 %v1061, %v1057
        %v1262 = vpack.c.b16 %v1062, %v1058
        %v1263 = vpack.c.b16 %v1063, %v1059
        %v1264 = vpack.c.b16 %v1068, %v1064
        %v1265 = vpack.c.b16 %v1069, %v1065
        %v1266 = vpack.c.b16 %v1070, %v1066
        %v1267 = vpack.c.b16 %v1071, %v1067
        %v1268 = vpack.c.b16 %v1076, %v1072
        %v1269 = vpack.c.b16 %v1077, %v1073
        %v1270 = vpack.c.b16 %v1078, %v1074
        %v1271 = vpack.c.b16 %v1079, %v1075
        %v1272 = vpack.c.b16 %v1084, %v1080
        %v1273 = vpack.c.b16 %v1085, %v1081
        %v1274 = vpack.c.b16 %v1086, %v1082
        %v1275 = vpack.c.b16 %v1087, %v1083
        %v1276 = vpack.c.b16 %v1092, %v1088
        %v1277 = vpack.c.b16 %v1093, %v1089
        %v1278 = vpack.c.b16 %v1094, %v1090
        %v1279 = vpack.c.b16 %v1095, %v1091
        %v1280 = vpack.c.b16 %v1100, %v1096
        %v1281 = vpack.c.b16 %v1101, %v1097
        %v1282 = vpack.c.b16 %v1102, %v1098
        %v1283 = vpack.c.b16 %v1103, %v1099
        %v1284 = vpack.c.b16 %v1108, %v1104
        %v1285 = vpack.c.b16 %v1109, %v1105
        %v1286 = vpack.c.b16 %v1110, %v1106
        %v1287 = vpack.c.b16 %v1111, %v1107
        %v1288 = vpack.c.b16 %v1116, %v1112
        %v1289 = vpack.c.b16 %v1117, %v1113
        %v1290 = vpack.c.b16 %v1118, %v1114
        %v1291 = vpack.c.b16 %v1119, %v1115
        %v1292 = vpack.c.b16 %v1124, %v1120
        %v1293 = vpack.c.b16 %v1125, %v1121
        %v1294 = vpack.c.b16 %v1126, %v1122
        %v1295 = vpack.c.b16 %v1127, %v1123
        %v1296 = vpack.c.b16 %v1132, %v1128
        %v1297 = vpack.c.b16 %v1133, %v1129
        %v1298 = vpack.c.b16 %v1134, %v1130
        %v1299 = vpack.c.b16 %v1135, %v1131
        %v1300 = vpack.c.b16 %v1140, %v1136
        %v1301 = vpack.c.b16 %v1141, %v1137
        %v1302 = vpack.c.b16 %v1142, %v1138
        %v1303 = vpack.c.b16 %v1143, %v1139
        %v1304 = vpack.c.b16 %v1148, %v1144
        %v1305 = vpack.c.b16 %v1149, %v1145
        %v1306 = vpack.c.b16 %v1150, %v1146
        %v1307 = vpack.c.b16 %v1151, %v1147
        %v1308 = vpack.c.b16 %v1156, %v1152
        %v1309 = vpack.c.b16 %v1157, %v1153
        %v1310 = vpack.c.b16 %v1158, %v1154
        %v1311 = vpack.c.b16 %v1159, %v1155
        %v1312 = vpack.c.b16 %v1164, %v1160
        %v1313 = vpack.c.b16 %v1165, %v1161
        %v1314 = vpack.c.b16 %v1166, %v1162
        %v1315 = vpack.c.b16 %v1167, %v1163
        %v1316 = vpack.c.b16 %v1172, %v1168
        %v1317 = vpack.c.b16 %v1173, %v1169
        %v1318 = vpack.c.b16 %v1174, %v1170
        %v1319 = vpack.c.b16 %v1175, %v1171
        %v1320 = vpack.c.b16 %v1180, %v1176
        %v1321 = vpack.c.b16 %v1181, %v1177
        %v1322 = vpack.c.b16 %v1182, %v1178
        %v1323 = vpack.c.b16 %v1183, %v1179
        %v1324 = vpack.c.b16 %v1188, %v1184
        %v1325 = vpack.c.b16 %v1189, %v1185
        %v1326 = vpack.c.b16 %v1190, %v1186
        %v1327 = vpack.c.b16 %v1191, %v1187
        %v1328 = vpack.c.b16 %v1196, %v1192
        %v1329 = vpack.c.b16 %v1197, %v1193
        %v1330 = vpack.c.b16 %v1198, %v1194
        %v1331 = vpack.c.b16 %v1199, %v1195
        %v1332 = vpack.c.b16 %v1204, %v1200
        %v1333 = vpack.c.b16 %v1205, %v1201
        %v1334 = vpack.c.b16 %v1206, %v1202
        %v1335 = vpack.c.b16 %v1207, %v1203
        %1464 = vmatprep.subr.bf16.mxu0 %v1237
        %1465 = vmatpush1.bf16.msra.mxu0 %v1236
        %1466 = vmatprep.subr.bf16.mxu0 %v1233
        %1467 = vmatpush1.bf16.msra.mxu0 %v1232
        %1468 = vmatprep.subr.bf16.mxu0 %v1229
        %1469 = vmatpush1.bf16.msra.mxu0 %v1228
        %1470 = vmatprep.subr.bf16.mxu0 %v1225
        %1471 = vmatpush1.bf16.msra.mxu0 %v1224
        %1472 = vmatprep.subr.bf16.mxu0 %v1221
        %1473 = vmatpush1.bf16.msra.mxu0 %v1220
        %1474 = vmatprep.subr.bf16.mxu0 %v1217
        %1475 = vmatpush1.bf16.msra.mxu0 %v1216
        %1476 = vmatprep.subr.bf16.mxu0 %v1213
        %1477 = vmatpush1.bf16.msra.mxu0 %v1212
        %1478 = vmatprep.subr.bf16.mxu0 %v1209
        %1479 = vmatpush1.bf16.msra.mxu0 %v1208
        %1480 = vmatprep.subr.bf16.mxu0 %v1269
        %1481 = vmatpush2.bf16.msra.mxu0 %v1268
        %1482 = vmatprep.subr.bf16.mxu0 %v1265
        %1483 = vmatpush2.bf16.msra.mxu0 %v1264
        %1484 = vmatprep.subr.bf16.mxu0 %v1261
        %1485 = vmatpush2.bf16.msra.mxu0 %v1260
        %1486 = vmatprep.subr.bf16.mxu0 %v1257
        %1487 = vmatpush2.bf16.msra.mxu0 %v1256
        %1488 = vmatprep.subr.bf16.mxu0 %v1253
        %1489 = vmatpush2.bf16.msra.mxu0 %v1252
        %1490 = vmatprep.subr.bf16.mxu0 %v1249
        %1491 = vmatpush2.bf16.msra.mxu0 %v1248
        %1492 = vmatprep.subr.bf16.mxu0 %v1245
        %1493 = vmatpush2.bf16.msra.mxu0 %v1244
        %1494 = vmatprep.subr.bf16.mxu0 %v1241
        %1495 = vmatpush2.bf16.msra.mxu0 %v1240
        %1496 = vmatprep.mubr.bf16.mxu0 %v668
        %1497 = vmatmul.mubr.bf16.gmra.mxu0 %v667
        %v1498 = vpop.f32.mrf.mxu0
        %v1499 = vadd.f32 %v807, %v1498
        %v1500 = vpop.f32.mrf.mxu0
        %v1501 = vadd.f32 %v811, %v1500
        %v1502 = vpop.f32.mrf.mxu0
        %v1503 = vadd.f32 %v807, %v1502
        %v1504 = vpop.f32.mrf.mxu0
        %v1505 = vadd.f32 %v811, %v1504
        %1506 = vmatprep.mubr.bf16.mxu0 %v672
        %1507 = vmatmul.mubr.bf16.gmra.mxu0 %v671
        %v1508 = vpop.f32.mrf.mxu0
        %v1509 = vadd.f32 %v807, %v1508
        %v1510 = vpop.f32.mrf.mxu0
        %v1511 = vadd.f32 %v811, %v1510
        %v1512 = vpop.f32.mrf.mxu0
        %v1513 = vadd.f32 %v807, %v1512
        %v1514 = vpop.f32.mrf.mxu0
        %v1515 = vadd.f32 %v811, %v1514
        %1516 = vdwg.mxu0
        %1517 = vmatprep.subr.bf16.mxu0 %v1301
        %1518 = vmatpush1.bf16.msra.mxu0 %v1300
        %1519 = vmatprep.subr.bf16.mxu0 %v1297
        %1520 = vmatpush1.bf16.msra.mxu0 %v1296
        %1521 = vmatprep.subr.bf16.mxu0 %v1293
        %1522 = vmatpush1.bf16.msra.mxu0 %v1292
        %1523 = vmatprep.subr.bf16.mxu0 %v1289
        %1524 = vmatpush1.bf16.msra.mxu0 %v1288
        %1525 = vmatprep.subr.bf16.mxu0 %v1285
        %1526 = vmatpush1.bf16.msra.mxu0 %v1284
        %1527 = vmatprep.subr.bf16.mxu0 %v1281
        %1528 = vmatpush1.bf16.msra.mxu0 %v1280
        %1529 = vmatprep.subr.bf16.mxu0 %v1277
        %1530 = vmatpush1.bf16.msra.mxu0 %v1276
        %1531 = vmatprep.subr.bf16.mxu0 %v1273
        %1532 = vmatpush1.bf16.msra.mxu0 %v1272
        %1533 = vmatprep.subr.bf16.mxu0 %v1333
        %1534 = vmatpush2.bf16.msra.mxu0 %v1332
        %1535 = vmatprep.subr.bf16.mxu0 %v1329
        %1536 = vmatpush2.bf16.msra.mxu0 %v1328
        %1537 = vmatprep.subr.bf16.mxu0 %v1325
        %1538 = vmatpush2.bf16.msra.mxu0 %v1324
        %1539 = vmatprep.subr.bf16.mxu0 %v1321
        %1540 = vmatpush2.bf16.msra.mxu0 %v1320
        %1541 = vmatprep.subr.bf16.mxu0 %v1317
        %1542 = vmatpush2.bf16.msra.mxu0 %v1316
        %1543 = vmatprep.subr.bf16.mxu0 %v1313
        %1544 = vmatpush2.bf16.msra.mxu0 %v1312
        %1545 = vmatprep.subr.bf16.mxu0 %v1309
        %1546 = vmatpush2.bf16.msra.mxu0 %v1308
        %1547 = vmatprep.subr.bf16.mxu0 %v1305
        %1548 = vmatpush2.bf16.msra.mxu0 %v1304
        %1549 = vmatprep.mubr.bf16.mxu0 %v670
        %1550 = vmatmul.mubr.bf16.gmra.mxu0 %v669
        %v1551 = vpop.f32.mrf.mxu0
        %v1552 = vadd.f32 %v1499, %v1551
        %v1553 = vpop.f32.mrf.mxu0
        %v1554 = vadd.f32 %v1501, %v1553
        %v1555 = vpop.f32.mrf.mxu0
        %v1556 = vadd.f32 %v1503, %v1555
        %v1557 = vpop.f32.mrf.mxu0
        %v1558 = vadd.f32 %v1505, %v1557
        %1559 = vmatprep.mubr.bf16.mxu0 %v674
        %1560 = vmatmul.mubr.bf16.gmra.mxu0 %v673
        %v1561 = vpop.f32.mrf.mxu0
        %v1562 = vadd.f32 %v1509, %v1561
        %v1563 = vpop.f32.mrf.mxu0
        %v1564 = vadd.f32 %v1511, %v1563
        %v1565 = vpop.f32.mrf.mxu0
        %v1566 = vadd.f32 %v1513, %v1565
        %v1567 = vpop.f32.mrf.mxu0
        %v1568 = vadd.f32 %v1515, %v1567
        %1569 = vdwg.mxu0
        %1570 = vmatprep.subr.bf16.mxu0 %v1239
        %1571 = vmatpush1.bf16.msra.mxu0 %v1238
        %1572 = vmatprep.subr.bf16.mxu0 %v1235
        %1573 = vmatpush1.bf16.msra.mxu0 %v1234
        %1574 = vmatprep.subr.bf16.mxu0 %v1231
        %1575 = vmatpush1.bf16.msra.mxu0 %v1230
        %1576 = vmatprep.subr.bf16.mxu0 %v1227
        %1577 = vmatpush1.bf16.msra.mxu0 %v1226
        %1578 = vmatprep.subr.bf16.mxu0 %v1223
        %1579 = vmatpush1.bf16.msra.mxu0 %v1222
        %1580 = vmatprep.subr.bf16.mxu0 %v1219
        %1581 = vmatpush1.bf16.msra.mxu0 %v1218
        %1582 = vmatprep.subr.bf16.mxu0 %v1215
        %1583 = vmatpush1.bf16.msra.mxu0 %v1214
        %1584 = vmatprep.subr.bf16.mxu0 %v1211
        %1585 = vmatpush1.bf16.msra.mxu0 %v1210
        %1586 = vmatprep.subr.bf16.mxu0 %v1271
        %1587 = vmatpush2.bf16.msra.mxu0 %v1270
        %1588 = vmatprep.subr.bf16.mxu0 %v1267
        %1589 = vmatpush2.bf16.msra.mxu0 %v1266
        %1590 = vmatprep.subr.bf16.mxu0 %v1263
        %1591 = vmatpush2.bf16.msra.mxu0 %v1262
        %1592 = vmatprep.subr.bf16.mxu0 %v1259
        %1593 = vmatpush2.bf16.msra.mxu0 %v1258
        %1594 = vmatprep.subr.bf16.mxu0 %v1255
        %1595 = vmatpush2.bf16.msra.mxu0 %v1254
        %1596 = vmatprep.subr.bf16.mxu0 %v1251
        %1597 = vmatpush2.bf16.msra.mxu0 %v1250
        %1598 = vmatprep.subr.bf16.mxu0 %v1247
        %1599 = vmatpush2.bf16.msra.mxu0 %v1246
        %1600 = vmatprep.subr.bf16.mxu0 %v1243
        %1601 = vmatpush2.bf16.msra.mxu0 %v1242
        %1602 = vmatprep.mubr.bf16.mxu0 %v668
        %1603 = vmatmul.mubr.bf16.gmra.mxu0 %v667
        %v1604 = vpop.f32.mrf.mxu0
        %v1605 = vadd.f32 %v815, %v1604
        %v1606 = vpop.f32.mrf.mxu0
        %v1607 = vadd.f32 %v819, %v1606
        %v1608 = vpop.f32.mrf.mxu0
        %v1609 = vadd.f32 %v815, %v1608
        %v1610 = vpop.f32.mrf.mxu0
        %v1611 = vadd.f32 %v819, %v1610
        %1612 = vmatprep.mubr.bf16.mxu0 %v672
        %1613 = vmatmul.mubr.bf16.gmra.mxu0 %v671
        %v1614 = vpop.f32.mrf.mxu0
        %v1615 = vadd.f32 %v815, %v1614
        %v1616 = vpop.f32.mrf.mxu0
        %v1617 = vadd.f32 %v819, %v1616
        %v1618 = vpop.f32.mrf.mxu0
        %v1619 = vadd.f32 %v815, %v1618
        %v1620 = vpop.f32.mrf.mxu0
        %v1621 = vadd.f32 %v819, %v1620
        %1622 = vdwg.mxu0
        %1623 = vmatprep.subr.bf16.mxu0 %v1303
        %1624 = vmatpush1.bf16.msra.mxu0 %v1302
        %1625 = vmatprep.subr.bf16.mxu0 %v1299
        %1626 = vmatpush1.bf16.msra.mxu0 %v1298
        %1627 = vmatprep.subr.bf16.mxu0 %v1295
        %1628 = vmatpush1.bf16.msra.mxu0 %v1294
        %1629 = vmatprep.subr.bf16.mxu0 %v1291
        %1630 = vmatpush1.bf16.msra.mxu0 %v1290
        %1631 = vmatprep.subr.bf16.mxu0 %v1287
        %1632 = vmatpush1.bf16.msra.mxu0 %v1286
        %1633 = vmatprep.subr.bf16.mxu0 %v1283
        %1634 = vmatpush1.bf16.msra.mxu0 %v1282
        %1635 = vmatprep.subr.bf16.mxu0 %v1279
        %1636 = vmatpush1.bf16.msra.mxu0 %v1278
        %1637 = vmatprep.subr.bf16.mxu0 %v1275
        %1638 = vmatpush1.bf16.msra.mxu0 %v1274
        %1639 = vmatprep.subr.bf16.mxu0 %v1335
        %1640 = vmatpush2.bf16.msra.mxu0 %v1334
        %1641 = vmatprep.subr.bf16.mxu0 %v1331
        %1642 = vmatpush2.bf16.msra.mxu0 %v1330
        %1643 = vmatprep.subr.bf16.mxu0 %v1327
        %1644 = vmatpush2.bf16.msra.mxu0 %v1326
        %1645 = vmatprep.subr.bf16.mxu0 %v1323
        %1646 = vmatpush2.bf16.msra.mxu0 %v1322
        %1647 = vmatprep.subr.bf16.mxu0 %v1319
        %1648 = vmatpush2.bf16.msra.mxu0 %v1318
        %1649 = vmatprep.subr.bf16.mxu0 %v1315
        %1650 = vmatpush2.bf16.msra.mxu0 %v1314
        %1651 = vmatprep.subr.bf16.mxu0 %v1311
        %1652 = vmatpush2.bf16.msra.mxu0 %v1310
        %1653 = vmatprep.subr.bf16.mxu0 %v1307
        %1654 = vmatpush2.bf16.msra.mxu0 %v1306
        %1655 = vmatprep.mubr.bf16.mxu0 %v670
        %1656 = vmatmul.mubr.bf16.gmra.mxu0 %v669
        %v1657 = vpop.f32.mrf.mxu0
        %v1658 = vadd.f32 %v1605, %v1657
        %v1659 = vpop.f32.mrf.mxu0
        %v1660 = vadd.f32 %v1607, %v1659
        %v1661 = vpop.f32.mrf.mxu0
        %v1662 = vadd.f32 %v1609, %v1661
        %v1663 = vpop.f32.mrf.mxu0
        %v1664 = vadd.f32 %v1611, %v1663
        %1665 = vmatprep.mubr.bf16.mxu0 %v674
        %1666 = vmatmul.mubr.bf16.gmra.mxu0 %v673
        %v1667 = vpop.f32.mrf.mxu0
        %v1668 = vadd.f32 %v1615, %v1667
        %v1669 = vpop.f32.mrf.mxu0
        %v1670 = vadd.f32 %v1617, %v1669
        %v1671 = vpop.f32.mrf.mxu0
        %v1672 = vadd.f32 %v1619, %v1671
        %v1673 = vpop.f32.mrf.mxu0
        %v1674 = vadd.f32 %v1621, %v1673
        %1675 = vdwg.mxu0
        %v1676 = vmax.f32 %v1552, 0.0
        %v1677 = vmax.f32 %v1554, 0.0
        %v1678 = vmax.f32 %v1658, 0.0
        %v1679 = vmax.f32 %v1660, 0.0
        %v1680 = vmax.f32 %v1556, 0.0
        %v1681 = vmax.f32 %v1558, 0.0
        %v1682 = vmax.f32 %v1662, 0.0
        %v1683 = vmax.f32 %v1664, 0.0
        %v1684 = vmax.f32 %v1562, 0.0
        %v1685 = vmax.f32 %v1564, 0.0
        %v1686 = vmax.f32 %v1668, 0.0
        %v1687 = vmax.f32 %v1670, 0.0
        %v1688 = vmax.f32 %v1566, 0.0
        %v1689 = vmax.f32 %v1568, 0.0
        %v1690 = vmax.f32 %v1672, 0.0
        %v1691 = vmax.f32 %v1674, 0.0
        %v1692 = vpack.c.bf16 %v1680, %v1676
        %v1693 = vpack.c.bf16 %v1681, %v1677
        %v1694 = vpack.c.bf16 %v1682, %v1678
        %v1695 = vpack.c.bf16 %v1683, %v1679
        %v1696 = vpack.c.bf16 %v1688, %v1684
        %v1697 = vpack.c.bf16 %v1689, %v1685
        %v1698 = vpack.c.bf16 %v1690, %v1686
        %v1699 = vpack.c.bf16 %v1691, %v1687
        %v1700 = vld [vmem:[%s377] sm:$0xff]
        %v1701 = vld [vmem:[%s377 + $0x8] sm:$0xff]
        %v1702 = vld [vmem:[%s377 + $0x10] sm:$0xff]
        %v1703 = vld [vmem:[%s377 + $0x18] sm:$0xff]
        %v1704 = vld [vmem:[%s377 + $0x20] sm:$0xff]
        %v1705 = vld [vmem:[%s377 + $0x28] sm:$0xff]
        %v1706 = vld [vmem:[%s377 + $0x30] sm:$0xff]
        %v1707 = vld [vmem:[%s377 + $0x38] sm:$0xff]
        %v1708 = vld [vmem:[%s377 + $0x40] sm:$0xff]
        %v1709 = vld [vmem:[%s377 + $0x48] sm:$0xff]
        %v1710 = vld [vmem:[%s377 + $0x50] sm:$0xff]
        %v1711 = vld [vmem:[%s377 + $0x58] sm:$0xff]
        %v1712 = vld [vmem:[%s377 + $0x60] sm:$0xff]
        %v1713 = vld [vmem:[%s377 + $0x68] sm:$0xff]
        %v1714 = vld [vmem:[%s377 + $0x70] sm:$0xff]
        %v1715 = vld [vmem:[%s377 + $0x78] sm:$0xff]
        %v1716 = vld [vmem:[%s377 + $0x80] sm:$0xff]
        %v1717 = vld [vmem:[%s377 + $0x88] sm:$0xff]
        %v1718 = vld [vmem:[%s377 + $0x90] sm:$0xff]
        %v1719 = vld [vmem:[%s377 + $0x98] sm:$0xff]
        %v1720 = vld [vmem:[%s377 + $0xa0] sm:$0xff]
        %v1721 = vld [vmem:[%s377 + $0xa8] sm:$0xff]
        %v1722 = vld [vmem:[%s377 + $0xb0] sm:$0xff]
        %v1723 = vld [vmem:[%s377 + $0xb8] sm:$0xff]
        %v1724 = vld [vmem:[%s377 + $0xc0] sm:$0xff]
        %v1725 = vld [vmem:[%s377 + $0xc8] sm:$0xff]
        %v1726 = vld [vmem:[%s377 + $0xd0] sm:$0xff]
        %v1727 = vld [vmem:[%s377 + $0xd8] sm:$0xff]
        %v1728 = vld [vmem:[%s377 + $0xe0] sm:$0xff]
        %v1729 = vld [vmem:[%s377 + $0xe8] sm:$0xff]
        %v1730 = vld [vmem:[%s377 + $0xf0] sm:$0xff]
        %v1731 = vld [vmem:[%s377 + $0xf8] sm:$0xff]
        %v1732 = vld [vmem:[%s377 + $0x100] sm:$0xff]
        %v1733 = vld [vmem:[%s377 + $0x108] sm:$0xff]
        %v1734 = vld [vmem:[%s377 + $0x110] sm:$0xff]
        %v1735 = vld [vmem:[%s377 + $0x118] sm:$0xff]
        %v1736 = vld [vmem:[%s377 + $0x120] sm:$0xff]
        %v1737 = vld [vmem:[%s377 + $0x128] sm:$0xff]
        %v1738 = vld [vmem:[%s377 + $0x130] sm:$0xff]
        %v1739 = vld [vmem:[%s377 + $0x138] sm:$0xff]
        %v1740 = vld [vmem:[%s377 + $0x140] sm:$0xff]
        %v1741 = vld [vmem:[%s377 + $0x148] sm:$0xff]
        %v1742 = vld [vmem:[%s377 + $0x150] sm:$0xff]
        %v1743 = vld [vmem:[%s377 + $0x158] sm:$0xff]
        %v1744 = vld [vmem:[%s377 + $0x160] sm:$0xff]
        %v1745 = vld [vmem:[%s377 + $0x168] sm:$0xff]
        %v1746 = vld [vmem:[%s377 + $0x170] sm:$0xff]
        %v1747 = vld [vmem:[%s377 + $0x178] sm:$0xff]
        %v1748 = vld [vmem:[%s377 + $0x180] sm:$0xff]
        %v1749 = vld [vmem:[%s377 + $0x188] sm:$0xff]
        %v1750 = vld [vmem:[%s377 + $0x190] sm:$0xff]
        %v1751 = vld [vmem:[%s377 + $0x198] sm:$0xff]
        %v1752 = vld [vmem:[%s377 + $0x1a0] sm:$0xff]
        %v1753 = vld [vmem:[%s377 + $0x1a8] sm:$0xff]
        %v1754 = vld [vmem:[%s377 + $0x1b0] sm:$0xff]
        %v1755 = vld [vmem:[%s377 + $0x1b8] sm:$0xff]
        %v1756 = vld [vmem:[%s377 + $0x1c0] sm:$0xff]
        %v1757 = vld [vmem:[%s377 + $0x1c8] sm:$0xff]
        %v1758 = vld [vmem:[%s377 + $0x1d0] sm:$0xff]
        %v1759 = vld [vmem:[%s377 + $0x1d8] sm:$0xff]
        %v1760 = vld [vmem:[%s377 + $0x1e0] sm:$0xff]
        %v1761 = vld [vmem:[%s377 + $0x1e8] sm:$0xff]
        %v1762 = vld [vmem:[%s377 + $0x1f0] sm:$0xff]
        %v1763 = vld [vmem:[%s377 + $0x1f8] sm:$0xff]
        %v1764 = vld [vmem:[%s377 + $0x200] sm:$0xff]
        %v1765 = vld [vmem:[%s377 + $0x208] sm:$0xff]
        %v1766 = vld [vmem:[%s377 + $0x210] sm:$0xff]
        %v1767 = vld [vmem:[%s377 + $0x218] sm:$0xff]
        %v1768 = vld [vmem:[%s377 + $0x220] sm:$0xff]
        %v1769 = vld [vmem:[%s377 + $0x228] sm:$0xff]
        %v1770 = vld [vmem:[%s377 + $0x230] sm:$0xff]
        %v1771 = vld [vmem:[%s377 + $0x238] sm:$0xff]
        %v1772 = vld [vmem:[%s377 + $0x240] sm:$0xff]
        %v1773 = vld [vmem:[%s377 + $0x248] sm:$0xff]
        %v1774 = vld [vmem:[%s377 + $0x250] sm:$0xff]
        %v1775 = vld [vmem:[%s377 + $0x258] sm:$0xff]
        %v1776 = vld [vmem:[%s377 + $0x260] sm:$0xff]
        %v1777 = vld [vmem:[%s377 + $0x268] sm:$0xff]
        %v1778 = vld [vmem:[%s377 + $0x270] sm:$0xff]
        %v1779 = vld [vmem:[%s377 + $0x278] sm:$0xff]
        %v1780 = vld [vmem:[%s377 + $0x280] sm:$0xff]
        %v1781 = vld [vmem:[%s377 + $0x288] sm:$0xff]
        %v1782 = vld [vmem:[%s377 + $0x290] sm:$0xff]
        %v1783 = vld [vmem:[%s377 + $0x298] sm:$0xff]
        %v1784 = vld [vmem:[%s377 + $0x2a0] sm:$0xff]
        %v1785 = vld [vmem:[%s377 + $0x2a8] sm:$0xff]
        %v1786 = vld [vmem:[%s377 + $0x2b0] sm:$0xff]
        %v1787 = vld [vmem:[%s377 + $0x2b8] sm:$0xff]
        %v1788 = vld [vmem:[%s377 + $0x2c0] sm:$0xff]
        %v1789 = vld [vmem:[%s377 + $0x2c8] sm:$0xff]
        %v1790 = vld [vmem:[%s377 + $0x2d0] sm:$0xff]
        %v1791 = vld [vmem:[%s377 + $0x2d8] sm:$0xff]
        %v1792 = vld [vmem:[%s377 + $0x2e0] sm:$0xff]
        %v1793 = vld [vmem:[%s377 + $0x2e8] sm:$0xff]
        %v1794 = vld [vmem:[%s377 + $0x2f0] sm:$0xff]
        %v1795 = vld [vmem:[%s377 + $0x2f8] sm:$0xff]
        %v1796 = vld [vmem:[%s377 + $0x300] sm:$0xff]
        %v1797 = vld [vmem:[%s377 + $0x308] sm:$0xff]
        %v1798 = vld [vmem:[%s377 + $0x310] sm:$0xff]
        %v1799 = vld [vmem:[%s377 + $0x318] sm:$0xff]
        %v1800 = vld [vmem:[%s377 + $0x320] sm:$0xff]
        %v1801 = vld [vmem:[%s377 + $0x328] sm:$0xff]
        %v1802 = vld [vmem:[%s377 + $0x330] sm:$0xff]
        %v1803 = vld [vmem:[%s377 + $0x338] sm:$0xff]
        %v1804 = vld [vmem:[%s377 + $0x340] sm:$0xff]
        %v1805 = vld [vmem:[%s377 + $0x348] sm:$0xff]
        %v1806 = vld [vmem:[%s377 + $0x350] sm:$0xff]
        %v1807 = vld [vmem:[%s377 + $0x358] sm:$0xff]
        %v1808 = vld [vmem:[%s377 + $0x360] sm:$0xff]
        %v1809 = vld [vmem:[%s377 + $0x368] sm:$0xff]
        %v1810 = vld [vmem:[%s377 + $0x370] sm:$0xff]
        %v1811 = vld [vmem:[%s377 + $0x378] sm:$0xff]
        %v1812 = vld [vmem:[%s377 + $0x380] sm:$0xff]
        %v1813 = vld [vmem:[%s377 + $0x388] sm:$0xff]
        %v1814 = vld [vmem:[%s377 + $0x390] sm:$0xff]
        %v1815 = vld [vmem:[%s377 + $0x398] sm:$0xff]
        %v1816 = vld [vmem:[%s377 + $0x3a0] sm:$0xff]
        %v1817 = vld [vmem:[%s377 + $0x3a8] sm:$0xff]
        %v1818 = vld [vmem:[%s377 + $0x3b0] sm:$0xff]
        %v1819 = vld [vmem:[%s377 + $0x3b8] sm:$0xff]
        %v1820 = vld [vmem:[%s377 + $0x3c0] sm:$0xff]
        %v1821 = vld [vmem:[%s377 + $0x3c8] sm:$0xff]
        %v1822 = vld [vmem:[%s377 + $0x3d0] sm:$0xff]
        %v1823 = vld [vmem:[%s377 + $0x3d8] sm:$0xff]
        %v1824 = vld [vmem:[%s377 + $0x3e0] sm:$0xff]
        %v1825 = vld [vmem:[%s377 + $0x3e8] sm:$0xff]
        %v1826 = vld [vmem:[%s377 + $0x3f0] sm:$0xff]
        %v1827 = vld [vmem:[%s377 + $0x3f8] sm:$0xff]
        %v1829 = vlaneseq
        %v1830 = vshrl.u32 %v1829, 7
        %v1831 = vsub.s32 0, %v1830
        %v1832 = vrot.slane %v457, %v1831
        %v1833 = vlaneseq
        %v1834 = vshrl.u32 %v1833, 7
        %v1835 = vsub.s32 1, %v1834
        %v1836 = vrot.slane %v457, %v1835
        %v1837 = vlaneseq
        %v1838 = vshrl.u32 %v1837, 7
        %v1839 = vsub.s32 2, %v1838
        %v1840 = vrot.slane %v457, %v1839
        %v1841 = vlaneseq
        %v1842 = vshrl.u32 %v1841, 7
        %v1843 = vsub.s32 3, %v1842
        %v1844 = vrot.slane %v457, %v1843
        %v1977 = vunpack.c.l.b16 %v1700
        %v1978 = vunpack.c.h.b16 %v1700
        %v1979 = vunpack.c.l.b16 %v1701
        %v1980 = vunpack.c.h.b16 %v1701
        %v1981 = vunpack.c.l.b16 %v1702
        %v1982 = vunpack.c.h.b16 %v1702
        %v1983 = vunpack.c.l.b16 %v1703
        %v1984 = vunpack.c.h.b16 %v1703
        %v1985 = vunpack.c.l.b16 %v1704
        %v1986 = vunpack.c.h.b16 %v1704
        %v1987 = vunpack.c.l.b16 %v1705
        %v1988 = vunpack.c.h.b16 %v1705
        %v1989 = vunpack.c.l.b16 %v1706
        %v1990 = vunpack.c.h.b16 %v1706
        %v1991 = vunpack.c.l.b16 %v1707
        %v1992 = vunpack.c.h.b16 %v1707
        %v1993 = vunpack.c.l.b16 %v1708
        %v1994 = vunpack.c.h.b16 %v1708
        %v1995 = vunpack.c.l.b16 %v1709
        %v1996 = vunpack.c.h.b16 %v1709
        %v1997 = vunpack.c.l.b16 %v1710
        %v1998 = vunpack.c.h.b16 %v1710
        %v1999 = vunpack.c.l.b16 %v1711
        %v2000 = vunpack.c.h.b16 %v1711
        %v2001 = vunpack.c.l.b16 %v1712
        %v2002 = vunpack.c.h.b16 %v1712
        %v2003 = vunpack.c.l.b16 %v1713
        %v2004 = vunpack.c.h.b16 %v1713
        %v2005 = vunpack.c.l.b16 %v1714
        %v2006 = vunpack.c.h.b16 %v1714
        %v2007 = vunpack.c.l.b16 %v1715
        %v2008 = vunpack.c.h.b16 %v1715
        %v2009 = vunpack.c.l.b16 %v1716
        %v2010 = vunpack.c.h.b16 %v1716
        %v2011 = vunpack.c.l.b16 %v1717
        %v2012 = vunpack.c.h.b16 %v1717
        %v2013 = vunpack.c.l.b16 %v1718
        %v2014 = vunpack.c.h.b16 %v1718
        %v2015 = vunpack.c.l.b16 %v1719
        %v2016 = vunpack.c.h.b16 %v1719
        %v2017 = vunpack.c.l.b16 %v1720
        %v2018 = vunpack.c.h.b16 %v1720
        %v2019 = vunpack.c.l.b16 %v1721
        %v2020 = vunpack.c.h.b16 %v1721
        %v2021 = vunpack.c.l.b16 %v1722
        %v2022 = vunpack.c.h.b16 %v1722
        %v2023 = vunpack.c.l.b16 %v1723
        %v2024 = vunpack.c.h.b16 %v1723
        %v2025 = vunpack.c.l.b16 %v1724
        %v2026 = vunpack.c.h.b16 %v1724
        %v2027 = vunpack.c.l.b16 %v1725
        %v2028 = vunpack.c.h.b16 %v1725
        %v2029 = vunpack.c.l.b16 %v1726
        %v2030 = vunpack.c.h.b16 %v1726
        %v2031 = vunpack.c.l.b16 %v1727
        %v2032 = vunpack.c.h.b16 %v1727
        %v2033 = vunpack.c.l.b16 %v1728
        %v2034 = vunpack.c.h.b16 %v1728
        %v2035 = vunpack.c.l.b16 %v1729
        %v2036 = vunpack.c.h.b16 %v1729
        %v2037 = vunpack.c.l.b16 %v1730
        %v2038 = vunpack.c.h.b16 %v1730
        %v2039 = vunpack.c.l.b16 %v1731
        %v2040 = vunpack.c.h.b16 %v1731
        %v2041 = vunpack.c.l.b16 %v1732
        %v2042 = vunpack.c.h.b16 %v1732
        %v2043 = vunpack.c.l.b16 %v1733
        %v2044 = vunpack.c.h.b16 %v1733
        %v2045 = vunpack.c.l.b16 %v1734
        %v2046 = vunpack.c.h.b16 %v1734
        %v2047 = vunpack.c.l.b16 %v1735
        %v2048 = vunpack.c.h.b16 %v1735
        %v2049 = vunpack.c.l.b16 %v1736
        %v2050 = vunpack.c.h.b16 %v1736
        %v2051 = vunpack.c.l.b16 %v1737
        %v2052 = vunpack.c.h.b16 %v1737
        %v2053 = vunpack.c.l.b16 %v1738
        %v2054 = vunpack.c.h.b16 %v1738
        %v2055 = vunpack.c.l.b16 %v1739
        %v2056 = vunpack.c.h.b16 %v1739
        %v2057 = vunpack.c.l.b16 %v1740
        %v2058 = vunpack.c.h.b16 %v1740
        %v2059 = vunpack.c.l.b16 %v1741
        %v2060 = vunpack.c.h.b16 %v1741
        %v2061 = vunpack.c.l.b16 %v1742
        %v2062 = vunpack.c.h.b16 %v1742
        %v2063 = vunpack.c.l.b16 %v1743
        %v2064 = vunpack.c.h.b16 %v1743
        %v2065 = vunpack.c.l.b16 %v1744
        %v2066 = vunpack.c.h.b16 %v1744
        %v2067 = vunpack.c.l.b16 %v1745
        %v2068 = vunpack.c.h.b16 %v1745
        %v2069 = vunpack.c.l.b16 %v1746
        %v2070 = vunpack.c.h.b16 %v1746
        %v2071 = vunpack.c.l.b16 %v1747
        %v2072 = vunpack.c.h.b16 %v1747
        %v2073 = vunpack.c.l.b16 %v1748
        %v2074 = vunpack.c.h.b16 %v1748
        %v2075 = vunpack.c.l.b16 %v1749
        %v2076 = vunpack.c.h.b16 %v1749
        %v2077 = vunpack.c.l.b16 %v1750
        %v2078 = vunpack.c.h.b16 %v1750
        %v2079 = vunpack.c.l.b16 %v1751
        %v2080 = vunpack.c.h.b16 %v1751
        %v2081 = vunpack.c.l.b16 %v1752
        %v2082 = vunpack.c.h.b16 %v1752
        %v2083 = vunpack.c.l.b16 %v1753
        %v2084 = vunpack.c.h.b16 %v1753
        %v2085 = vunpack.c.l.b16 %v1754
        %v2086 = vunpack.c.h.b16 %v1754
        %v2087 = vunpack.c.l.b16 %v1755
        %v2088 = vunpack.c.h.b16 %v1755
        %v2089 = vunpack.c.l.b16 %v1756
        %v2090 = vunpack.c.h.b16 %v1756
        %v2091 = vunpack.c.l.b16 %v1757
        %v2092 = vunpack.c.h.b16 %v1757
        %v2093 = vunpack.c.l.b16 %v1758
        %v2094 = vunpack.c.h.b16 %v1758
        %v2095 = vunpack.c.l.b16 %v1759
        %v2096 = vunpack.c.h.b16 %v1759
        %v2097 = vunpack.c.l.b16 %v1760
        %v2098 = vunpack.c.h.b16 %v1760
        %v2099 = vunpack.c.l.b16 %v1761
        %v2100 = vunpack.c.h.b16 %v1761
        %v2101 = vunpack.c.l.b16 %v1762
        %v2102 = vunpack.c.h.b16 %v1762
        %v2103 = vunpack.c.l.b16 %v1763
        %v2104 = vunpack.c.h.b16 %v1763
        %v2105 = vunpack.c.l.b16 %v1764
        %v2106 = vunpack.c.h.b16 %v1764
        %v2107 = vunpack.c.l.b16 %v1765
        %v2108 = vunpack.c.h.b16 %v1765
        %v2109 = vunpack.c.l.b16 %v1766
        %v2110 = vunpack.c.h.b16 %v1766
        %v2111 = vunpack.c.l.b16 %v1767
        %v2112 = vunpack.c.h.b16 %v1767
        %v2113 = vunpack.c.l.b16 %v1768
        %v2114 = vunpack.c.h.b16 %v1768
        %v2115 = vunpack.c.l.b16 %v1769
        %v2116 = vunpack.c.h.b16 %v1769
        %v2117 = vunpack.c.l.b16 %v1770
        %v2118 = vunpack.c.h.b16 %v1770
        %v2119 = vunpack.c.l.b16 %v1771
        %v2120 = vunpack.c.h.b16 %v1771
        %v2121 = vunpack.c.l.b16 %v1772
        %v2122 = vunpack.c.h.b16 %v1772
        %v2123 = vunpack.c.l.b16 %v1773
        %v2124 = vunpack.c.h.b16 %v1773
        %v2125 = vunpack.c.l.b16 %v1774
        %v2126 = vunpack.c.h.b16 %v1774
        %v2127 = vunpack.c.l.b16 %v1775
        %v2128 = vunpack.c.h.b16 %v1775
        %v2129 = vunpack.c.l.b16 %v1776
        %v2130 = vunpack.c.h.b16 %v1776
        %v2131 = vunpack.c.l.b16 %v1777
        %v2132 = vunpack.c.h.b16 %v1777
        %v2133 = vunpack.c.l.b16 %v1778
        %v2134 = vunpack.c.h.b16 %v1778
        %v2135 = vunpack.c.l.b16 %v1779
        %v2136 = vunpack.c.h.b16 %v1779
        %v2137 = vunpack.c.l.b16 %v1780
        %v2138 = vunpack.c.h.b16 %v1780
        %v2139 = vunpack.c.l.b16 %v1781
        %v2140 = vunpack.c.h.b16 %v1781
        %v2141 = vunpack.c.l.b16 %v1782
        %v2142 = vunpack.c.h.b16 %v1782
        %v2143 = vunpack.c.l.b16 %v1783
        %v2144 = vunpack.c.h.b16 %v1783
        %v2145 = vunpack.c.l.b16 %v1784
        %v2146 = vunpack.c.h.b16 %v1784
        %v2147 = vunpack.c.l.b16 %v1785
        %v2148 = vunpack.c.h.b16 %v1785
        %v2149 = vunpack.c.l.b16 %v1786
        %v2150 = vunpack.c.h.b16 %v1786
        %v2151 = vunpack.c.l.b16 %v1787
        %v2152 = vunpack.c.h.b16 %v1787
        %v2153 = vunpack.c.l.b16 %v1788
        %v2154 = vunpack.c.h.b16 %v1788
        %v2155 = vunpack.c.l.b16 %v1789
        %v2156 = vunpack.c.h.b16 %v1789
        %v2157 = vunpack.c.l.b16 %v1790
        %v2158 = vunpack.c.h.b16 %v1790
        %v2159 = vunpack.c.l.b16 %v1791
        %v2160 = vunpack.c.h.b16 %v1791
        %v2161 = vunpack.c.l.b16 %v1792
        %v2162 = vunpack.c.h.b16 %v1792
        %v2163 = vunpack.c.l.b16 %v1793
        %v2164 = vunpack.c.h.b16 %v1793
        %v2165 = vunpack.c.l.b16 %v1794
        %v2166 = vunpack.c.h.b16 %v1794
        %v2167 = vunpack.c.l.b16 %v1795
        %v2168 = vunpack.c.h.b16 %v1795
        %v2169 = vunpack.c.l.b16 %v1796
        %v2170 = vunpack.c.h.b16 %v1796
        %v2171 = vunpack.c.l.b16 %v1797
        %v2172 = vunpack.c.h.b16 %v1797
        %v2173 = vunpack.c.l.b16 %v1798
        %v2174 = vunpack.c.h.b16 %v1798
        %v2175 = vunpack.c.l.b16 %v1799
        %v2176 = vunpack.c.h.b16 %v1799
        %v2177 = vunpack.c.l.b16 %v1800
        %v2178 = vunpack.c.h.b16 %v1800
        %v2179 = vunpack.c.l.b16 %v1801
        %v2180 = vunpack.c.h.b16 %v1801
        %v2181 = vunpack.c.l.b16 %v1802
        %v2182 = vunpack.c.h.b16 %v1802
        %v2183 = vunpack.c.l.b16 %v1803
        %v2184 = vunpack.c.h.b16 %v1803
        %v2185 = vunpack.c.l.b16 %v1804
        %v2186 = vunpack.c.h.b16 %v1804
        %v2187 = vunpack.c.l.b16 %v1805
        %v2188 = vunpack.c.h.b16 %v1805
        %v2189 = vunpack.c.l.b16 %v1806
        %v2190 = vunpack.c.h.b16 %v1806
        %v2191 = vunpack.c.l.b16 %v1807
        %v2192 = vunpack.c.h.b16 %v1807
        %v2193 = vunpack.c.l.b16 %v1808
        %v2194 = vunpack.c.h.b16 %v1808
        %v2195 = vunpack.c.l.b16 %v1809
        %v2196 = vunpack.c.h.b16 %v1809
        %v2197 = vunpack.c.l.b16 %v1810
        %v2198 = vunpack.c.h.b16 %v1810
        %v2199 = vunpack.c.l.b16 %v1811
        %v2200 = vunpack.c.h.b16 %v1811
        %v2201 = vunpack.c.l.b16 %v1812
        %v2202 = vunpack.c.h.b16 %v1812
        %v2203 = vunpack.c.l.b16 %v1813
        %v2204 = vunpack.c.h.b16 %v1813
        %v2205 = vunpack.c.l.b16 %v1814
        %v2206 = vunpack.c.h.b16 %v1814
        %v2207 = vunpack.c.l.b16 %v1815
        %v2208 = vunpack.c.h.b16 %v1815
        %v2209 = vunpack.c.l.b16 %v1816
        %v2210 = vunpack.c.h.b16 %v1816
        %v2211 = vunpack.c.l.b16 %v1817
        %v2212 = vunpack.c.h.b16 %v1817
        %v2213 = vunpack.c.l.b16 %v1818
        %v2214 = vunpack.c.h.b16 %v1818
        %v2215 = vunpack.c.l.b16 %v1819
        %v2216 = vunpack.c.h.b16 %v1819
        %v2217 = vunpack.c.l.b16 %v1820
        %v2218 = vunpack.c.h.b16 %v1820
        %v2219 = vunpack.c.l.b16 %v1821
        %v2220 = vunpack.c.h.b16 %v1821
        %v2221 = vunpack.c.l.b16 %v1822
        %v2222 = vunpack.c.h.b16 %v1822
        %v2223 = vunpack.c.l.b16 %v1823
        %v2224 = vunpack.c.h.b16 %v1823
        %v2225 = vunpack.c.l.b16 %v1824
        %v2226 = vunpack.c.h.b16 %v1824
        %v2227 = vunpack.c.l.b16 %v1825
        %v2228 = vunpack.c.h.b16 %v1825
        %v2229 = vunpack.c.l.b16 %v1826
        %v2230 = vunpack.c.h.b16 %v1826
        %v2231 = vunpack.c.l.b16 %v1827
        %v2232 = vunpack.c.h.b16 %v1827
        %v2233 = vpack.c.b16 %v1981, %v1977
        %v2234 = vpack.c.b16 %v1982, %v1978
        %v2235 = vpack.c.b16 %v1983, %v1979
        %v2236 = vpack.c.b16 %v1984, %v1980
        %v2237 = vpack.c.b16 %v1989, %v1985
        %v2238 = vpack.c.b16 %v1990, %v1986
        %v2239 = vpack.c.b16 %v1991, %v1987
        %v2240 = vpack.c.b16 %v1992, %v1988
        %v2241 = vpack.c.b16 %v1997, %v1993
        %v2242 = vpack.c.b16 %v1998, %v1994
        %v2243 = vpack.c.b16 %v1999, %v1995
        %v2244 = vpack.c.b16 %v2000, %v1996
        %v2245 = vpack.c.b16 %v2005, %v2001
        %v2246 = vpack.c.b16 %v2006, %v2002
        %v2247 = vpack.c.b16 %v2007, %v2003
        %v2248 = vpack.c.b16 %v2008, %v2004
        %v2249 = vpack.c.b16 %v2013, %v2009
        %v2250 = vpack.c.b16 %v2014, %v2010
        %v2251 = vpack.c.b16 %v2015, %v2011
        %v2252 = vpack.c.b16 %v2016, %v2012
        %v2253 = vpack.c.b16 %v2021, %v2017
        %v2254 = vpack.c.b16 %v2022, %v2018
        %v2255 = vpack.c.b16 %v2023, %v2019
        %v2256 = vpack.c.b16 %v2024, %v2020
        %v2257 = vpack.c.b16 %v2029, %v2025
        %v2258 = vpack.c.b16 %v2030, %v2026
        %v2259 = vpack.c.b16 %v2031, %v2027
        %v2260 = vpack.c.b16 %v2032, %v2028
        %v2261 = vpack.c.b16 %v2037, %v2033
        %v2262 = vpack.c.b16 %v2038, %v2034
        %v2263 = vpack.c.b16 %v2039, %v2035
        %v2264 = vpack.c.b16 %v2040, %v2036
        %v2265 = vpack.c.b16 %v2045, %v2041
        %v2266 = vpack.c.b16 %v2046, %v2042
        %v2267 = vpack.c.b16 %v2047, %v2043
        %v2268 = vpack.c.b16 %v2048, %v2044
        %v2269 = vpack.c.b16 %v2053, %v2049
        %v2270 = vpack.c.b16 %v2054, %v2050
        %v2271 = vpack.c.b16 %v2055, %v2051
        %v2272 = vpack.c.b16 %v2056, %v2052
        %v2273 = vpack.c.b16 %v2061, %v2057
        %v2274 = vpack.c.b16 %v2062, %v2058
        %v2275 = vpack.c.b16 %v2063, %v2059
        %v2276 = vpack.c.b16 %v2064, %v2060
        %v2277 = vpack.c.b16 %v2069, %v2065
        %v2278 = vpack.c.b16 %v2070, %v2066
        %v2279 = vpack.c.b16 %v2071, %v2067
        %v2280 = vpack.c.b16 %v2072, %v2068
        %v2281 = vpack.c.b16 %v2077, %v2073
        %v2282 = vpack.c.b16 %v2078, %v2074
        %v2283 = vpack.c.b16 %v2079, %v2075
        %v2284 = vpack.c.b16 %v2080, %v2076
        %v2285 = vpack.c.b16 %v2085, %v2081
        %v2286 = vpack.c.b16 %v2086, %v2082
        %v2287 = vpack.c.b16 %v2087, %v2083
        %v2288 = vpack.c.b16 %v2088, %v2084
        %v2289 = vpack.c.b16 %v2093, %v2089
        %v2290 = vpack.c.b16 %v2094, %v2090
        %v2291 = vpack.c.b16 %v2095, %v2091
        %v2292 = vpack.c.b16 %v2096, %v2092
        %v2293 = vpack.c.b16 %v2101, %v2097
        %v2294 = vpack.c.b16 %v2102, %v2098
        %v2295 = vpack.c.b16 %v2103, %v2099
        %v2296 = vpack.c.b16 %v2104, %v2100
        %v2297 = vpack.c.b16 %v2109, %v2105
        %v2298 = vpack.c.b16 %v2110, %v2106
        %v2299 = vpack.c.b16 %v2111, %v2107
        %v2300 = vpack.c.b16 %v2112, %v2108
        %v2301 = vpack.c.b16 %v2117, %v2113
        %v2302 = vpack.c.b16 %v2118, %v2114
        %v2303 = vpack.c.b16 %v2119, %v2115
        %v2304 = vpack.c.b16 %v2120, %v2116
        %v2305 = vpack.c.b16 %v2125, %v2121
        %v2306 = vpack.c.b16 %v2126, %v2122
        %v2307 = vpack.c.b16 %v2127, %v2123
        %v2308 = vpack.c.b16 %v2128, %v2124
        %v2309 = vpack.c.b16 %v2133, %v2129
        %v2310 = vpack.c.b16 %v2134, %v2130
        %v2311 = vpack.c.b16 %v2135, %v2131
        %v2312 = vpack.c.b16 %v2136, %v2132
        %v2313 = vpack.c.b16 %v2141, %v2137
        %v2314 = vpack.c.b16 %v2142, %v2138
        %v2315 = vpack.c.b16 %v2143, %v2139
        %v2316 = vpack.c.b16 %v2144, %v2140
        %v2317 = vpack.c.b16 %v2149, %v2145
        %v2318 = vpack.c.b16 %v2150, %v2146
        %v2319 = vpack.c.b16 %v2151, %v2147
        %v2320 = vpack.c.b16 %v2152, %v2148
        %v2321 = vpack.c.b16 %v2157, %v2153
        %v2322 = vpack.c.b16 %v2158, %v2154
        %v2323 = vpack.c.b16 %v2159, %v2155
        %v2324 = vpack.c.b16 %v2160, %v2156
        %v2325 = vpack.c.b16 %v2165, %v2161
        %v2326 = vpack.c.b16 %v2166, %v2162
        %v2327 = vpack.c.b16 %v2167, %v2163
        %v2328 = vpack.c.b16 %v2168, %v2164
        %v2329 = vpack.c.b16 %v2173, %v2169
        %v2330 = vpack.c.b16 %v2174, %v2170
        %v2331 = vpack.c.b16 %v2175, %v2171
        %v2332 = vpack.c.b16 %v2176, %v2172
        %v2333 = vpack.c.b16 %v2181, %v2177
        %v2334 = vpack.c.b16 %v2182, %v2178
        %v2335 = vpack.c.b16 %v2183, %v2179
        %v2336 = vpack.c.b16 %v2184, %v2180
        %v2337 = vpack.c.b16 %v2189, %v2185
        %v2338 = vpack.c.b16 %v2190, %v2186
        %v2339 = vpack.c.b16 %v2191, %v2187
        %v2340 = vpack.c.b16 %v2192, %v2188
        %v2341 = vpack.c.b16 %v2197, %v2193
        %v2342 = vpack.c.b16 %v2198, %v2194
        %v2343 = vpack.c.b16 %v2199, %v2195
        %v2344 = vpack.c.b16 %v2200, %v2196
        %v2345 = vpack.c.b16 %v2205, %v2201
        %v2346 = vpack.c.b16 %v2206, %v2202
        %v2347 = vpack.c.b16 %v2207, %v2203
        %v2348 = vpack.c.b16 %v2208, %v2204
        %v2349 = vpack.c.b16 %v2213, %v2209
        %v2350 = vpack.c.b16 %v2214, %v2210
        %v2351 = vpack.c.b16 %v2215, %v2211
        %v2352 = vpack.c.b16 %v2216, %v2212
        %v2353 = vpack.c.b16 %v2221, %v2217
        %v2354 = vpack.c.b16 %v2222, %v2218
        %v2355 = vpack.c.b16 %v2223, %v2219
        %v2356 = vpack.c.b16 %v2224, %v2220
        %v2357 = vpack.c.b16 %v2229, %v2225
        %v2358 = vpack.c.b16 %v2230, %v2226
        %v2359 = vpack.c.b16 %v2231, %v2227
        %v2360 = vpack.c.b16 %v2232, %v2228
        %2489 = vmatprep.subr.bf16.mxu0 %v2262
        %2490 = vmatpush1.bf16.msra.mxu0 %v2261
        %2491 = vmatprep.subr.bf16.mxu0 %v2258
        %2492 = vmatpush1.bf16.msra.mxu0 %v2257
        %2493 = vmatprep.subr.bf16.mxu0 %v2254
        %2494 = vmatpush1.bf16.msra.mxu0 %v2253
        %2495 = vmatprep.subr.bf16.mxu0 %v2250
        %2496 = vmatpush1.bf16.msra.mxu0 %v2249
        %2497 = vmatprep.subr.bf16.mxu0 %v2246
        %2498 = vmatpush1.bf16.msra.mxu0 %v2245
        %2499 = vmatprep.subr.bf16.mxu0 %v2242
        %2500 = vmatpush1.bf16.msra.mxu0 %v2241
        %2501 = vmatprep.subr.bf16.mxu0 %v2238
        %2502 = vmatpush1.bf16.msra.mxu0 %v2237
        %2503 = vmatprep.subr.bf16.mxu0 %v2234
        %2504 = vmatpush1.bf16.msra.mxu0 %v2233
        %2505 = vmatprep.subr.bf16.mxu0 %v2294
        %2506 = vmatpush2.bf16.msra.mxu0 %v2293
        %2507 = vmatprep.subr.bf16.mxu0 %v2290
        %2508 = vmatpush2.bf16.msra.mxu0 %v2289
        %2509 = vmatprep.subr.bf16.mxu0 %v2286
        %2510 = vmatpush2.bf16.msra.mxu0 %v2285
        %2511 = vmatprep.subr.bf16.mxu0 %v2282
        %2512 = vmatpush2.bf16.msra.mxu0 %v2281
        %2513 = vmatprep.subr.bf16.mxu0 %v2278
        %2514 = vmatpush2.bf16.msra.mxu0 %v2277
        %2515 = vmatprep.subr.bf16.mxu0 %v2274
        %2516 = vmatpush2.bf16.msra.mxu0 %v2273
        %2517 = vmatprep.subr.bf16.mxu0 %v2270
        %2518 = vmatpush2.bf16.msra.mxu0 %v2269
        %2519 = vmatprep.subr.bf16.mxu0 %v2266
        %2520 = vmatpush2.bf16.msra.mxu0 %v2265
        %2521 = vmatprep.mubr.bf16.mxu0 %v1693
        %2522 = vmatmul.mubr.bf16.gmra.mxu0 %v1692
        %v2523 = vpop.f32.mrf.mxu0
        %v2524 = vadd.f32 %v1832, %v2523
        %v2525 = vpop.f32.mrf.mxu0
        %v2526 = vadd.f32 %v1836, %v2525
        %v2527 = vpop.f32.mrf.mxu0
        %v2528 = vadd.f32 %v1832, %v2527
        %v2529 = vpop.f32.mrf.mxu0
        %v2530 = vadd.f32 %v1836, %v2529
        %2531 = vmatprep.mubr.bf16.mxu0 %v1697
        %2532 = vmatmul.mubr.bf16.gmra.mxu0 %v1696
        %v2533 = vpop.f32.mrf.mxu0
        %v2534 = vadd.f32 %v1832, %v2533
        %v2535 = vpop.f32.mrf.mxu0
        %v2536 = vadd.f32 %v1836, %v2535
        %v2537 = vpop.f32.mrf.mxu0
        %v2538 = vadd.f32 %v1832, %v2537
        %v2539 = vpop.f32.mrf.mxu0
        %v2540 = vadd.f32 %v1836, %v2539
        %2541 = vdwg.mxu0
        %2542 = vmatprep.subr.bf16.mxu0 %v2326
        %2543 = vmatpush1.bf16.msra.mxu0 %v2325
        %2544 = vmatprep.subr.bf16.mxu0 %v2322
        %2545 = vmatpush1.bf16.msra.mxu0 %v2321
        %2546 = vmatprep.subr.bf16.mxu0 %v2318
        %2547 = vmatpush1.bf16.msra.mxu0 %v2317
        %2548 = vmatprep.subr.bf16.mxu0 %v2314
        %2549 = vmatpush1.bf16.msra.mxu0 %v2313
        %2550 = vmatprep.subr.bf16.mxu0 %v2310
        %2551 = vmatpush1.bf16.msra.mxu0 %v2309
        %2552 = vmatprep.subr.bf16.mxu0 %v2306
        %2553 = vmatpush1.bf16.msra.mxu0 %v2305
        %2554 = vmatprep.subr.bf16.mxu0 %v2302
        %2555 = vmatpush1.bf16.msra.mxu0 %v2301
        %2556 = vmatprep.subr.bf16.mxu0 %v2298
        %2557 = vmatpush1.bf16.msra.mxu0 %v2297
        %2558 = vmatprep.subr.bf16.mxu0 %v2358
        %2559 = vmatpush2.bf16.msra.mxu0 %v2357
        %2560 = vmatprep.subr.bf16.mxu0 %v2354
        %2561 = vmatpush2.bf16.msra.mxu0 %v2353
        %2562 = vmatprep.subr.bf16.mxu0 %v2350
        %2563 = vmatpush2.bf16.msra.mxu0 %v2349
        %2564 = vmatprep.subr.bf16.mxu0 %v2346
        %2565 = vmatpush2.bf16.msra.mxu0 %v2345
        %2566 = vmatprep.subr.bf16.mxu0 %v2342
        %2567 = vmatpush2.bf16.msra.mxu0 %v2341
        %2568 = vmatprep.subr.bf16.mxu0 %v2338
        %2569 = vmatpush2.bf16.msra.mxu0 %v2337
        %2570 = vmatprep.subr.bf16.mxu0 %v2334
        %2571 = vmatpush2.bf16.msra.mxu0 %v2333
        %2572 = vmatprep.subr.bf16.mxu0 %v2330
        %2573 = vmatpush2.bf16.msra.mxu0 %v2329
        %2574 = vmatprep.mubr.bf16.mxu0 %v1695
        %2575 = vmatmul.mubr.bf16.gmra.mxu0 %v1694
        %v2576 = vpop.f32.mrf.mxu0
        %v2577 = vadd.f32 %v2524, %v2576
        %v2578 = vpop.f32.mrf.mxu0
        %v2579 = vadd.f32 %v2526, %v2578
        %v2580 = vpop.f32.mrf.mxu0
        %v2581 = vadd.f32 %v2528, %v2580
        %v2582 = vpop.f32.mrf.mxu0
        %v2583 = vadd.f32 %v2530, %v2582
        %2584 = vmatprep.mubr.bf16.mxu0 %v1699
        %2585 = vmatmul.mubr.bf16.gmra.mxu0 %v1698
        %v2586 = vpop.f32.mrf.mxu0
        %v2587 = vadd.f32 %v2534, %v2586
        %v2588 = vpop.f32.mrf.mxu0
        %v2589 = vadd.f32 %v2536, %v2588
        %v2590 = vpop.f32.mrf.mxu0
        %v2591 = vadd.f32 %v2538, %v2590
        %v2592 = vpop.f32.mrf.mxu0
        %v2593 = vadd.f32 %v2540, %v2592
        %2594 = vdwg.mxu0
        %2595 = vmatprep.subr.bf16.mxu0 %v2264
        %2596 = vmatpush1.bf16.msra.mxu0 %v2263
        %2597 = vmatprep.subr.bf16.mxu0 %v2260
        %2598 = vmatpush1.bf16.msra.mxu0 %v2259
        %2599 = vmatprep.subr.bf16.mxu0 %v2256
        %2600 = vmatpush1.bf16.msra.mxu0 %v2255
        %2601 = vmatprep.subr.bf16.mxu0 %v2252
        %2602 = vmatpush1.bf16.msra.mxu0 %v2251
        %2603 = vmatprep.subr.bf16.mxu0 %v2248
        %2604 = vmatpush1.bf16.msra.mxu0 %v2247
        %2605 = vmatprep.subr.bf16.mxu0 %v2244
        %2606 = vmatpush1.bf16.msra.mxu0 %v2243
        %2607 = vmatprep.subr.bf16.mxu0 %v2240
        %2608 = vmatpush1.bf16.msra.mxu0 %v2239
        %2609 = vmatprep.subr.bf16.mxu0 %v2236
        %2610 = vmatpush1.bf16.msra.mxu0 %v2235
        %2611 = vmatprep.subr.bf16.mxu0 %v2296
        %2612 = vmatpush2.bf16.msra.mxu0 %v2295
        %2613 = vmatprep.subr.bf16.mxu0 %v2292
        %2614 = vmatpush2.bf16.msra.mxu0 %v2291
        %2615 = vmatprep.subr.bf16.mxu0 %v2288
        %2616 = vmatpush2.bf16.msra.mxu0 %v2287
        %2617 = vmatprep.subr.bf16.mxu0 %v2284
        %2618 = vmatpush2.bf16.msra.mxu0 %v2283
        %2619 = vmatprep.subr.bf16.mxu0 %v2280
        %2620 = vmatpush2.bf16.msra.mxu0 %v2279
        %2621 = vmatprep.subr.bf16.mxu0 %v2276
        %2622 = vmatpush2.bf16.msra.mxu0 %v2275
        %2623 = vmatprep.subr.bf16.mxu0 %v2272
        %2624 = vmatpush2.bf16.msra.mxu0 %v2271
        %2625 = vmatprep.subr.bf16.mxu0 %v2268
        %2626 = vmatpush2.bf16.msra.mxu0 %v2267
        %2627 = vmatprep.mubr.bf16.mxu0 %v1693
        %2628 = vmatmul.mubr.bf16.gmra.mxu0 %v1692
        %v2629 = vpop.f32.mrf.mxu0
        %v2630 = vadd.f32 %v1840, %v2629
        %v2631 = vpop.f32.mrf.mxu0
        %v2632 = vadd.f32 %v1844, %v2631
        %v2633 = vpop.f32.mrf.mxu0
        %v2634 = vadd.f32 %v1840, %v2633
        %v2635 = vpop.f32.mrf.mxu0
        %v2636 = vadd.f32 %v1844, %v2635
        %2637 = vmatprep.mubr.bf16.mxu0 %v1697
        %2638 = vmatmul.mubr.bf16.gmra.mxu0 %v1696
        %v2639 = vpop.f32.mrf.mxu0
        %v2640 = vadd.f32 %v1840, %v2639
        %v2641 = vpop.f32.mrf.mxu0
        %v2642 = vadd.f32 %v1844, %v2641
        %v2643 = vpop.f32.mrf.mxu0
        %v2644 = vadd.f32 %v1840, %v2643
        %v2645 = vpop.f32.mrf.mxu0
        %v2646 = vadd.f32 %v1844, %v2645
        %2647 = vdwg.mxu0
        %2648 = vmatprep.subr.bf16.mxu0 %v2328
        %2649 = vmatpush1.bf16.msra.mxu0 %v2327
        %2650 = vmatprep.subr.bf16.mxu0 %v2324
        %2651 = vmatpush1.bf16.msra.mxu0 %v2323
        %2652 = vmatprep.subr.bf16.mxu0 %v2320
        %2653 = vmatpush1.bf16.msra.mxu0 %v2319
        %2654 = vmatprep.subr.bf16.mxu0 %v2316
        %2655 = vmatpush1.bf16.msra.mxu0 %v2315
        %2656 = vmatprep.subr.bf16.mxu0 %v2312
        %2657 = vmatpush1.bf16.msra.mxu0 %v2311
        %2658 = vmatprep.subr.bf16.mxu0 %v2308
        %2659 = vmatpush1.bf16.msra.mxu0 %v2307
        %2660 = vmatprep.subr.bf16.mxu0 %v2304
        %2661 = vmatpush1.bf16.msra.mxu0 %v2303
        %2662 = vmatprep.subr.bf16.mxu0 %v2300
        %2663 = vmatpush1.bf16.msra.mxu0 %v2299
        %2664 = vmatprep.subr.bf16.mxu0 %v2360
        %2665 = vmatpush2.bf16.msra.mxu0 %v2359
        %2666 = vmatprep.subr.bf16.mxu0 %v2356
        %2667 = vmatpush2.bf16.msra.mxu0 %v2355
        %2668 = vmatprep.subr.bf16.mxu0 %v2352
        %2669 = vmatpush2.bf16.msra.mxu0 %v2351
        %2670 = vmatprep.subr.bf16.mxu0 %v2348
        %2671 = vmatpush2.bf16.msra.mxu0 %v2347
        %2672 = vmatprep.subr.bf16.mxu0 %v2344
        %2673 = vmatpush2.bf16.msra.mxu0 %v2343
        %2674 = vmatprep.subr.bf16.mxu0 %v2340
        %2675 = vmatpush2.bf16.msra.mxu0 %v2339
        %2676 = vmatprep.subr.bf16.mxu0 %v2336
        %2677 = vmatpush2.bf16.msra.mxu0 %v2335
        %2678 = vmatprep.subr.bf16.mxu0 %v2332
        %2679 = vmatpush2.bf16.msra.mxu0 %v2331
        %2680 = vmatprep.mubr.bf16.mxu0 %v1695
        %2681 = vmatmul.mubr.bf16.gmra.mxu0 %v1694
        %v2682 = vpop.f32.mrf.mxu0
        %v2683 = vadd.f32 %v2630, %v2682
        %v2684 = vpop.f32.mrf.mxu0
        %v2685 = vadd.f32 %v2632, %v2684
        %v2686 = vpop.f32.mrf.mxu0
        %v2687 = vadd.f32 %v2634, %v2686
        %v2688 = vpop.f32.mrf.mxu0
        %v2689 = vadd.f32 %v2636, %v2688
        %2690 = vmatprep.mubr.bf16.mxu0 %v1699
        %2691 = vmatmul.mubr.bf16.gmra.mxu0 %v1698
        %v2692 = vpop.f32.mrf.mxu0
        %v2693 = vadd.f32 %v2640, %v2692
        %v2694 = vpop.f32.mrf.mxu0
        %v2695 = vadd.f32 %v2642, %v2694
        %v2696 = vpop.f32.mrf.mxu0
        %v2697 = vadd.f32 %v2644, %v2696
        %v2698 = vpop.f32.mrf.mxu0
        %v2699 = vadd.f32 %v2646, %v2698
        %2700 = vdwg.mxu0
        %v2701 = vmax.f32 %v2577, 0.0
        %v2702 = vmax.f32 %v2579, 0.0
        %v2703 = vmax.f32 %v2683, 0.0
        %v2704 = vmax.f32 %v2685, 0.0
        %v2705 = vmax.f32 %v2581, 0.0
        %v2706 = vmax.f32 %v2583, 0.0
        %v2707 = vmax.f32 %v2687, 0.0
        %v2708 = vmax.f32 %v2689, 0.0
        %v2709 = vmax.f32 %v2587, 0.0
        %v2710 = vmax.f32 %v2589, 0.0
        %v2711 = vmax.f32 %v2693, 0.0
        %v2712 = vmax.f32 %v2695, 0.0
        %v2713 = vmax.f32 %v2591, 0.0
        %v2714 = vmax.f32 %v2593, 0.0
        %v2715 = vmax.f32 %v2697, 0.0
        %v2716 = vmax.f32 %v2699, 0.0
        %v2717 = vpack.c.bf16 %v2705, %v2701
        %v2718 = vpack.c.bf16 %v2706, %v2702
        %v2719 = vpack.c.bf16 %v2707, %v2703
        %v2720 = vpack.c.bf16 %v2708, %v2704
        %v2721 = vpack.c.bf16 %v2713, %v2709
        %v2722 = vpack.c.bf16 %v2714, %v2710
        %v2723 = vpack.c.bf16 %v2715, %v2711
        %v2724 = vpack.c.bf16 %v2716, %v2712
        %v2725 = vld [vmem:[%s386] sm:$0xf]
        %v2726 = vld [vmem:[%s386 + $0x4] sm:$0xf]
        %v2727 = vld [vmem:[%s386 + $0x8] sm:$0xf]
        %v2728 = vld [vmem:[%s386 + $0xc] sm:$0xf]
        %v2729 = vld [vmem:[%s386 + $0x10] sm:$0xf]
        %v2730 = vld [vmem:[%s386 + $0x14] sm:$0xf]
        %v2731 = vld [vmem:[%s386 + $0x18] sm:$0xf]
        %v2732 = vld [vmem:[%s386 + $0x1c] sm:$0xf]
        %v2733 = vld [vmem:[%s386 + $0x20] sm:$0xf]
        %v2734 = vld [vmem:[%s386 + $0x24] sm:$0xf]
        %v2735 = vld [vmem:[%s386 + $0x28] sm:$0xf]
        %v2736 = vld [vmem:[%s386 + $0x2c] sm:$0xf]
        %v2737 = vld [vmem:[%s386 + $0x30] sm:$0xf]
        %v2738 = vld [vmem:[%s386 + $0x34] sm:$0xf]
        %v2739 = vld [vmem:[%s386 + $0x38] sm:$0xf]
        %v2740 = vld [vmem:[%s386 + $0x3c] sm:$0xf]
        %v2741 = vld [vmem:[%s386 + $0x40] sm:$0xf]
        %v2742 = vld [vmem:[%s386 + $0x44] sm:$0xf]
        %v2743 = vld [vmem:[%s386 + $0x48] sm:$0xf]
        %v2744 = vld [vmem:[%s386 + $0x4c] sm:$0xf]
        %v2745 = vld [vmem:[%s386 + $0x50] sm:$0xf]
        %v2746 = vld [vmem:[%s386 + $0x54] sm:$0xf]
        %v2747 = vld [vmem:[%s386 + $0x58] sm:$0xf]
        %v2748 = vld [vmem:[%s386 + $0x5c] sm:$0xf]
        %v2749 = vld [vmem:[%s386 + $0x60] sm:$0xf]
        %v2750 = vld [vmem:[%s386 + $0x64] sm:$0xf]
        %v2751 = vld [vmem:[%s386 + $0x68] sm:$0xf]
        %v2752 = vld [vmem:[%s386 + $0x6c] sm:$0xf]
        %v2753 = vld [vmem:[%s386 + $0x70] sm:$0xf]
        %v2754 = vld [vmem:[%s386 + $0x74] sm:$0xf]
        %v2755 = vld [vmem:[%s386 + $0x78] sm:$0xf]
        %v2756 = vld [vmem:[%s386 + $0x7c] sm:$0xf]
        %v2757 = vld [vmem:[%s386 + $0x80] sm:$0xf]
        %v2758 = vld [vmem:[%s386 + $0x84] sm:$0xf]
        %v2759 = vld [vmem:[%s386 + $0x88] sm:$0xf]
        %v2760 = vld [vmem:[%s386 + $0x8c] sm:$0xf]
        %v2761 = vld [vmem:[%s386 + $0x90] sm:$0xf]
        %v2762 = vld [vmem:[%s386 + $0x94] sm:$0xf]
        %v2763 = vld [vmem:[%s386 + $0x98] sm:$0xf]
        %v2764 = vld [vmem:[%s386 + $0x9c] sm:$0xf]
        %v2765 = vld [vmem:[%s386 + $0xa0] sm:$0xf]
        %v2766 = vld [vmem:[%s386 + $0xa4] sm:$0xf]
        %v2767 = vld [vmem:[%s386 + $0xa8] sm:$0xf]
        %v2768 = vld [vmem:[%s386 + $0xac] sm:$0xf]
        %v2769 = vld [vmem:[%s386 + $0xb0] sm:$0xf]
        %v2770 = vld [vmem:[%s386 + $0xb4] sm:$0xf]
        %v2771 = vld [vmem:[%s386 + $0xb8] sm:$0xf]
        %v2772 = vld [vmem:[%s386 + $0xbc] sm:$0xf]
        %v2773 = vld [vmem:[%s386 + $0xc0] sm:$0xf]
        %v2774 = vld [vmem:[%s386 + $0xc4] sm:$0xf]
        %v2775 = vld [vmem:[%s386 + $0xc8] sm:$0xf]
        %v2776 = vld [vmem:[%s386 + $0xcc] sm:$0xf]
        %v2777 = vld [vmem:[%s386 + $0xd0] sm:$0xf]
        %v2778 = vld [vmem:[%s386 + $0xd4] sm:$0xf]
        %v2779 = vld [vmem:[%s386 + $0xd8] sm:$0xf]
        %v2780 = vld [vmem:[%s386 + $0xdc] sm:$0xf]
        %v2781 = vld [vmem:[%s386 + $0xe0] sm:$0xf]
        %v2782 = vld [vmem:[%s386 + $0xe4] sm:$0xf]
        %v2783 = vld [vmem:[%s386 + $0xe8] sm:$0xf]
        %v2784 = vld [vmem:[%s386 + $0xec] sm:$0xf]
        %v2785 = vld [vmem:[%s386 + $0xf0] sm:$0xf]
        %v2786 = vld [vmem:[%s386 + $0xf4] sm:$0xf]
        %v2787 = vld [vmem:[%s386 + $0xf8] sm:$0xf]
        %v2788 = vld [vmem:[%s386 + $0xfc] sm:$0xf]
        %v2790 = vlaneseq
        %v2791 = vshrl.u32 %v2790, 7
        %v2792 = vsub.s32 0, %v2791
        %v2793 = vrot.slane %v458, %v2792
        %v2859 = vunpack.c.l.b16 %v2725
        %v2860 = vunpack.c.l.b16 %v2726
        %v2861 = vunpack.c.l.b16 %v2727
        %v2862 = vunpack.c.l.b16 %v2728
        %v2863 = vunpack.c.l.b16 %v2729
        %v2864 = vunpack.c.l.b16 %v2730
        %v2865 = vunpack.c.l.b16 %v2731
        %v2866 = vunpack.c.l.b16 %v2732
        %v2867 = vunpack.c.l.b16 %v2733
        %v2868 = vunpack.c.l.b16 %v2734
        %v2869 = vunpack.c.l.b16 %v2735
        %v2870 = vunpack.c.l.b16 %v2736
        %v2871 = vunpack.c.l.b16 %v2737
        %v2872 = vunpack.c.l.b16 %v2738
        %v2873 = vunpack.c.l.b16 %v2739
        %v2874 = vunpack.c.l.b16 %v2740
        %v2875 = vunpack.c.l.b16 %v2741
        %v2876 = vunpack.c.l.b16 %v2742
        %v2877 = vunpack.c.l.b16 %v2743
        %v2878 = vunpack.c.l.b16 %v2744
        %v2879 = vunpack.c.l.b16 %v2745
        %v2880 = vunpack.c.l.b16 %v2746
        %v2881 = vunpack.c.l.b16 %v2747
        %v2882 = vunpack.c.l.b16 %v2748
        %v2883 = vunpack.c.l.b16 %v2749
        %v2884 = vunpack.c.l.b16 %v2750
        %v2885 = vunpack.c.l.b16 %v2751
        %v2886 = vunpack.c.l.b16 %v2752
        %v2887 = vunpack.c.l.b16 %v2753
        %v2888 = vunpack.c.l.b16 %v2754
        %v2889 = vunpack.c.l.b16 %v2755
        %v2890 = vunpack.c.l.b16 %v2756
        %v2891 = vunpack.c.l.b16 %v2757
        %v2892 = vunpack.c.l.b16 %v2758
        %v2893 = vunpack.c.l.b16 %v2759
        %v2894 = vunpack.c.l.b16 %v2760
        %v2895 = vunpack.c.l.b16 %v2761
        %v2896 = vunpack.c.l.b16 %v2762
        %v2897 = vunpack.c.l.b16 %v2763
        %v2898 = vunpack.c.l.b16 %v2764
        %v2899 = vunpack.c.l.b16 %v2765
        %v2900 = vunpack.c.l.b16 %v2766
        %v2901 = vunpack.c.l.b16 %v2767
        %v2902 = vunpack.c.l.b16 %v2768
        %v2903 = vunpack.c.l.b16 %v2769
        %v2904 = vunpack.c.l.b16 %v2770
        %v2905 = vunpack.c.l.b16 %v2771
        %v2906 = vunpack.c.l.b16 %v2772
        %v2907 = vunpack.c.l.b16 %v2773
        %v2908 = vunpack.c.l.b16 %v2774
        %v2909 = vunpack.c.l.b16 %v2775
        %v2910 = vunpack.c.l.b16 %v2776
        %v2911 = vunpack.c.l.b16 %v2777
        %v2912 = vunpack.c.l.b16 %v2778
        %v2913 = vunpack.c.l.b16 %v2779
        %v2914 = vunpack.c.l.b16 %v2780
        %v2915 = vunpack.c.l.b16 %v2781
        %v2916 = vunpack.c.l.b16 %v2782
        %v2917 = vunpack.c.l.b16 %v2783
        %v2918 = vunpack.c.l.b16 %v2784
        %v2919 = vunpack.c.l.b16 %v2785
        %v2920 = vunpack.c.l.b16 %v2786
        %v2921 = vunpack.c.l.b16 %v2787
        %v2922 = vunpack.c.l.b16 %v2788
        %v2923 = vpack.c.b16 %v2860, %v2859
        %v2924 = vpack.c.b16 %v2862, %v2861
        %v2925 = vpack.c.b16 %v2864, %v2863
        %v2926 = vpack.c.b16 %v2866, %v2865
        %v2927 = vpack.c.b16 %v2868, %v2867
        %v2928 = vpack.c.b16 %v2870, %v2869
        %v2929 = vpack.c.b16 %v2872, %v2871
        %v2930 = vpack.c.b16 %v2874, %v2873
        %v2931 = vpack.c.b16 %v2876, %v2875
        %v2932 = vpack.c.b16 %v2878, %v2877
        %v2933 = vpack.c.b16 %v2880, %v2879
        %v2934 = vpack.c.b16 %v2882, %v2881
        %v2935 = vpack.c.b16 %v2884, %v2883
        %v2936 = vpack.c.b16 %v2886, %v2885
        %v2937 = vpack.c.b16 %v2888, %v2887
        %v2938 = vpack.c.b16 %v2890, %v2889
        %v2939 = vpack.c.b16 %v2892, %v2891
        %v2940 = vpack.c.b16 %v2894, %v2893
        %v2941 = vpack.c.b16 %v2896, %v2895
        %v2942 = vpack.c.b16 %v2898, %v2897
        %v2943 = vpack.c.b16 %v2900, %v2899
        %v2944 = vpack.c.b16 %v2902, %v2901
        %v2945 = vpack.c.b16 %v2904, %v2903
        %v2946 = vpack.c.b16 %v2906, %v2905
        %v2947 = vpack.c.b16 %v2908, %v2907
        %v2948 = vpack.c.b16 %v2910, %v2909
        %v2949 = vpack.c.b16 %v2912, %v2911
        %v2950 = vpack.c.b16 %v2914, %v2913
        %v2951 = vpack.c.b16 %v2916, %v2915
        %v2952 = vpack.c.b16 %v2918, %v2917
        %v2953 = vpack.c.b16 %v2920, %v2919
        %v2954 = vpack.c.b16 %v2922, %v2921
        %2987 = vmatprep.subr.bf16.mxu0 0
        %2988 = vmatpush1.bf16.msra.mxu0 %v2930
        %2989 = vmatprep.subr.bf16.mxu0 0
        %2990 = vmatpush1.bf16.msra.mxu0 %v2929
        %2991 = vmatprep.subr.bf16.mxu0 0
        %2992 = vmatpush1.bf16.msra.mxu0 %v2928
        %2993 = vmatprep.subr.bf16.mxu0 0
        %2994 = vmatpush1.bf16.msra.mxu0 %v2927
        %2995 = vmatprep.subr.bf16.mxu0 0
        %2996 = vmatpush1.bf16.msra.mxu0 %v2926
        %2997 = vmatprep.subr.bf16.mxu0 0
        %2998 = vmatpush1.bf16.msra.mxu0 %v2925
        %2999 = vmatprep.subr.bf16.mxu0 0
        %3000 = vmatpush1.bf16.msra.mxu0 %v2924
        %3001 = vmatprep.subr.bf16.mxu0 0
        %3002 = vmatpush1.bf16.msra.mxu0 %v2923
        %3003 = vmatprep.subr.bf16.mxu0 0
        %3004 = vmatpush2.bf16.msra.mxu0 %v2938
        %3005 = vmatprep.subr.bf16.mxu0 0
        %3006 = vmatpush2.bf16.msra.mxu0 %v2937
        %3007 = vmatprep.subr.bf16.mxu0 0
        %3008 = vmatpush2.bf16.msra.mxu0 %v2936
        %3009 = vmatprep.subr.bf16.mxu0 0
        %3010 = vmatpush2.bf16.msra.mxu0 %v2935
        %3011 = vmatprep.subr.bf16.mxu0 0
        %3012 = vmatpush2.bf16.msra.mxu0 %v2934
        %3013 = vmatprep.subr.bf16.mxu0 0
        %3014 = vmatpush2.bf16.msra.mxu0 %v2933
        %3015 = vmatprep.subr.bf16.mxu0 0
        %3016 = vmatpush2.bf16.msra.mxu0 %v2932
        %3017 = vmatprep.subr.bf16.mxu0 0
        %3018 = vmatpush2.bf16.msra.mxu0 %v2931
        %3019 = vmatprep.mubr.bf16.mxu0 %v2718
        %3020 = vmatmul.mubr.bf16.gmra.mxu0 %v2717
        %v3021 = vpop.f32.mrf.mxu0
        %v3022 = vadd.f32 %v2793, %v3021
        %v3023 = vpop.f32.mrf.mxu0
        %v3024 = vpop.f32.mrf.mxu0
        %v3025 = vadd.f32 %v2793, %v3024
        %v3026 = vpop.f32.mrf.mxu0
        %3027 = vmatprep.mubr.bf16.mxu0 %v2722
        %3028 = vmatmul.mubr.bf16.gmra.mxu0 %v2721
        %v3029 = vpop.f32.mrf.mxu0
        %v3030 = vadd.f32 %v2793, %v3029
        %v3031 = vpop.f32.mrf.mxu0
        %v3032 = vpop.f32.mrf.mxu0
        %v3033 = vadd.f32 %v2793, %v3032
        %v3034 = vpop.f32.mrf.mxu0
        %3035 = vdwg.mxu0
        %3036 = vmatprep.subr.bf16.mxu0 0
        %3037 = vmatpush1.bf16.msra.mxu0 %v2946
        %3038 = vmatprep.subr.bf16.mxu0 0
        %3039 = vmatpush1.bf16.msra.mxu0 %v2945
        %3040 = vmatprep.subr.bf16.mxu0 0
        %3041 = vmatpush1.bf16.msra.mxu0 %v2944
        %3042 = vmatprep.subr.bf16.mxu0 0
        %3043 = vmatpush1.bf16.msra.mxu0 %v2943
        %3044 = vmatprep.subr.bf16.mxu0 0
        %3045 = vmatpush1.bf16.msra.mxu0 %v2942
        %3046 = vmatprep.subr.bf16.mxu0 0
        %3047 = vmatpush1.bf16.msra.mxu0 %v2941
        %3048 = vmatprep.subr.bf16.mxu0 0
        %3049 = vmatpush1.bf16.msra.mxu0 %v2940
        %3050 = vmatprep.subr.bf16.mxu0 0
        %3051 = vmatpush1.bf16.msra.mxu0 %v2939
        %3052 = vmatprep.subr.bf16.mxu0 0
        %3053 = vmatpush2.bf16.msra.mxu0 %v2954
        %3054 = vmatprep.subr.bf16.mxu0 0
        %3055 = vmatpush2.bf16.msra.mxu0 %v2953
        %3056 = vmatprep.subr.bf16.mxu0 0
        %3057 = vmatpush2.bf16.msra.mxu0 %v2952
        %3058 = vmatprep.subr.bf16.mxu0 0
        %3059 = vmatpush2.bf16.msra.mxu0 %v2951
        %3060 = vmatprep.subr.bf16.mxu0 0
        %3061 = vmatpush2.bf16.msra.mxu0 %v2950
        %3062 = vmatprep.subr.bf16.mxu0 0
        %3063 = vmatpush2.bf16.msra.mxu0 %v2949
        %3064 = vmatprep.subr.bf16.mxu0 0
        %3065 = vmatpush2.bf16.msra.mxu0 %v2948
        %3066 = vmatprep.subr.bf16.mxu0 0
        %3067 = vmatpush2.bf16.msra.mxu0 %v2947
        %3068 = vmatprep.mubr.bf16.mxu0 %v2720
        %3069 = vmatmul.mubr.bf16.gmra.mxu0 %v2719
        %v3070 = vpop.f32.mrf.mxu0
        %v3071 = vadd.f32 %v3022, %v3070
        %v3072 = vpop.f32.mrf.mxu0
        %v3073 = vpop.f32.mrf.mxu0
        %v3074 = vadd.f32 %v3025, %v3073
        %v3075 = vpop.f32.mrf.mxu0
        %3076 = vmatprep.mubr.bf16.mxu0 %v2724
        %3077 = vmatmul.mubr.bf16.gmra.mxu0 %v2723
        %v3078 = vpop.f32.mrf.mxu0
        %v3079 = vadd.f32 %v3030, %v3078
        %v3080 = vpop.f32.mrf.mxu0
        %v3081 = vpop.f32.mrf.mxu0
        %v3082 = vadd.f32 %v3033, %v3081
        %v3083 = vpop.f32.mrf.mxu0
        %3084 = vdwg.mxu0
        %3085 = vst [vmem:[%s443] sm:$0xff] %v3071
        %3086 = vst [vmem:[%s443 + $0x8] sm:$0xff] %v3074
        %3087 = vst [vmem:[%s443 + $0x10] sm:$0xff] %v3079
        %3088 = vst [vmem:[%s443 + $0x18] sm:$0xff] %v3082
        %s3089 = scalar_lea.vmem %s395, 13 [#allocation11]
        %v3090 = vld [vmem:[%s3089] sm:$0xf]
        %v3091 = vld [vmem:[%s3089 + $0x4] sm:$0xf]
        %v3092 = vld [vmem:[%s3089 + $0x8] sm:$0xf]
        %v3093 = vld [vmem:[%s3089 + $0xc] sm:$0x1]
        %s3094 = scalar_lea.vmem %s359, 64 [#allocation5]
        %v3095 = vld [vmem:[%s3094] sm:$0xff]
        %v3096 = vld [vmem:[%s3094 + $0x8] sm:$0xff]
        %v3097 = vld [vmem:[%s3094 + $0x10] sm:$0xff]
        %v3098 = vld [vmem:[%s3094 + $0x18] sm:$0xff]
        %v3099 = vld [vmem:[%s3094 + $0x20] sm:$0xff]
        %v3100 = vld [vmem:[%s3094 + $0x28] sm:$0xff]
        %v3101 = vld [vmem:[%s3094 + $0x30] sm:$0xff]
        %v3102 = vld [vmem:[%s3094 + $0x38] sm:$0xff]
        %v3104 = vlaneseq
        %v3105 = vshrl.u32 %v3104, 7
        %v3106 = vsub.s32 0, %v3105
        %v3107 = vrot.slane %v3090, %v3106
        %v3108 = vlaneseq
        %v3109 = vshrl.u32 %v3108, 7
        %v3110 = vsub.s32 1, %v3109
        %v3111 = vrot.slane %v3090, %v3110
        %v3112 = vlaneseq
        %v3113 = vshrl.u32 %v3112, 7
        %v3114 = vsub.s32 2, %v3113
        %v3115 = vrot.slane %v3090, %v3114
        %v3116 = vlaneseq
        %v3117 = vshrl.u32 %v3116, 7
        %v3118 = vsub.s32 3, %v3117
        %v3119 = vrot.slane %v3090, %v3118
        %v3132 = vunpack.c.l.b16 %v3095
        %v3133 = vunpack.c.h.b16 %v3095
        %v3134 = vunpack.c.l.b16 %v3096
        %v3135 = vunpack.c.h.b16 %v3096
        %v3136 = vunpack.c.l.b16 %v3097
        %v3137 = vunpack.c.h.b16 %v3097
        %v3138 = vunpack.c.l.b16 %v3098
        %v3139 = vunpack.c.h.b16 %v3098
        %v3140 = vunpack.c.l.b16 %v3099
        %v3141 = vunpack.c.h.b16 %v3099
        %v3142 = vunpack.c.l.b16 %v3100
        %v3143 = vunpack.c.h.b16 %v3100
        %v3144 = vunpack.c.l.b16 %v3101
        %v3145 = vunpack.c.h.b16 %v3101
        %v3146 = vunpack.c.l.b16 %v3102
        %v3147 = vunpack.c.h.b16 %v3102
        %v3148 = vpack.c.b16 %v3136, %v3132
        %v3149 = vpack.c.b16 %v3137, %v3133
        %v3150 = vpack.c.b16 %v3138, %v3134
        %v3151 = vpack.c.b16 %v3139, %v3135
        %v3152 = vpack.c.b16 %v3144, %v3140
        %v3153 = vpack.c.b16 %v3145, %v3141
        %v3154 = vpack.c.b16 %v3146, %v3142
        %v3155 = vpack.c.b16 %v3147, %v3143
        %3164 = vmatprep.subr.bf16.mxu0 0
        %3165 = vmatpush1.bf16.msra.mxu0 0
        %3166 = vmatprep.subr.bf16.mxu0 0
        %3167 = vmatpush1.bf16.msra.mxu0 0
        %3168 = vmatprep.subr.bf16.mxu0 0
        %3169 = vmatpush1.bf16.msra.mxu0 0
        %3170 = vmatprep.subr.bf16.mxu0 0
        %3171 = vmatpush1.bf16.msra.mxu0 0
        %3172 = vmatprep.subr.bf16.mxu0 0
        %3173 = vmatpush1.bf16.msra.mxu0 0
        %3174 = vmatprep.subr.bf16.mxu0 0
        %3175 = vmatpush1.bf16.msra.mxu0 0
        %3176 = vmatprep.subr.bf16.mxu0 %v3153
        %3177 = vmatpush1.bf16.msra.mxu0 %v3152
        %3178 = vmatprep.subr.bf16.mxu0 %v3149
        %3179 = vmatpush1.bf16.msra.mxu0 %v3148
        %3180 = vmatprep.subr.bf16.mxu0 0
        %3181 = vmatpush2.bf16.msra.mxu0 0
        %3182 = vmatprep.subr.bf16.mxu0 0
        %3183 = vmatpush2.bf16.msra.mxu0 0
        %3184 = vmatprep.subr.bf16.mxu0 0
        %3185 = vmatpush2.bf16.msra.mxu0 0
        %3186 = vmatprep.subr.bf16.mxu0 0
        %3187 = vmatpush2.bf16.msra.mxu0 0
        %3188 = vmatprep.subr.bf16.mxu0 0
        %3189 = vmatpush2.bf16.msra.mxu0 0
        %3190 = vmatprep.subr.bf16.mxu0 0
        %3191 = vmatpush2.bf16.msra.mxu0 0
        %3192 = vmatprep.subr.bf16.mxu0 0
        %3193 = vmatpush2.bf16.msra.mxu0 0
        %3194 = vmatprep.subr.bf16.mxu0 0
        %3195 = vmatpush2.bf16.msra.mxu0 0
        %3196 = vmatprep.mubr.bf16.mxu0 0
        %3197 = vmatmul.mubr.bf16.gmra.mxu0 %v540
        %v3198 = vpop.f32.mrf.mxu0
        %v3199 = vadd.f32 %v3107, %v3198
        %v3200 = vpop.f32.mrf.mxu0
        %v3201 = vadd.f32 %v3111, %v3200
        %v3202 = vpop.f32.mrf.mxu0
        %v3203 = vadd.f32 %v3107, %v3202
        %v3204 = vpop.f32.mrf.mxu0
        %v3205 = vadd.f32 %v3111, %v3204
        %3206 = vmatprep.mubr.bf16.mxu0 0
        %3207 = vmatmul.mubr.bf16.gmra.mxu0 %v543
        %v3208 = vpop.f32.mrf.mxu0
        %v3209 = vadd.f32 %v3107, %v3208
        %v3210 = vpop.f32.mrf.mxu0
        %v3211 = vadd.f32 %v3111, %v3210
        %v3212 = vpop.f32.mrf.mxu0
        %v3213 = vadd.f32 %v3107, %v3212
        %v3214 = vpop.f32.mrf.mxu0
        %v3215 = vadd.f32 %v3111, %v3214
        %3216 = vdwg.mxu0
        %3217 = vmatprep.subr.bf16.mxu0 0
        %3218 = vmatpush1.bf16.msra.mxu0 0
        %3219 = vmatprep.subr.bf16.mxu0 0
        %3220 = vmatpush1.bf16.msra.mxu0 0
        %3221 = vmatprep.subr.bf16.mxu0 0
        %3222 = vmatpush1.bf16.msra.mxu0 0
        %3223 = vmatprep.subr.bf16.mxu0 0
        %3224 = vmatpush1.bf16.msra.mxu0 0
        %3225 = vmatprep.subr.bf16.mxu0 0
        %3226 = vmatpush1.bf16.msra.mxu0 0
        %3227 = vmatprep.subr.bf16.mxu0 0
        %3228 = vmatpush1.bf16.msra.mxu0 0
        %3229 = vmatprep.subr.bf16.mxu0 %v3155
        %3230 = vmatpush1.bf16.msra.mxu0 %v3154
        %3231 = vmatprep.subr.bf16.mxu0 %v3151
        %3232 = vmatpush1.bf16.msra.mxu0 %v3150
        %3233 = vmatprep.subr.bf16.mxu0 0
        %3234 = vmatpush2.bf16.msra.mxu0 0
        %3235 = vmatprep.subr.bf16.mxu0 0
        %3236 = vmatpush2.bf16.msra.mxu0 0
        %3237 = vmatprep.subr.bf16.mxu0 0
        %3238 = vmatpush2.bf16.msra.mxu0 0
        %3239 = vmatprep.subr.bf16.mxu0 0
        %3240 = vmatpush2.bf16.msra.mxu0 0
        %3241 = vmatprep.subr.bf16.mxu0 0
        %3242 = vmatpush2.bf16.msra.mxu0 0
        %3243 = vmatprep.subr.bf16.mxu0 0
        %3244 = vmatpush2.bf16.msra.mxu0 0
        %3245 = vmatprep.subr.bf16.mxu0 0
        %3246 = vmatpush2.bf16.msra.mxu0 0
        %3247 = vmatprep.subr.bf16.mxu0 0
        %3248 = vmatpush2.bf16.msra.mxu0 0
        %3249 = vmatprep.mubr.bf16.mxu0 0
        %3250 = vmatmul.mubr.bf16.gmra.mxu0 %v540
        %v3251 = vpop.f32.mrf.mxu0
        %v3252 = vadd.f32 %v3115, %v3251
        %v3253 = vpop.f32.mrf.mxu0
        %v3254 = vadd.f32 %v3119, %v3253
        %v3255 = vpop.f32.mrf.mxu0
        %v3256 = vadd.f32 %v3115, %v3255
        %v3257 = vpop.f32.mrf.mxu0
        %v3258 = vadd.f32 %v3119, %v3257
        %3259 = vmatprep.mubr.bf16.mxu0 0
        %3260 = vmatmul.mubr.bf16.gmra.mxu0 %v543
        %v3261 = vpop.f32.mrf.mxu0
        %v3262 = vadd.f32 %v3115, %v3261
        %v3263 = vpop.f32.mrf.mxu0
        %v3264 = vadd.f32 %v3119, %v3263
        %v3265 = vpop.f32.mrf.mxu0
        %v3266 = vadd.f32 %v3115, %v3265
        %v3267 = vpop.f32.mrf.mxu0
        %v3268 = vadd.f32 %v3119, %v3267
        %3269 = vdwg.mxu0
        %v3270 = vmax.f32 %v3199, 0.0
        %v3271 = vmax.f32 %v3201, 0.0
        %v3272 = vmax.f32 %v3252, 0.0
        %v3273 = vmax.f32 %v3254, 0.0
        %v3274 = vmax.f32 %v3203, 0.0
        %v3275 = vmax.f32 %v3205, 0.0
        %v3276 = vmax.f32 %v3256, 0.0
        %v3277 = vmax.f32 %v3258, 0.0
        %v3278 = vmax.f32 %v3209, 0.0
        %v3279 = vmax.f32 %v3211, 0.0
        %v3280 = vmax.f32 %v3262, 0.0
        %v3281 = vmax.f32 %v3264, 0.0
        %v3282 = vmax.f32 %v3213, 0.0
        %v3283 = vmax.f32 %v3215, 0.0
        %v3284 = vmax.f32 %v3266, 0.0
        %v3285 = vmax.f32 %v3268, 0.0
        %v3286 = vpack.c.bf16 %v3274, %v3270
        %v3287 = vpack.c.bf16 %v3275, %v3271
        %v3288 = vpack.c.bf16 %v3276, %v3272
        %v3289 = vpack.c.bf16 %v3277, %v3273
        %v3290 = vpack.c.bf16 %v3282, %v3278
        %v3291 = vpack.c.bf16 %v3283, %v3279
        %v3292 = vpack.c.bf16 %v3284, %v3280
        %v3293 = vpack.c.bf16 %v3285, %v3281
        %s3294 = scalar_lea.vmem %s368, 1024 [#allocation7]
        %v3295 = vld [vmem:[%s3294] sm:$0xff]
        %v3296 = vld [vmem:[%s3294 + $0x8] sm:$0xff]
        %v3297 = vld [vmem:[%s3294 + $0x10] sm:$0xff]
        %v3298 = vld [vmem:[%s3294 + $0x18] sm:$0xff]
        %v3299 = vld [vmem:[%s3294 + $0x20] sm:$0xff]
        %v3300 = vld [vmem:[%s3294 + $0x28] sm:$0xff]
        %v3301 = vld [vmem:[%s3294 + $0x30] sm:$0xff]
        %v3302 = vld [vmem:[%s3294 + $0x38] sm:$0xff]
        %v3303 = vld [vmem:[%s3294 + $0x40] sm:$0xff]
        %v3304 = vld [vmem:[%s3294 + $0x48] sm:$0xff]
        %v3305 = vld [vmem:[%s3294 + $0x50] sm:$0xff]
        %v3306 = vld [vmem:[%s3294 + $0x58] sm:$0xff]
        %v3307 = vld [vmem:[%s3294 + $0x60] sm:$0xff]
        %v3308 = vld [vmem:[%s3294 + $0x68] sm:$0xff]
        %v3309 = vld [vmem:[%s3294 + $0x70] sm:$0xff]
        %v3310 = vld [vmem:[%s3294 + $0x78] sm:$0xff]
        %v3311 = vld [vmem:[%s3294 + $0x80] sm:$0xff]
        %v3312 = vld [vmem:[%s3294 + $0x88] sm:$0xff]
        %v3313 = vld [vmem:[%s3294 + $0x90] sm:$0xff]
        %v3314 = vld [vmem:[%s3294 + $0x98] sm:$0xff]
        %v3315 = vld [vmem:[%s3294 + $0xa0] sm:$0xff]
        %v3316 = vld [vmem:[%s3294 + $0xa8] sm:$0xff]
        %v3317 = vld [vmem:[%s3294 + $0xb0] sm:$0xff]
        %v3318 = vld [vmem:[%s3294 + $0xb8] sm:$0xff]
        %v3319 = vld [vmem:[%s3294 + $0xc0] sm:$0xff]
        %v3320 = vld [vmem:[%s3294 + $0xc8] sm:$0xff]
        %v3321 = vld [vmem:[%s3294 + $0xd0] sm:$0xff]
        %v3322 = vld [vmem:[%s3294 + $0xd8] sm:$0xff]
        %v3323 = vld [vmem:[%s3294 + $0xe0] sm:$0xff]
        %v3324 = vld [vmem:[%s3294 + $0xe8] sm:$0xff]
        %v3325 = vld [vmem:[%s3294 + $0xf0] sm:$0xff]
        %v3326 = vld [vmem:[%s3294 + $0xf8] sm:$0xff]
        %v3327 = vld [vmem:[%s3294 + $0x100] sm:$0xff]
        %v3328 = vld [vmem:[%s3294 + $0x108] sm:$0xff]
        %v3329 = vld [vmem:[%s3294 + $0x110] sm:$0xff]
        %v3330 = vld [vmem:[%s3294 + $0x118] sm:$0xff]
        %v3331 = vld [vmem:[%s3294 + $0x120] sm:$0xff]
        %v3332 = vld [vmem:[%s3294 + $0x128] sm:$0xff]
        %v3333 = vld [vmem:[%s3294 + $0x130] sm:$0xff]
        %v3334 = vld [vmem:[%s3294 + $0x138] sm:$0xff]
        %v3335 = vld [vmem:[%s3294 + $0x140] sm:$0xff]
        %v3336 = vld [vmem:[%s3294 + $0x148] sm:$0xff]
        %v3337 = vld [vmem:[%s3294 + $0x150] sm:$0xff]
        %v3338 = vld [vmem:[%s3294 + $0x158] sm:$0xff]
        %v3339 = vld [vmem:[%s3294 + $0x160] sm:$0xff]
        %v3340 = vld [vmem:[%s3294 + $0x168] sm:$0xff]
        %v3341 = vld [vmem:[%s3294 + $0x170] sm:$0xff]
        %v3342 = vld [vmem:[%s3294 + $0x178] sm:$0xff]
        %v3343 = vld [vmem:[%s3294 + $0x180] sm:$0xff]
        %v3344 = vld [vmem:[%s3294 + $0x188] sm:$0xff]
        %v3345 = vld [vmem:[%s3294 + $0x190] sm:$0xff]
        %v3346 = vld [vmem:[%s3294 + $0x198] sm:$0xff]
        %v3347 = vld [vmem:[%s3294 + $0x1a0] sm:$0xff]
        %v3348 = vld [vmem:[%s3294 + $0x1a8] sm:$0xff]
        %v3349 = vld [vmem:[%s3294 + $0x1b0] sm:$0xff]
        %v3350 = vld [vmem:[%s3294 + $0x1b8] sm:$0xff]
        %v3351 = vld [vmem:[%s3294 + $0x1c0] sm:$0xff]
        %v3352 = vld [vmem:[%s3294 + $0x1c8] sm:$0xff]
        %v3353 = vld [vmem:[%s3294 + $0x1d0] sm:$0xff]
        %v3354 = vld [vmem:[%s3294 + $0x1d8] sm:$0xff]
        %v3355 = vld [vmem:[%s3294 + $0x1e0] sm:$0xff]
        %v3356 = vld [vmem:[%s3294 + $0x1e8] sm:$0xff]
        %v3357 = vld [vmem:[%s3294 + $0x1f0] sm:$0xff]
        %v3358 = vld [vmem:[%s3294 + $0x1f8] sm:$0xff]
        %v3359 = vld [vmem:[%s3294 + $0x200] sm:$0xff]
        %v3360 = vld [vmem:[%s3294 + $0x208] sm:$0xff]
        %v3361 = vld [vmem:[%s3294 + $0x210] sm:$0xff]
        %v3362 = vld [vmem:[%s3294 + $0x218] sm:$0xff]
        %v3363 = vld [vmem:[%s3294 + $0x220] sm:$0xff]
        %v3364 = vld [vmem:[%s3294 + $0x228] sm:$0xff]
        %v3365 = vld [vmem:[%s3294 + $0x230] sm:$0xff]
        %v3366 = vld [vmem:[%s3294 + $0x238] sm:$0xff]
        %v3367 = vld [vmem:[%s3294 + $0x240] sm:$0xff]
        %v3368 = vld [vmem:[%s3294 + $0x248] sm:$0xff]
        %v3369 = vld [vmem:[%s3294 + $0x250] sm:$0xff]
        %v3370 = vld [vmem:[%s3294 + $0x258] sm:$0xff]
        %v3371 = vld [vmem:[%s3294 + $0x260] sm:$0xff]
        %v3372 = vld [vmem:[%s3294 + $0x268] sm:$0xff]
        %v3373 = vld [vmem:[%s3294 + $0x270] sm:$0xff]
        %v3374 = vld [vmem:[%s3294 + $0x278] sm:$0xff]
        %v3375 = vld [vmem:[%s3294 + $0x280] sm:$0xff]
        %v3376 = vld [vmem:[%s3294 + $0x288] sm:$0xff]
        %v3377 = vld [vmem:[%s3294 + $0x290] sm:$0xff]
        %v3378 = vld [vmem:[%s3294 + $0x298] sm:$0xff]
        %v3379 = vld [vmem:[%s3294 + $0x2a0] sm:$0xff]
        %v3380 = vld [vmem:[%s3294 + $0x2a8] sm:$0xff]
        %v3381 = vld [vmem:[%s3294 + $0x2b0] sm:$0xff]
        %v3382 = vld [vmem:[%s3294 + $0x2b8] sm:$0xff]
        %v3383 = vld [vmem:[%s3294 + $0x2c0] sm:$0xff]
        %v3384 = vld [vmem:[%s3294 + $0x2c8] sm:$0xff]
        %v3385 = vld [vmem:[%s3294 + $0x2d0] sm:$0xff]
        %v3386 = vld [vmem:[%s3294 + $0x2d8] sm:$0xff]
        %v3387 = vld [vmem:[%s3294 + $0x2e0] sm:$0xff]
        %v3388 = vld [vmem:[%s3294 + $0x2e8] sm:$0xff]
        %v3389 = vld [vmem:[%s3294 + $0x2f0] sm:$0xff]
        %v3390 = vld [vmem:[%s3294 + $0x2f8] sm:$0xff]
        %v3391 = vld [vmem:[%s3294 + $0x300] sm:$0xff]
        %v3392 = vld [vmem:[%s3294 + $0x308] sm:$0xff]
        %v3393 = vld [vmem:[%s3294 + $0x310] sm:$0xff]
        %v3394 = vld [vmem:[%s3294 + $0x318] sm:$0xff]
        %v3395 = vld [vmem:[%s3294 + $0x320] sm:$0xff]
        %v3396 = vld [vmem:[%s3294 + $0x328] sm:$0xff]
        %v3397 = vld [vmem:[%s3294 + $0x330] sm:$0xff]
        %v3398 = vld [vmem:[%s3294 + $0x338] sm:$0xff]
        %v3399 = vld [vmem:[%s3294 + $0x340] sm:$0xff]
        %v3400 = vld [vmem:[%s3294 + $0x348] sm:$0xff]
        %v3401 = vld [vmem:[%s3294 + $0x350] sm:$0xff]
        %v3402 = vld [vmem:[%s3294 + $0x358] sm:$0xff]
        %v3403 = vld [vmem:[%s3294 + $0x360] sm:$0xff]
        %v3404 = vld [vmem:[%s3294 + $0x368] sm:$0xff]
        %v3405 = vld [vmem:[%s3294 + $0x370] sm:$0xff]
        %v3406 = vld [vmem:[%s3294 + $0x378] sm:$0xff]
        %v3407 = vld [vmem:[%s3294 + $0x380] sm:$0xff]
        %v3408 = vld [vmem:[%s3294 + $0x388] sm:$0xff]
        %v3409 = vld [vmem:[%s3294 + $0x390] sm:$0xff]
        %v3410 = vld [vmem:[%s3294 + $0x398] sm:$0xff]
        %v3411 = vld [vmem:[%s3294 + $0x3a0] sm:$0xff]
        %v3412 = vld [vmem:[%s3294 + $0x3a8] sm:$0xff]
        %v3413 = vld [vmem:[%s3294 + $0x3b0] sm:$0xff]
        %v3414 = vld [vmem:[%s3294 + $0x3b8] sm:$0xff]
        %v3415 = vld [vmem:[%s3294 + $0x3c0] sm:$0xff]
        %v3416 = vld [vmem:[%s3294 + $0x3c8] sm:$0xff]
        %v3417 = vld [vmem:[%s3294 + $0x3d0] sm:$0xff]
        %v3418 = vld [vmem:[%s3294 + $0x3d8] sm:$0xff]
        %v3419 = vld [vmem:[%s3294 + $0x3e0] sm:$0xff]
        %v3420 = vld [vmem:[%s3294 + $0x3e8] sm:$0xff]
        %v3421 = vld [vmem:[%s3294 + $0x3f0] sm:$0xff]
        %v3422 = vld [vmem:[%s3294 + $0x3f8] sm:$0xff]
        %v3424 = vlaneseq
        %v3425 = vshrl.u32 %v3424, 7
        %v3426 = vsub.s32 0, %v3425
        %v3427 = vrot.slane %v3091, %v3426
        %v3428 = vlaneseq
        %v3429 = vshrl.u32 %v3428, 7
        %v3430 = vsub.s32 1, %v3429
        %v3431 = vrot.slane %v3091, %v3430
        %v3432 = vlaneseq
        %v3433 = vshrl.u32 %v3432, 7
        %v3434 = vsub.s32 2, %v3433
        %v3435 = vrot.slane %v3091, %v3434
        %v3436 = vlaneseq
        %v3437 = vshrl.u32 %v3436, 7
        %v3438 = vsub.s32 3, %v3437
        %v3439 = vrot.slane %v3091, %v3438
        %v3572 = vunpack.c.l.b16 %v3295
        %v3573 = vunpack.c.h.b16 %v3295
        %v3574 = vunpack.c.l.b16 %v3296
        %v3575 = vunpack.c.h.b16 %v3296
        %v3576 = vunpack.c.l.b16 %v3297
        %v3577 = vunpack.c.h.b16 %v3297
        %v3578 = vunpack.c.l.b16 %v3298
        %v3579 = vunpack.c.h.b16 %v3298
        %v3580 = vunpack.c.l.b16 %v3299
        %v3581 = vunpack.c.h.b16 %v3299
        %v3582 = vunpack.c.l.b16 %v3300
        %v3583 = vunpack.c.h.b16 %v3300
        %v3584 = vunpack.c.l.b16 %v3301
        %v3585 = vunpack.c.h.b16 %v3301
        %v3586 = vunpack.c.l.b16 %v3302
        %v3587 = vunpack.c.h.b16 %v3302
        %v3588 = vunpack.c.l.b16 %v3303
        %v3589 = vunpack.c.h.b16 %v3303
        %v3590 = vunpack.c.l.b16 %v3304
        %v3591 = vunpack.c.h.b16 %v3304
        %v3592 = vunpack.c.l.b16 %v3305
        %v3593 = vunpack.c.h.b16 %v3305
        %v3594 = vunpack.c.l.b16 %v3306
        %v3595 = vunpack.c.h.b16 %v3306
        %v3596 = vunpack.c.l.b16 %v3307
        %v3597 = vunpack.c.h.b16 %v3307
        %v3598 = vunpack.c.l.b16 %v3308
        %v3599 = vunpack.c.h.b16 %v3308
        %v3600 = vunpack.c.l.b16 %v3309
        %v3601 = vunpack.c.h.b16 %v3309
        %v3602 = vunpack.c.l.b16 %v3310
        %v3603 = vunpack.c.h.b16 %v3310
        %v3604 = vunpack.c.l.b16 %v3311
        %v3605 = vunpack.c.h.b16 %v3311
        %v3606 = vunpack.c.l.b16 %v3312
        %v3607 = vunpack.c.h.b16 %v3312
        %v3608 = vunpack.c.l.b16 %v3313
        %v3609 = vunpack.c.h.b16 %v3313
        %v3610 = vunpack.c.l.b16 %v3314
        %v3611 = vunpack.c.h.b16 %v3314
        %v3612 = vunpack.c.l.b16 %v3315
        %v3613 = vunpack.c.h.b16 %v3315
        %v3614 = vunpack.c.l.b16 %v3316
        %v3615 = vunpack.c.h.b16 %v3316
        %v3616 = vunpack.c.l.b16 %v3317
        %v3617 = vunpack.c.h.b16 %v3317
        %v3618 = vunpack.c.l.b16 %v3318
        %v3619 = vunpack.c.h.b16 %v3318
        %v3620 = vunpack.c.l.b16 %v3319
        %v3621 = vunpack.c.h.b16 %v3319
        %v3622 = vunpack.c.l.b16 %v3320
        %v3623 = vunpack.c.h.b16 %v3320
        %v3624 = vunpack.c.l.b16 %v3321
        %v3625 = vunpack.c.h.b16 %v3321
        %v3626 = vunpack.c.l.b16 %v3322
        %v3627 = vunpack.c.h.b16 %v3322
        %v3628 = vunpack.c.l.b16 %v3323
        %v3629 = vunpack.c.h.b16 %v3323
        %v3630 = vunpack.c.l.b16 %v3324
        %v3631 = vunpack.c.h.b16 %v3324
        %v3632 = vunpack.c.l.b16 %v3325
        %v3633 = vunpack.c.h.b16 %v3325
        %v3634 = vunpack.c.l.b16 %v3326
        %v3635 = vunpack.c.h.b16 %v3326
        %v3636 = vunpack.c.l.b16 %v3327
        %v3637 = vunpack.c.h.b16 %v3327
        %v3638 = vunpack.c.l.b16 %v3328
        %v3639 = vunpack.c.h.b16 %v3328
        %v3640 = vunpack.c.l.b16 %v3329
        %v3641 = vunpack.c.h.b16 %v3329
        %v3642 = vunpack.c.l.b16 %v3330
        %v3643 = vunpack.c.h.b16 %v3330
        %v3644 = vunpack.c.l.b16 %v3331
        %v3645 = vunpack.c.h.b16 %v3331
        %v3646 = vunpack.c.l.b16 %v3332
        %v3647 = vunpack.c.h.b16 %v3332
        %v3648 = vunpack.c.l.b16 %v3333
        %v3649 = vunpack.c.h.b16 %v3333
        %v3650 = vunpack.c.l.b16 %v3334
        %v3651 = vunpack.c.h.b16 %v3334
        %v3652 = vunpack.c.l.b16 %v3335
        %v3653 = vunpack.c.h.b16 %v3335
        %v3654 = vunpack.c.l.b16 %v3336
        %v3655 = vunpack.c.h.b16 %v3336
        %v3656 = vunpack.c.l.b16 %v3337
        %v3657 = vunpack.c.h.b16 %v3337
        %v3658 = vunpack.c.l.b16 %v3338
        %v3659 = vunpack.c.h.b16 %v3338
        %v3660 = vunpack.c.l.b16 %v3339
        %v3661 = vunpack.c.h.b16 %v3339
        %v3662 = vunpack.c.l.b16 %v3340
        %v3663 = vunpack.c.h.b16 %v3340
        %v3664 = vunpack.c.l.b16 %v3341
        %v3665 = vunpack.c.h.b16 %v3341
        %v3666 = vunpack.c.l.b16 %v3342
        %v3667 = vunpack.c.h.b16 %v3342
        %v3668 = vunpack.c.l.b16 %v3343
        %v3669 = vunpack.c.h.b16 %v3343
        %v3670 = vunpack.c.l.b16 %v3344
        %v3671 = vunpack.c.h.b16 %v3344
        %v3672 = vunpack.c.l.b16 %v3345
        %v3673 = vunpack.c.h.b16 %v3345
        %v3674 = vunpack.c.l.b16 %v3346
        %v3675 = vunpack.c.h.b16 %v3346
        %v3676 = vunpack.c.l.b16 %v3347
        %v3677 = vunpack.c.h.b16 %v3347
        %v3678 = vunpack.c.l.b16 %v3348
        %v3679 = vunpack.c.h.b16 %v3348
        %v3680 = vunpack.c.l.b16 %v3349
        %v3681 = vunpack.c.h.b16 %v3349
        %v3682 = vunpack.c.l.b16 %v3350
        %v3683 = vunpack.c.h.b16 %v3350
        %v3684 = vunpack.c.l.b16 %v3351
        %v3685 = vunpack.c.h.b16 %v3351
        %v3686 = vunpack.c.l.b16 %v3352
        %v3687 = vunpack.c.h.b16 %v3352
        %v3688 = vunpack.c.l.b16 %v3353
        %v3689 = vunpack.c.h.b16 %v3353
        %v3690 = vunpack.c.l.b16 %v3354
        %v3691 = vunpack.c.h.b16 %v3354
        %v3692 = vunpack.c.l.b16 %v3355
        %v3693 = vunpack.c.h.b16 %v3355
        %v3694 = vunpack.c.l.b16 %v3356
        %v3695 = vunpack.c.h.b16 %v3356
        %v3696 = vunpack.c.l.b16 %v3357
        %v3697 = vunpack.c.h.b16 %v3357
        %v3698 = vunpack.c.l.b16 %v3358
        %v3699 = vunpack.c.h.b16 %v3358
        %v3700 = vunpack.c.l.b16 %v3359
        %v3701 = vunpack.c.h.b16 %v3359
        %v3702 = vunpack.c.l.b16 %v3360
        %v3703 = vunpack.c.h.b16 %v3360
        %v3704 = vunpack.c.l.b16 %v3361
        %v3705 = vunpack.c.h.b16 %v3361
        %v3706 = vunpack.c.l.b16 %v3362
        %v3707 = vunpack.c.h.b16 %v3362
        %v3708 = vunpack.c.l.b16 %v3363
        %v3709 = vunpack.c.h.b16 %v3363
        %v3710 = vunpack.c.l.b16 %v3364
        %v3711 = vunpack.c.h.b16 %v3364
        %v3712 = vunpack.c.l.b16 %v3365
        %v3713 = vunpack.c.h.b16 %v3365
        %v3714 = vunpack.c.l.b16 %v3366
        %v3715 = vunpack.c.h.b16 %v3366
        %v3716 = vunpack.c.l.b16 %v3367
        %v3717 = vunpack.c.h.b16 %v3367
        %v3718 = vunpack.c.l.b16 %v3368
        %v3719 = vunpack.c.h.b16 %v3368
        %v3720 = vunpack.c.l.b16 %v3369
        %v3721 = vunpack.c.h.b16 %v3369
        %v3722 = vunpack.c.l.b16 %v3370
        %v3723 = vunpack.c.h.b16 %v3370
        %v3724 = vunpack.c.l.b16 %v3371
        %v3725 = vunpack.c.h.b16 %v3371
        %v3726 = vunpack.c.l.b16 %v3372
        %v3727 = vunpack.c.h.b16 %v3372
        %v3728 = vunpack.c.l.b16 %v3373
        %v3729 = vunpack.c.h.b16 %v3373
        %v3730 = vunpack.c.l.b16 %v3374
        %v3731 = vunpack.c.h.b16 %v3374
        %v3732 = vunpack.c.l.b16 %v3375
        %v3733 = vunpack.c.h.b16 %v3375
        %v3734 = vunpack.c.l.b16 %v3376
        %v3735 = vunpack.c.h.b16 %v3376
        %v3736 = vunpack.c.l.b16 %v3377
        %v3737 = vunpack.c.h.b16 %v3377
        %v3738 = vunpack.c.l.b16 %v3378
        %v3739 = vunpack.c.h.b16 %v3378
        %v3740 = vunpack.c.l.b16 %v3379
        %v3741 = vunpack.c.h.b16 %v3379
        %v3742 = vunpack.c.l.b16 %v3380
        %v3743 = vunpack.c.h.b16 %v3380
        %v3744 = vunpack.c.l.b16 %v3381
        %v3745 = vunpack.c.h.b16 %v3381
        %v3746 = vunpack.c.l.b16 %v3382
        %v3747 = vunpack.c.h.b16 %v3382
        %v3748 = vunpack.c.l.b16 %v3383
        %v3749 = vunpack.c.h.b16 %v3383
        %v3750 = vunpack.c.l.b16 %v3384
        %v3751 = vunpack.c.h.b16 %v3384
        %v3752 = vunpack.c.l.b16 %v3385
        %v3753 = vunpack.c.h.b16 %v3385
        %v3754 = vunpack.c.l.b16 %v3386
        %v3755 = vunpack.c.h.b16 %v3386
        %v3756 = vunpack.c.l.b16 %v3387
        %v3757 = vunpack.c.h.b16 %v3387
        %v3758 = vunpack.c.l.b16 %v3388
        %v3759 = vunpack.c.h.b16 %v3388
        %v3760 = vunpack.c.l.b16 %v3389
        %v3761 = vunpack.c.h.b16 %v3389
        %v3762 = vunpack.c.l.b16 %v3390
        %v3763 = vunpack.c.h.b16 %v3390
        %v3764 = vunpack.c.l.b16 %v3391
        %v3765 = vunpack.c.h.b16 %v3391
        %v3766 = vunpack.c.l.b16 %v3392
        %v3767 = vunpack.c.h.b16 %v3392
        %v3768 = vunpack.c.l.b16 %v3393
        %v3769 = vunpack.c.h.b16 %v3393
        %v3770 = vunpack.c.l.b16 %v3394
        %v3771 = vunpack.c.h.b16 %v3394
        %v3772 = vunpack.c.l.b16 %v3395
        %v3773 = vunpack.c.h.b16 %v3395
        %v3774 = vunpack.c.l.b16 %v3396
        %v3775 = vunpack.c.h.b16 %v3396
        %v3776 = vunpack.c.l.b16 %v3397
        %v3777 = vunpack.c.h.b16 %v3397
        %v3778 = vunpack.c.l.b16 %v3398
        %v3779 = vunpack.c.h.b16 %v3398
        %v3780 = vunpack.c.l.b16 %v3399
        %v3781 = vunpack.c.h.b16 %v3399
        %v3782 = vunpack.c.l.b16 %v3400
        %v3783 = vunpack.c.h.b16 %v3400
        %v3784 = vunpack.c.l.b16 %v3401
        %v3785 = vunpack.c.h.b16 %v3401
        %v3786 = vunpack.c.l.b16 %v3402
        %v3787 = vunpack.c.h.b16 %v3402
        %v3788 = vunpack.c.l.b16 %v3403
        %v3789 = vunpack.c.h.b16 %v3403
        %v3790 = vunpack.c.l.b16 %v3404
        %v3791 = vunpack.c.h.b16 %v3404
        %v3792 = vunpack.c.l.b16 %v3405
        %v3793 = vunpack.c.h.b16 %v3405
        %v3794 = vunpack.c.l.b16 %v3406
        %v3795 = vunpack.c.h.b16 %v3406
        %v3796 = vunpack.c.l.b16 %v3407
        %v3797 = vunpack.c.h.b16 %v3407
        %v3798 = vunpack.c.l.b16 %v3408
        %v3799 = vunpack.c.h.b16 %v3408
        %v3800 = vunpack.c.l.b16 %v3409
        %v3801 = vunpack.c.h.b16 %v3409
        %v3802 = vunpack.c.l.b16 %v3410
        %v3803 = vunpack.c.h.b16 %v3410
        %v3804 = vunpack.c.l.b16 %v3411
        %v3805 = vunpack.c.h.b16 %v3411
        %v3806 = vunpack.c.l.b16 %v3412
        %v3807 = vunpack.c.h.b16 %v3412
        %v3808 = vunpack.c.l.b16 %v3413
        %v3809 = vunpack.c.h.b16 %v3413
        %v3810 = vunpack.c.l.b16 %v3414
        %v3811 = vunpack.c.h.b16 %v3414
        %v3812 = vunpack.c.l.b16 %v3415
        %v3813 = vunpack.c.h.b16 %v3415
        %v3814 = vunpack.c.l.b16 %v3416
        %v3815 = vunpack.c.h.b16 %v3416
        %v3816 = vunpack.c.l.b16 %v3417
        %v3817 = vunpack.c.h.b16 %v3417
        %v3818 = vunpack.c.l.b16 %v3418
        %v3819 = vunpack.c.h.b16 %v3418
        %v3820 = vunpack.c.l.b16 %v3419
        %v3821 = vunpack.c.h.b16 %v3419
        %v3822 = vunpack.c.l.b16 %v3420
        %v3823 = vunpack.c.h.b16 %v3420
        %v3824 = vunpack.c.l.b16 %v3421
        %v3825 = vunpack.c.h.b16 %v3421
        %v3826 = vunpack.c.l.b16 %v3422
        %v3827 = vunpack.c.h.b16 %v3422
        %v3828 = vpack.c.b16 %v3576, %v3572
        %v3829 = vpack.c.b16 %v3577, %v3573
        %v3830 = vpack.c.b16 %v3578, %v3574
        %v3831 = vpack.c.b16 %v3579, %v3575
        %v3832 = vpack.c.b16 %v3584, %v3580
        %v3833 = vpack.c.b16 %v3585, %v3581
        %v3834 = vpack.c.b16 %v3586, %v3582
        %v3835 = vpack.c.b16 %v3587, %v3583
        %v3836 = vpack.c.b16 %v3592, %v3588
        %v3837 = vpack.c.b16 %v3593, %v3589
        %v3838 = vpack.c.b16 %v3594, %v3590
        %v3839 = vpack.c.b16 %v3595, %v3591
        %v3840 = vpack.c.b16 %v3600, %v3596
        %v3841 = vpack.c.b16 %v3601, %v3597
        %v3842 = vpack.c.b16 %v3602, %v3598
        %v3843 = vpack.c.b16 %v3603, %v3599
        %v3844 = vpack.c.b16 %v3608, %v3604
        %v3845 = vpack.c.b16 %v3609, %v3605
        %v3846 = vpack.c.b16 %v3610, %v3606
        %v3847 = vpack.c.b16 %v3611, %v3607
        %v3848 = vpack.c.b16 %v3616, %v3612
        %v3849 = vpack.c.b16 %v3617, %v3613
        %v3850 = vpack.c.b16 %v3618, %v3614
        %v3851 = vpack.c.b16 %v3619, %v3615
        %v3852 = vpack.c.b16 %v3624, %v3620
        %v3853 = vpack.c.b16 %v3625, %v3621
        %v3854 = vpack.c.b16 %v3626, %v3622
        %v3855 = vpack.c.b16 %v3627, %v3623
        %v3856 = vpack.c.b16 %v3632, %v3628
        %v3857 = vpack.c.b16 %v3633, %v3629
        %v3858 = vpack.c.b16 %v3634, %v3630
        %v3859 = vpack.c.b16 %v3635, %v3631
        %v3860 = vpack.c.b16 %v3640, %v3636
        %v3861 = vpack.c.b16 %v3641, %v3637
        %v3862 = vpack.c.b16 %v3642, %v3638
        %v3863 = vpack.c.b16 %v3643, %v3639
        %v3864 = vpack.c.b16 %v3648, %v3644
        %v3865 = vpack.c.b16 %v3649, %v3645
        %v3866 = vpack.c.b16 %v3650, %v3646
        %v3867 = vpack.c.b16 %v3651, %v3647
        %v3868 = vpack.c.b16 %v3656, %v3652
        %v3869 = vpack.c.b16 %v3657, %v3653
        %v3870 = vpack.c.b16 %v3658, %v3654
        %v3871 = vpack.c.b16 %v3659, %v3655
        %v3872 = vpack.c.b16 %v3664, %v3660
        %v3873 = vpack.c.b16 %v3665, %v3661
        %v3874 = vpack.c.b16 %v3666, %v3662
        %v3875 = vpack.c.b16 %v3667, %v3663
        %v3876 = vpack.c.b16 %v3672, %v3668
        %v3877 = vpack.c.b16 %v3673, %v3669
        %v3878 = vpack.c.b16 %v3674, %v3670
        %v3879 = vpack.c.b16 %v3675, %v3671
        %v3880 = vpack.c.b16 %v3680, %v3676
        %v3881 = vpack.c.b16 %v3681, %v3677
        %v3882 = vpack.c.b16 %v3682, %v3678
        %v3883 = vpack.c.b16 %v3683, %v3679
        %v3884 = vpack.c.b16 %v3688, %v3684
        %v3885 = vpack.c.b16 %v3689, %v3685
        %v3886 = vpack.c.b16 %v3690, %v3686
        %v3887 = vpack.c.b16 %v3691, %v3687
        %v3888 = vpack.c.b16 %v3696, %v3692
        %v3889 = vpack.c.b16 %v3697, %v3693
        %v3890 = vpack.c.b16 %v3698, %v3694
        %v3891 = vpack.c.b16 %v3699, %v3695
        %v3892 = vpack.c.b16 %v3704, %v3700
        %v3893 = vpack.c.b16 %v3705, %v3701
        %v3894 = vpack.c.b16 %v3706, %v3702
        %v3895 = vpack.c.b16 %v3707, %v3703
        %v3896 = vpack.c.b16 %v3712, %v3708
        %v3897 = vpack.c.b16 %v3713, %v3709
        %v3898 = vpack.c.b16 %v3714, %v3710
        %v3899 = vpack.c.b16 %v3715, %v3711
        %v3900 = vpack.c.b16 %v3720, %v3716
        %v3901 = vpack.c.b16 %v3721, %v3717
        %v3902 = vpack.c.b16 %v3722, %v3718
        %v3903 = vpack.c.b16 %v3723, %v3719
        %v3904 = vpack.c.b16 %v3728, %v3724
        %v3905 = vpack.c.b16 %v3729, %v3725
        %v3906 = vpack.c.b16 %v3730, %v3726
        %v3907 = vpack.c.b16 %v3731, %v3727
        %v3908 = vpack.c.b16 %v3736, %v3732
        %v3909 = vpack.c.b16 %v3737, %v3733
        %v3910 = vpack.c.b16 %v3738, %v3734
        %v3911 = vpack.c.b16 %v3739, %v3735
        %v3912 = vpack.c.b16 %v3744, %v3740
        %v3913 = vpack.c.b16 %v3745, %v3741
        %v3914 = vpack.c.b16 %v3746, %v3742
        %v3915 = vpack.c.b16 %v3747, %v3743
        %v3916 = vpack.c.b16 %v3752, %v3748
        %v3917 = vpack.c.b16 %v3753, %v3749
        %v3918 = vpack.c.b16 %v3754, %v3750
        %v3919 = vpack.c.b16 %v3755, %v3751
        %v3920 = vpack.c.b16 %v3760, %v3756
        %v3921 = vpack.c.b16 %v3761, %v3757
        %v3922 = vpack.c.b16 %v3762, %v3758
        %v3923 = vpack.c.b16 %v3763, %v3759
        %v3924 = vpack.c.b16 %v3768, %v3764
        %v3925 = vpack.c.b16 %v3769, %v3765
        %v3926 = vpack.c.b16 %v3770, %v3766
        %v3927 = vpack.c.b16 %v3771, %v3767
        %v3928 = vpack.c.b16 %v3776, %v3772
        %v3929 = vpack.c.b16 %v3777, %v3773
        %v3930 = vpack.c.b16 %v3778, %v3774
        %v3931 = vpack.c.b16 %v3779, %v3775
        %v3932 = vpack.c.b16 %v3784, %v3780
        %v3933 = vpack.c.b16 %v3785, %v3781
        %v3934 = vpack.c.b16 %v3786, %v3782
        %v3935 = vpack.c.b16 %v3787, %v3783
        %v3936 = vpack.c.b16 %v3792, %v3788
        %v3937 = vpack.c.b16 %v3793, %v3789
        %v3938 = vpack.c.b16 %v3794, %v3790
        %v3939 = vpack.c.b16 %v3795, %v3791
        %v3940 = vpack.c.b16 %v3800, %v3796
        %v3941 = vpack.c.b16 %v3801, %v3797
        %v3942 = vpack.c.b16 %v3802, %v3798
        %v3943 = vpack.c.b16 %v3803, %v3799
        %v3944 = vpack.c.b16 %v3808, %v3804
        %v3945 = vpack.c.b16 %v3809, %v3805
        %v3946 = vpack.c.b16 %v3810, %v3806
        %v3947 = vpack.c.b16 %v3811, %v3807
        %v3948 = vpack.c.b16 %v3816, %v3812
        %v3949 = vpack.c.b16 %v3817, %v3813
        %v3950 = vpack.c.b16 %v3818, %v3814
        %v3951 = vpack.c.b16 %v3819, %v3815
        %v3952 = vpack.c.b16 %v3824, %v3820
        %v3953 = vpack.c.b16 %v3825, %v3821
        %v3954 = vpack.c.b16 %v3826, %v3822
        %v3955 = vpack.c.b16 %v3827, %v3823
        %4084 = vmatprep.subr.bf16.mxu0 %v3857
        %4085 = vmatpush1.bf16.msra.mxu0 %v3856
        %4086 = vmatprep.subr.bf16.mxu0 %v3853
        %4087 = vmatpush1.bf16.msra.mxu0 %v3852
        %4088 = vmatprep.subr.bf16.mxu0 %v3849
        %4089 = vmatpush1.bf16.msra.mxu0 %v3848
        %4090 = vmatprep.subr.bf16.mxu0 %v3845
        %4091 = vmatpush1.bf16.msra.mxu0 %v3844
        %4092 = vmatprep.subr.bf16.mxu0 %v3841
        %4093 = vmatpush1.bf16.msra.mxu0 %v3840
        %4094 = vmatprep.subr.bf16.mxu0 %v3837
        %4095 = vmatpush1.bf16.msra.mxu0 %v3836
        %4096 = vmatprep.subr.bf16.mxu0 %v3833
        %4097 = vmatpush1.bf16.msra.mxu0 %v3832
        %4098 = vmatprep.subr.bf16.mxu0 %v3829
        %4099 = vmatpush1.bf16.msra.mxu0 %v3828
        %4100 = vmatprep.subr.bf16.mxu0 %v3889
        %4101 = vmatpush2.bf16.msra.mxu0 %v3888
        %4102 = vmatprep.subr.bf16.mxu0 %v3885
        %4103 = vmatpush2.bf16.msra.mxu0 %v3884
        %4104 = vmatprep.subr.bf16.mxu0 %v3881
        %4105 = vmatpush2.bf16.msra.mxu0 %v3880
        %4106 = vmatprep.subr.bf16.mxu0 %v3877
        %4107 = vmatpush2.bf16.msra.mxu0 %v3876
        %4108 = vmatprep.subr.bf16.mxu0 %v3873
        %4109 = vmatpush2.bf16.msra.mxu0 %v3872
        %4110 = vmatprep.subr.bf16.mxu0 %v3869
        %4111 = vmatpush2.bf16.msra.mxu0 %v3868
        %4112 = vmatprep.subr.bf16.mxu0 %v3865
        %4113 = vmatpush2.bf16.msra.mxu0 %v3864
        %4114 = vmatprep.subr.bf16.mxu0 %v3861
        %4115 = vmatpush2.bf16.msra.mxu0 %v3860
        %4116 = vmatprep.mubr.bf16.mxu0 %v3287
        %4117 = vmatmul.mubr.bf16.gmra.mxu0 %v3286
        %v4118 = vpop.f32.mrf.mxu0
        %v4119 = vadd.f32 %v3427, %v4118
        %v4120 = vpop.f32.mrf.mxu0
        %v4121 = vadd.f32 %v3431, %v4120
        %v4122 = vpop.f32.mrf.mxu0
        %v4123 = vadd.f32 %v3427, %v4122
        %v4124 = vpop.f32.mrf.mxu0
        %v4125 = vadd.f32 %v3431, %v4124
        %4126 = vmatprep.mubr.bf16.mxu0 %v3291
        %4127 = vmatmul.mubr.bf16.gmra.mxu0 %v3290
        %v4128 = vpop.f32.mrf.mxu0
        %v4129 = vadd.f32 %v3427, %v4128
        %v4130 = vpop.f32.mrf.mxu0
        %v4131 = vadd.f32 %v3431, %v4130
        %v4132 = vpop.f32.mrf.mxu0
        %v4133 = vadd.f32 %v3427, %v4132
        %v4134 = vpop.f32.mrf.mxu0
        %v4135 = vadd.f32 %v3431, %v4134
        %4136 = vdwg.mxu0
        %4137 = vmatprep.subr.bf16.mxu0 %v3921
        %4138 = vmatpush1.bf16.msra.mxu0 %v3920
        %4139 = vmatprep.subr.bf16.mxu0 %v3917
        %4140 = vmatpush1.bf16.msra.mxu0 %v3916
        %4141 = vmatprep.subr.bf16.mxu0 %v3913
        %4142 = vmatpush1.bf16.msra.mxu0 %v3912
        %4143 = vmatprep.subr.bf16.mxu0 %v3909
        %4144 = vmatpush1.bf16.msra.mxu0 %v3908
        %4145 = vmatprep.subr.bf16.mxu0 %v3905
        %4146 = vmatpush1.bf16.msra.mxu0 %v3904
        %4147 = vmatprep.subr.bf16.mxu0 %v3901
        %4148 = vmatpush1.bf16.msra.mxu0 %v3900
        %4149 = vmatprep.subr.bf16.mxu0 %v3897
        %4150 = vmatpush1.bf16.msra.mxu0 %v3896
        %4151 = vmatprep.subr.bf16.mxu0 %v3893
        %4152 = vmatpush1.bf16.msra.mxu0 %v3892
        %4153 = vmatprep.subr.bf16.mxu0 %v3953
        %4154 = vmatpush2.bf16.msra.mxu0 %v3952
        %4155 = vmatprep.subr.bf16.mxu0 %v3949
        %4156 = vmatpush2.bf16.msra.mxu0 %v3948
        %4157 = vmatprep.subr.bf16.mxu0 %v3945
        %4158 = vmatpush2.bf16.msra.mxu0 %v3944
        %4159 = vmatprep.subr.bf16.mxu0 %v3941
        %4160 = vmatpush2.bf16.msra.mxu0 %v3940
        %4161 = vmatprep.subr.bf16.mxu0 %v3937
        %4162 = vmatpush2.bf16.msra.mxu0 %v3936
        %4163 = vmatprep.subr.bf16.mxu0 %v3933
        %4164 = vmatpush2.bf16.msra.mxu0 %v3932
        %4165 = vmatprep.subr.bf16.mxu0 %v3929
        %4166 = vmatpush2.bf16.msra.mxu0 %v3928
        %4167 = vmatprep.subr.bf16.mxu0 %v3925
        %4168 = vmatpush2.bf16.msra.mxu0 %v3924
        %4169 = vmatprep.mubr.bf16.mxu0 %v3289
        %4170 = vmatmul.mubr.bf16.gmra.mxu0 %v3288
        %v4171 = vpop.f32.mrf.mxu0
        %v4172 = vadd.f32 %v4119, %v4171
        %v4173 = vpop.f32.mrf.mxu0
        %v4174 = vadd.f32 %v4121, %v4173
        %v4175 = vpop.f32.mrf.mxu0
        %v4176 = vadd.f32 %v4123, %v4175
        %v4177 = vpop.f32.mrf.mxu0
        %v4178 = vadd.f32 %v4125, %v4177
        %4179 = vmatprep.mubr.bf16.mxu0 %v3293
        %4180 = vmatmul.mubr.bf16.gmra.mxu0 %v3292
        %v4181 = vpop.f32.mrf.mxu0
        %v4182 = vadd.f32 %v4129, %v4181
        %v4183 = vpop.f32.mrf.mxu0
        %v4184 = vadd.f32 %v4131, %v4183
        %v4185 = vpop.f32.mrf.mxu0
        %v4186 = vadd.f32 %v4133, %v4185
        %v4187 = vpop.f32.mrf.mxu0
        %v4188 = vadd.f32 %v4135, %v4187
        %4189 = vdwg.mxu0
        %4190 = vmatprep.subr.bf16.mxu0 %v3859
        %4191 = vmatpush1.bf16.msra.mxu0 %v3858
        %4192 = vmatprep.subr.bf16.mxu0 %v3855
        %4193 = vmatpush1.bf16.msra.mxu0 %v3854
        %4194 = vmatprep.subr.bf16.mxu0 %v3851
        %4195 = vmatpush1.bf16.msra.mxu0 %v3850
        %4196 = vmatprep.subr.bf16.mxu0 %v3847
        %4197 = vmatpush1.bf16.msra.mxu0 %v3846
        %4198 = vmatprep.subr.bf16.mxu0 %v3843
        %4199 = vmatpush1.bf16.msra.mxu0 %v3842
        %4200 = vmatprep.subr.bf16.mxu0 %v3839
        %4201 = vmatpush1.bf16.msra.mxu0 %v3838
        %4202 = vmatprep.subr.bf16.mxu0 %v3835
        %4203 = vmatpush1.bf16.msra.mxu0 %v3834
        %4204 = vmatprep.subr.bf16.mxu0 %v3831
        %4205 = vmatpush1.bf16.msra.mxu0 %v3830
        %4206 = vmatprep.subr.bf16.mxu0 %v3891
        %4207 = vmatpush2.bf16.msra.mxu0 %v3890
        %4208 = vmatprep.subr.bf16.mxu0 %v3887
        %4209 = vmatpush2.bf16.msra.mxu0 %v3886
        %4210 = vmatprep.subr.bf16.mxu0 %v3883
        %4211 = vmatpush2.bf16.msra.mxu0 %v3882
        %4212 = vmatprep.subr.bf16.mxu0 %v3879
        %4213 = vmatpush2.bf16.msra.mxu0 %v3878
        %4214 = vmatprep.subr.bf16.mxu0 %v3875
        %4215 = vmatpush2.bf16.msra.mxu0 %v3874
        %4216 = vmatprep.subr.bf16.mxu0 %v3871
        %4217 = vmatpush2.bf16.msra.mxu0 %v3870
        %4218 = vmatprep.subr.bf16.mxu0 %v3867
        %4219 = vmatpush2.bf16.msra.mxu0 %v3866
        %4220 = vmatprep.subr.bf16.mxu0 %v3863
        %4221 = vmatpush2.bf16.msra.mxu0 %v3862
        %4222 = vmatprep.mubr.bf16.mxu0 %v3287
        %4223 = vmatmul.mubr.bf16.gmra.mxu0 %v3286
        %v4224 = vpop.f32.mrf.mxu0
        %v4225 = vadd.f32 %v3435, %v4224
        %v4226 = vpop.f32.mrf.mxu0
        %v4227 = vadd.f32 %v3439, %v4226
        %v4228 = vpop.f32.mrf.mxu0
        %v4229 = vadd.f32 %v3435, %v4228
        %v4230 = vpop.f32.mrf.mxu0
        %v4231 = vadd.f32 %v3439, %v4230
        %4232 = vmatprep.mubr.bf16.mxu0 %v3291
        %4233 = vmatmul.mubr.bf16.gmra.mxu0 %v3290
        %v4234 = vpop.f32.mrf.mxu0
        %v4235 = vadd.f32 %v3435, %v4234
        %v4236 = vpop.f32.mrf.mxu0
        %v4237 = vadd.f32 %v3439, %v4236
        %v4238 = vpop.f32.mrf.mxu0
        %v4239 = vadd.f32 %v3435, %v4238
        %v4240 = vpop.f32.mrf.mxu0
        %v4241 = vadd.f32 %v3439, %v4240
        %4242 = vdwg.mxu0
        %4243 = vmatprep.subr.bf16.mxu0 %v3923
        %4244 = vmatpush1.bf16.msra.mxu0 %v3922
        %4245 = vmatprep.subr.bf16.mxu0 %v3919
        %4246 = vmatpush1.bf16.msra.mxu0 %v3918
        %4247 = vmatprep.subr.bf16.mxu0 %v3915
        %4248 = vmatpush1.bf16.msra.mxu0 %v3914
        %4249 = vmatprep.subr.bf16.mxu0 %v3911
        %4250 = vmatpush1.bf16.msra.mxu0 %v3910
        %4251 = vmatprep.subr.bf16.mxu0 %v3907
        %4252 = vmatpush1.bf16.msra.mxu0 %v3906
        %4253 = vmatprep.subr.bf16.mxu0 %v3903
        %4254 = vmatpush1.bf16.msra.mxu0 %v3902
        %4255 = vmatprep.subr.bf16.mxu0 %v3899
        %4256 = vmatpush1.bf16.msra.mxu0 %v3898
        %4257 = vmatprep.subr.bf16.mxu0 %v3895
        %4258 = vmatpush1.bf16.msra.mxu0 %v3894
        %4259 = vmatprep.subr.bf16.mxu0 %v3955
        %4260 = vmatpush2.bf16.msra.mxu0 %v3954
        %4261 = vmatprep.subr.bf16.mxu0 %v3951
        %4262 = vmatpush2.bf16.msra.mxu0 %v3950
        %4263 = vmatprep.subr.bf16.mxu0 %v3947
        %4264 = vmatpush2.bf16.msra.mxu0 %v3946
        %4265 = vmatprep.subr.bf16.mxu0 %v3943
        %4266 = vmatpush2.bf16.msra.mxu0 %v3942
        %4267 = vmatprep.subr.bf16.mxu0 %v3939
        %4268 = vmatpush2.bf16.msra.mxu0 %v3938
        %4269 = vmatprep.subr.bf16.mxu0 %v3935
        %4270 = vmatpush2.bf16.msra.mxu0 %v3934
        %4271 = vmatprep.subr.bf16.mxu0 %v3931
        %4272 = vmatpush2.bf16.msra.mxu0 %v3930
        %4273 = vmatprep.subr.bf16.mxu0 %v3927
        %4274 = vmatpush2.bf16.msra.mxu0 %v3926
        %4275 = vmatprep.mubr.bf16.mxu0 %v3289
        %4276 = vmatmul.mubr.bf16.gmra.mxu0 %v3288
        %v4277 = vpop.f32.mrf.mxu0
        %v4278 = vadd.f32 %v4225, %v4277
        %v4279 = vpop.f32.mrf.mxu0
        %v4280 = vadd.f32 %v4227, %v4279
        %v4281 = vpop.f32.mrf.mxu0
        %v4282 = vadd.f32 %v4229, %v4281
        %v4283 = vpop.f32.mrf.mxu0
        %v4284 = vadd.f32 %v4231, %v4283
        %4285 = vmatprep.mubr.bf16.mxu0 %v3293
        %4286 = vmatmul.mubr.bf16.gmra.mxu0 %v3292
        %v4287 = vpop.f32.mrf.mxu0
        %v4288 = vadd.f32 %v4235, %v4287
        %v4289 = vpop.f32.mrf.mxu0
        %v4290 = vadd.f32 %v4237, %v4289
        %v4291 = vpop.f32.mrf.mxu0
        %v4292 = vadd.f32 %v4239, %v4291
        %v4293 = vpop.f32.mrf.mxu0
        %v4294 = vadd.f32 %v4241, %v4293
        %4295 = vdwg.mxu0
        %v4296 = vmax.f32 %v4172, 0.0
        %v4297 = vmax.f32 %v4174, 0.0
        %v4298 = vmax.f32 %v4278, 0.0
        %v4299 = vmax.f32 %v4280, 0.0
        %v4300 = vmax.f32 %v4176, 0.0
        %v4301 = vmax.f32 %v4178, 0.0
        %v4302 = vmax.f32 %v4282, 0.0
        %v4303 = vmax.f32 %v4284, 0.0
        %v4304 = vmax.f32 %v4182, 0.0
        %v4305 = vmax.f32 %v4184, 0.0
        %v4306 = vmax.f32 %v4288, 0.0
        %v4307 = vmax.f32 %v4290, 0.0
        %v4308 = vmax.f32 %v4186, 0.0
        %v4309 = vmax.f32 %v4188, 0.0
        %v4310 = vmax.f32 %v4292, 0.0
        %v4311 = vmax.f32 %v4294, 0.0
        %v4312 = vpack.c.bf16 %v4300, %v4296
        %v4313 = vpack.c.bf16 %v4301, %v4297
        %v4314 = vpack.c.bf16 %v4302, %v4298
        %v4315 = vpack.c.bf16 %v4303, %v4299
        %v4316 = vpack.c.bf16 %v4308, %v4304
        %v4317 = vpack.c.bf16 %v4309, %v4305
        %v4318 = vpack.c.bf16 %v4310, %v4306
        %v4319 = vpack.c.bf16 %v4311, %v4307
        %s4320 = scalar_lea.vmem %s377, 1024 [#allocation8]
        %v4321 = vld [vmem:[%s4320] sm:$0xff]
        %v4322 = vld [vmem:[%s4320 + $0x8] sm:$0xff]
        %v4323 = vld [vmem:[%s4320 + $0x10] sm:$0xff]
        %v4324 = vld [vmem:[%s4320 + $0x18] sm:$0xff]
        %v4325 = vld [vmem:[%s4320 + $0x20] sm:$0xff]
        %v4326 = vld [vmem:[%s4320 + $0x28] sm:$0xff]
        %v4327 = vld [vmem:[%s4320 + $0x30] sm:$0xff]
        %v4328 = vld [vmem:[%s4320 + $0x38] sm:$0xff]
        %v4329 = vld [vmem:[%s4320 + $0x40] sm:$0xff]
        %v4330 = vld [vmem:[%s4320 + $0x48] sm:$0xff]
        %v4331 = vld [vmem:[%s4320 + $0x50] sm:$0xff]
        %v4332 = vld [vmem:[%s4320 + $0x58] sm:$0xff]
        %v4333 = vld [vmem:[%s4320 + $0x60] sm:$0xff]
        %v4334 = vld [vmem:[%s4320 + $0x68] sm:$0xff]
        %v4335 = vld [vmem:[%s4320 + $0x70] sm:$0xff]
        %v4336 = vld [vmem:[%s4320 + $0x78] sm:$0xff]
        %v4337 = vld [vmem:[%s4320 + $0x80] sm:$0xff]
        %v4338 = vld [vmem:[%s4320 + $0x88] sm:$0xff]
        %v4339 = vld [vmem:[%s4320 + $0x90] sm:$0xff]
        %v4340 = vld [vmem:[%s4320 + $0x98] sm:$0xff]
        %v4341 = vld [vmem:[%s4320 + $0xa0] sm:$0xff]
        %v4342 = vld [vmem:[%s4320 + $0xa8] sm:$0xff]
        %v4343 = vld [vmem:[%s4320 + $0xb0] sm:$0xff]
        %v4344 = vld [vmem:[%s4320 + $0xb8] sm:$0xff]
        %v4345 = vld [vmem:[%s4320 + $0xc0] sm:$0xff]
        %v4346 = vld [vmem:[%s4320 + $0xc8] sm:$0xff]
        %v4347 = vld [vmem:[%s4320 + $0xd0] sm:$0xff]
        %v4348 = vld [vmem:[%s4320 + $0xd8] sm:$0xff]
        %v4349 = vld [vmem:[%s4320 + $0xe0] sm:$0xff]
        %v4350 = vld [vmem:[%s4320 + $0xe8] sm:$0xff]
        %v4351 = vld [vmem:[%s4320 + $0xf0] sm:$0xff]
        %v4352 = vld [vmem:[%s4320 + $0xf8] sm:$0xff]
        %v4353 = vld [vmem:[%s4320 + $0x100] sm:$0xff]
        %v4354 = vld [vmem:[%s4320 + $0x108] sm:$0xff]
        %v4355 = vld [vmem:[%s4320 + $0x110] sm:$0xff]
        %v4356 = vld [vmem:[%s4320 + $0x118] sm:$0xff]
        %v4357 = vld [vmem:[%s4320 + $0x120] sm:$0xff]
        %v4358 = vld [vmem:[%s4320 + $0x128] sm:$0xff]
        %v4359 = vld [vmem:[%s4320 + $0x130] sm:$0xff]
        %v4360 = vld [vmem:[%s4320 + $0x138] sm:$0xff]
        %v4361 = vld [vmem:[%s4320 + $0x140] sm:$0xff]
        %v4362 = vld [vmem:[%s4320 + $0x148] sm:$0xff]
        %v4363 = vld [vmem:[%s4320 + $0x150] sm:$0xff]
        %v4364 = vld [vmem:[%s4320 + $0x158] sm:$0xff]
        %v4365 = vld [vmem:[%s4320 + $0x160] sm:$0xff]
        %v4366 = vld [vmem:[%s4320 + $0x168] sm:$0xff]
        %v4367 = vld [vmem:[%s4320 + $0x170] sm:$0xff]
        %v4368 = vld [vmem:[%s4320 + $0x178] sm:$0xff]
        %v4369 = vld [vmem:[%s4320 + $0x180] sm:$0xff]
        %v4370 = vld [vmem:[%s4320 + $0x188] sm:$0xff]
        %v4371 = vld [vmem:[%s4320 + $0x190] sm:$0xff]
        %v4372 = vld [vmem:[%s4320 + $0x198] sm:$0xff]
        %v4373 = vld [vmem:[%s4320 + $0x1a0] sm:$0xff]
        %v4374 = vld [vmem:[%s4320 + $0x1a8] sm:$0xff]
        %v4375 = vld [vmem:[%s4320 + $0x1b0] sm:$0xff]
        %v4376 = vld [vmem:[%s4320 + $0x1b8] sm:$0xff]
        %v4377 = vld [vmem:[%s4320 + $0x1c0] sm:$0xff]
        %v4378 = vld [vmem:[%s4320 + $0x1c8] sm:$0xff]
        %v4379 = vld [vmem:[%s4320 + $0x1d0] sm:$0xff]
        %v4380 = vld [vmem:[%s4320 + $0x1d8] sm:$0xff]
        %v4381 = vld [vmem:[%s4320 + $0x1e0] sm:$0xff]
        %v4382 = vld [vmem:[%s4320 + $0x1e8] sm:$0xff]
        %v4383 = vld [vmem:[%s4320 + $0x1f0] sm:$0xff]
        %v4384 = vld [vmem:[%s4320 + $0x1f8] sm:$0xff]
        %v4385 = vld [vmem:[%s4320 + $0x200] sm:$0xff]
        %v4386 = vld [vmem:[%s4320 + $0x208] sm:$0xff]
        %v4387 = vld [vmem:[%s4320 + $0x210] sm:$0xff]
        %v4388 = vld [vmem:[%s4320 + $0x218] sm:$0xff]
        %v4389 = vld [vmem:[%s4320 + $0x220] sm:$0xff]
        %v4390 = vld [vmem:[%s4320 + $0x228] sm:$0xff]
        %v4391 = vld [vmem:[%s4320 + $0x230] sm:$0xff]
        %v4392 = vld [vmem:[%s4320 + $0x238] sm:$0xff]
        %v4393 = vld [vmem:[%s4320 + $0x240] sm:$0xff]
        %v4394 = vld [vmem:[%s4320 + $0x248] sm:$0xff]
        %v4395 = vld [vmem:[%s4320 + $0x250] sm:$0xff]
        %v4396 = vld [vmem:[%s4320 + $0x258] sm:$0xff]
        %v4397 = vld [vmem:[%s4320 + $0x260] sm:$0xff]
        %v4398 = vld [vmem:[%s4320 + $0x268] sm:$0xff]
        %v4399 = vld [vmem:[%s4320 + $0x270] sm:$0xff]
        %v4400 = vld [vmem:[%s4320 + $0x278] sm:$0xff]
        %v4401 = vld [vmem:[%s4320 + $0x280] sm:$0xff]
        %v4402 = vld [vmem:[%s4320 + $0x288] sm:$0xff]
        %v4403 = vld [vmem:[%s4320 + $0x290] sm:$0xff]
        %v4404 = vld [vmem:[%s4320 + $0x298] sm:$0xff]
        %v4405 = vld [vmem:[%s4320 + $0x2a0] sm:$0xff]
        %v4406 = vld [vmem:[%s4320 + $0x2a8] sm:$0xff]
        %v4407 = vld [vmem:[%s4320 + $0x2b0] sm:$0xff]
        %v4408 = vld [vmem:[%s4320 + $0x2b8] sm:$0xff]
        %v4409 = vld [vmem:[%s4320 + $0x2c0] sm:$0xff]
        %v4410 = vld [vmem:[%s4320 + $0x2c8] sm:$0xff]
        %v4411 = vld [vmem:[%s4320 + $0x2d0] sm:$0xff]
        %v4412 = vld [vmem:[%s4320 + $0x2d8] sm:$0xff]
        %v4413 = vld [vmem:[%s4320 + $0x2e0] sm:$0xff]
        %v4414 = vld [vmem:[%s4320 + $0x2e8] sm:$0xff]
        %v4415 = vld [vmem:[%s4320 + $0x2f0] sm:$0xff]
        %v4416 = vld [vmem:[%s4320 + $0x2f8] sm:$0xff]
        %v4417 = vld [vmem:[%s4320 + $0x300] sm:$0xff]
        %v4418 = vld [vmem:[%s4320 + $0x308] sm:$0xff]
        %v4419 = vld [vmem:[%s4320 + $0x310] sm:$0xff]
        %v4420 = vld [vmem:[%s4320 + $0x318] sm:$0xff]
        %v4421 = vld [vmem:[%s4320 + $0x320] sm:$0xff]
        %v4422 = vld [vmem:[%s4320 + $0x328] sm:$0xff]
        %v4423 = vld [vmem:[%s4320 + $0x330] sm:$0xff]
        %v4424 = vld [vmem:[%s4320 + $0x338] sm:$0xff]
        %v4425 = vld [vmem:[%s4320 + $0x340] sm:$0xff]
        %v4426 = vld [vmem:[%s4320 + $0x348] sm:$0xff]
        %v4427 = vld [vmem:[%s4320 + $0x350] sm:$0xff]
        %v4428 = vld [vmem:[%s4320 + $0x358] sm:$0xff]
        %v4429 = vld [vmem:[%s4320 + $0x360] sm:$0xff]
        %v4430 = vld [vmem:[%s4320 + $0x368] sm:$0xff]
        %v4431 = vld [vmem:[%s4320 + $0x370] sm:$0xff]
        %v4432 = vld [vmem:[%s4320 + $0x378] sm:$0xff]
        %v4433 = vld [vmem:[%s4320 + $0x380] sm:$0xff]
        %v4434 = vld [vmem:[%s4320 + $0x388] sm:$0xff]
        %v4435 = vld [vmem:[%s4320 + $0x390] sm:$0xff]
        %v4436 = vld [vmem:[%s4320 + $0x398] sm:$0xff]
        %v4437 = vld [vmem:[%s4320 + $0x3a0] sm:$0xff]
        %v4438 = vld [vmem:[%s4320 + $0x3a8] sm:$0xff]
        %v4439 = vld [vmem:[%s4320 + $0x3b0] sm:$0xff]
        %v4440 = vld [vmem:[%s4320 + $0x3b8] sm:$0xff]
        %v4441 = vld [vmem:[%s4320 + $0x3c0] sm:$0xff]
        %v4442 = vld [vmem:[%s4320 + $0x3c8] sm:$0xff]
        %v4443 = vld [vmem:[%s4320 + $0x3d0] sm:$0xff]
        %v4444 = vld [vmem:[%s4320 + $0x3d8] sm:$0xff]
        %v4445 = vld [vmem:[%s4320 + $0x3e0] sm:$0xff]
        %v4446 = vld [vmem:[%s4320 + $0x3e8] sm:$0xff]
        %v4447 = vld [vmem:[%s4320 + $0x3f0] sm:$0xff]
        %v4448 = vld [vmem:[%s4320 + $0x3f8] sm:$0xff]
        %v4450 = vlaneseq
        %v4451 = vshrl.u32 %v4450, 7
        %v4452 = vsub.s32 0, %v4451
        %v4453 = vrot.slane %v3092, %v4452
        %v4454 = vlaneseq
        %v4455 = vshrl.u32 %v4454, 7
        %v4456 = vsub.s32 1, %v4455
        %v4457 = vrot.slane %v3092, %v4456
        %v4458 = vlaneseq
        %v4459 = vshrl.u32 %v4458, 7
        %v4460 = vsub.s32 2, %v4459
        %v4461 = vrot.slane %v3092, %v4460
        %v4462 = vlaneseq
        %v4463 = vshrl.u32 %v4462, 7
        %v4464 = vsub.s32 3, %v4463
        %v4465 = vrot.slane %v3092, %v4464
        %v4598 = vunpack.c.l.b16 %v4321
        %v4599 = vunpack.c.h.b16 %v4321
        %v4600 = vunpack.c.l.b16 %v4322
        %v4601 = vunpack.c.h.b16 %v4322
        %v4602 = vunpack.c.l.b16 %v4323
        %v4603 = vunpack.c.h.b16 %v4323
        %v4604 = vunpack.c.l.b16 %v4324
        %v4605 = vunpack.c.h.b16 %v4324
        %v4606 = vunpack.c.l.b16 %v4325
        %v4607 = vunpack.c.h.b16 %v4325
        %v4608 = vunpack.c.l.b16 %v4326
        %v4609 = vunpack.c.h.b16 %v4326
        %v4610 = vunpack.c.l.b16 %v4327
        %v4611 = vunpack.c.h.b16 %v4327
        %v4612 = vunpack.c.l.b16 %v4328
        %v4613 = vunpack.c.h.b16 %v4328
        %v4614 = vunpack.c.l.b16 %v4329
        %v4615 = vunpack.c.h.b16 %v4329
        %v4616 = vunpack.c.l.b16 %v4330
        %v4617 = vunpack.c.h.b16 %v4330
        %v4618 = vunpack.c.l.b16 %v4331
        %v4619 = vunpack.c.h.b16 %v4331
        %v4620 = vunpack.c.l.b16 %v4332
        %v4621 = vunpack.c.h.b16 %v4332
        %v4622 = vunpack.c.l.b16 %v4333
        %v4623 = vunpack.c.h.b16 %v4333
        %v4624 = vunpack.c.l.b16 %v4334
        %v4625 = vunpack.c.h.b16 %v4334
        %v4626 = vunpack.c.l.b16 %v4335
        %v4627 = vunpack.c.h.b16 %v4335
        %v4628 = vunpack.c.l.b16 %v4336
        %v4629 = vunpack.c.h.b16 %v4336
        %v4630 = vunpack.c.l.b16 %v4337
        %v4631 = vunpack.c.h.b16 %v4337
        %v4632 = vunpack.c.l.b16 %v4338
        %v4633 = vunpack.c.h.b16 %v4338
        %v4634 = vunpack.c.l.b16 %v4339
        %v4635 = vunpack.c.h.b16 %v4339
        %v4636 = vunpack.c.l.b16 %v4340
        %v4637 = vunpack.c.h.b16 %v4340
        %v4638 = vunpack.c.l.b16 %v4341
        %v4639 = vunpack.c.h.b16 %v4341
        %v4640 = vunpack.c.l.b16 %v4342
        %v4641 = vunpack.c.h.b16 %v4342
        %v4642 = vunpack.c.l.b16 %v4343
        %v4643 = vunpack.c.h.b16 %v4343
        %v4644 = vunpack.c.l.b16 %v4344
        %v4645 = vunpack.c.h.b16 %v4344
        %v4646 = vunpack.c.l.b16 %v4345
        %v4647 = vunpack.c.h.b16 %v4345
        %v4648 = vunpack.c.l.b16 %v4346
        %v4649 = vunpack.c.h.b16 %v4346
        %v4650 = vunpack.c.l.b16 %v4347
        %v4651 = vunpack.c.h.b16 %v4347
        %v4652 = vunpack.c.l.b16 %v4348
        %v4653 = vunpack.c.h.b16 %v4348
        %v4654 = vunpack.c.l.b16 %v4349
        %v4655 = vunpack.c.h.b16 %v4349
        %v4656 = vunpack.c.l.b16 %v4350
        %v4657 = vunpack.c.h.b16 %v4350
        %v4658 = vunpack.c.l.b16 %v4351
        %v4659 = vunpack.c.h.b16 %v4351
        %v4660 = vunpack.c.l.b16 %v4352
        %v4661 = vunpack.c.h.b16 %v4352
        %v4662 = vunpack.c.l.b16 %v4353
        %v4663 = vunpack.c.h.b16 %v4353
        %v4664 = vunpack.c.l.b16 %v4354
        %v4665 = vunpack.c.h.b16 %v4354
        %v4666 = vunpack.c.l.b16 %v4355
        %v4667 = vunpack.c.h.b16 %v4355
        %v4668 = vunpack.c.l.b16 %v4356
        %v4669 = vunpack.c.h.b16 %v4356
        %v4670 = vunpack.c.l.b16 %v4357
        %v4671 = vunpack.c.h.b16 %v4357
        %v4672 = vunpack.c.l.b16 %v4358
        %v4673 = vunpack.c.h.b16 %v4358
        %v4674 = vunpack.c.l.b16 %v4359
        %v4675 = vunpack.c.h.b16 %v4359
        %v4676 = vunpack.c.l.b16 %v4360
        %v4677 = vunpack.c.h.b16 %v4360
        %v4678 = vunpack.c.l.b16 %v4361
        %v4679 = vunpack.c.h.b16 %v4361
        %v4680 = vunpack.c.l.b16 %v4362
        %v4681 = vunpack.c.h.b16 %v4362
        %v4682 = vunpack.c.l.b16 %v4363
        %v4683 = vunpack.c.h.b16 %v4363
        %v4684 = vunpack.c.l.b16 %v4364
        %v4685 = vunpack.c.h.b16 %v4364
        %v4686 = vunpack.c.l.b16 %v4365
        %v4687 = vunpack.c.h.b16 %v4365
        %v4688 = vunpack.c.l.b16 %v4366
        %v4689 = vunpack.c.h.b16 %v4366
        %v4690 = vunpack.c.l.b16 %v4367
        %v4691 = vunpack.c.h.b16 %v4367
        %v4692 = vunpack.c.l.b16 %v4368
        %v4693 = vunpack.c.h.b16 %v4368
        %v4694 = vunpack.c.l.b16 %v4369
        %v4695 = vunpack.c.h.b16 %v4369
        %v4696 = vunpack.c.l.b16 %v4370
        %v4697 = vunpack.c.h.b16 %v4370
        %v4698 = vunpack.c.l.b16 %v4371
        %v4699 = vunpack.c.h.b16 %v4371
        %v4700 = vunpack.c.l.b16 %v4372
        %v4701 = vunpack.c.h.b16 %v4372
        %v4702 = vunpack.c.l.b16 %v4373
        %v4703 = vunpack.c.h.b16 %v4373
        %v4704 = vunpack.c.l.b16 %v4374
        %v4705 = vunpack.c.h.b16 %v4374
        %v4706 = vunpack.c.l.b16 %v4375
        %v4707 = vunpack.c.h.b16 %v4375
        %v4708 = vunpack.c.l.b16 %v4376
        %v4709 = vunpack.c.h.b16 %v4376
        %v4710 = vunpack.c.l.b16 %v4377
        %v4711 = vunpack.c.h.b16 %v4377
        %v4712 = vunpack.c.l.b16 %v4378
        %v4713 = vunpack.c.h.b16 %v4378
        %v4714 = vunpack.c.l.b16 %v4379
        %v4715 = vunpack.c.h.b16 %v4379
        %v4716 = vunpack.c.l.b16 %v4380
        %v4717 = vunpack.c.h.b16 %v4380
        %v4718 = vunpack.c.l.b16 %v4381
        %v4719 = vunpack.c.h.b16 %v4381
        %v4720 = vunpack.c.l.b16 %v4382
        %v4721 = vunpack.c.h.b16 %v4382
        %v4722 = vunpack.c.l.b16 %v4383
        %v4723 = vunpack.c.h.b16 %v4383
        %v4724 = vunpack.c.l.b16 %v4384
        %v4725 = vunpack.c.h.b16 %v4384
        %v4726 = vunpack.c.l.b16 %v4385
        %v4727 = vunpack.c.h.b16 %v4385
        %v4728 = vunpack.c.l.b16 %v4386
        %v4729 = vunpack.c.h.b16 %v4386
        %v4730 = vunpack.c.l.b16 %v4387
        %v4731 = vunpack.c.h.b16 %v4387
        %v4732 = vunpack.c.l.b16 %v4388
        %v4733 = vunpack.c.h.b16 %v4388
        %v4734 = vunpack.c.l.b16 %v4389
        %v4735 = vunpack.c.h.b16 %v4389
        %v4736 = vunpack.c.l.b16 %v4390
        %v4737 = vunpack.c.h.b16 %v4390
        %v4738 = vunpack.c.l.b16 %v4391
        %v4739 = vunpack.c.h.b16 %v4391
        %v4740 = vunpack.c.l.b16 %v4392
        %v4741 = vunpack.c.h.b16 %v4392
        %v4742 = vunpack.c.l.b16 %v4393
        %v4743 = vunpack.c.h.b16 %v4393
        %v4744 = vunpack.c.l.b16 %v4394
        %v4745 = vunpack.c.h.b16 %v4394
        %v4746 = vunpack.c.l.b16 %v4395
        %v4747 = vunpack.c.h.b16 %v4395
        %v4748 = vunpack.c.l.b16 %v4396
        %v4749 = vunpack.c.h.b16 %v4396
        %v4750 = vunpack.c.l.b16 %v4397
        %v4751 = vunpack.c.h.b16 %v4397
        %v4752 = vunpack.c.l.b16 %v4398
        %v4753 = vunpack.c.h.b16 %v4398
        %v4754 = vunpack.c.l.b16 %v4399
        %v4755 = vunpack.c.h.b16 %v4399
        %v4756 = vunpack.c.l.b16 %v4400
        %v4757 = vunpack.c.h.b16 %v4400
        %v4758 = vunpack.c.l.b16 %v4401
        %v4759 = vunpack.c.h.b16 %v4401
        %v4760 = vunpack.c.l.b16 %v4402
        %v4761 = vunpack.c.h.b16 %v4402
        %v4762 = vunpack.c.l.b16 %v4403
        %v4763 = vunpack.c.h.b16 %v4403
        %v4764 = vunpack.c.l.b16 %v4404
        %v4765 = vunpack.c.h.b16 %v4404
        %v4766 = vunpack.c.l.b16 %v4405
        %v4767 = vunpack.c.h.b16 %v4405
        %v4768 = vunpack.c.l.b16 %v4406
        %v4769 = vunpack.c.h.b16 %v4406
        %v4770 = vunpack.c.l.b16 %v4407
        %v4771 = vunpack.c.h.b16 %v4407
        %v4772 = vunpack.c.l.b16 %v4408
        %v4773 = vunpack.c.h.b16 %v4408
        %v4774 = vunpack.c.l.b16 %v4409
        %v4775 = vunpack.c.h.b16 %v4409
        %v4776 = vunpack.c.l.b16 %v4410
        %v4777 = vunpack.c.h.b16 %v4410
        %v4778 = vunpack.c.l.b16 %v4411
        %v4779 = vunpack.c.h.b16 %v4411
        %v4780 = vunpack.c.l.b16 %v4412
        %v4781 = vunpack.c.h.b16 %v4412
        %v4782 = vunpack.c.l.b16 %v4413
        %v4783 = vunpack.c.h.b16 %v4413
        %v4784 = vunpack.c.l.b16 %v4414
        %v4785 = vunpack.c.h.b16 %v4414
        %v4786 = vunpack.c.l.b16 %v4415
        %v4787 = vunpack.c.h.b16 %v4415
        %v4788 = vunpack.c.l.b16 %v4416
        %v4789 = vunpack.c.h.b16 %v4416
        %v4790 = vunpack.c.l.b16 %v4417
        %v4791 = vunpack.c.h.b16 %v4417
        %v4792 = vunpack.c.l.b16 %v4418
        %v4793 = vunpack.c.h.b16 %v4418
        %v4794 = vunpack.c.l.b16 %v4419
        %v4795 = vunpack.c.h.b16 %v4419
        %v4796 = vunpack.c.l.b16 %v4420
        %v4797 = vunpack.c.h.b16 %v4420
        %v4798 = vunpack.c.l.b16 %v4421
        %v4799 = vunpack.c.h.b16 %v4421
        %v4800 = vunpack.c.l.b16 %v4422
        %v4801 = vunpack.c.h.b16 %v4422
        %v4802 = vunpack.c.l.b16 %v4423
        %v4803 = vunpack.c.h.b16 %v4423
        %v4804 = vunpack.c.l.b16 %v4424
        %v4805 = vunpack.c.h.b16 %v4424
        %v4806 = vunpack.c.l.b16 %v4425
        %v4807 = vunpack.c.h.b16 %v4425
        %v4808 = vunpack.c.l.b16 %v4426
        %v4809 = vunpack.c.h.b16 %v4426
        %v4810 = vunpack.c.l.b16 %v4427
        %v4811 = vunpack.c.h.b16 %v4427
        %v4812 = vunpack.c.l.b16 %v4428
        %v4813 = vunpack.c.h.b16 %v4428
        %v4814 = vunpack.c.l.b16 %v4429
        %v4815 = vunpack.c.h.b16 %v4429
        %v4816 = vunpack.c.l.b16 %v4430
        %v4817 = vunpack.c.h.b16 %v4430
        %v4818 = vunpack.c.l.b16 %v4431
        %v4819 = vunpack.c.h.b16 %v4431
        %v4820 = vunpack.c.l.b16 %v4432
        %v4821 = vunpack.c.h.b16 %v4432
        %v4822 = vunpack.c.l.b16 %v4433
        %v4823 = vunpack.c.h.b16 %v4433
        %v4824 = vunpack.c.l.b16 %v4434
        %v4825 = vunpack.c.h.b16 %v4434
        %v4826 = vunpack.c.l.b16 %v4435
        %v4827 = vunpack.c.h.b16 %v4435
        %v4828 = vunpack.c.l.b16 %v4436
        %v4829 = vunpack.c.h.b16 %v4436
        %v4830 = vunpack.c.l.b16 %v4437
        %v4831 = vunpack.c.h.b16 %v4437
        %v4832 = vunpack.c.l.b16 %v4438
        %v4833 = vunpack.c.h.b16 %v4438
        %v4834 = vunpack.c.l.b16 %v4439
        %v4835 = vunpack.c.h.b16 %v4439
        %v4836 = vunpack.c.l.b16 %v4440
        %v4837 = vunpack.c.h.b16 %v4440
        %v4838 = vunpack.c.l.b16 %v4441
        %v4839 = vunpack.c.h.b16 %v4441
        %v4840 = vunpack.c.l.b16 %v4442
        %v4841 = vunpack.c.h.b16 %v4442
        %v4842 = vunpack.c.l.b16 %v4443
        %v4843 = vunpack.c.h.b16 %v4443
        %v4844 = vunpack.c.l.b16 %v4444
        %v4845 = vunpack.c.h.b16 %v4444
        %v4846 = vunpack.c.l.b16 %v4445
        %v4847 = vunpack.c.h.b16 %v4445
        %v4848 = vunpack.c.l.b16 %v4446
        %v4849 = vunpack.c.h.b16 %v4446
        %v4850 = vunpack.c.l.b16 %v4447
        %v4851 = vunpack.c.h.b16 %v4447
        %v4852 = vunpack.c.l.b16 %v4448
        %v4853 = vunpack.c.h.b16 %v4448
        %v4854 = vpack.c.b16 %v4602, %v4598
        %v4855 = vpack.c.b16 %v4603, %v4599
        %v4856 = vpack.c.b16 %v4604, %v4600
        %v4857 = vpack.c.b16 %v4605, %v4601
        %v4858 = vpack.c.b16 %v4610, %v4606
        %v4859 = vpack.c.b16 %v4611, %v4607
        %v4860 = vpack.c.b16 %v4612, %v4608
        %v4861 = vpack.c.b16 %v4613, %v4609
        %v4862 = vpack.c.b16 %v4618, %v4614
        %v4863 = vpack.c.b16 %v4619, %v4615
        %v4864 = vpack.c.b16 %v4620, %v4616
        %v4865 = vpack.c.b16 %v4621, %v4617
        %v4866 = vpack.c.b16 %v4626, %v4622
        %v4867 = vpack.c.b16 %v4627, %v4623
        %v4868 = vpack.c.b16 %v4628, %v4624
        %v4869 = vpack.c.b16 %v4629, %v4625
        %v4870 = vpack.c.b16 %v4634, %v4630
        %v4871 = vpack.c.b16 %v4635, %v4631
        %v4872 = vpack.c.b16 %v4636, %v4632
        %v4873 = vpack.c.b16 %v4637, %v4633
        %v4874 = vpack.c.b16 %v4642, %v4638
        %v4875 = vpack.c.b16 %v4643, %v4639
        %v4876 = vpack.c.b16 %v4644, %v4640
        %v4877 = vpack.c.b16 %v4645, %v4641
        %v4878 = vpack.c.b16 %v4650, %v4646
        %v4879 = vpack.c.b16 %v4651, %v4647
        %v4880 = vpack.c.b16 %v4652, %v4648
        %v4881 = vpack.c.b16 %v4653, %v4649
        %v4882 = vpack.c.b16 %v4658, %v4654
        %v4883 = vpack.c.b16 %v4659, %v4655
        %v4884 = vpack.c.b16 %v4660, %v4656
        %v4885 = vpack.c.b16 %v4661, %v4657
        %v4886 = vpack.c.b16 %v4666, %v4662
        %v4887 = vpack.c.b16 %v4667, %v4663
        %v4888 = vpack.c.b16 %v4668, %v4664
        %v4889 = vpack.c.b16 %v4669, %v4665
        %v4890 = vpack.c.b16 %v4674, %v4670
        %v4891 = vpack.c.b16 %v4675, %v4671
        %v4892 = vpack.c.b16 %v4676, %v4672
        %v4893 = vpack.c.b16 %v4677, %v4673
        %v4894 = vpack.c.b16 %v4682, %v4678
        %v4895 = vpack.c.b16 %v4683, %v4679
        %v4896 = vpack.c.b16 %v4684, %v4680
        %v4897 = vpack.c.b16 %v4685, %v4681
        %v4898 = vpack.c.b16 %v4690, %v4686
        %v4899 = vpack.c.b16 %v4691, %v4687
        %v4900 = vpack.c.b16 %v4692, %v4688
        %v4901 = vpack.c.b16 %v4693, %v4689
        %v4902 = vpack.c.b16 %v4698, %v4694
        %v4903 = vpack.c.b16 %v4699, %v4695
        %v4904 = vpack.c.b16 %v4700, %v4696
        %v4905 = vpack.c.b16 %v4701, %v4697
        %v4906 = vpack.c.b16 %v4706, %v4702
        %v4907 = vpack.c.b16 %v4707, %v4703
        %v4908 = vpack.c.b16 %v4708, %v4704
        %v4909 = vpack.c.b16 %v4709, %v4705
        %v4910 = vpack.c.b16 %v4714, %v4710
        %v4911 = vpack.c.b16 %v4715, %v4711
        %v4912 = vpack.c.b16 %v4716, %v4712
        %v4913 = vpack.c.b16 %v4717, %v4713
        %v4914 = vpack.c.b16 %v4722, %v4718
        %v4915 = vpack.c.b16 %v4723, %v4719
        %v4916 = vpack.c.b16 %v4724, %v4720
        %v4917 = vpack.c.b16 %v4725, %v4721
        %v4918 = vpack.c.b16 %v4730, %v4726
        %v4919 = vpack.c.b16 %v4731, %v4727
        %v4920 = vpack.c.b16 %v4732, %v4728
        %v4921 = vpack.c.b16 %v4733, %v4729
        %v4922 = vpack.c.b16 %v4738, %v4734
        %v4923 = vpack.c.b16 %v4739, %v4735
        %v4924 = vpack.c.b16 %v4740, %v4736
        %v4925 = vpack.c.b16 %v4741, %v4737
        %v4926 = vpack.c.b16 %v4746, %v4742
        %v4927 = vpack.c.b16 %v4747, %v4743
        %v4928 = vpack.c.b16 %v4748, %v4744
        %v4929 = vpack.c.b16 %v4749, %v4745
        %v4930 = vpack.c.b16 %v4754, %v4750
        %v4931 = vpack.c.b16 %v4755, %v4751
        %v4932 = vpack.c.b16 %v4756, %v4752
        %v4933 = vpack.c.b16 %v4757, %v4753
        %v4934 = vpack.c.b16 %v4762, %v4758
        %v4935 = vpack.c.b16 %v4763, %v4759
        %v4936 = vpack.c.b16 %v4764, %v4760
        %v4937 = vpack.c.b16 %v4765, %v4761
        %v4938 = vpack.c.b16 %v4770, %v4766
        %v4939 = vpack.c.b16 %v4771, %v4767
        %v4940 = vpack.c.b16 %v4772, %v4768
        %v4941 = vpack.c.b16 %v4773, %v4769
        %v4942 = vpack.c.b16 %v4778, %v4774
        %v4943 = vpack.c.b16 %v4779, %v4775
        %v4944 = vpack.c.b16 %v4780, %v4776
        %v4945 = vpack.c.b16 %v4781, %v4777
        %v4946 = vpack.c.b16 %v4786, %v4782
        %v4947 = vpack.c.b16 %v4787, %v4783
        %v4948 = vpack.c.b16 %v4788, %v4784
        %v4949 = vpack.c.b16 %v4789, %v4785
        %v4950 = vpack.c.b16 %v4794, %v4790
        %v4951 = vpack.c.b16 %v4795, %v4791
        %v4952 = vpack.c.b16 %v4796, %v4792
        %v4953 = vpack.c.b16 %v4797, %v4793
        %v4954 = vpack.c.b16 %v4802, %v4798
        %v4955 = vpack.c.b16 %v4803, %v4799
        %v4956 = vpack.c.b16 %v4804, %v4800
        %v4957 = vpack.c.b16 %v4805, %v4801
        %v4958 = vpack.c.b16 %v4810, %v4806
        %v4959 = vpack.c.b16 %v4811, %v4807
        %v4960 = vpack.c.b16 %v4812, %v4808
        %v4961 = vpack.c.b16 %v4813, %v4809
        %v4962 = vpack.c.b16 %v4818, %v4814
        %v4963 = vpack.c.b16 %v4819, %v4815
        %v4964 = vpack.c.b16 %v4820, %v4816
        %v4965 = vpack.c.b16 %v4821, %v4817
        %v4966 = vpack.c.b16 %v4826, %v4822
        %v4967 = vpack.c.b16 %v4827, %v4823
        %v4968 = vpack.c.b16 %v4828, %v4824
        %v4969 = vpack.c.b16 %v4829, %v4825
        %v4970 = vpack.c.b16 %v4834, %v4830
        %v4971 = vpack.c.b16 %v4835, %v4831
        %v4972 = vpack.c.b16 %v4836, %v4832
        %v4973 = vpack.c.b16 %v4837, %v4833
        %v4974 = vpack.c.b16 %v4842, %v4838
        %v4975 = vpack.c.b16 %v4843, %v4839
        %v4976 = vpack.c.b16 %v4844, %v4840
        %v4977 = vpack.c.b16 %v4845, %v4841
        %v4978 = vpack.c.b16 %v4850, %v4846
        %v4979 = vpack.c.b16 %v4851, %v4847
        %v4980 = vpack.c.b16 %v4852, %v4848
        %v4981 = vpack.c.b16 %v4853, %v4849
        %5110 = vmatprep.subr.bf16.mxu0 %v4883
        %5111 = vmatpush1.bf16.msra.mxu0 %v4882
        %5112 = vmatprep.subr.bf16.mxu0 %v4879
        %5113 = vmatpush1.bf16.msra.mxu0 %v4878
        %5114 = vmatprep.subr.bf16.mxu0 %v4875
        %5115 = vmatpush1.bf16.msra.mxu0 %v4874
        %5116 = vmatprep.subr.bf16.mxu0 %v4871
        %5117 = vmatpush1.bf16.msra.mxu0 %v4870
        %5118 = vmatprep.subr.bf16.mxu0 %v4867
        %5119 = vmatpush1.bf16.msra.mxu0 %v4866
        %5120 = vmatprep.subr.bf16.mxu0 %v4863
        %5121 = vmatpush1.bf16.msra.mxu0 %v4862
        %5122 = vmatprep.subr.bf16.mxu0 %v4859
        %5123 = vmatpush1.bf16.msra.mxu0 %v4858
        %5124 = vmatprep.subr.bf16.mxu0 %v4855
        %5125 = vmatpush1.bf16.msra.mxu0 %v4854
        %5126 = vmatprep.subr.bf16.mxu0 %v4915
        %5127 = vmatpush2.bf16.msra.mxu0 %v4914
        %5128 = vmatprep.subr.bf16.mxu0 %v4911
        %5129 = vmatpush2.bf16.msra.mxu0 %v4910
        %5130 = vmatprep.subr.bf16.mxu0 %v4907
        %5131 = vmatpush2.bf16.msra.mxu0 %v4906
        %5132 = vmatprep.subr.bf16.mxu0 %v4903
        %5133 = vmatpush2.bf16.msra.mxu0 %v4902
        %5134 = vmatprep.subr.bf16.mxu0 %v4899
        %5135 = vmatpush2.bf16.msra.mxu0 %v4898
        %5136 = vmatprep.subr.bf16.mxu0 %v4895
        %5137 = vmatpush2.bf16.msra.mxu0 %v4894
        %5138 = vmatprep.subr.bf16.mxu0 %v4891
        %5139 = vmatpush2.bf16.msra.mxu0 %v4890
        %5140 = vmatprep.subr.bf16.mxu0 %v4887
        %5141 = vmatpush2.bf16.msra.mxu0 %v4886
        %5142 = vmatprep.mubr.bf16.mxu0 %v4313
        %5143 = vmatmul.mubr.bf16.gmra.mxu0 %v4312
        %v5144 = vpop.f32.mrf.mxu0
        %v5145 = vadd.f32 %v4453, %v5144
        %v5146 = vpop.f32.mrf.mxu0
        %v5147 = vadd.f32 %v4457, %v5146
        %v5148 = vpop.f32.mrf.mxu0
        %v5149 = vadd.f32 %v4453, %v5148
        %v5150 = vpop.f32.mrf.mxu0
        %v5151 = vadd.f32 %v4457, %v5150
        %5152 = vmatprep.mubr.bf16.mxu0 %v4317
        %5153 = vmatmul.mubr.bf16.gmra.mxu0 %v4316
        %v5154 = vpop.f32.mrf.mxu0
        %v5155 = vadd.f32 %v4453, %v5154
        %v5156 = vpop.f32.mrf.mxu0
        %v5157 = vadd.f32 %v4457, %v5156
        %v5158 = vpop.f32.mrf.mxu0
        %v5159 = vadd.f32 %v4453, %v5158
        %v5160 = vpop.f32.mrf.mxu0
        %v5161 = vadd.f32 %v4457, %v5160
        %5162 = vdwg.mxu0
        %5163 = vmatprep.subr.bf16.mxu0 %v4947
        %5164 = vmatpush1.bf16.msra.mxu0 %v4946
        %5165 = vmatprep.subr.bf16.mxu0 %v4943
        %5166 = vmatpush1.bf16.msra.mxu0 %v4942
        %5167 = vmatprep.subr.bf16.mxu0 %v4939
        %5168 = vmatpush1.bf16.msra.mxu0 %v4938
        %5169 = vmatprep.subr.bf16.mxu0 %v4935
        %5170 = vmatpush1.bf16.msra.mxu0 %v4934
        %5171 = vmatprep.subr.bf16.mxu0 %v4931
        %5172 = vmatpush1.bf16.msra.mxu0 %v4930
        %5173 = vmatprep.subr.bf16.mxu0 %v4927
        %5174 = vmatpush1.bf16.msra.mxu0 %v4926
        %5175 = vmatprep.subr.bf16.mxu0 %v4923
        %5176 = vmatpush1.bf16.msra.mxu0 %v4922
        %5177 = vmatprep.subr.bf16.mxu0 %v4919
        %5178 = vmatpush1.bf16.msra.mxu0 %v4918
        %5179 = vmatprep.subr.bf16.mxu0 %v4979
        %5180 = vmatpush2.bf16.msra.mxu0 %v4978
        %5181 = vmatprep.subr.bf16.mxu0 %v4975
        %5182 = vmatpush2.bf16.msra.mxu0 %v4974
        %5183 = vmatprep.subr.bf16.mxu0 %v4971
        %5184 = vmatpush2.bf16.msra.mxu0 %v4970
        %5185 = vmatprep.subr.bf16.mxu0 %v4967
        %5186 = vmatpush2.bf16.msra.mxu0 %v4966
        %5187 = vmatprep.subr.bf16.mxu0 %v4963
        %5188 = vmatpush2.bf16.msra.mxu0 %v4962
        %5189 = vmatprep.subr.bf16.mxu0 %v4959
        %5190 = vmatpush2.bf16.msra.mxu0 %v4958
        %5191 = vmatprep.subr.bf16.mxu0 %v4955
        %5192 = vmatpush2.bf16.msra.mxu0 %v4954
        %5193 = vmatprep.subr.bf16.mxu0 %v4951
        %5194 = vmatpush2.bf16.msra.mxu0 %v4950
        %5195 = vmatprep.mubr.bf16.mxu0 %v4315
        %5196 = vmatmul.mubr.bf16.gmra.mxu0 %v4314
        %v5197 = vpop.f32.mrf.mxu0
        %v5198 = vadd.f32 %v5145, %v5197
        %v5199 = vpop.f32.mrf.mxu0
        %v5200 = vadd.f32 %v5147, %v5199
        %v5201 = vpop.f32.mrf.mxu0
        %v5202 = vadd.f32 %v5149, %v5201
        %v5203 = vpop.f32.mrf.mxu0
        %v5204 = vadd.f32 %v5151, %v5203
        %5205 = vmatprep.mubr.bf16.mxu0 %v4319
        %5206 = vmatmul.mubr.bf16.gmra.mxu0 %v4318
        %v5207 = vpop.f32.mrf.mxu0
        %v5208 = vadd.f32 %v5155, %v5207
        %v5209 = vpop.f32.mrf.mxu0
        %v5210 = vadd.f32 %v5157, %v5209
        %v5211 = vpop.f32.mrf.mxu0
        %v5212 = vadd.f32 %v5159, %v5211
        %v5213 = vpop.f32.mrf.mxu0
        %v5214 = vadd.f32 %v5161, %v5213
        %5215 = vdwg.mxu0
        %5216 = vmatprep.subr.bf16.mxu0 %v4885
        %5217 = vmatpush1.bf16.msra.mxu0 %v4884
        %5218 = vmatprep.subr.bf16.mxu0 %v4881
        %5219 = vmatpush1.bf16.msra.mxu0 %v4880
        %5220 = vmatprep.subr.bf16.mxu0 %v4877
        %5221 = vmatpush1.bf16.msra.mxu0 %v4876
        %5222 = vmatprep.subr.bf16.mxu0 %v4873
        %5223 = vmatpush1.bf16.msra.mxu0 %v4872
        %5224 = vmatprep.subr.bf16.mxu0 %v4869
        %5225 = vmatpush1.bf16.msra.mxu0 %v4868
        %5226 = vmatprep.subr.bf16.mxu0 %v4865
        %5227 = vmatpush1.bf16.msra.mxu0 %v4864
        %5228 = vmatprep.subr.bf16.mxu0 %v4861
        %5229 = vmatpush1.bf16.msra.mxu0 %v4860
        %5230 = vmatprep.subr.bf16.mxu0 %v4857
        %5231 = vmatpush1.bf16.msra.mxu0 %v4856
        %5232 = vmatprep.subr.bf16.mxu0 %v4917
        %5233 = vmatpush2.bf16.msra.mxu0 %v4916
        %5234 = vmatprep.subr.bf16.mxu0 %v4913
        %5235 = vmatpush2.bf16.msra.mxu0 %v4912
        %5236 = vmatprep.subr.bf16.mxu0 %v4909
        %5237 = vmatpush2.bf16.msra.mxu0 %v4908
        %5238 = vmatprep.subr.bf16.mxu0 %v4905
        %5239 = vmatpush2.bf16.msra.mxu0 %v4904
        %5240 = vmatprep.subr.bf16.mxu0 %v4901
        %5241 = vmatpush2.bf16.msra.mxu0 %v4900
        %5242 = vmatprep.subr.bf16.mxu0 %v4897
        %5243 = vmatpush2.bf16.msra.mxu0 %v4896
        %5244 = vmatprep.subr.bf16.mxu0 %v4893
        %5245 = vmatpush2.bf16.msra.mxu0 %v4892
        %5246 = vmatprep.subr.bf16.mxu0 %v4889
        %5247 = vmatpush2.bf16.msra.mxu0 %v4888
        %5248 = vmatprep.mubr.bf16.mxu0 %v4313
        %5249 = vmatmul.mubr.bf16.gmra.mxu0 %v4312
        %v5250 = vpop.f32.mrf.mxu0
        %v5251 = vadd.f32 %v4461, %v5250
        %v5252 = vpop.f32.mrf.mxu0
        %v5253 = vadd.f32 %v4465, %v5252
        %v5254 = vpop.f32.mrf.mxu0
        %v5255 = vadd.f32 %v4461, %v5254
        %v5256 = vpop.f32.mrf.mxu0
        %v5257 = vadd.f32 %v4465, %v5256
        %5258 = vmatprep.mubr.bf16.mxu0 %v4317
        %5259 = vmatmul.mubr.bf16.gmra.mxu0 %v4316
        %v5260 = vpop.f32.mrf.mxu0
        %v5261 = vadd.f32 %v4461, %v5260
        %v5262 = vpop.f32.mrf.mxu0
        %v5263 = vadd.f32 %v4465, %v5262
        %v5264 = vpop.f32.mrf.mxu0
        %v5265 = vadd.f32 %v4461, %v5264
        %v5266 = vpop.f32.mrf.mxu0
        %v5267 = vadd.f32 %v4465, %v5266
        %5268 = vdwg.mxu0
        %5269 = vmatprep.subr.bf16.mxu0 %v4949
        %5270 = vmatpush1.bf16.msra.mxu0 %v4948
        %5271 = vmatprep.subr.bf16.mxu0 %v4945
        %5272 = vmatpush1.bf16.msra.mxu0 %v4944
        %5273 = vmatprep.subr.bf16.mxu0 %v4941
        %5274 = vmatpush1.bf16.msra.mxu0 %v4940
        %5275 = vmatprep.subr.bf16.mxu0 %v4937
        %5276 = vmatpush1.bf16.msra.mxu0 %v4936
        %5277 = vmatprep.subr.bf16.mxu0 %v4933
        %5278 = vmatpush1.bf16.msra.mxu0 %v4932
        %5279 = vmatprep.subr.bf16.mxu0 %v4929
        %5280 = vmatpush1.bf16.msra.mxu0 %v4928
        %5281 = vmatprep.subr.bf16.mxu0 %v4925
        %5282 = vmatpush1.bf16.msra.mxu0 %v4924
        %5283 = vmatprep.subr.bf16.mxu0 %v4921
        %5284 = vmatpush1.bf16.msra.mxu0 %v4920
        %5285 = vmatprep.subr.bf16.mxu0 %v4981
        %5286 = vmatpush2.bf16.msra.mxu0 %v4980
        %5287 = vmatprep.subr.bf16.mxu0 %v4977
        %5288 = vmatpush2.bf16.msra.mxu0 %v4976
        %5289 = vmatprep.subr.bf16.mxu0 %v4973
        %5290 = vmatpush2.bf16.msra.mxu0 %v4972
        %5291 = vmatprep.subr.bf16.mxu0 %v4969
        %5292 = vmatpush2.bf16.msra.mxu0 %v4968
        %5293 = vmatprep.subr.bf16.mxu0 %v4965
        %5294 = vmatpush2.bf16.msra.mxu0 %v4964
        %5295 = vmatprep.subr.bf16.mxu0 %v4961
        %5296 = vmatpush2.bf16.msra.mxu0 %v4960
        %5297 = vmatprep.subr.bf16.mxu0 %v4957
        %5298 = vmatpush2.bf16.msra.mxu0 %v4956
        %5299 = vmatprep.subr.bf16.mxu0 %v4953
        %5300 = vmatpush2.bf16.msra.mxu0 %v4952
        %5301 = vmatprep.mubr.bf16.mxu0 %v4315
        %5302 = vmatmul.mubr.bf16.gmra.mxu0 %v4314
        %v5303 = vpop.f32.mrf.mxu0
        %v5304 = vadd.f32 %v5251, %v5303
        %v5305 = vpop.f32.mrf.mxu0
        %v5306 = vadd.f32 %v5253, %v5305
        %v5307 = vpop.f32.mrf.mxu0
        %v5308 = vadd.f32 %v5255, %v5307
        %v5309 = vpop.f32.mrf.mxu0
        %v5310 = vadd.f32 %v5257, %v5309
        %5311 = vmatprep.mubr.bf16.mxu0 %v4319
        %5312 = vmatmul.mubr.bf16.gmra.mxu0 %v4318
        %v5313 = vpop.f32.mrf.mxu0
        %v5314 = vadd.f32 %v5261, %v5313
        %v5315 = vpop.f32.mrf.mxu0
        %v5316 = vadd.f32 %v5263, %v5315
        %v5317 = vpop.f32.mrf.mxu0
        %v5318 = vadd.f32 %v5265, %v5317
        %v5319 = vpop.f32.mrf.mxu0
        %v5320 = vadd.f32 %v5267, %v5319
        %5321 = vdwg.mxu0
        %v5322 = vmax.f32 %v5198, 0.0
        %v5323 = vmax.f32 %v5200, 0.0
        %v5324 = vmax.f32 %v5304, 0.0
        %v5325 = vmax.f32 %v5306, 0.0
        %v5326 = vmax.f32 %v5202, 0.0
        %v5327 = vmax.f32 %v5204, 0.0
        %v5328 = vmax.f32 %v5308, 0.0
        %v5329 = vmax.f32 %v5310, 0.0
        %v5330 = vmax.f32 %v5208, 0.0
        %v5331 = vmax.f32 %v5210, 0.0
        %v5332 = vmax.f32 %v5314, 0.0
        %v5333 = vmax.f32 %v5316, 0.0
        %v5334 = vmax.f32 %v5212, 0.0
        %v5335 = vmax.f32 %v5214, 0.0
        %v5336 = vmax.f32 %v5318, 0.0
        %v5337 = vmax.f32 %v5320, 0.0
        %v5338 = vpack.c.bf16 %v5326, %v5322
        %v5339 = vpack.c.bf16 %v5327, %v5323
        %v5340 = vpack.c.bf16 %v5328, %v5324
        %v5341 = vpack.c.bf16 %v5329, %v5325
        %v5342 = vpack.c.bf16 %v5334, %v5330
        %v5343 = vpack.c.bf16 %v5335, %v5331
        %v5344 = vpack.c.bf16 %v5336, %v5332
        %v5345 = vpack.c.bf16 %v5337, %v5333
        %s5346 = scalar_lea.vmem %s386, 256 [#allocation10]
        %v5347 = vld [vmem:[%s5346] sm:$0xf]
        %v5348 = vld [vmem:[%s5346 + $0x4] sm:$0xf]
        %v5349 = vld [vmem:[%s5346 + $0x8] sm:$0xf]
        %v5350 = vld [vmem:[%s5346 + $0xc] sm:$0xf]
        %v5351 = vld [vmem:[%s5346 + $0x10] sm:$0xf]
        %v5352 = vld [vmem:[%s5346 + $0x14] sm:$0xf]
        %v5353 = vld [vmem:[%s5346 + $0x18] sm:$0xf]
        %v5354 = vld [vmem:[%s5346 + $0x1c] sm:$0xf]
        %v5355 = vld [vmem:[%s5346 + $0x20] sm:$0xf]
        %v5356 = vld [vmem:[%s5346 + $0x24] sm:$0xf]
        %v5357 = vld [vmem:[%s5346 + $0x28] sm:$0xf]
        %v5358 = vld [vmem:[%s5346 + $0x2c] sm:$0xf]
        %v5359 = vld [vmem:[%s5346 + $0x30] sm:$0xf]
        %v5360 = vld [vmem:[%s5346 + $0x34] sm:$0xf]
        %v5361 = vld [vmem:[%s5346 + $0x38] sm:$0xf]
        %v5362 = vld [vmem:[%s5346 + $0x3c] sm:$0xf]
        %v5363 = vld [vmem:[%s5346 + $0x40] sm:$0xf]
        %v5364 = vld [vmem:[%s5346 + $0x44] sm:$0xf]
        %v5365 = vld [vmem:[%s5346 + $0x48] sm:$0xf]
        %v5366 = vld [vmem:[%s5346 + $0x4c] sm:$0xf]
        %v5367 = vld [vmem:[%s5346 + $0x50] sm:$0xf]
        %v5368 = vld [vmem:[%s5346 + $0x54] sm:$0xf]
        %v5369 = vld [vmem:[%s5346 + $0x58] sm:$0xf]
        %v5370 = vld [vmem:[%s5346 + $0x5c] sm:$0xf]
        %v5371 = vld [vmem:[%s5346 + $0x60] sm:$0xf]
        %v5372 = vld [vmem:[%s5346 + $0x64] sm:$0xf]
        %v5373 = vld [vmem:[%s5346 + $0x68] sm:$0xf]
        %v5374 = vld [vmem:[%s5346 + $0x6c] sm:$0xf]
        %v5375 = vld [vmem:[%s5346 + $0x70] sm:$0xf]
        %v5376 = vld [vmem:[%s5346 + $0x74] sm:$0xf]
        %v5377 = vld [vmem:[%s5346 + $0x78] sm:$0xf]
        %v5378 = vld [vmem:[%s5346 + $0x7c] sm:$0xf]
        %v5379 = vld [vmem:[%s5346 + $0x80] sm:$0xf]
        %v5380 = vld [vmem:[%s5346 + $0x84] sm:$0xf]
        %v5381 = vld [vmem:[%s5346 + $0x88] sm:$0xf]
        %v5382 = vld [vmem:[%s5346 + $0x8c] sm:$0xf]
        %v5383 = vld [vmem:[%s5346 + $0x90] sm:$0xf]
        %v5384 = vld [vmem:[%s5346 + $0x94] sm:$0xf]
        %v5385 = vld [vmem:[%s5346 + $0x98] sm:$0xf]
        %v5386 = vld [vmem:[%s5346 + $0x9c] sm:$0xf]
        %v5387 = vld [vmem:[%s5346 + $0xa0] sm:$0xf]
        %v5388 = vld [vmem:[%s5346 + $0xa4] sm:$0xf]
        %v5389 = vld [vmem:[%s5346 + $0xa8] sm:$0xf]
        %v5390 = vld [vmem:[%s5346 + $0xac] sm:$0xf]
        %v5391 = vld [vmem:[%s5346 + $0xb0] sm:$0xf]
        %v5392 = vld [vmem:[%s5346 + $0xb4] sm:$0xf]
        %v5393 = vld [vmem:[%s5346 + $0xb8] sm:$0xf]
        %v5394 = vld [vmem:[%s5346 + $0xbc] sm:$0xf]
        %v5395 = vld [vmem:[%s5346 + $0xc0] sm:$0xf]
        %v5396 = vld [vmem:[%s5346 + $0xc4] sm:$0xf]
        %v5397 = vld [vmem:[%s5346 + $0xc8] sm:$0xf]
        %v5398 = vld [vmem:[%s5346 + $0xcc] sm:$0xf]
        %v5399 = vld [vmem:[%s5346 + $0xd0] sm:$0xf]
        %v5400 = vld [vmem:[%s5346 + $0xd4] sm:$0xf]
        %v5401 = vld [vmem:[%s5346 + $0xd8] sm:$0xf]
        %v5402 = vld [vmem:[%s5346 + $0xdc] sm:$0xf]
        %v5403 = vld [vmem:[%s5346 + $0xe0] sm:$0xf]
        %v5404 = vld [vmem:[%s5346 + $0xe4] sm:$0xf]
        %v5405 = vld [vmem:[%s5346 + $0xe8] sm:$0xf]
        %v5406 = vld [vmem:[%s5346 + $0xec] sm:$0xf]
        %v5407 = vld [vmem:[%s5346 + $0xf0] sm:$0xf]
        %v5408 = vld [vmem:[%s5346 + $0xf4] sm:$0xf]
        %v5409 = vld [vmem:[%s5346 + $0xf8] sm:$0xf]
        %v5410 = vld [vmem:[%s5346 + $0xfc] sm:$0xf]
        %v5412 = vlaneseq
        %v5413 = vshrl.u32 %v5412, 7
        %v5414 = vsub.s32 0, %v5413
        %v5415 = vrot.slane %v3093, %v5414
        %v5481 = vunpack.c.l.b16 %v5347
        %v5482 = vunpack.c.l.b16 %v5348
        %v5483 = vunpack.c.l.b16 %v5349
        %v5484 = vunpack.c.l.b16 %v5350
        %v5485 = vunpack.c.l.b16 %v5351
        %v5486 = vunpack.c.l.b16 %v5352
        %v5487 = vunpack.c.l.b16 %v5353
        %v5488 = vunpack.c.l.b16 %v5354
        %v5489 = vunpack.c.l.b16 %v5355
        %v5490 = vunpack.c.l.b16 %v5356
        %v5491 = vunpack.c.l.b16 %v5357
        %v5492 = vunpack.c.l.b16 %v5358
        %v5493 = vunpack.c.l.b16 %v5359
        %v5494 = vunpack.c.l.b16 %v5360
        %v5495 = vunpack.c.l.b16 %v5361
        %v5496 = vunpack.c.l.b16 %v5362
        %v5497 = vunpack.c.l.b16 %v5363
        %v5498 = vunpack.c.l.b16 %v5364
        %v5499 = vunpack.c.l.b16 %v5365
        %v5500 = vunpack.c.l.b16 %v5366
        %v5501 = vunpack.c.l.b16 %v5367
        %v5502 = vunpack.c.l.b16 %v5368
        %v5503 = vunpack.c.l.b16 %v5369
        %v5504 = vunpack.c.l.b16 %v5370
        %v5505 = vunpack.c.l.b16 %v5371
        %v5506 = vunpack.c.l.b16 %v5372
        %v5507 = vunpack.c.l.b16 %v5373
        %v5508 = vunpack.c.l.b16 %v5374
        %v5509 = vunpack.c.l.b16 %v5375
        %v5510 = vunpack.c.l.b16 %v5376
        %v5511 = vunpack.c.l.b16 %v5377
        %v5512 = vunpack.c.l.b16 %v5378
        %v5513 = vunpack.c.l.b16 %v5379
        %v5514 = vunpack.c.l.b16 %v5380
        %v5515 = vunpack.c.l.b16 %v5381
        %v5516 = vunpack.c.l.b16 %v5382
        %v5517 = vunpack.c.l.b16 %v5383
        %v5518 = vunpack.c.l.b16 %v5384
        %v5519 = vunpack.c.l.b16 %v5385
        %v5520 = vunpack.c.l.b16 %v5386
        %v5521 = vunpack.c.l.b16 %v5387
        %v5522 = vunpack.c.l.b16 %v5388
        %v5523 = vunpack.c.l.b16 %v5389
        %v5524 = vunpack.c.l.b16 %v5390
        %v5525 = vunpack.c.l.b16 %v5391
        %v5526 = vunpack.c.l.b16 %v5392
        %v5527 = vunpack.c.l.b16 %v5393
        %v5528 = vunpack.c.l.b16 %v5394
        %v5529 = vunpack.c.l.b16 %v5395
        %v5530 = vunpack.c.l.b16 %v5396
        %v5531 = vunpack.c.l.b16 %v5397
        %v5532 = vunpack.c.l.b16 %v5398
        %v5533 = vunpack.c.l.b16 %v5399
        %v5534 = vunpack.c.l.b16 %v5400
        %v5535 = vunpack.c.l.b16 %v5401
        %v5536 = vunpack.c.l.b16 %v5402
        %v5537 = vunpack.c.l.b16 %v5403
        %v5538 = vunpack.c.l.b16 %v5404
        %v5539 = vunpack.c.l.b16 %v5405
        %v5540 = vunpack.c.l.b16 %v5406
        %v5541 = vunpack.c.l.b16 %v5407
        %v5542 = vunpack.c.l.b16 %v5408
        %v5543 = vunpack.c.l.b16 %v5409
        %v5544 = vunpack.c.l.b16 %v5410
        %v5545 = vpack.c.b16 %v5482, %v5481
        %v5546 = vpack.c.b16 %v5484, %v5483
        %v5547 = vpack.c.b16 %v5486, %v5485
        %v5548 = vpack.c.b16 %v5488, %v5487
        %v5549 = vpack.c.b16 %v5490, %v5489
        %v5550 = vpack.c.b16 %v5492, %v5491
        %v5551 = vpack.c.b16 %v5494, %v5493
        %v5552 = vpack.c.b16 %v5496, %v5495
        %v5553 = vpack.c.b16 %v5498, %v5497
        %v5554 = vpack.c.b16 %v5500, %v5499
        %v5555 = vpack.c.b16 %v5502, %v5501
        %v5556 = vpack.c.b16 %v5504, %v5503
        %v5557 = vpack.c.b16 %v5506, %v5505
        %v5558 = vpack.c.b16 %v5508, %v5507
        %v5559 = vpack.c.b16 %v5510, %v5509
        %v5560 = vpack.c.b16 %v5512, %v5511
        %v5561 = vpack.c.b16 %v5514, %v5513
        %v5562 = vpack.c.b16 %v5516, %v5515
        %v5563 = vpack.c.b16 %v5518, %v5517
        %v5564 = vpack.c.b16 %v5520, %v5519
        %v5565 = vpack.c.b16 %v5522, %v5521
        %v5566 = vpack.c.b16 %v5524, %v5523
        %v5567 = vpack.c.b16 %v5526, %v5525
        %v5568 = vpack.c.b16 %v5528, %v5527
        %v5569 = vpack.c.b16 %v5530, %v5529
        %v5570 = vpack.c.b16 %v5532, %v5531
        %v5571 = vpack.c.b16 %v5534, %v5533
        %v5572 = vpack.c.b16 %v5536, %v5535
        %v5573 = vpack.c.b16 %v5538, %v5537
        %v5574 = vpack.c.b16 %v5540, %v5539
        %v5575 = vpack.c.b16 %v5542, %v5541
        %v5576 = vpack.c.b16 %v5544, %v5543
        %5609 = vmatprep.subr.bf16.mxu0 0
        %5610 = vmatpush1.bf16.msra.mxu0 %v5552
        %5611 = vmatprep.subr.bf16.mxu0 0
        %5612 = vmatpush1.bf16.msra.mxu0 %v5551
        %5613 = vmatprep.subr.bf16.mxu0 0
        %5614 = vmatpush1.bf16.msra.mxu0 %v5550
        %5615 = vmatprep.subr.bf16.mxu0 0
        %5616 = vmatpush1.bf16.msra.mxu0 %v5549
        %5617 = vmatprep.subr.bf16.mxu0 0
        %5618 = vmatpush1.bf16.msra.mxu0 %v5548
        %5619 = vmatprep.subr.bf16.mxu0 0
        %5620 = vmatpush1.bf16.msra.mxu0 %v5547
        %5621 = vmatprep.subr.bf16.mxu0 0
        %5622 = vmatpush1.bf16.msra.mxu0 %v5546
        %5623 = vmatprep.subr.bf16.mxu0 0
        %5624 = vmatpush1.bf16.msra.mxu0 %v5545
        %5625 = vmatprep.subr.bf16.mxu0 0
        %5626 = vmatpush2.bf16.msra.mxu0 %v5560
        %5627 = vmatprep.subr.bf16.mxu0 0
        %5628 = vmatpush2.bf16.msra.mxu0 %v5559
        %5629 = vmatprep.subr.bf16.mxu0 0
        %5630 = vmatpush2.bf16.msra.mxu0 %v5558
        %5631 = vmatprep.subr.bf16.mxu0 0
        %5632 = vmatpush2.bf16.msra.mxu0 %v5557
        %5633 = vmatprep.subr.bf16.mxu0 0
        %5634 = vmatpush2.bf16.msra.mxu0 %v5556
        %5635 = vmatprep.subr.bf16.mxu0 0
        %5636 = vmatpush2.bf16.msra.mxu0 %v5555
        %5637 = vmatprep.subr.bf16.mxu0 0
        %5638 = vmatpush2.bf16.msra.mxu0 %v5554
        %5639 = vmatprep.subr.bf16.mxu0 0
        %5640 = vmatpush2.bf16.msra.mxu0 %v5553
        %5641 = vmatprep.mubr.bf16.mxu0 %v5339
        %5642 = vmatmul.mubr.bf16.gmra.mxu0 %v5338
        %v5643 = vpop.f32.mrf.mxu0
        %v5644 = vadd.f32 %v5415, %v5643
        %v5645 = vpop.f32.mrf.mxu0
        %v5646 = vpop.f32.mrf.mxu0
        %v5647 = vadd.f32 %v5415, %v5646
        %v5648 = vpop.f32.mrf.mxu0
        %5649 = vmatprep.mubr.bf16.mxu0 %v5343
        %5650 = vmatmul.mubr.bf16.gmra.mxu0 %v5342
        %v5651 = vpop.f32.mrf.mxu0
        %v5652 = vadd.f32 %v5415, %v5651
        %v5653 = vpop.f32.mrf.mxu0
        %v5654 = vpop.f32.mrf.mxu0
        %v5655 = vadd.f32 %v5415, %v5654
        %v5656 = vpop.f32.mrf.mxu0
        %5657 = vdwg.mxu0
        %5658 = vmatprep.subr.bf16.mxu0 0
        %5659 = vmatpush1.bf16.msra.mxu0 %v5568
        %5660 = vmatprep.subr.bf16.mxu0 0
        %5661 = vmatpush1.bf16.msra.mxu0 %v5567
        %5662 = vmatprep.subr.bf16.mxu0 0
        %5663 = vmatpush1.bf16.msra.mxu0 %v5566
        %5664 = vmatprep.subr.bf16.mxu0 0
        %5665 = vmatpush1.bf16.msra.mxu0 %v5565
        %5666 = vmatprep.subr.bf16.mxu0 0
        %5667 = vmatpush1.bf16.msra.mxu0 %v5564
        %5668 = vmatprep.subr.bf16.mxu0 0
        %5669 = vmatpush1.bf16.msra.mxu0 %v5563
        %5670 = vmatprep.subr.bf16.mxu0 0
        %5671 = vmatpush1.bf16.msra.mxu0 %v5562
        %5672 = vmatprep.subr.bf16.mxu0 0
        %5673 = vmatpush1.bf16.msra.mxu0 %v5561
        %5674 = vmatprep.subr.bf16.mxu0 0
        %5675 = vmatpush2.bf16.msra.mxu0 %v5576
        %5676 = vmatprep.subr.bf16.mxu0 0
        %5677 = vmatpush2.bf16.msra.mxu0 %v5575
        %5678 = vmatprep.subr.bf16.mxu0 0
        %5679 = vmatpush2.bf16.msra.mxu0 %v5574
        %5680 = vmatprep.subr.bf16.mxu0 0
        %5681 = vmatpush2.bf16.msra.mxu0 %v5573
        %5682 = vmatprep.subr.bf16.mxu0 0
        %5683 = vmatpush2.bf16.msra.mxu0 %v5572
        %5684 = vmatprep.subr.bf16.mxu0 0
        %5685 = vmatpush2.bf16.msra.mxu0 %v5571
        %5686 = vmatprep.subr.bf16.mxu0 0
        %5687 = vmatpush2.bf16.msra.mxu0 %v5570
        %5688 = vmatprep.subr.bf16.mxu0 0
        %5689 = vmatpush2.bf16.msra.mxu0 %v5569
        %5690 = vmatprep.mubr.bf16.mxu0 %v5341
        %5691 = vmatmul.mubr.bf16.gmra.mxu0 %v5340
        %v5692 = vpop.f32.mrf.mxu0
        %v5693 = vadd.f32 %v5644, %v5692
        %v5694 = vpop.f32.mrf.mxu0
        %v5695 = vpop.f32.mrf.mxu0
        %v5696 = vadd.f32 %v5647, %v5695
        %v5697 = vpop.f32.mrf.mxu0
        %5698 = vmatprep.mubr.bf16.mxu0 %v5345
        %5699 = vmatmul.mubr.bf16.gmra.mxu0 %v5344
        %v5700 = vpop.f32.mrf.mxu0
        %v5701 = vadd.f32 %v5652, %v5700
        %v5702 = vpop.f32.mrf.mxu0
        %v5703 = vpop.f32.mrf.mxu0
        %v5704 = vadd.f32 %v5655, %v5703
        %v5705 = vpop.f32.mrf.mxu0
        %5706 = vdwg.mxu0
        %s5707 = scalar_lea.vmem %s443, 32 [#allocation13]
        %5708 = vst [vmem:[%s5707] sm:$0xff] %v5693
        %5709 = vst [vmem:[%s5707 + $0x8] sm:$0xff] %v5696
        %5710 = vst [vmem:[%s5707 + $0x10] sm:$0xff] %v5701
        %5711 = vst [vmem:[%s5707 + $0x18] sm:$0xff] %v5704
        %s5712 = scalar_lea.vmem %s395, 26 [#allocation11]
        %v5713 = vld [vmem:[%s5712] sm:$0xf]
        %v5714 = vld [vmem:[%s5712 + $0x4] sm:$0xf]
        %v5715 = vld [vmem:[%s5712 + $0x8] sm:$0xf]
        %v5716 = vld [vmem:[%s5712 + $0xc] sm:$0x1]
        %s5717 = scalar_lea.vmem %s359, 128 [#allocation5]
        %v5718 = vld [vmem:[%s5717] sm:$0xff]
        %v5719 = vld [vmem:[%s5717 + $0x8] sm:$0xff]
        %v5720 = vld [vmem:[%s5717 + $0x10] sm:$0xff]
        %v5721 = vld [vmem:[%s5717 + $0x18] sm:$0xff]
        %v5722 = vld [vmem:[%s5717 + $0x20] sm:$0xff]
        %v5723 = vld [vmem:[%s5717 + $0x28] sm:$0xff]
        %v5724 = vld [vmem:[%s5717 + $0x30] sm:$0xff]
        %v5725 = vld [vmem:[%s5717 + $0x38] sm:$0xff]
        %v5727 = vlaneseq
        %v5728 = vshrl.u32 %v5727, 7
        %v5729 = vsub.s32 0, %v5728
        %v5730 = vrot.slane %v5713, %v5729
        %v5731 = vlaneseq
        %v5732 = vshrl.u32 %v5731, 7
        %v5733 = vsub.s32 1, %v5732
        %v5734 = vrot.slane %v5713, %v5733
        %v5735 = vlaneseq
        %v5736 = vshrl.u32 %v5735, 7
        %v5737 = vsub.s32 2, %v5736
        %v5738 = vrot.slane %v5713, %v5737
        %v5739 = vlaneseq
        %v5740 = vshrl.u32 %v5739, 7
        %v5741 = vsub.s32 3, %v5740
        %v5742 = vrot.slane %v5713, %v5741
        %v5755 = vunpack.c.l.b16 %v5718
        %v5756 = vunpack.c.h.b16 %v5718
        %v5757 = vunpack.c.l.b16 %v5719
        %v5758 = vunpack.c.h.b16 %v5719
        %v5759 = vunpack.c.l.b16 %v5720
        %v5760 = vunpack.c.h.b16 %v5720
        %v5761 = vunpack.c.l.b16 %v5721
        %v5762 = vunpack.c.h.b16 %v5721
        %v5763 = vunpack.c.l.b16 %v5722
        %v5764 = vunpack.c.h.b16 %v5722
        %v5765 = vunpack.c.l.b16 %v5723
        %v5766 = vunpack.c.h.b16 %v5723
        %v5767 = vunpack.c.l.b16 %v5724
        %v5768 = vunpack.c.h.b16 %v5724
        %v5769 = vunpack.c.l.b16 %v5725
        %v5770 = vunpack.c.h.b16 %v5725
        %v5771 = vpack.c.b16 %v5759, %v5755
        %v5772 = vpack.c.b16 %v5760, %v5756
        %v5773 = vpack.c.b16 %v5761, %v5757
        %v5774 = vpack.c.b16 %v5762, %v5758
        %v5775 = vpack.c.b16 %v5767, %v5763
        %v5776 = vpack.c.b16 %v5768, %v5764
        %v5777 = vpack.c.b16 %v5769, %v5765
        %v5778 = vpack.c.b16 %v5770, %v5766
        %5787 = vmatprep.subr.bf16.mxu0 0
        %5788 = vmatpush1.bf16.msra.mxu0 0
        %5789 = vmatprep.subr.bf16.mxu0 0
        %5790 = vmatpush1.bf16.msra.mxu0 0
        %5791 = vmatprep.subr.bf16.mxu0 0
        %5792 = vmatpush1.bf16.msra.mxu0 0
        %5793 = vmatprep.subr.bf16.mxu0 0
        %5794 = vmatpush1.bf16.msra.mxu0 0
        %5795 = vmatprep.subr.bf16.mxu0 0
        %5796 = vmatpush1.bf16.msra.mxu0 0
        %5797 = vmatprep.subr.bf16.mxu0 0
        %5798 = vmatpush1.bf16.msra.mxu0 0
        %5799 = vmatprep.subr.bf16.mxu0 %v5776
        %5800 = vmatpush1.bf16.msra.mxu0 %v5775
        %5801 = vmatprep.subr.bf16.mxu0 %v5772
        %5802 = vmatpush1.bf16.msra.mxu0 %v5771
        %5803 = vmatprep.subr.bf16.mxu0 0
        %5804 = vmatpush2.bf16.msra.mxu0 0
        %5805 = vmatprep.subr.bf16.mxu0 0
        %5806 = vmatpush2.bf16.msra.mxu0 0
        %5807 = vmatprep.subr.bf16.mxu0 0
        %5808 = vmatpush2.bf16.msra.mxu0 0
        %5809 = vmatprep.subr.bf16.mxu0 0
        %5810 = vmatpush2.bf16.msra.mxu0 0
        %5811 = vmatprep.subr.bf16.mxu0 0
        %5812 = vmatpush2.bf16.msra.mxu0 0
        %5813 = vmatprep.subr.bf16.mxu0 0
        %5814 = vmatpush2.bf16.msra.mxu0 0
        %5815 = vmatprep.subr.bf16.mxu0 0
        %5816 = vmatpush2.bf16.msra.mxu0 0
        %5817 = vmatprep.subr.bf16.mxu0 0
        %5818 = vmatpush2.bf16.msra.mxu0 0
        %5819 = vmatprep.mubr.bf16.mxu0 0
        %5820 = vmatmul.mubr.bf16.gmra.mxu0 %v540
        %v5821 = vpop.f32.mrf.mxu0
        %v5822 = vadd.f32 %v5730, %v5821
        %v5823 = vpop.f32.mrf.mxu0
        %v5824 = vadd.f32 %v5734, %v5823
        %v5825 = vpop.f32.mrf.mxu0
        %v5826 = vadd.f32 %v5730, %v5825
        %v5827 = vpop.f32.mrf.mxu0
        %v5828 = vadd.f32 %v5734, %v5827
        %5829 = vmatprep.mubr.bf16.mxu0 0
        %5830 = vmatmul.mubr.bf16.gmra.mxu0 %v543
        %v5831 = vpop.f32.mrf.mxu0
        %v5832 = vadd.f32 %v5730, %v5831
        %v5833 = vpop.f32.mrf.mxu0
        %v5834 = vadd.f32 %v5734, %v5833
        %v5835 = vpop.f32.mrf.mxu0
        %v5836 = vadd.f32 %v5730, %v5835
        %v5837 = vpop.f32.mrf.mxu0
        %v5838 = vadd.f32 %v5734, %v5837
        %5839 = vdwg.mxu0
        %5840 = vmatprep.subr.bf16.mxu0 0
        %5841 = vmatpush1.bf16.msra.mxu0 0
        %5842 = vmatprep.subr.bf16.mxu0 0
        %5843 = vmatpush1.bf16.msra.mxu0 0
        %5844 = vmatprep.subr.bf16.mxu0 0
        %5845 = vmatpush1.bf16.msra.mxu0 0
        %5846 = vmatprep.subr.bf16.mxu0 0
        %5847 = vmatpush1.bf16.msra.mxu0 0
        %5848 = vmatprep.subr.bf16.mxu0 0
        %5849 = vmatpush1.bf16.msra.mxu0 0
        %5850 = vmatprep.subr.bf16.mxu0 0
        %5851 = vmatpush1.bf16.msra.mxu0 0
        %5852 = vmatprep.subr.bf16.mxu0 %v5778
        %5853 = vmatpush1.bf16.msra.mxu0 %v5777
        %5854 = vmatprep.subr.bf16.mxu0 %v5774
        %5855 = vmatpush1.bf16.msra.mxu0 %v5773
        %5856 = vmatprep.subr.bf16.mxu0 0
        %5857 = vmatpush2.bf16.msra.mxu0 0
        %5858 = vmatprep.subr.bf16.mxu0 0
        %5859 = vmatpush2.bf16.msra.mxu0 0
        %5860 = vmatprep.subr.bf16.mxu0 0
        %5861 = vmatpush2.bf16.msra.mxu0 0
        %5862 = vmatprep.subr.bf16.mxu0 0
        %5863 = vmatpush2.bf16.msra.mxu0 0
        %5864 = vmatprep.subr.bf16.mxu0 0
        %5865 = vmatpush2.bf16.msra.mxu0 0
        %5866 = vmatprep.subr.bf16.mxu0 0
        %5867 = vmatpush2.bf16.msra.mxu0 0
        %5868 = vmatprep.subr.bf16.mxu0 0
        %5869 = vmatpush2.bf16.msra.mxu0 0
        %5870 = vmatprep.subr.bf16.mxu0 0
        %5871 = vmatpush2.bf16.msra.mxu0 0
        %5872 = vmatprep.mubr.bf16.mxu0 0
        %5873 = vmatmul.mubr.bf16.gmra.mxu0 %v540
        %v5874 = vpop.f32.mrf.mxu0
        %v5875 = vadd.f32 %v5738, %v5874
        %v5876 = vpop.f32.mrf.mxu0
        %v5877 = vadd.f32 %v5742, %v5876
        %v5878 = vpop.f32.mrf.mxu0
        %v5879 = vadd.f32 %v5738, %v5878
        %v5880 = vpop.f32.mrf.mxu0
        %v5881 = vadd.f32 %v5742, %v5880
        %5882 = vmatprep.mubr.bf16.mxu0 0
        %5883 = vmatmul.mubr.bf16.gmra.mxu0 %v543
        %v5884 = vpop.f32.mrf.mxu0
        %v5885 = vadd.f32 %v5738, %v5884
        %v5886 = vpop.f32.mrf.mxu0
        %v5887 = vadd.f32 %v5742, %v5886
        %v5888 = vpop.f32.mrf.mxu0
        %v5889 = vadd.f32 %v5738, %v5888
        %v5890 = vpop.f32.mrf.mxu0
        %v5891 = vadd.f32 %v5742, %v5890
        %5892 = vdwg.mxu0
        %v5893 = vmax.f32 %v5822, 0.0
        %v5894 = vmax.f32 %v5824, 0.0
        %v5895 = vmax.f32 %v5875, 0.0
        %v5896 = vmax.f32 %v5877, 0.0
        %v5897 = vmax.f32 %v5826, 0.0
        %v5898 = vmax.f32 %v5828, 0.0
        %v5899 = vmax.f32 %v5879, 0.0
        %v5900 = vmax.f32 %v5881, 0.0
        %v5901 = vmax.f32 %v5832, 0.0
        %v5902 = vmax.f32 %v5834, 0.0
        %v5903 = vmax.f32 %v5885, 0.0
        %v5904 = vmax.f32 %v5887, 0.0
        %v5905 = vmax.f32 %v5836, 0.0
        %v5906 = vmax.f32 %v5838, 0.0
        %v5907 = vmax.f32 %v5889, 0.0
        %v5908 = vmax.f32 %v5891, 0.0
        %v5909 = vpack.c.bf16 %v5897, %v5893
        %v5910 = vpack.c.bf16 %v5898, %v5894
        %v5911 = vpack.c.bf16 %v5899, %v5895
        %v5912 = vpack.c.bf16 %v5900, %v5896
        %v5913 = vpack.c.bf16 %v5905, %v5901
        %v5914 = vpack.c.bf16 %v5906, %v5902
        %v5915 = vpack.c.bf16 %v5907, %v5903
        %v5916 = vpack.c.bf16 %v5908, %v5904
        %s5917 = scalar_lea.vmem %s368, 2048 [#allocation7]
        %v5918 = vld [vmem:[%s5917] sm:$0xff]
        %v5919 = vld [vmem:[%s5917 + $0x8] sm:$0xff]
        %v5920 = vld [vmem:[%s5917 + $0x10] sm:$0xff]
        %v5921 = vld [vmem:[%s5917 + $0x18] sm:$0xff]
        %v5922 = vld [vmem:[%s5917 + $0x20] sm:$0xff]
        %v5923 = vld [vmem:[%s5917 + $0x28] sm:$0xff]
        %v5924 = vld [vmem:[%s5917 + $0x30] sm:$0xff]
        %v5925 = vld [vmem:[%s5917 + $0x38] sm:$0xff]
        %v5926 = vld [vmem:[%s5917 + $0x40] sm:$0xff]
        %v5927 = vld [vmem:[%s5917 + $0x48] sm:$0xff]
        %v5928 = vld [vmem:[%s5917 + $0x50] sm:$0xff]
        %v5929 = vld [vmem:[%s5917 + $0x58] sm:$0xff]
        %v5930 = vld [vmem:[%s5917 + $0x60] sm:$0xff]
        %v5931 = vld [vmem:[%s5917 + $0x68] sm:$0xff]
        %v5932 = vld [vmem:[%s5917 + $0x70] sm:$0xff]
        %v5933 = vld [vmem:[%s5917 + $0x78] sm:$0xff]
        %v5934 = vld [vmem:[%s5917 + $0x80] sm:$0xff]
        %v5935 = vld [vmem:[%s5917 + $0x88] sm:$0xff]
        %v5936 = vld [vmem:[%s5917 + $0x90] sm:$0xff]
        %v5937 = vld [vmem:[%s5917 + $0x98] sm:$0xff]
        %v5938 = vld [vmem:[%s5917 + $0xa0] sm:$0xff]
        %v5939 = vld [vmem:[%s5917 + $0xa8] sm:$0xff]
        %v5940 = vld [vmem:[%s5917 + $0xb0] sm:$0xff]
        %v5941 = vld [vmem:[%s5917 + $0xb8] sm:$0xff]
        %v5942 = vld [vmem:[%s5917 + $0xc0] sm:$0xff]
        %v5943 = vld [vmem:[%s5917 + $0xc8] sm:$0xff]
        %v5944 = vld [vmem:[%s5917 + $0xd0] sm:$0xff]
        %v5945 = vld [vmem:[%s5917 + $0xd8] sm:$0xff]
        %v5946 = vld [vmem:[%s5917 + $0xe0] sm:$0xff]
        %v5947 = vld [vmem:[%s5917 + $0xe8] sm:$0xff]
        %v5948 = vld [vmem:[%s5917 + $0xf0] sm:$0xff]
        %v5949 = vld [vmem:[%s5917 + $0xf8] sm:$0xff]
        %v5950 = vld [vmem:[%s5917 + $0x100] sm:$0xff]
        %v5951 = vld [vmem:[%s5917 + $0x108] sm:$0xff]
        %v5952 = vld [vmem:[%s5917 + $0x110] sm:$0xff]
        %v5953 = vld [vmem:[%s5917 + $0x118] sm:$0xff]
        %v5954 = vld [vmem:[%s5917 + $0x120] sm:$0xff]
        %v5955 = vld [vmem:[%s5917 + $0x128] sm:$0xff]
        %v5956 = vld [vmem:[%s5917 + $0x130] sm:$0xff]
        %v5957 = vld [vmem:[%s5917 + $0x138] sm:$0xff]
        %v5958 = vld [vmem:[%s5917 + $0x140] sm:$0xff]
        %v5959 = vld [vmem:[%s5917 + $0x148] sm:$0xff]
        %v5960 = vld [vmem:[%s5917 + $0x150] sm:$0xff]
        %v5961 = vld [vmem:[%s5917 + $0x158] sm:$0xff]
        %v5962 = vld [vmem:[%s5917 + $0x160] sm:$0xff]
        %v5963 = vld [vmem:[%s5917 + $0x168] sm:$0xff]
        %v5964 = vld [vmem:[%s5917 + $0x170] sm:$0xff]
        %v5965 = vld [vmem:[%s5917 + $0x178] sm:$0xff]
        %v5966 = vld [vmem:[%s5917 + $0x180] sm:$0xff]
        %v5967 = vld [vmem:[%s5917 + $0x188] sm:$0xff]
        %v5968 = vld [vmem:[%s5917 + $0x190] sm:$0xff]
        %v5969 = vld [vmem:[%s5917 + $0x198] sm:$0xff]
        %v5970 = vld [vmem:[%s5917 + $0x1a0] sm:$0xff]
        %v5971 = vld [vmem:[%s5917 + $0x1a8] sm:$0xff]
        %v5972 = vld [vmem:[%s5917 + $0x1b0] sm:$0xff]
        %v5973 = vld [vmem:[%s5917 + $0x1b8] sm:$0xff]
        %v5974 = vld [vmem:[%s5917 + $0x1c0] sm:$0xff]
        %v5975 = vld [vmem:[%s5917 + $0x1c8] sm:$0xff]
        %v5976 = vld [vmem:[%s5917 + $0x1d0] sm:$0xff]
        %v5977 = vld [vmem:[%s5917 + $0x1d8] sm:$0xff]
        %v5978 = vld [vmem:[%s5917 + $0x1e0] sm:$0xff]
        %v5979 = vld [vmem:[%s5917 + $0x1e8] sm:$0xff]
        %v5980 = vld [vmem:[%s5917 + $0x1f0] sm:$0xff]
        %v5981 = vld [vmem:[%s5917 + $0x1f8] sm:$0xff]
        %v5982 = vld [vmem:[%s5917 + $0x200] sm:$0xff]
        %v5983 = vld [vmem:[%s5917 + $0x208] sm:$0xff]
        %v5984 = vld [vmem:[%s5917 + $0x210] sm:$0xff]
        %v5985 = vld [vmem:[%s5917 + $0x218] sm:$0xff]
        %v5986 = vld [vmem:[%s5917 + $0x220] sm:$0xff]
        %v5987 = vld [vmem:[%s5917 + $0x228] sm:$0xff]
        %v5988 = vld [vmem:[%s5917 + $0x230] sm:$0xff]
        %v5989 = vld [vmem:[%s5917 + $0x238] sm:$0xff]
        %v5990 = vld [vmem:[%s5917 + $0x240] sm:$0xff]
        %v5991 = vld [vmem:[%s5917 + $0x248] sm:$0xff]
        %v5992 = vld [vmem:[%s5917 + $0x250] sm:$0xff]
        %v5993 = vld [vmem:[%s5917 + $0x258] sm:$0xff]
        %v5994 = vld [vmem:[%s5917 + $0x260] sm:$0xff]
        %v5995 = vld [vmem:[%s5917 + $0x268] sm:$0xff]
        %v5996 = vld [vmem:[%s5917 + $0x270] sm:$0xff]
        %v5997 = vld [vmem:[%s5917 + $0x278] sm:$0xff]
        %v5998 = vld [vmem:[%s5917 + $0x280] sm:$0xff]
        %v5999 = vld [vmem:[%s5917 + $0x288] sm:$0xff]
        %v6000 = vld [vmem:[%s5917 + $0x290] sm:$0xff]
        %v6001 = vld [vmem:[%s5917 + $0x298] sm:$0xff]
        %v6002 = vld [vmem:[%s5917 + $0x2a0] sm:$0xff]
        %v6003 = vld [vmem:[%s5917 + $0x2a8] sm:$0xff]
        %v6004 = vld [vmem:[%s5917 + $0x2b0] sm:$0xff]
        %v6005 = vld [vmem:[%s5917 + $0x2b8] sm:$0xff]
        %v6006 = vld [vmem:[%s5917 + $0x2c0] sm:$0xff]
        %v6007 = vld [vmem:[%s5917 + $0x2c8] sm:$0xff]
        %v6008 = vld [vmem:[%s5917 + $0x2d0] sm:$0xff]
        %v6009 = vld [vmem:[%s5917 + $0x2d8] sm:$0xff]
        %v6010 = vld [vmem:[%s5917 + $0x2e0] sm:$0xff]
        %v6011 = vld [vmem:[%s5917 + $0x2e8] sm:$0xff]
        %v6012 = vld [vmem:[%s5917 + $0x2f0] sm:$0xff]
        %v6013 = vld [vmem:[%s5917 + $0x2f8] sm:$0xff]
        %v6014 = vld [vmem:[%s5917 + $0x300] sm:$0xff]
        %v6015 = vld [vmem:[%s5917 + $0x308] sm:$0xff]
        %v6016 = vld [vmem:[%s5917 + $0x310] sm:$0xff]
        %v6017 = vld [vmem:[%s5917 + $0x318] sm:$0xff]
        %v6018 = vld [vmem:[%s5917 + $0x320] sm:$0xff]
        %v6019 = vld [vmem:[%s5917 + $0x328] sm:$0xff]
        %v6020 = vld [vmem:[%s5917 + $0x330] sm:$0xff]
        %v6021 = vld [vmem:[%s5917 + $0x338] sm:$0xff]
        %v6022 = vld [vmem:[%s5917 + $0x340] sm:$0xff]
        %v6023 = vld [vmem:[%s5917 + $0x348] sm:$0xff]
        %v6024 = vld [vmem:[%s5917 + $0x350] sm:$0xff]
        %v6025 = vld [vmem:[%s5917 + $0x358] sm:$0xff]
        %v6026 = vld [vmem:[%s5917 + $0x360] sm:$0xff]
        %v6027 = vld [vmem:[%s5917 + $0x368] sm:$0xff]
        %v6028 = vld [vmem:[%s5917 + $0x370] sm:$0xff]
        %v6029 = vld [vmem:[%s5917 + $0x378] sm:$0xff]
        %v6030 = vld [vmem:[%s5917 + $0x380] sm:$0xff]
        %v6031 = vld [vmem:[%s5917 + $0x388] sm:$0xff]
        %v6032 = vld [vmem:[%s5917 + $0x390] sm:$0xff]
        %v6033 = vld [vmem:[%s5917 + $0x398] sm:$0xff]
        %v6034 = vld [vmem:[%s5917 + $0x3a0] sm:$0xff]
        %v6035 = vld [vmem:[%s5917 + $0x3a8] sm:$0xff]
        %v6036 = vld [vmem:[%s5917 + $0x3b0] sm:$0xff]
        %v6037 = vld [vmem:[%s5917 + $0x3b8] sm:$0xff]
        %v6038 = vld [vmem:[%s5917 + $0x3c0] sm:$0xff]
        %v6039 = vld [vmem:[%s5917 + $0x3c8] sm:$0xff]
        %v6040 = vld [vmem:[%s5917 + $0x3d0] sm:$0xff]
        %v6041 = vld [vmem:[%s5917 + $0x3d8] sm:$0xff]
        %v6042 = vld [vmem:[%s5917 + $0x3e0] sm:$0xff]
        %v6043 = vld [vmem:[%s5917 + $0x3e8] sm:$0xff]
        %v6044 = vld [vmem:[%s5917 + $0x3f0] sm:$0xff]
        %v6045 = vld [vmem:[%s5917 + $0x3f8] sm:$0xff]
        %v6047 = vlaneseq
        %v6048 = vshrl.u32 %v6047, 7
        %v6049 = vsub.s32 0, %v6048
        %v6050 = vrot.slane %v5714, %v6049
        %v6051 = vlaneseq
        %v6052 = vshrl.u32 %v6051, 7
        %v6053 = vsub.s32 1, %v6052
        %v6054 = vrot.slane %v5714, %v6053
        %v6055 = vlaneseq
        %v6056 = vshrl.u32 %v6055, 7
        %v6057 = vsub.s32 2, %v6056
        %v6058 = vrot.slane %v5714, %v6057
        %v6059 = vlaneseq
        %v6060 = vshrl.u32 %v6059, 7
        %v6061 = vsub.s32 3, %v6060
        %v6062 = vrot.slane %v5714, %v6061
        %v6195 = vunpack.c.l.b16 %v5918
        %v6196 = vunpack.c.h.b16 %v5918
        %v6197 = vunpack.c.l.b16 %v5919
        %v6198 = vunpack.c.h.b16 %v5919
        %v6199 = vunpack.c.l.b16 %v5920
        %v6200 = vunpack.c.h.b16 %v5920
        %v6201 = vunpack.c.l.b16 %v5921
        %v6202 = vunpack.c.h.b16 %v5921
        %v6203 = vunpack.c.l.b16 %v5922
        %v6204 = vunpack.c.h.b16 %v5922
        %v6205 = vunpack.c.l.b16 %v5923
        %v6206 = vunpack.c.h.b16 %v5923
        %v6207 = vunpack.c.l.b16 %v5924
        %v6208 = vunpack.c.h.b16 %v5924
        %v6209 = vunpack.c.l.b16 %v5925
        %v6210 = vunpack.c.h.b16 %v5925
        %v6211 = vunpack.c.l.b16 %v5926
        %v6212 = vunpack.c.h.b16 %v5926
        %v6213 = vunpack.c.l.b16 %v5927
        %v6214 = vunpack.c.h.b16 %v5927
        %v6215 = vunpack.c.l.b16 %v5928
        %v6216 = vunpack.c.h.b16 %v5928
        %v6217 = vunpack.c.l.b16 %v5929
        %v6218 = vunpack.c.h.b16 %v5929
        %v6219 = vunpack.c.l.b16 %v5930
        %v6220 = vunpack.c.h.b16 %v5930
        %v6221 = vunpack.c.l.b16 %v5931
        %v6222 = vunpack.c.h.b16 %v5931
        %v6223 = vunpack.c.l.b16 %v5932
        %v6224 = vunpack.c.h.b16 %v5932
        %v6225 = vunpack.c.l.b16 %v5933
        %v6226 = vunpack.c.h.b16 %v5933
        %v6227 = vunpack.c.l.b16 %v5934
        %v6228 = vunpack.c.h.b16 %v5934
        %v6229 = vunpack.c.l.b16 %v5935
        %v6230 = vunpack.c.h.b16 %v5935
        %v6231 = vunpack.c.l.b16 %v5936
        %v6232 = vunpack.c.h.b16 %v5936
        %v6233 = vunpack.c.l.b16 %v5937
        %v6234 = vunpack.c.h.b16 %v5937
        %v6235 = vunpack.c.l.b16 %v5938
        %v6236 = vunpack.c.h.b16 %v5938
        %v6237 = vunpack.c.l.b16 %v5939
        %v6238 = vunpack.c.h.b16 %v5939
        %v6239 = vunpack.c.l.b16 %v5940
        %v6240 = vunpack.c.h.b16 %v5940
        %v6241 = vunpack.c.l.b16 %v5941
        %v6242 = vunpack.c.h.b16 %v5941
        %v6243 = vunpack.c.l.b16 %v5942
        %v6244 = vunpack.c.h.b16 %v5942
        %v6245 = vunpack.c.l.b16 %v5943
        %v6246 = vunpack.c.h.b16 %v5943
        %v6247 = vunpack.c.l.b16 %v5944
        %v6248 = vunpack.c.h.b16 %v5944
        %v6249 = vunpack.c.l.b16 %v5945
        %v6250 = vunpack.c.h.b16 %v5945
        %v6251 = vunpack.c.l.b16 %v5946
        %v6252 = vunpack.c.h.b16 %v5946
        %v6253 = vunpack.c.l.b16 %v5947
        %v6254 = vunpack.c.h.b16 %v5947
        %v6255 = vunpack.c.l.b16 %v5948
        %v6256 = vunpack.c.h.b16 %v5948
        %v6257 = vunpack.c.l.b16 %v5949
        %v6258 = vunpack.c.h.b16 %v5949
        %v6259 = vunpack.c.l.b16 %v5950
        %v6260 = vunpack.c.h.b16 %v5950
        %v6261 = vunpack.c.l.b16 %v5951
        %v6262 = vunpack.c.h.b16 %v5951
        %v6263 = vunpack.c.l.b16 %v5952
        %v6264 = vunpack.c.h.b16 %v5952
        %v6265 = vunpack.c.l.b16 %v5953
        %v6266 = vunpack.c.h.b16 %v5953
        %v6267 = vunpack.c.l.b16 %v5954
        %v6268 = vunpack.c.h.b16 %v5954
        %v6269 = vunpack.c.l.b16 %v5955
        %v6270 = vunpack.c.h.b16 %v5955
        %v6271 = vunpack.c.l.b16 %v5956
        %v6272 = vunpack.c.h.b16 %v5956
        %v6273 = vunpack.c.l.b16 %v5957
        %v6274 = vunpack.c.h.b16 %v5957
        %v6275 = vunpack.c.l.b16 %v5958
        %v6276 = vunpack.c.h.b16 %v5958
        %v6277 = vunpack.c.l.b16 %v5959
        %v6278 = vunpack.c.h.b16 %v5959
        %v6279 = vunpack.c.l.b16 %v5960
        %v6280 = vunpack.c.h.b16 %v5960
        %v6281 = vunpack.c.l.b16 %v5961
        %v6282 = vunpack.c.h.b16 %v5961
        %v6283 = vunpack.c.l.b16 %v5962
        %v6284 = vunpack.c.h.b16 %v5962
        %v6285 = vunpack.c.l.b16 %v5963
        %v6286 = vunpack.c.h.b16 %v5963
        %v6287 = vunpack.c.l.b16 %v5964
        %v6288 = vunpack.c.h.b16 %v5964
        %v6289 = vunpack.c.l.b16 %v5965
        %v6290 = vunpack.c.h.b16 %v5965
        %v6291 = vunpack.c.l.b16 %v5966
        %v6292 = vunpack.c.h.b16 %v5966
        %v6293 = vunpack.c.l.b16 %v5967
        %v6294 = vunpack.c.h.b16 %v5967
        %v6295 = vunpack.c.l.b16 %v5968
        %v6296 = vunpack.c.h.b16 %v5968
        %v6297 = vunpack.c.l.b16 %v5969
        %v6298 = vunpack.c.h.b16 %v5969
        %v6299 = vunpack.c.l.b16 %v5970
        %v6300 = vunpack.c.h.b16 %v5970
        %v6301 = vunpack.c.l.b16 %v5971
        %v6302 = vunpack.c.h.b16 %v5971
        %v6303 = vunpack.c.l.b16 %v5972
        %v6304 = vunpack.c.h.b16 %v5972
        %v6305 = vunpack.c.l.b16 %v5973
        %v6306 = vunpack.c.h.b16 %v5973
        %v6307 = vunpack.c.l.b16 %v5974
        %v6308 = vunpack.c.h.b16 %v5974
        %v6309 = vunpack.c.l.b16 %v5975
        %v6310 = vunpack.c.h.b16 %v5975
        %v6311 = vunpack.c.l.b16 %v5976
        %v6312 = vunpack.c.h.b16 %v5976
        %v6313 = vunpack.c.l.b16 %v5977
        %v6314 = vunpack.c.h.b16 %v5977
        %v6315 = vunpack.c.l.b16 %v5978
        %v6316 = vunpack.c.h.b16 %v5978
        %v6317 = vunpack.c.l.b16 %v5979
        %v6318 = vunpack.c.h.b16 %v5979
        %v6319 = vunpack.c.l.b16 %v5980
        %v6320 = vunpack.c.h.b16 %v5980
        %v6321 = vunpack.c.l.b16 %v5981
        %v6322 = vunpack.c.h.b16 %v5981
        %v6323 = vunpack.c.l.b16 %v5982
        %v6324 = vunpack.c.h.b16 %v5982
        %v6325 = vunpack.c.l.b16 %v5983
        %v6326 = vunpack.c.h.b16 %v5983
        %v6327 = vunpack.c.l.b16 %v5984
        %v6328 = vunpack.c.h.b16 %v5984
        %v6329 = vunpack.c.l.b16 %v5985
        %v6330 = vunpack.c.h.b16 %v5985
        %v6331 = vunpack.c.l.b16 %v5986
        %v6332 = vunpack.c.h.b16 %v5986
        %v6333 = vunpack.c.l.b16 %v5987
        %v6334 = vunpack.c.h.b16 %v5987
        %v6335 = vunpack.c.l.b16 %v5988
        %v6336 = vunpack.c.h.b16 %v5988
        %v6337 = vunpack.c.l.b16 %v5989
        %v6338 = vunpack.c.h.b16 %v5989
        %v6339 = vunpack.c.l.b16 %v5990
        %v6340 = vunpack.c.h.b16 %v5990
        %v6341 = vunpack.c.l.b16 %v5991
        %v6342 = vunpack.c.h.b16 %v5991
        %v6343 = vunpack.c.l.b16 %v5992
        %v6344 = vunpack.c.h.b16 %v5992
        %v6345 = vunpack.c.l.b16 %v5993
        %v6346 = vunpack.c.h.b16 %v5993
        %v6347 = vunpack.c.l.b16 %v5994
        %v6348 = vunpack.c.h.b16 %v5994
        %v6349 = vunpack.c.l.b16 %v5995
        %v6350 = vunpack.c.h.b16 %v5995
        %v6351 = vunpack.c.l.b16 %v5996
        %v6352 = vunpack.c.h.b16 %v5996
        %v6353 = vunpack.c.l.b16 %v5997
        %v6354 = vunpack.c.h.b16 %v5997
        %v6355 = vunpack.c.l.b16 %v5998
        %v6356 = vunpack.c.h.b16 %v5998
        %v6357 = vunpack.c.l.b16 %v5999
        %v6358 = vunpack.c.h.b16 %v5999
        %v6359 = vunpack.c.l.b16 %v6000
        %v6360 = vunpack.c.h.b16 %v6000
        %v6361 = vunpack.c.l.b16 %v6001
        %v6362 = vunpack.c.h.b16 %v6001
        %v6363 = vunpack.c.l.b16 %v6002
        %v6364 = vunpack.c.h.b16 %v6002
        %v6365 = vunpack.c.l.b16 %v6003
        %v6366 = vunpack.c.h.b16 %v6003
        %v6367 = vunpack.c.l.b16 %v6004
        %v6368 = vunpack.c.h.b16 %v6004
        %v6369 = vunpack.c.l.b16 %v6005
        %v6370 = vunpack.c.h.b16 %v6005
        %v6371 = vunpack.c.l.b16 %v6006
        %v6372 = vunpack.c.h.b16 %v6006
        %v6373 = vunpack.c.l.b16 %v6007
        %v6374 = vunpack.c.h.b16 %v6007
        %v6375 = vunpack.c.l.b16 %v6008
        %v6376 = vunpack.c.h.b16 %v6008
        %v6377 = vunpack.c.l.b16 %v6009
        %v6378 = vunpack.c.h.b16 %v6009
        %v6379 = vunpack.c.l.b16 %v6010
        %v6380 = vunpack.c.h.b16 %v6010
        %v6381 = vunpack.c.l.b16 %v6011
        %v6382 = vunpack.c.h.b16 %v6011
        %v6383 = vunpack.c.l.b16 %v6012
        %v6384 = vunpack.c.h.b16 %v6012
        %v6385 = vunpack.c.l.b16 %v6013
        %v6386 = vunpack.c.h.b16 %v6013
        %v6387 = vunpack.c.l.b16 %v6014
        %v6388 = vunpack.c.h.b16 %v6014
        %v6389 = vunpack.c.l.b16 %v6015
        %v6390 = vunpack.c.h.b16 %v6015
        %v6391 = vunpack.c.l.b16 %v6016
        %v6392 = vunpack.c.h.b16 %v6016
        %v6393 = vunpack.c.l.b16 %v6017
        %v6394 = vunpack.c.h.b16 %v6017
        %v6395 = vunpack.c.l.b16 %v6018
        %v6396 = vunpack.c.h.b16 %v6018
        %v6397 = vunpack.c.l.b16 %v6019
        %v6398 = vunpack.c.h.b16 %v6019
        %v6399 = vunpack.c.l.b16 %v6020
        %v6400 = vunpack.c.h.b16 %v6020
        %v6401 = vunpack.c.l.b16 %v6021
        %v6402 = vunpack.c.h.b16 %v6021
        %v6403 = vunpack.c.l.b16 %v6022
        %v6404 = vunpack.c.h.b16 %v6022
        %v6405 = vunpack.c.l.b16 %v6023
        %v6406 = vunpack.c.h.b16 %v6023
        %v6407 = vunpack.c.l.b16 %v6024
        %v6408 = vunpack.c.h.b16 %v6024
        %v6409 = vunpack.c.l.b16 %v6025
        %v6410 = vunpack.c.h.b16 %v6025
        %v6411 = vunpack.c.l.b16 %v6026
        %v6412 = vunpack.c.h.b16 %v6026
        %v6413 = vunpack.c.l.b16 %v6027
        %v6414 = vunpack.c.h.b16 %v6027
        %v6415 = vunpack.c.l.b16 %v6028
        %v6416 = vunpack.c.h.b16 %v6028
        %v6417 = vunpack.c.l.b16 %v6029
        %v6418 = vunpack.c.h.b16 %v6029
        %v6419 = vunpack.c.l.b16 %v6030
        %v6420 = vunpack.c.h.b16 %v6030
        %v6421 = vunpack.c.l.b16 %v6031
        %v6422 = vunpack.c.h.b16 %v6031
        %v6423 = vunpack.c.l.b16 %v6032
        %v6424 = vunpack.c.h.b16 %v6032
        %v6425 = vunpack.c.l.b16 %v6033
        %v6426 = vunpack.c.h.b16 %v6033
        %v6427 = vunpack.c.l.b16 %v6034
        %v6428 = vunpack.c.h.b16 %v6034
        %v6429 = vunpack.c.l.b16 %v6035
        %v6430 = vunpack.c.h.b16 %v6035
        %v6431 = vunpack.c.l.b16 %v6036
        %v6432 = vunpack.c.h.b16 %v6036
        %v6433 = vunpack.c.l.b16 %v6037
        %v6434 = vunpack.c.h.b16 %v6037
        %v6435 = vunpack.c.l.b16 %v6038
        %v6436 = vunpack.c.h.b16 %v6038
        %v6437 = vunpack.c.l.b16 %v6039
        %v6438 = vunpack.c.h.b16 %v6039
        %v6439 = vunpack.c.l.b16 %v6040
        %v6440 = vunpack.c.h.b16 %v6040
        %v6441 = vunpack.c.l.b16 %v6041
        %v6442 = vunpack.c.h.b16 %v6041
        %v6443 = vunpack.c.l.b16 %v6042
        %v6444 = vunpack.c.h.b16 %v6042
        %v6445 = vunpack.c.l.b16 %v6043
        %v6446 = vunpack.c.h.b16 %v6043
        %v6447 = vunpack.c.l.b16 %v6044
        %v6448 = vunpack.c.h.b16 %v6044
        %v6449 = vunpack.c.l.b16 %v6045
        %v6450 = vunpack.c.h.b16 %v6045
        %v6451 = vpack.c.b16 %v6199, %v6195
        %v6452 = vpack.c.b16 %v6200, %v6196
        %v6453 = vpack.c.b16 %v6201, %v6197
        %v6454 = vpack.c.b16 %v6202, %v6198
        %v6455 = vpack.c.b16 %v6207, %v6203
        %v6456 = vpack.c.b16 %v6208, %v6204
        %v6457 = vpack.c.b16 %v6209, %v6205
        %v6458 = vpack.c.b16 %v6210, %v6206
        %v6459 = vpack.c.b16 %v6215, %v6211
        %v6460 = vpack.c.b16 %v6216, %v6212
        %v6461 = vpack.c.b16 %v6217, %v6213
        %v6462 = vpack.c.b16 %v6218, %v6214
        %v6463 = vpack.c.b16 %v6223, %v6219
        %v6464 = vpack.c.b16 %v6224, %v6220
        %v6465 = vpack.c.b16 %v6225, %v6221
        %v6466 = vpack.c.b16 %v6226, %v6222
        %v6467 = vpack.c.b16 %v6231, %v6227
        %v6468 = vpack.c.b16 %v6232, %v6228
        %v6469 = vpack.c.b16 %v6233, %v6229
        %v6470 = vpack.c.b16 %v6234, %v6230
        %v6471 = vpack.c.b16 %v6239, %v6235
        %v6472 = vpack.c.b16 %v6240, %v6236
        %v6473 = vpack.c.b16 %v6241, %v6237
        %v6474 = vpack.c.b16 %v6242, %v6238
        %v6475 = vpack.c.b16 %v6247, %v6243
        %v6476 = vpack.c.b16 %v6248, %v6244
        %v6477 = vpack.c.b16 %v6249, %v6245
        %v6478 = vpack.c.b16 %v6250, %v6246
        %v6479 = vpack.c.b16 %v6255, %v6251
        %v6480 = vpack.c.b16 %v6256, %v6252
        %v6481 = vpack.c.b16 %v6257, %v6253
        %v6482 = vpack.c.b16 %v6258, %v6254
        %v6483 = vpack.c.b16 %v6263, %v6259
        %v6484 = vpack.c.b16 %v6264, %v6260
        %v6485 = vpack.c.b16 %v6265, %v6261
        %v6486 = vpack.c.b16 %v6266, %v6262
        %v6487 = vpack.c.b16 %v6271, %v6267
        %v6488 = vpack.c.b16 %v6272, %v6268
        %v6489 = vpack.c.b16 %v6273, %v6269
        %v6490 = vpack.c.b16 %v6274, %v6270
        %v6491 = vpack.c.b16 %v6279, %v6275
        %v6492 = vpack.c.b16 %v6280, %v6276
        %v6493 = vpack.c.b16 %v6281, %v6277
        %v6494 = vpack.c.b16 %v6282, %v6278
        %v6495 = vpack.c.b16 %v6287, %v6283
        %v6496 = vpack.c.b16 %v6288, %v6284
        %v6497 = vpack.c.b16 %v6289, %v6285
        %v6498 = vpack.c.b16 %v6290, %v6286
        %v6499 = vpack.c.b16 %v6295, %v6291
        %v6500 = vpack.c.b16 %v6296, %v6292
        %v6501 = vpack.c.b16 %v6297, %v6293
        %v6502 = vpack.c.b16 %v6298, %v6294
        %v6503 = vpack.c.b16 %v6303, %v6299
        %v6504 = vpack.c.b16 %v6304, %v6300
        %v6505 = vpack.c.b16 %v6305, %v6301
        %v6506 = vpack.c.b16 %v6306, %v6302
        %v6507 = vpack.c.b16 %v6311, %v6307
        %v6508 = vpack.c.b16 %v6312, %v6308
        %v6509 = vpack.c.b16 %v6313, %v6309
        %v6510 = vpack.c.b16 %v6314, %v6310
        %v6511 = vpack.c.b16 %v6319, %v6315
        %v6512 = vpack.c.b16 %v6320, %v6316
        %v6513 = vpack.c.b16 %v6321, %v6317
        %v6514 = vpack.c.b16 %v6322, %v6318
        %v6515 = vpack.c.b16 %v6327, %v6323
        %v6516 = vpack.c.b16 %v6328, %v6324
        %v6517 = vpack.c.b16 %v6329, %v6325
        %v6518 = vpack.c.b16 %v6330, %v6326
        %v6519 = vpack.c.b16 %v6335, %v6331
        %v6520 = vpack.c.b16 %v6336, %v6332
        %v6521 = vpack.c.b16 %v6337, %v6333
        %v6522 = vpack.c.b16 %v6338, %v6334
        %v6523 = vpack.c.b16 %v6343, %v6339
        %v6524 = vpack.c.b16 %v6344, %v6340
        %v6525 = vpack.c.b16 %v6345, %v6341
        %v6526 = vpack.c.b16 %v6346, %v6342
        %v6527 = vpack.c.b16 %v6351, %v6347
        %v6528 = vpack.c.b16 %v6352, %v6348
        %v6529 = vpack.c.b16 %v6353, %v6349
        %v6530 = vpack.c.b16 %v6354, %v6350
        %v6531 = vpack.c.b16 %v6359, %v6355
        %v6532 = vpack.c.b16 %v6360, %v6356
        %v6533 = vpack.c.b16 %v6361, %v6357
        %v6534 = vpack.c.b16 %v6362, %v6358
        %v6535 = vpack.c.b16 %v6367, %v6363
        %v6536 = vpack.c.b16 %v6368, %v6364
        %v6537 = vpack.c.b16 %v6369, %v6365
        %v6538 = vpack.c.b16 %v6370, %v6366
        %v6539 = vpack.c.b16 %v6375, %v6371
        %v6540 = vpack.c.b16 %v6376, %v6372
        %v6541 = vpack.c.b16 %v6377, %v6373
        %v6542 = vpack.c.b16 %v6378, %v6374
        %v6543 = vpack.c.b16 %v6383, %v6379
        %v6544 = vpack.c.b16 %v6384, %v6380
        %v6545 = vpack.c.b16 %v6385, %v6381
        %v6546 = vpack.c.b16 %v6386, %v6382
        %v6547 = vpack.c.b16 %v6391, %v6387
        %v6548 = vpack.c.b16 %v6392, %v6388
        %v6549 = vpack.c.b16 %v6393, %v6389
        %v6550 = vpack.c.b16 %v6394, %v6390
        %v6551 = vpack.c.b16 %v6399, %v6395
        %v6552 = vpack.c.b16 %v6400, %v6396
        %v6553 = vpack.c.b16 %v6401, %v6397
        %v6554 = vpack.c.b16 %v6402, %v6398
        %v6555 = vpack.c.b16 %v6407, %v6403
        %v6556 = vpack.c.b16 %v6408, %v6404
        %v6557 = vpack.c.b16 %v6409, %v6405
        %v6558 = vpack.c.b16 %v6410, %v6406
        %v6559 = vpack.c.b16 %v6415, %v6411
        %v6560 = vpack.c.b16 %v6416, %v6412
        %v6561 = vpack.c.b16 %v6417, %v6413
        %v6562 = vpack.c.b16 %v6418, %v6414
        %v6563 = vpack.c.b16 %v6423, %v6419
        %v6564 = vpack.c.b16 %v6424, %v6420
        %v6565 = vpack.c.b16 %v6425, %v6421
        %v6566 = vpack.c.b16 %v6426, %v6422
        %v6567 = vpack.c.b16 %v6431, %v6427
        %v6568 = vpack.c.b16 %v6432, %v6428
        %v6569 = vpack.c.b16 %v6433, %v6429
        %v6570 = vpack.c.b16 %v6434, %v6430
        %v6571 = vpack.c.b16 %v6439, %v6435
        %v6572 = vpack.c.b16 %v6440, %v6436
        %v6573 = vpack.c.b16 %v6441, %v6437
        %v6574 = vpack.c.b16 %v6442, %v6438
        %v6575 = vpack.c.b16 %v6447, %v6443
        %v6576 = vpack.c.b16 %v6448, %v6444
        %v6577 = vpack.c.b16 %v6449, %v6445
        %v6578 = vpack.c.b16 %v6450, %v6446
        %6707 = vmatprep.subr.bf16.mxu0 %v6480
        %6708 = vmatpush1.bf16.msra.mxu0 %v6479
        %6709 = vmatprep.subr.bf16.mxu0 %v6476
        %6710 = vmatpush1.bf16.msra.mxu0 %v6475
        %6711 = vmatprep.subr.bf16.mxu0 %v6472
        %6712 = vmatpush1.bf16.msra.mxu0 %v6471
        %6713 = vmatprep.subr.bf16.mxu0 %v6468
        %6714 = vmatpush1.bf16.msra.mxu0 %v6467
        %6715 = vmatprep.subr.bf16.mxu0 %v6464
        %6716 = vmatpush1.bf16.msra.mxu0 %v6463
        %6717 = vmatprep.subr.bf16.mxu0 %v6460
        %6718 = vmatpush1.bf16.msra.mxu0 %v6459
        %6719 = vmatprep.subr.bf16.mxu0 %v6456
        %6720 = vmatpush1.bf16.msra.mxu0 %v6455
        %6721 = vmatprep.subr.bf16.mxu0 %v6452
        %6722 = vmatpush1.bf16.msra.mxu0 %v6451
        %6723 = vmatprep.subr.bf16.mxu0 %v6512
        %6724 = vmatpush2.bf16.msra.mxu0 %v6511
        %6725 = vmatprep.subr.bf16.mxu0 %v6508
        %6726 = vmatpush2.bf16.msra.mxu0 %v6507
        %6727 = vmatprep.subr.bf16.mxu0 %v6504
        %6728 = vmatpush2.bf16.msra.mxu0 %v6503
        %6729 = vmatprep.subr.bf16.mxu0 %v6500
        %6730 = vmatpush2.bf16.msra.mxu0 %v6499
        %6731 = vmatprep.subr.bf16.mxu0 %v6496
        %6732 = vmatpush2.bf16.msra.mxu0 %v6495
        %6733 = vmatprep.subr.bf16.mxu0 %v6492
        %6734 = vmatpush2.bf16.msra.mxu0 %v6491
        %6735 = vmatprep.subr.bf16.mxu0 %v6488
        %6736 = vmatpush2.bf16.msra.mxu0 %v6487
        %6737 = vmatprep.subr.bf16.mxu0 %v6484
        %6738 = vmatpush2.bf16.msra.mxu0 %v6483
        %6739 = vmatprep.mubr.bf16.mxu0 %v5910
        %6740 = vmatmul.mubr.bf16.gmra.mxu0 %v5909
        %v6741 = vpop.f32.mrf.mxu0
        %v6742 = vadd.f32 %v6050, %v6741
        %v6743 = vpop.f32.mrf.mxu0
        %v6744 = vadd.f32 %v6054, %v6743
        %v6745 = vpop.f32.mrf.mxu0
        %v6746 = vadd.f32 %v6050, %v6745
        %v6747 = vpop.f32.mrf.mxu0
        %v6748 = vadd.f32 %v6054, %v6747
        %6749 = vmatprep.mubr.bf16.mxu0 %v5914
        %6750 = vmatmul.mubr.bf16.gmra.mxu0 %v5913
        %v6751 = vpop.f32.mrf.mxu0
        %v6752 = vadd.f32 %v6050, %v6751
        %v6753 = vpop.f32.mrf.mxu0
        %v6754 = vadd.f32 %v6054, %v6753
        %v6755 = vpop.f32.mrf.mxu0
        %v6756 = vadd.f32 %v6050, %v6755
        %v6757 = vpop.f32.mrf.mxu0
        %v6758 = vadd.f32 %v6054, %v6757
        %6759 = vdwg.mxu0
        %6760 = vmatprep.subr.bf16.mxu0 %v6544
        %6761 = vmatpush1.bf16.msra.mxu0 %v6543
        %6762 = vmatprep.subr.bf16.mxu0 %v6540
        %6763 = vmatpush1.bf16.msra.mxu0 %v6539
        %6764 = vmatprep.subr.bf16.mxu0 %v6536
        %6765 = vmatpush1.bf16.msra.mxu0 %v6535
        %6766 = vmatprep.subr.bf16.mxu0 %v6532
        %6767 = vmatpush1.bf16.msra.mxu0 %v6531
        %6768 = vmatprep.subr.bf16.mxu0 %v6528
        %6769 = vmatpush1.bf16.msra.mxu0 %v6527
        %6770 = vmatprep.subr.bf16.mxu0 %v6524
        %6771 = vmatpush1.bf16.msra.mxu0 %v6523
        %6772 = vmatprep.subr.bf16.mxu0 %v6520
        %6773 = vmatpush1.bf16.msra.mxu0 %v6519
        %6774 = vmatprep.subr.bf16.mxu0 %v6516
        %6775 = vmatpush1.bf16.msra.mxu0 %v6515
        %6776 = vmatprep.subr.bf16.mxu0 %v6576
        %6777 = vmatpush2.bf16.msra.mxu0 %v6575
        %6778 = vmatprep.subr.bf16.mxu0 %v6572
        %6779 = vmatpush2.bf16.msra.mxu0 %v6571
        %6780 = vmatprep.subr.bf16.mxu0 %v6568
        %6781 = vmatpush2.bf16.msra.mxu0 %v6567
        %6782 = vmatprep.subr.bf16.mxu0 %v6564
        %6783 = vmatpush2.bf16.msra.mxu0 %v6563
        %6784 = vmatprep.subr.bf16.mxu0 %v6560
        %6785 = vmatpush2.bf16.msra.mxu0 %v6559
        %6786 = vmatprep.subr.bf16.mxu0 %v6556
        %6787 = vmatpush2.bf16.msra.mxu0 %v6555
        %6788 = vmatprep.subr.bf16.mxu0 %v6552
        %6789 = vmatpush2.bf16.msra.mxu0 %v6551
        %6790 = vmatprep.subr.bf16.mxu0 %v6548
        %6791 = vmatpush2.bf16.msra.mxu0 %v6547
        %6792 = vmatprep.mubr.bf16.mxu0 %v5912
        %6793 = vmatmul.mubr.bf16.gmra.mxu0 %v5911
        %v6794 = vpop.f32.mrf.mxu0
        %v6795 = vadd.f32 %v6742, %v6794
        %v6796 = vpop.f32.mrf.mxu0
        %v6797 = vadd.f32 %v6744, %v6796
        %v6798 = vpop.f32.mrf.mxu0
        %v6799 = vadd.f32 %v6746, %v6798
        %v6800 = vpop.f32.mrf.mxu0
        %v6801 = vadd.f32 %v6748, %v6800
        %6802 = vmatprep.mubr.bf16.mxu0 %v5916
        %6803 = vmatmul.mubr.bf16.gmra.mxu0 %v5915
        %v6804 = vpop.f32.mrf.mxu0
        %v6805 = vadd.f32 %v6752, %v6804
        %v6806 = vpop.f32.mrf.mxu0
        %v6807 = vadd.f32 %v6754, %v6806
        %v6808 = vpop.f32.mrf.mxu0
        %v6809 = vadd.f32 %v6756, %v6808
        %v6810 = vpop.f32.mrf.mxu0
        %v6811 = vadd.f32 %v6758, %v6810
        %6812 = vdwg.mxu0
        %6813 = vmatprep.subr.bf16.mxu0 %v6482
        %6814 = vmatpush1.bf16.msra.mxu0 %v6481
        %6815 = vmatprep.subr.bf16.mxu0 %v6478
        %6816 = vmatpush1.bf16.msra.mxu0 %v6477
        %6817 = vmatprep.subr.bf16.mxu0 %v6474
        %6818 = vmatpush1.bf16.msra.mxu0 %v6473
        %6819 = vmatprep.subr.bf16.mxu0 %v6470
        %6820 = vmatpush1.bf16.msra.mxu0 %v6469
        %6821 = vmatprep.subr.bf16.mxu0 %v6466
        %6822 = vmatpush1.bf16.msra.mxu0 %v6465
        %6823 = vmatprep.subr.bf16.mxu0 %v6462
        %6824 = vmatpush1.bf16.msra.mxu0 %v6461
        %6825 = vmatprep.subr.bf16.mxu0 %v6458
        %6826 = vmatpush1.bf16.msra.mxu0 %v6457
        %6827 = vmatprep.subr.bf16.mxu0 %v6454
        %6828 = vmatpush1.bf16.msra.mxu0 %v6453
        %6829 = vmatprep.subr.bf16.mxu0 %v6514
        %6830 = vmatpush2.bf16.msra.mxu0 %v6513
        %6831 = vmatprep.subr.bf16.mxu0 %v6510
        %6832 = vmatpush2.bf16.msra.mxu0 %v6509
        %6833 = vmatprep.subr.bf16.mxu0 %v6506
        %6834 = vmatpush2.bf16.msra.mxu0 %v6505
        %6835 = vmatprep.subr.bf16.mxu0 %v6502
        %6836 = vmatpush2.bf16.msra.mxu0 %v6501
        %6837 = vmatprep.subr.bf16.mxu0 %v6498
        %6838 = vmatpush2.bf16.msra.mxu0 %v6497
        %6839 = vmatprep.subr.bf16.mxu0 %v6494
        %6840 = vmatpush2.bf16.msra.mxu0 %v6493
        %6841 = vmatprep.subr.bf16.mxu0 %v6490
        %6842 = vmatpush2.bf16.msra.mxu0 %v6489
        %6843 = vmatprep.subr.bf16.mxu0 %v6486
        %6844 = vmatpush2.bf16.msra.mxu0 %v6485
        %6845 = vmatprep.mubr.bf16.mxu0 %v5910
        %6846 = vmatmul.mubr.bf16.gmra.mxu0 %v5909
        %v6847 = vpop.f32.mrf.mxu0
        %v6848 = vadd.f32 %v6058, %v6847
        %v6849 = vpop.f32.mrf.mxu0
        %v6850 = vadd.f32 %v6062, %v6849
        %v6851 = vpop.f32.mrf.mxu0
        %v6852 = vadd.f32 %v6058, %v6851
        %v6853 = vpop.f32.mrf.mxu0
        %v6854 = vadd.f32 %v6062, %v6853
        %6855 = vmatprep.mubr.bf16.mxu0 %v5914
        %6856 = vmatmul.mubr.bf16.gmra.mxu0 %v5913
        %v6857 = vpop.f32.mrf.mxu0
        %v6858 = vadd.f32 %v6058, %v6857
        %v6859 = vpop.f32.mrf.mxu0
        %v6860 = vadd.f32 %v6062, %v6859
        %v6861 = vpop.f32.mrf.mxu0
        %v6862 = vadd.f32 %v6058, %v6861
        %v6863 = vpop.f32.mrf.mxu0
        %v6864 = vadd.f32 %v6062, %v6863
        %6865 = vdwg.mxu0
        %6866 = vmatprep.subr.bf16.mxu0 %v6546
        %6867 = vmatpush1.bf16.msra.mxu0 %v6545
        %6868 = vmatprep.subr.bf16.mxu0 %v6542
        %6869 = vmatpush1.bf16.msra.mxu0 %v6541
        %6870 = vmatprep.subr.bf16.mxu0 %v6538
        %6871 = vmatpush1.bf16.msra.mxu0 %v6537
        %6872 = vmatprep.subr.bf16.mxu0 %v6534
        %6873 = vmatpush1.bf16.msra.mxu0 %v6533
        %6874 = vmatprep.subr.bf16.mxu0 %v6530
        %6875 = vmatpush1.bf16.msra.mxu0 %v6529
        %6876 = vmatprep.subr.bf16.mxu0 %v6526
        %6877 = vmatpush1.bf16.msra.mxu0 %v6525
        %6878 = vmatprep.subr.bf16.mxu0 %v6522
        %6879 = vmatpush1.bf16.msra.mxu0 %v6521
        %6880 = vmatprep.subr.bf16.mxu0 %v6518
        %6881 = vmatpush1.bf16.msra.mxu0 %v6517
        %6882 = vmatprep.subr.bf16.mxu0 %v6578
        %6883 = vmatpush2.bf16.msra.mxu0 %v6577
        %6884 = vmatprep.subr.bf16.mxu0 %v6574
        %6885 = vmatpush2.bf16.msra.mxu0 %v6573
        %6886 = vmatprep.subr.bf16.mxu0 %v6570
        %6887 = vmatpush2.bf16.msra.mxu0 %v6569
        %6888 = vmatprep.subr.bf16.mxu0 %v6566
        %6889 = vmatpush2.bf16.msra.mxu0 %v6565
        %6890 = vmatprep.subr.bf16.mxu0 %v6562
        %6891 = vmatpush2.bf16.msra.mxu0 %v6561
        %6892 = vmatprep.subr.bf16.mxu0 %v6558
        %6893 = vmatpush2.bf16.msra.mxu0 %v6557
        %6894 = vmatprep.subr.bf16.mxu0 %v6554
        %6895 = vmatpush2.bf16.msra.mxu0 %v6553
        %6896 = vmatprep.subr.bf16.mxu0 %v6550
        %6897 = vmatpush2.bf16.msra.mxu0 %v6549
        %6898 = vmatprep.mubr.bf16.mxu0 %v5912
        %6899 = vmatmul.mubr.bf16.gmra.mxu0 %v5911
        %v6900 = vpop.f32.mrf.mxu0
        %v6901 = vadd.f32 %v6848, %v6900
        %v6902 = vpop.f32.mrf.mxu0
        %v6903 = vadd.f32 %v6850, %v6902
        %v6904 = vpop.f32.mrf.mxu0
        %v6905 = vadd.f32 %v6852, %v6904
        %v6906 = vpop.f32.mrf.mxu0
        %v6907 = vadd.f32 %v6854, %v6906
        %6908 = vmatprep.mubr.bf16.mxu0 %v5916
        %6909 = vmatmul.mubr.bf16.gmra.mxu0 %v5915
        %v6910 = vpop.f32.mrf.mxu0
        %v6911 = vadd.f32 %v6858, %v6910
        %v6912 = vpop.f32.mrf.mxu0
        %v6913 = vadd.f32 %v6860, %v6912
        %v6914 = vpop.f32.mrf.mxu0
        %v6915 = vadd.f32 %v6862, %v6914
        %v6916 = vpop.f32.mrf.mxu0
        %v6917 = vadd.f32 %v6864, %v6916
        %6918 = vdwg.mxu0
        %v6919 = vmax.f32 %v6795, 0.0
        %v6920 = vmax.f32 %v6797, 0.0
        %v6921 = vmax.f32 %v6901, 0.0
        %v6922 = vmax.f32 %v6903, 0.0
        %v6923 = vmax.f32 %v6799, 0.0
        %v6924 = vmax.f32 %v6801, 0.0
        %v6925 = vmax.f32 %v6905, 0.0
        %v6926 = vmax.f32 %v6907, 0.0
        %v6927 = vmax.f32 %v6805, 0.0
        %v6928 = vmax.f32 %v6807, 0.0
        %v6929 = vmax.f32 %v6911, 0.0
        %v6930 = vmax.f32 %v6913, 0.0
        %v6931 = vmax.f32 %v6809, 0.0
        %v6932 = vmax.f32 %v6811, 0.0
        %v6933 = vmax.f32 %v6915, 0.0
        %v6934 = vmax.f32 %v6917, 0.0
        %v6935 = vpack.c.bf16 %v6923, %v6919
        %v6936 = vpack.c.bf16 %v6924, %v6920
        %v6937 = vpack.c.bf16 %v6925, %v6921
        %v6938 = vpack.c.bf16 %v6926, %v6922
        %v6939 = vpack.c.bf16 %v6931, %v6927
        %v6940 = vpack.c.bf16 %v6932, %v6928
        %v6941 = vpack.c.bf16 %v6933, %v6929
        %v6942 = vpack.c.bf16 %v6934, %v6930
        %s6943 = scalar_lea.vmem %s377, 2048 [#allocation8]
        %v6944 = vld [vmem:[%s6943] sm:$0xff]
        %v6945 = vld [vmem:[%s6943 + $0x8] sm:$0xff]
        %v6946 = vld [vmem:[%s6943 + $0x10] sm:$0xff]
        %v6947 = vld [vmem:[%s6943 + $0x18] sm:$0xff]
        %v6948 = vld [vmem:[%s6943 + $0x20] sm:$0xff]
        %v6949 = vld [vmem:[%s6943 + $0x28] sm:$0xff]
        %v6950 = vld [vmem:[%s6943 + $0x30] sm:$0xff]
        %v6951 = vld [vmem:[%s6943 + $0x38] sm:$0xff]
        %v6952 = vld [vmem:[%s6943 + $0x40] sm:$0xff]
        %v6953 = vld [vmem:[%s6943 + $0x48] sm:$0xff]
        %v6954 = vld [vmem:[%s6943 + $0x50] sm:$0xff]
        %v6955 = vld [vmem:[%s6943 + $0x58] sm:$0xff]
        %v6956 = vld [vmem:[%s6943 + $0x60] sm:$0xff]
        %v6957 = vld [vmem:[%s6943 + $0x68] sm:$0xff]
        %v6958 = vld [vmem:[%s6943 + $0x70] sm:$0xff]
        %v6959 = vld [vmem:[%s6943 + $0x78] sm:$0xff]
        %v6960 = vld [vmem:[%s6943 + $0x80] sm:$0xff]
        %v6961 = vld [vmem:[%s6943 + $0x88] sm:$0xff]
        %v6962 = vld [vmem:[%s6943 + $0x90] sm:$0xff]
        %v6963 = vld [vmem:[%s6943 + $0x98] sm:$0xff]
        %v6964 = vld [vmem:[%s6943 + $0xa0] sm:$0xff]
        %v6965 = vld [vmem:[%s6943 + $0xa8] sm:$0xff]
        %v6966 = vld [vmem:[%s6943 + $0xb0] sm:$0xff]
        %v6967 = vld [vmem:[%s6943 + $0xb8] sm:$0xff]
        %v6968 = vld [vmem:[%s6943 + $0xc0] sm:$0xff]
        %v6969 = vld [vmem:[%s6943 + $0xc8] sm:$0xff]
        %v6970 = vld [vmem:[%s6943 + $0xd0] sm:$0xff]
        %v6971 = vld [vmem:[%s6943 + $0xd8] sm:$0xff]
        %v6972 = vld [vmem:[%s6943 + $0xe0] sm:$0xff]
        %v6973 = vld [vmem:[%s6943 + $0xe8] sm:$0xff]
        %v6974 = vld [vmem:[%s6943 + $0xf0] sm:$0xff]
        %v6975 = vld [vmem:[%s6943 + $0xf8] sm:$0xff]
        %v6976 = vld [vmem:[%s6943 + $0x100] sm:$0xff]
        %v6977 = vld [vmem:[%s6943 + $0x108] sm:$0xff]
        %v6978 = vld [vmem:[%s6943 + $0x110] sm:$0xff]
        %v6979 = vld [vmem:[%s6943 + $0x118] sm:$0xff]
        %v6980 = vld [vmem:[%s6943 + $0x120] sm:$0xff]
        %v6981 = vld [vmem:[%s6943 + $0x128] sm:$0xff]
        %v6982 = vld [vmem:[%s6943 + $0x130] sm:$0xff]
        %v6983 = vld [vmem:[%s6943 + $0x138] sm:$0xff]
        %v6984 = vld [vmem:[%s6943 + $0x140] sm:$0xff]
        %v6985 = vld [vmem:[%s6943 + $0x148] sm:$0xff]
        %v6986 = vld [vmem:[%s6943 + $0x150] sm:$0xff]
        %v6987 = vld [vmem:[%s6943 + $0x158] sm:$0xff]
        %v6988 = vld [vmem:[%s6943 + $0x160] sm:$0xff]
        %v6989 = vld [vmem:[%s6943 + $0x168] sm:$0xff]
        %v6990 = vld [vmem:[%s6943 + $0x170] sm:$0xff]
        %v6991 = vld [vmem:[%s6943 + $0x178] sm:$0xff]
        %v6992 = vld [vmem:[%s6943 + $0x180] sm:$0xff]
        %v6993 = vld [vmem:[%s6943 + $0x188] sm:$0xff]
        %v6994 = vld [vmem:[%s6943 + $0x190] sm:$0xff]
        %v6995 = vld [vmem:[%s6943 + $0x198] sm:$0xff]
        %v6996 = vld [vmem:[%s6943 + $0x1a0] sm:$0xff]
        %v6997 = vld [vmem:[%s6943 + $0x1a8] sm:$0xff]
        %v6998 = vld [vmem:[%s6943 + $0x1b0] sm:$0xff]
        %v6999 = vld [vmem:[%s6943 + $0x1b8] sm:$0xff]
        %v7000 = vld [vmem:[%s6943 + $0x1c0] sm:$0xff]
        %v7001 = vld [vmem:[%s6943 + $0x1c8] sm:$0xff]
        %v7002 = vld [vmem:[%s6943 + $0x1d0] sm:$0xff]
        %v7003 = vld [vmem:[%s6943 + $0x1d8] sm:$0xff]
        %v7004 = vld [vmem:[%s6943 + $0x1e0] sm:$0xff]
        %v7005 = vld [vmem:[%s6943 + $0x1e8] sm:$0xff]
        %v7006 = vld [vmem:[%s6943 + $0x1f0] sm:$0xff]
        %v7007 = vld [vmem:[%s6943 + $0x1f8] sm:$0xff]
        %v7008 = vld [vmem:[%s6943 + $0x200] sm:$0xff]
        %v7009 = vld [vmem:[%s6943 + $0x208] sm:$0xff]
        %v7010 = vld [vmem:[%s6943 + $0x210] sm:$0xff]
        %v7011 = vld [vmem:[%s6943 + $0x218] sm:$0xff]
        %v7012 = vld [vmem:[%s6943 + $0x220] sm:$0xff]
        %v7013 = vld [vmem:[%s6943 + $0x228] sm:$0xff]
        %v7014 = vld [vmem:[%s6943 + $0x230] sm:$0xff]
        %v7015 = vld [vmem:[%s6943 + $0x238] sm:$0xff]
        %v7016 = vld [vmem:[%s6943 + $0x240] sm:$0xff]
        %v7017 = vld [vmem:[%s6943 + $0x248] sm:$0xff]
        %v7018 = vld [vmem:[%s6943 + $0x250] sm:$0xff]
        %v7019 = vld [vmem:[%s6943 + $0x258] sm:$0xff]
        %v7020 = vld [vmem:[%s6943 + $0x260] sm:$0xff]
        %v7021 = vld [vmem:[%s6943 + $0x268] sm:$0xff]
        %v7022 = vld [vmem:[%s6943 + $0x270] sm:$0xff]
        %v7023 = vld [vmem:[%s6943 + $0x278] sm:$0xff]
        %v7024 = vld [vmem:[%s6943 + $0x280] sm:$0xff]
        %v7025 = vld [vmem:[%s6943 + $0x288] sm:$0xff]
        %v7026 = vld [vmem:[%s6943 + $0x290] sm:$0xff]
        %v7027 = vld [vmem:[%s6943 + $0x298] sm:$0xff]
        %v7028 = vld [vmem:[%s6943 + $0x2a0] sm:$0xff]
        %v7029 = vld [vmem:[%s6943 + $0x2a8] sm:$0xff]
        %v7030 = vld [vmem:[%s6943 + $0x2b0] sm:$0xff]
        %v7031 = vld [vmem:[%s6943 + $0x2b8] sm:$0xff]
        %v7032 = vld [vmem:[%s6943 + $0x2c0] sm:$0xff]
        %v7033 = vld [vmem:[%s6943 + $0x2c8] sm:$0xff]
        %v7034 = vld [vmem:[%s6943 + $0x2d0] sm:$0xff]
        %v7035 = vld [vmem:[%s6943 + $0x2d8] sm:$0xff]
        %v7036 = vld [vmem:[%s6943 + $0x2e0] sm:$0xff]
        %v7037 = vld [vmem:[%s6943 + $0x2e8] sm:$0xff]
        %v7038 = vld [vmem:[%s6943 + $0x2f0] sm:$0xff]
        %v7039 = vld [vmem:[%s6943 + $0x2f8] sm:$0xff]
        %v7040 = vld [vmem:[%s6943 + $0x300] sm:$0xff]
        %v7041 = vld [vmem:[%s6943 + $0x308] sm:$0xff]
        %v7042 = vld [vmem:[%s6943 + $0x310] sm:$0xff]
        %v7043 = vld [vmem:[%s6943 + $0x318] sm:$0xff]
        %v7044 = vld [vmem:[%s6943 + $0x320] sm:$0xff]
        %v7045 = vld [vmem:[%s6943 + $0x328] sm:$0xff]
        %v7046 = vld [vmem:[%s6943 + $0x330] sm:$0xff]
        %v7047 = vld [vmem:[%s6943 + $0x338] sm:$0xff]
        %v7048 = vld [vmem:[%s6943 + $0x340] sm:$0xff]
        %v7049 = vld [vmem:[%s6943 + $0x348] sm:$0xff]
        %v7050 = vld [vmem:[%s6943 + $0x350] sm:$0xff]
        %v7051 = vld [vmem:[%s6943 + $0x358] sm:$0xff]
        %v7052 = vld [vmem:[%s6943 + $0x360] sm:$0xff]
        %v7053 = vld [vmem:[%s6943 + $0x368] sm:$0xff]
        %v7054 = vld [vmem:[%s6943 + $0x370] sm:$0xff]
        %v7055 = vld [vmem:[%s6943 + $0x378] sm:$0xff]
        %v7056 = vld [vmem:[%s6943 + $0x380] sm:$0xff]
        %v7057 = vld [vmem:[%s6943 + $0x388] sm:$0xff]
        %v7058 = vld [vmem:[%s6943 + $0x390] sm:$0xff]
        %v7059 = vld [vmem:[%s6943 + $0x398] sm:$0xff]
        %v7060 = vld [vmem:[%s6943 + $0x3a0] sm:$0xff]
        %v7061 = vld [vmem:[%s6943 + $0x3a8] sm:$0xff]
        %v7062 = vld [vmem:[%s6943 + $0x3b0] sm:$0xff]
        %v7063 = vld [vmem:[%s6943 + $0x3b8] sm:$0xff]
        %v7064 = vld [vmem:[%s6943 + $0x3c0] sm:$0xff]
        %v7065 = vld [vmem:[%s6943 + $0x3c8] sm:$0xff]
        %v7066 = vld [vmem:[%s6943 + $0x3d0] sm:$0xff]
        %v7067 = vld [vmem:[%s6943 + $0x3d8] sm:$0xff]
        %v7068 = vld [vmem:[%s6943 + $0x3e0] sm:$0xff]
        %v7069 = vld [vmem:[%s6943 + $0x3e8] sm:$0xff]
        %v7070 = vld [vmem:[%s6943 + $0x3f0] sm:$0xff]
        %v7071 = vld [vmem:[%s6943 + $0x3f8] sm:$0xff]
        %v7073 = vlaneseq
        %v7074 = vshrl.u32 %v7073, 7
        %v7075 = vsub.s32 0, %v7074
        %v7076 = vrot.slane %v5715, %v7075
        %v7077 = vlaneseq
        %v7078 = vshrl.u32 %v7077, 7
        %v7079 = vsub.s32 1, %v7078
        %v7080 = vrot.slane %v5715, %v7079
        %v7081 = vlaneseq
        %v7082 = vshrl.u32 %v7081, 7
        %v7083 = vsub.s32 2, %v7082
        %v7084 = vrot.slane %v5715, %v7083
        %v7085 = vlaneseq
        %v7086 = vshrl.u32 %v7085, 7
        %v7087 = vsub.s32 3, %v7086
        %v7088 = vrot.slane %v5715, %v7087
        %v7221 = vunpack.c.l.b16 %v6944
        %v7222 = vunpack.c.h.b16 %v6944
        %v7223 = vunpack.c.l.b16 %v6945
        %v7224 = vunpack.c.h.b16 %v6945
        %v7225 = vunpack.c.l.b16 %v6946
        %v7226 = vunpack.c.h.b16 %v6946
        %v7227 = vunpack.c.l.b16 %v6947
        %v7228 = vunpack.c.h.b16 %v6947
        %v7229 = vunpack.c.l.b16 %v6948
        %v7230 = vunpack.c.h.b16 %v6948
        %v7231 = vunpack.c.l.b16 %v6949
        %v7232 = vunpack.c.h.b16 %v6949
        %v7233 = vunpack.c.l.b16 %v6950
        %v7234 = vunpack.c.h.b16 %v6950
        %v7235 = vunpack.c.l.b16 %v6951
        %v7236 = vunpack.c.h.b16 %v6951
        %v7237 = vunpack.c.l.b16 %v6952
        %v7238 = vunpack.c.h.b16 %v6952
        %v7239 = vunpack.c.l.b16 %v6953
        %v7240 = vunpack.c.h.b16 %v6953
        %v7241 = vunpack.c.l.b16 %v6954
        %v7242 = vunpack.c.h.b16 %v6954
        %v7243 = vunpack.c.l.b16 %v6955
        %v7244 = vunpack.c.h.b16 %v6955
        %v7245 = vunpack.c.l.b16 %v6956
        %v7246 = vunpack.c.h.b16 %v6956
        %v7247 = vunpack.c.l.b16 %v6957
        %v7248 = vunpack.c.h.b16 %v6957
        %v7249 = vunpack.c.l.b16 %v6958
        %v7250 = vunpack.c.h.b16 %v6958
        %v7251 = vunpack.c.l.b16 %v6959
        %v7252 = vunpack.c.h.b16 %v6959
        %v7253 = vunpack.c.l.b16 %v6960
        %v7254 = vunpack.c.h.b16 %v6960
        %v7255 = vunpack.c.l.b16 %v6961
        %v7256 = vunpack.c.h.b16 %v6961
        %v7257 = vunpack.c.l.b16 %v6962
        %v7258 = vunpack.c.h.b16 %v6962
        %v7259 = vunpack.c.l.b16 %v6963
        %v7260 = vunpack.c.h.b16 %v6963
        %v7261 = vunpack.c.l.b16 %v6964
        %v7262 = vunpack.c.h.b16 %v6964
        %v7263 = vunpack.c.l.b16 %v6965
        %v7264 = vunpack.c.h.b16 %v6965
        %v7265 = vunpack.c.l.b16 %v6966
        %v7266 = vunpack.c.h.b16 %v6966
        %v7267 = vunpack.c.l.b16 %v6967
        %v7268 = vunpack.c.h.b16 %v6967
        %v7269 = vunpack.c.l.b16 %v6968
        %v7270 = vunpack.c.h.b16 %v6968
        %v7271 = vunpack.c.l.b16 %v6969
        %v7272 = vunpack.c.h.b16 %v6969
        %v7273 = vunpack.c.l.b16 %v6970
        %v7274 = vunpack.c.h.b16 %v6970
        %v7275 = vunpack.c.l.b16 %v6971
        %v7276 = vunpack.c.h.b16 %v6971
        %v7277 = vunpack.c.l.b16 %v6972
        %v7278 = vunpack.c.h.b16 %v6972
        %v7279 = vunpack.c.l.b16 %v6973
        %v7280 = vunpack.c.h.b16 %v6973
        %v7281 = vunpack.c.l.b16 %v6974
        %v7282 = vunpack.c.h.b16 %v6974
        %v7283 = vunpack.c.l.b16 %v6975
        %v7284 = vunpack.c.h.b16 %v6975
        %v7285 = vunpack.c.l.b16 %v6976
        %v7286 = vunpack.c.h.b16 %v6976
        %v7287 = vunpack.c.l.b16 %v6977
        %v7288 = vunpack.c.h.b16 %v6977
        %v7289 = vunpack.c.l.b16 %v6978
        %v7290 = vunpack.c.h.b16 %v6978
        %v7291 = vunpack.c.l.b16 %v6979
        %v7292 = vunpack.c.h.b16 %v6979
        %v7293 = vunpack.c.l.b16 %v6980
        %v7294 = vunpack.c.h.b16 %v6980
        %v7295 = vunpack.c.l.b16 %v6981
        %v7296 = vunpack.c.h.b16 %v6981
        %v7297 = vunpack.c.l.b16 %v6982
        %v7298 = vunpack.c.h.b16 %v6982
        %v7299 = vunpack.c.l.b16 %v6983
        %v7300 = vunpack.c.h.b16 %v6983
        %v7301 = vunpack.c.l.b16 %v6984
        %v7302 = vunpack.c.h.b16 %v6984
        %v7303 = vunpack.c.l.b16 %v6985
        %v7304 = vunpack.c.h.b16 %v6985
        %v7305 = vunpack.c.l.b16 %v6986
        %v7306 = vunpack.c.h.b16 %v6986
        %v7307 = vunpack.c.l.b16 %v6987
        %v7308 = vunpack.c.h.b16 %v6987
        %v7309 = vunpack.c.l.b16 %v6988
        %v7310 = vunpack.c.h.b16 %v6988
        %v7311 = vunpack.c.l.b16 %v6989
        %v7312 = vunpack.c.h.b16 %v6989
        %v7313 = vunpack.c.l.b16 %v6990
        %v7314 = vunpack.c.h.b16 %v6990
        %v7315 = vunpack.c.l.b16 %v6991
        %v7316 = vunpack.c.h.b16 %v6991
        %v7317 = vunpack.c.l.b16 %v6992
        %v7318 = vunpack.c.h.b16 %v6992
        %v7319 = vunpack.c.l.b16 %v6993
        %v7320 = vunpack.c.h.b16 %v6993
        %v7321 = vunpack.c.l.b16 %v6994
        %v7322 = vunpack.c.h.b16 %v6994
        %v7323 = vunpack.c.l.b16 %v6995
        %v7324 = vunpack.c.h.b16 %v6995
        %v7325 = vunpack.c.l.b16 %v6996
        %v7326 = vunpack.c.h.b16 %v6996
        %v7327 = vunpack.c.l.b16 %v6997
        %v7328 = vunpack.c.h.b16 %v6997
        %v7329 = vunpack.c.l.b16 %v6998
        %v7330 = vunpack.c.h.b16 %v6998
        %v7331 = vunpack.c.l.b16 %v6999
        %v7332 = vunpack.c.h.b16 %v6999
        %v7333 = vunpack.c.l.b16 %v7000
        %v7334 = vunpack.c.h.b16 %v7000
        %v7335 = vunpack.c.l.b16 %v7001
        %v7336 = vunpack.c.h.b16 %v7001
        %v7337 = vunpack.c.l.b16 %v7002
        %v7338 = vunpack.c.h.b16 %v7002
        %v7339 = vunpack.c.l.b16 %v7003
        %v7340 = vunpack.c.h.b16 %v7003
        %v7341 = vunpack.c.l.b16 %v7004
        %v7342 = vunpack.c.h.b16 %v7004
        %v7343 = vunpack.c.l.b16 %v7005
        %v7344 = vunpack.c.h.b16 %v7005
        %v7345 = vunpack.c.l.b16 %v7006
        %v7346 = vunpack.c.h.b16 %v7006
        %v7347 = vunpack.c.l.b16 %v7007
        %v7348 = vunpack.c.h.b16 %v7007
        %v7349 = vunpack.c.l.b16 %v7008
        %v7350 = vunpack.c.h.b16 %v7008
        %v7351 = vunpack.c.l.b16 %v7009
        %v7352 = vunpack.c.h.b16 %v7009
        %v7353 = vunpack.c.l.b16 %v7010
        %v7354 = vunpack.c.h.b16 %v7010
        %v7355 = vunpack.c.l.b16 %v7011
        %v7356 = vunpack.c.h.b16 %v7011
        %v7357 = vunpack.c.l.b16 %v7012
        %v7358 = vunpack.c.h.b16 %v7012
        %v7359 = vunpack.c.l.b16 %v7013
        %v7360 = vunpack.c.h.b16 %v7013
        %v7361 = vunpack.c.l.b16 %v7014
        %v7362 = vunpack.c.h.b16 %v7014
        %v7363 = vunpack.c.l.b16 %v7015
        %v7364 = vunpack.c.h.b16 %v7015
        %v7365 = vunpack.c.l.b16 %v7016
        %v7366 = vunpack.c.h.b16 %v7016
        %v7367 = vunpack.c.l.b16 %v7017
        %v7368 = vunpack.c.h.b16 %v7017
        %v7369 = vunpack.c.l.b16 %v7018
        %v7370 = vunpack.c.h.b16 %v7018
        %v7371 = vunpack.c.l.b16 %v7019
        %v7372 = vunpack.c.h.b16 %v7019
        %v7373 = vunpack.c.l.b16 %v7020
        %v7374 = vunpack.c.h.b16 %v7020
        %v7375 = vunpack.c.l.b16 %v7021
        %v7376 = vunpack.c.h.b16 %v7021
        %v7377 = vunpack.c.l.b16 %v7022
        %v7378 = vunpack.c.h.b16 %v7022
        %v7379 = vunpack.c.l.b16 %v7023
        %v7380 = vunpack.c.h.b16 %v7023
        %v7381 = vunpack.c.l.b16 %v7024
        %v7382 = vunpack.c.h.b16 %v7024
        %v7383 = vunpack.c.l.b16 %v7025
        %v7384 = vunpack.c.h.b16 %v7025
        %v7385 = vunpack.c.l.b16 %v7026
        %v7386 = vunpack.c.h.b16 %v7026
        %v7387 = vunpack.c.l.b16 %v7027
        %v7388 = vunpack.c.h.b16 %v7027
        %v7389 = vunpack.c.l.b16 %v7028
        %v7390 = vunpack.c.h.b16 %v7028
        %v7391 = vunpack.c.l.b16 %v7029
        %v7392 = vunpack.c.h.b16 %v7029
        %v7393 = vunpack.c.l.b16 %v7030
        %v7394 = vunpack.c.h.b16 %v7030
        %v7395 = vunpack.c.l.b16 %v7031
        %v7396 = vunpack.c.h.b16 %v7031
        %v7397 = vunpack.c.l.b16 %v7032
        %v7398 = vunpack.c.h.b16 %v7032
        %v7399 = vunpack.c.l.b16 %v7033
        %v7400 = vunpack.c.h.b16 %v7033
        %v7401 = vunpack.c.l.b16 %v7034
        %v7402 = vunpack.c.h.b16 %v7034
        %v7403 = vunpack.c.l.b16 %v7035
        %v7404 = vunpack.c.h.b16 %v7035
        %v7405 = vunpack.c.l.b16 %v7036
        %v7406 = vunpack.c.h.b16 %v7036
        %v7407 = vunpack.c.l.b16 %v7037
        %v7408 = vunpack.c.h.b16 %v7037
        %v7409 = vunpack.c.l.b16 %v7038
        %v7410 = vunpack.c.h.b16 %v7038
        %v7411 = vunpack.c.l.b16 %v7039
        %v7412 = vunpack.c.h.b16 %v7039
        %v7413 = vunpack.c.l.b16 %v7040
        %v7414 = vunpack.c.h.b16 %v7040
        %v7415 = vunpack.c.l.b16 %v7041
        %v7416 = vunpack.c.h.b16 %v7041
        %v7417 = vunpack.c.l.b16 %v7042
        %v7418 = vunpack.c.h.b16 %v7042
        %v7419 = vunpack.c.l.b16 %v7043
        %v7420 = vunpack.c.h.b16 %v7043
        %v7421 = vunpack.c.l.b16 %v7044
        %v7422 = vunpack.c.h.b16 %v7044
        %v7423 = vunpack.c.l.b16 %v7045
        %v7424 = vunpack.c.h.b16 %v7045
        %v7425 = vunpack.c.l.b16 %v7046
        %v7426 = vunpack.c.h.b16 %v7046
        %v7427 = vunpack.c.l.b16 %v7047
        %v7428 = vunpack.c.h.b16 %v7047
        %v7429 = vunpack.c.l.b16 %v7048
        %v7430 = vunpack.c.h.b16 %v7048
        %v7431 = vunpack.c.l.b16 %v7049
        %v7432 = vunpack.c.h.b16 %v7049
        %v7433 = vunpack.c.l.b16 %v7050
        %v7434 = vunpack.c.h.b16 %v7050
        %v7435 = vunpack.c.l.b16 %v7051
        %v7436 = vunpack.c.h.b16 %v7051
        %v7437 = vunpack.c.l.b16 %v7052
        %v7438 = vunpack.c.h.b16 %v7052
        %v7439 = vunpack.c.l.b16 %v7053
        %v7440 = vunpack.c.h.b16 %v7053
        %v7441 = vunpack.c.l.b16 %v7054
        %v7442 = vunpack.c.h.b16 %v7054
        %v7443 = vunpack.c.l.b16 %v7055
        %v7444 = vunpack.c.h.b16 %v7055
        %v7445 = vunpack.c.l.b16 %v7056
        %v7446 = vunpack.c.h.b16 %v7056
        %v7447 = vunpack.c.l.b16 %v7057
        %v7448 = vunpack.c.h.b16 %v7057
        %v7449 = vunpack.c.l.b16 %v7058
        %v7450 = vunpack.c.h.b16 %v7058
        %v7451 = vunpack.c.l.b16 %v7059
        %v7452 = vunpack.c.h.b16 %v7059
        %v7453 = vunpack.c.l.b16 %v7060
        %v7454 = vunpack.c.h.b16 %v7060
        %v7455 = vunpack.c.l.b16 %v7061
        %v7456 = vunpack.c.h.b16 %v7061
        %v7457 = vunpack.c.l.b16 %v7062
        %v7458 = vunpack.c.h.b16 %v7062
        %v7459 = vunpack.c.l.b16 %v7063
        %v7460 = vunpack.c.h.b16 %v7063
        %v7461 = vunpack.c.l.b16 %v7064
        %v7462 = vunpack.c.h.b16 %v7064
        %v7463 = vunpack.c.l.b16 %v7065
        %v7464 = vunpack.c.h.b16 %v7065
        %v7465 = vunpack.c.l.b16 %v7066
        %v7466 = vunpack.c.h.b16 %v7066
        %v7467 = vunpack.c.l.b16 %v7067
        %v7468 = vunpack.c.h.b16 %v7067
        %v7469 = vunpack.c.l.b16 %v7068
        %v7470 = vunpack.c.h.b16 %v7068
        %v7471 = vunpack.c.l.b16 %v7069
        %v7472 = vunpack.c.h.b16 %v7069
        %v7473 = vunpack.c.l.b16 %v7070
        %v7474 = vunpack.c.h.b16 %v7070
        %v7475 = vunpack.c.l.b16 %v7071
        %v7476 = vunpack.c.h.b16 %v7071
        %v7477 = vpack.c.b16 %v7225, %v7221
        %v7478 = vpack.c.b16 %v7226, %v7222
        %v7479 = vpack.c.b16 %v7227, %v7223
        %v7480 = vpack.c.b16 %v7228, %v7224
        %v7481 = vpack.c.b16 %v7233, %v7229
        %v7482 = vpack.c.b16 %v7234, %v7230
        %v7483 = vpack.c.b16 %v7235, %v7231
        %v7484 = vpack.c.b16 %v7236, %v7232
        %v7485 = vpack.c.b16 %v7241, %v7237
        %v7486 = vpack.c.b16 %v7242, %v7238
        %v7487 = vpack.c.b16 %v7243, %v7239
        %v7488 = vpack.c.b16 %v7244, %v7240
        %v7489 = vpack.c.b16 %v7249, %v7245
        %v7490 = vpack.c.b16 %v7250, %v7246
        %v7491 = vpack.c.b16 %v7251, %v7247
        %v7492 = vpack.c.b16 %v7252, %v7248
        %v7493 = vpack.c.b16 %v7257, %v7253
        %v7494 = vpack.c.b16 %v7258, %v7254
        %v7495 = vpack.c.b16 %v7259, %v7255
        %v7496 = vpack.c.b16 %v7260, %v7256
        %v7497 = vpack.c.b16 %v7265, %v7261
        %v7498 = vpack.c.b16 %v7266, %v7262
        %v7499 = vpack.c.b16 %v7267, %v7263
        %v7500 = vpack.c.b16 %v7268, %v7264
        %v7501 = vpack.c.b16 %v7273, %v7269
        %v7502 = vpack.c.b16 %v7274, %v7270
        %v7503 = vpack.c.b16 %v7275, %v7271
        %v7504 = vpack.c.b16 %v7276, %v7272
        %v7505 = vpack.c.b16 %v7281, %v7277
        %v7506 = vpack.c.b16 %v7282, %v7278
        %v7507 = vpack.c.b16 %v7283, %v7279
        %v7508 = vpack.c.b16 %v7284, %v7280
        %v7509 = vpack.c.b16 %v7289, %v7285
        %v7510 = vpack.c.b16 %v7290, %v7286
        %v7511 = vpack.c.b16 %v7291, %v7287
        %v7512 = vpack.c.b16 %v7292, %v7288
        %v7513 = vpack.c.b16 %v7297, %v7293
        %v7514 = vpack.c.b16 %v7298, %v7294
        %v7515 = vpack.c.b16 %v7299, %v7295
        %v7516 = vpack.c.b16 %v7300, %v7296
        %v7517 = vpack.c.b16 %v7305, %v7301
        %v7518 = vpack.c.b16 %v7306, %v7302
        %v7519 = vpack.c.b16 %v7307, %v7303
        %v7520 = vpack.c.b16 %v7308, %v7304
        %v7521 = vpack.c.b16 %v7313, %v7309
        %v7522 = vpack.c.b16 %v7314, %v7310
        %v7523 = vpack.c.b16 %v7315, %v7311
        %v7524 = vpack.c.b16 %v7316, %v7312
        %v7525 = vpack.c.b16 %v7321, %v7317
        %v7526 = vpack.c.b16 %v7322, %v7318
        %v7527 = vpack.c.b16 %v7323, %v7319
        %v7528 = vpack.c.b16 %v7324, %v7320
        %v7529 = vpack.c.b16 %v7329, %v7325
        %v7530 = vpack.c.b16 %v7330, %v7326
        %v7531 = vpack.c.b16 %v7331, %v7327
        %v7532 = vpack.c.b16 %v7332, %v7328
        %v7533 = vpack.c.b16 %v7337, %v7333
        %v7534 = vpack.c.b16 %v7338, %v7334
        %v7535 = vpack.c.b16 %v7339, %v7335
        %v7536 = vpack.c.b16 %v7340, %v7336
        %v7537 = vpack.c.b16 %v7345, %v7341
        %v7538 = vpack.c.b16 %v7346, %v7342
        %v7539 = vpack.c.b16 %v7347, %v7343
        %v7540 = vpack.c.b16 %v7348, %v7344
        %v7541 = vpack.c.b16 %v7353, %v7349
        %v7542 = vpack.c.b16 %v7354, %v7350
        %v7543 = vpack.c.b16 %v7355, %v7351
        %v7544 = vpack.c.b16 %v7356, %v7352
        %v7545 = vpack.c.b16 %v7361, %v7357
        %v7546 = vpack.c.b16 %v7362, %v7358
        %v7547 = vpack.c.b16 %v7363, %v7359
        %v7548 = vpack.c.b16 %v7364, %v7360
        %v7549 = vpack.c.b16 %v7369, %v7365
        %v7550 = vpack.c.b16 %v7370, %v7366
        %v7551 = vpack.c.b16 %v7371, %v7367
        %v7552 = vpack.c.b16 %v7372, %v7368
        %v7553 = vpack.c.b16 %v7377, %v7373
        %v7554 = vpack.c.b16 %v7378, %v7374
        %v7555 = vpack.c.b16 %v7379, %v7375
        %v7556 = vpack.c.b16 %v7380, %v7376
        %v7557 = vpack.c.b16 %v7385, %v7381
        %v7558 = vpack.c.b16 %v7386, %v7382
        %v7559 = vpack.c.b16 %v7387, %v7383
        %v7560 = vpack.c.b16 %v7388, %v7384
        %v7561 = vpack.c.b16 %v7393, %v7389
        %v7562 = vpack.c.b16 %v7394, %v7390
        %v7563 = vpack.c.b16 %v7395, %v7391
        %v7564 = vpack.c.b16 %v7396, %v7392
        %v7565 = vpack.c.b16 %v7401, %v7397
        %v7566 = vpack.c.b16 %v7402, %v7398
        %v7567 = vpack.c.b16 %v7403, %v7399
        %v7568 = vpack.c.b16 %v7404, %v7400
        %v7569 = vpack.c.b16 %v7409, %v7405
        %v7570 = vpack.c.b16 %v7410, %v7406
        %v7571 = vpack.c.b16 %v7411, %v7407
        %v7572 = vpack.c.b16 %v7412, %v7408
        %v7573 = vpack.c.b16 %v7417, %v7413
        %v7574 = vpack.c.b16 %v7418, %v7414
        %v7575 = vpack.c.b16 %v7419, %v7415
        %v7576 = vpack.c.b16 %v7420, %v7416
        %v7577 = vpack.c.b16 %v7425, %v7421
        %v7578 = vpack.c.b16 %v7426, %v7422
        %v7579 = vpack.c.b16 %v7427, %v7423
        %v7580 = vpack.c.b16 %v7428, %v7424
        %v7581 = vpack.c.b16 %v7433, %v7429
        %v7582 = vpack.c.b16 %v7434, %v7430
        %v7583 = vpack.c.b16 %v7435, %v7431
        %v7584 = vpack.c.b16 %v7436, %v7432
        %v7585 = vpack.c.b16 %v7441, %v7437
        %v7586 = vpack.c.b16 %v7442, %v7438
        %v7587 = vpack.c.b16 %v7443, %v7439
        %v7588 = vpack.c.b16 %v7444, %v7440
        %v7589 = vpack.c.b16 %v7449, %v7445
        %v7590 = vpack.c.b16 %v7450, %v7446
        %v7591 = vpack.c.b16 %v7451, %v7447
        %v7592 = vpack.c.b16 %v7452, %v7448
        %v7593 = vpack.c.b16 %v7457, %v7453
        %v7594 = vpack.c.b16 %v7458, %v7454
        %v7595 = vpack.c.b16 %v7459, %v7455
        %v7596 = vpack.c.b16 %v7460, %v7456
        %v7597 = vpack.c.b16 %v7465, %v7461
        %v7598 = vpack.c.b16 %v7466, %v7462
        %v7599 = vpack.c.b16 %v7467, %v7463
        %v7600 = vpack.c.b16 %v7468, %v7464
        %v7601 = vpack.c.b16 %v7473, %v7469
        %v7602 = vpack.c.b16 %v7474, %v7470
        %v7603 = vpack.c.b16 %v7475, %v7471
        %v7604 = vpack.c.b16 %v7476, %v7472
        %7733 = vmatprep.subr.bf16.mxu0 %v7506
        %7734 = vmatpush1.bf16.msra.mxu0 %v7505
        %7735 = vmatprep.subr.bf16.mxu0 %v7502
        %7736 = vmatpush1.bf16.msra.mxu0 %v7501
        %7737 = vmatprep.subr.bf16.mxu0 %v7498
        %7738 = vmatpush1.bf16.msra.mxu0 %v7497
        %7739 = vmatprep.subr.bf16.mxu0 %v7494
        %7740 = vmatpush1.bf16.msra.mxu0 %v7493
        %7741 = vmatprep.subr.bf16.mxu0 %v7490
        %7742 = vmatpush1.bf16.msra.mxu0 %v7489
        %7743 = vmatprep.subr.bf16.mxu0 %v7486
        %7744 = vmatpush1.bf16.msra.mxu0 %v7485
        %7745 = vmatprep.subr.bf16.mxu0 %v7482
        %7746 = vmatpush1.bf16.msra.mxu0 %v7481
        %7747 = vmatprep.subr.bf16.mxu0 %v7478
        %7748 = vmatpush1.bf16.msra.mxu0 %v7477
        %7749 = vmatprep.subr.bf16.mxu0 %v7538
        %7750 = vmatpush2.bf16.msra.mxu0 %v7537
        %7751 = vmatprep.subr.bf16.mxu0 %v7534
        %7752 = vmatpush2.bf16.msra.mxu0 %v7533
        %7753 = vmatprep.subr.bf16.mxu0 %v7530
        %7754 = vmatpush2.bf16.msra.mxu0 %v7529
        %7755 = vmatprep.subr.bf16.mxu0 %v7526
        %7756 = vmatpush2.bf16.msra.mxu0 %v7525
        %7757 = vmatprep.subr.bf16.mxu0 %v7522
        %7758 = vmatpush2.bf16.msra.mxu0 %v7521
        %7759 = vmatprep.subr.bf16.mxu0 %v7518
        %7760 = vmatpush2.bf16.msra.mxu0 %v7517
        %7761 = vmatprep.subr.bf16.mxu0 %v7514
        %7762 = vmatpush2.bf16.msra.mxu0 %v7513
        %7763 = vmatprep.subr.bf16.mxu0 %v7510
        %7764 = vmatpush2.bf16.msra.mxu0 %v7509
        %7765 = vmatprep.mubr.bf16.mxu0 %v6936
        %7766 = vmatmul.mubr.bf16.gmra.mxu0 %v6935
        %v7767 = vpop.f32.mrf.mxu0
        %v7768 = vadd.f32 %v7076, %v7767
        %v7769 = vpop.f32.mrf.mxu0
        %v7770 = vadd.f32 %v7080, %v7769
        %v7771 = vpop.f32.mrf.mxu0
        %v7772 = vadd.f32 %v7076, %v7771
        %v7773 = vpop.f32.mrf.mxu0
        %v7774 = vadd.f32 %v7080, %v7773
        %7775 = vmatprep.mubr.bf16.mxu0 %v6940
        %7776 = vmatmul.mubr.bf16.gmra.mxu0 %v6939
        %v7777 = vpop.f32.mrf.mxu0
        %v7778 = vadd.f32 %v7076, %v7777
        %v7779 = vpop.f32.mrf.mxu0
        %v7780 = vadd.f32 %v7080, %v7779
        %v7781 = vpop.f32.mrf.mxu0
        %v7782 = vadd.f32 %v7076, %v7781
        %v7783 = vpop.f32.mrf.mxu0
        %v7784 = vadd.f32 %v7080, %v7783
        %7785 = vdwg.mxu0
        %7786 = vmatprep.subr.bf16.mxu0 %v7570
        %7787 = vmatpush1.bf16.msra.mxu0 %v7569
        %7788 = vmatprep.subr.bf16.mxu0 %v7566
        %7789 = vmatpush1.bf16.msra.mxu0 %v7565
        %7790 = vmatprep.subr.bf16.mxu0 %v7562
        %7791 = vmatpush1.bf16.msra.mxu0 %v7561
        %7792 = vmatprep.subr.bf16.mxu0 %v7558
        %7793 = vmatpush1.bf16.msra.mxu0 %v7557
        %7794 = vmatprep.subr.bf16.mxu0 %v7554
        %7795 = vmatpush1.bf16.msra.mxu0 %v7553
        %7796 = vmatprep.subr.bf16.mxu0 %v7550
        %7797 = vmatpush1.bf16.msra.mxu0 %v7549
        %7798 = vmatprep.subr.bf16.mxu0 %v7546
        %7799 = vmatpush1.bf16.msra.mxu0 %v7545
        %7800 = vmatprep.subr.bf16.mxu0 %v7542
        %7801 = vmatpush1.bf16.msra.mxu0 %v7541
        %7802 = vmatprep.subr.bf16.mxu0 %v7602
        %7803 = vmatpush2.bf16.msra.mxu0 %v7601
        %7804 = vmatprep.subr.bf16.mxu0 %v7598
        %7805 = vmatpush2.bf16.msra.mxu0 %v7597
        %7806 = vmatprep.subr.bf16.mxu0 %v7594
        %7807 = vmatpush2.bf16.msra.mxu0 %v7593
        %7808 = vmatprep.subr.bf16.mxu0 %v7590
        %7809 = vmatpush2.bf16.msra.mxu0 %v7589
        %7810 = vmatprep.subr.bf16.mxu0 %v7586
        %7811 = vmatpush2.bf16.msra.mxu0 %v7585
        %7812 = vmatprep.subr.bf16.mxu0 %v7582
        %7813 = vmatpush2.bf16.msra.mxu0 %v7581
        %7814 = vmatprep.subr.bf16.mxu0 %v7578
        %7815 = vmatpush2.bf16.msra.mxu0 %v7577
        %7816 = vmatprep.subr.bf16.mxu0 %v7574
        %7817 = vmatpush2.bf16.msra.mxu0 %v7573
        %7818 = vmatprep.mubr.bf16.mxu0 %v6938
        %7819 = vmatmul.mubr.bf16.gmra.mxu0 %v6937
        %v7820 = vpop.f32.mrf.mxu0
        %v7821 = vadd.f32 %v7768, %v7820
        %v7822 = vpop.f32.mrf.mxu0
        %v7823 = vadd.f32 %v7770, %v7822
        %v7824 = vpop.f32.mrf.mxu0
        %v7825 = vadd.f32 %v7772, %v7824
        %v7826 = vpop.f32.mrf.mxu0
        %v7827 = vadd.f32 %v7774, %v7826
        %7828 = vmatprep.mubr.bf16.mxu0 %v6942
        %7829 = vmatmul.mubr.bf16.gmra.mxu0 %v6941
        %v7830 = vpop.f32.mrf.mxu0
        %v7831 = vadd.f32 %v7778, %v7830
        %v7832 = vpop.f32.mrf.mxu0
        %v7833 = vadd.f32 %v7780, %v7832
        %v7834 = vpop.f32.mrf.mxu0
        %v7835 = vadd.f32 %v7782, %v7834
        %v7836 = vpop.f32.mrf.mxu0
        %v7837 = vadd.f32 %v7784, %v7836
        %7838 = vdwg.mxu0
        %7839 = vmatprep.subr.bf16.mxu0 %v7508
        %7840 = vmatpush1.bf16.msra.mxu0 %v7507
        %7841 = vmatprep.subr.bf16.mxu0 %v7504
        %7842 = vmatpush1.bf16.msra.mxu0 %v7503
        %7843 = vmatprep.subr.bf16.mxu0 %v7500
        %7844 = vmatpush1.bf16.msra.mxu0 %v7499
        %7845 = vmatprep.subr.bf16.mxu0 %v7496
        %7846 = vmatpush1.bf16.msra.mxu0 %v7495
        %7847 = vmatprep.subr.bf16.mxu0 %v7492
        %7848 = vmatpush1.bf16.msra.mxu0 %v7491
        %7849 = vmatprep.subr.bf16.mxu0 %v7488
        %7850 = vmatpush1.bf16.msra.mxu0 %v7487
        %7851 = vmatprep.subr.bf16.mxu0 %v7484
        %7852 = vmatpush1.bf16.msra.mxu0 %v7483
        %7853 = vmatprep.subr.bf16.mxu0 %v7480
        %7854 = vmatpush1.bf16.msra.mxu0 %v7479
        %7855 = vmatprep.subr.bf16.mxu0 %v7540
        %7856 = vmatpush2.bf16.msra.mxu0 %v7539
        %7857 = vmatprep.subr.bf16.mxu0 %v7536
        %7858 = vmatpush2.bf16.msra.mxu0 %v7535
        %7859 = vmatprep.subr.bf16.mxu0 %v7532
        %7860 = vmatpush2.bf16.msra.mxu0 %v7531
        %7861 = vmatprep.subr.bf16.mxu0 %v7528
        %7862 = vmatpush2.bf16.msra.mxu0 %v7527
        %7863 = vmatprep.subr.bf16.mxu0 %v7524
        %7864 = vmatpush2.bf16.msra.mxu0 %v7523
        %7865 = vmatprep.subr.bf16.mxu0 %v7520
        %7866 = vmatpush2.bf16.msra.mxu0 %v7519
        %7867 = vmatprep.subr.bf16.mxu0 %v7516
        %7868 = vmatpush2.bf16.msra.mxu0 %v7515
        %7869 = vmatprep.subr.bf16.mxu0 %v7512
        %7870 = vmatpush2.bf16.msra.mxu0 %v7511
        %7871 = vmatprep.mubr.bf16.mxu0 %v6936
        %7872 = vmatmul.mubr.bf16.gmra.mxu0 %v6935
        %v7873 = vpop.f32.mrf.mxu0
        %v7874 = vadd.f32 %v7084, %v7873
        %v7875 = vpop.f32.mrf.mxu0
        %v7876 = vadd.f32 %v7088, %v7875
        %v7877 = vpop.f32.mrf.mxu0
        %v7878 = vadd.f32 %v7084, %v7877
        %v7879 = vpop.f32.mrf.mxu0
        %v7880 = vadd.f32 %v7088, %v7879
        %7881 = vmatprep.mubr.bf16.mxu0 %v6940
        %7882 = vmatmul.mubr.bf16.gmra.mxu0 %v6939
        %v7883 = vpop.f32.mrf.mxu0
        %v7884 = vadd.f32 %v7084, %v7883
        %v7885 = vpop.f32.mrf.mxu0
        %v7886 = vadd.f32 %v7088, %v7885
        %v7887 = vpop.f32.mrf.mxu0
        %v7888 = vadd.f32 %v7084, %v7887
        %v7889 = vpop.f32.mrf.mxu0
        %v7890 = vadd.f32 %v7088, %v7889
        %7891 = vdwg.mxu0
        %7892 = vmatprep.subr.bf16.mxu0 %v7572
        %7893 = vmatpush1.bf16.msra.mxu0 %v7571
        %7894 = vmatprep.subr.bf16.mxu0 %v7568
        %7895 = vmatpush1.bf16.msra.mxu0 %v7567
        %7896 = vmatprep.subr.bf16.mxu0 %v7564
        %7897 = vmatpush1.bf16.msra.mxu0 %v7563
        %7898 = vmatprep.subr.bf16.mxu0 %v7560
        %7899 = vmatpush1.bf16.msra.mxu0 %v7559
        %7900 = vmatprep.subr.bf16.mxu0 %v7556
        %7901 = vmatpush1.bf16.msra.mxu0 %v7555
        %7902 = vmatprep.subr.bf16.mxu0 %v7552
        %7903 = vmatpush1.bf16.msra.mxu0 %v7551
        %7904 = vmatprep.subr.bf16.mxu0 %v7548
        %7905 = vmatpush1.bf16.msra.mxu0 %v7547
        %7906 = vmatprep.subr.bf16.mxu0 %v7544
        %7907 = vmatpush1.bf16.msra.mxu0 %v7543
        %7908 = vmatprep.subr.bf16.mxu0 %v7604
        %7909 = vmatpush2.bf16.msra.mxu0 %v7603
        %7910 = vmatprep.subr.bf16.mxu0 %v7600
        %7911 = vmatpush2.bf16.msra.mxu0 %v7599
        %7912 = vmatprep.subr.bf16.mxu0 %v7596
        %7913 = vmatpush2.bf16.msra.mxu0 %v7595
        %7914 = vmatprep.subr.bf16.mxu0 %v7592
        %7915 = vmatpush2.bf16.msra.mxu0 %v7591
        %7916 = vmatprep.subr.bf16.mxu0 %v7588
        %7917 = vmatpush2.bf16.msra.mxu0 %v7587
        %7918 = vmatprep.subr.bf16.mxu0 %v7584
        %7919 = vmatpush2.bf16.msra.mxu0 %v7583
        %7920 = vmatprep.subr.bf16.mxu0 %v7580
        %7921 = vmatpush2.bf16.msra.mxu0 %v7579
        %7922 = vmatprep.subr.bf16.mxu0 %v7576
        %7923 = vmatpush2.bf16.msra.mxu0 %v7575
        %7924 = vmatprep.mubr.bf16.mxu0 %v6938
        %7925 = vmatmul.mubr.bf16.gmra.mxu0 %v6937
        %v7926 = vpop.f32.mrf.mxu0
        %v7927 = vadd.f32 %v7874, %v7926
        %v7928 = vpop.f32.mrf.mxu0
        %v7929 = vadd.f32 %v7876, %v7928
        %v7930 = vpop.f32.mrf.mxu0
        %v7931 = vadd.f32 %v7878, %v7930
        %v7932 = vpop.f32.mrf.mxu0
        %v7933 = vadd.f32 %v7880, %v7932
        %7934 = vmatprep.mubr.bf16.mxu0 %v6942
        %7935 = vmatmul.mubr.bf16.gmra.mxu0 %v6941
        %v7936 = vpop.f32.mrf.mxu0
        %v7937 = vadd.f32 %v7884, %v7936
        %v7938 = vpop.f32.mrf.mxu0
        %v7939 = vadd.f32 %v7886, %v7938
        %v7940 = vpop.f32.mrf.mxu0
        %v7941 = vadd.f32 %v7888, %v7940
        %v7942 = vpop.f32.mrf.mxu0
        %v7943 = vadd.f32 %v7890, %v7942
        %7944 = vdwg.mxu0
        %v7945 = vmax.f32 %v7821, 0.0
        %v7946 = vmax.f32 %v7823, 0.0
        %v7947 = vmax.f32 %v7927, 0.0
        %v7948 = vmax.f32 %v7929, 0.0
        %v7949 = vmax.f32 %v7825, 0.0
        %v7950 = vmax.f32 %v7827, 0.0
        %v7951 = vmax.f32 %v7931, 0.0
        %v7952 = vmax.f32 %v7933, 0.0
        %v7953 = vmax.f32 %v7831, 0.0
        %v7954 = vmax.f32 %v7833, 0.0
        %v7955 = vmax.f32 %v7937, 0.0
        %v7956 = vmax.f32 %v7939, 0.0
        %v7957 = vmax.f32 %v7835, 0.0
        %v7958 = vmax.f32 %v7837, 0.0
        %v7959 = vmax.f32 %v7941, 0.0
        %v7960 = vmax.f32 %v7943, 0.0
        %v7961 = vpack.c.bf16 %v7949, %v7945
        %v7962 = vpack.c.bf16 %v7950, %v7946
        %v7963 = vpack.c.bf16 %v7951, %v7947
        %v7964 = vpack.c.bf16 %v7952, %v7948
        %v7965 = vpack.c.bf16 %v7957, %v7953
        %v7966 = vpack.c.bf16 %v7958, %v7954
        %v7967 = vpack.c.bf16 %v7959, %v7955
        %v7968 = vpack.c.bf16 %v7960, %v7956
        %s7969 = scalar_lea.vmem %s386, 512 [#allocation10]
        %v7970 = vld [vmem:[%s7969] sm:$0xf]
        %v7971 = vld [vmem:[%s7969 + $0x4] sm:$0xf]
        %v7972 = vld [vmem:[%s7969 + $0x8] sm:$0xf]
        %v7973 = vld [vmem:[%s7969 + $0xc] sm:$0xf]
        %v7974 = vld [vmem:[%s7969 + $0x10] sm:$0xf]
        %v7975 = vld [vmem:[%s7969 + $0x14] sm:$0xf]
        %v7976 = vld [vmem:[%s7969 + $0x18] sm:$0xf]
        %v7977 = vld [vmem:[%s7969 + $0x1c] sm:$0xf]
        %v7978 = vld [vmem:[%s7969 + $0x20] sm:$0xf]
        %v7979 = vld [vmem:[%s7969 + $0x24] sm:$0xf]
        %v7980 = vld [vmem:[%s7969 + $0x28] sm:$0xf]
        %v7981 = vld [vmem:[%s7969 + $0x2c] sm:$0xf]
        %v7982 = vld [vmem:[%s7969 + $0x30] sm:$0xf]
        %v7983 = vld [vmem:[%s7969 + $0x34] sm:$0xf]
        %v7984 = vld [vmem:[%s7969 + $0x38] sm:$0xf]
        %v7985 = vld [vmem:[%s7969 + $0x3c] sm:$0xf]
        %v7986 = vld [vmem:[%s7969 + $0x40] sm:$0xf]
        %v7987 = vld [vmem:[%s7969 + $0x44] sm:$0xf]
        %v7988 = vld [vmem:[%s7969 + $0x48] sm:$0xf]
        %v7989 = vld [vmem:[%s7969 + $0x4c] sm:$0xf]
        %v7990 = vld [vmem:[%s7969 + $0x50] sm:$0xf]
        %v7991 = vld [vmem:[%s7969 + $0x54] sm:$0xf]
        %v7992 = vld [vmem:[%s7969 + $0x58] sm:$0xf]
        %v7993 = vld [vmem:[%s7969 + $0x5c] sm:$0xf]
        %v7994 = vld [vmem:[%s7969 + $0x60] sm:$0xf]
        %v7995 = vld [vmem:[%s7969 + $0x64] sm:$0xf]
        %v7996 = vld [vmem:[%s7969 + $0x68] sm:$0xf]
        %v7997 = vld [vmem:[%s7969 + $0x6c] sm:$0xf]
        %v7998 = vld [vmem:[%s7969 + $0x70] sm:$0xf]
        %v7999 = vld [vmem:[%s7969 + $0x74] sm:$0xf]
        %v8000 = vld [vmem:[%s7969 + $0x78] sm:$0xf]
        %v8001 = vld [vmem:[%s7969 + $0x7c] sm:$0xf]
        %v8002 = vld [vmem:[%s7969 + $0x80] sm:$0xf]
        %v8003 = vld [vmem:[%s7969 + $0x84] sm:$0xf]
        %v8004 = vld [vmem:[%s7969 + $0x88] sm:$0xf]
        %v8005 = vld [vmem:[%s7969 + $0x8c] sm:$0xf]
        %v8006 = vld [vmem:[%s7969 + $0x90] sm:$0xf]
        %v8007 = vld [vmem:[%s7969 + $0x94] sm:$0xf]
        %v8008 = vld [vmem:[%s7969 + $0x98] sm:$0xf]
        %v8009 = vld [vmem:[%s7969 + $0x9c] sm:$0xf]
        %v8010 = vld [vmem:[%s7969 + $0xa0] sm:$0xf]
        %v8011 = vld [vmem:[%s7969 + $0xa4] sm:$0xf]
        %v8012 = vld [vmem:[%s7969 + $0xa8] sm:$0xf]
        %v8013 = vld [vmem:[%s7969 + $0xac] sm:$0xf]
        %v8014 = vld [vmem:[%s7969 + $0xb0] sm:$0xf]
        %v8015 = vld [vmem:[%s7969 + $0xb4] sm:$0xf]
        %v8016 = vld [vmem:[%s7969 + $0xb8] sm:$0xf]
        %v8017 = vld [vmem:[%s7969 + $0xbc] sm:$0xf]
        %v8018 = vld [vmem:[%s7969 + $0xc0] sm:$0xf]
        %v8019 = vld [vmem:[%s7969 + $0xc4] sm:$0xf]
        %v8020 = vld [vmem:[%s7969 + $0xc8] sm:$0xf]
        %v8021 = vld [vmem:[%s7969 + $0xcc] sm:$0xf]
        %v8022 = vld [vmem:[%s7969 + $0xd0] sm:$0xf]
        %v8023 = vld [vmem:[%s7969 + $0xd4] sm:$0xf]
        %v8024 = vld [vmem:[%s7969 + $0xd8] sm:$0xf]
        %v8025 = vld [vmem:[%s7969 + $0xdc] sm:$0xf]
        %v8026 = vld [vmem:[%s7969 + $0xe0] sm:$0xf]
        %v8027 = vld [vmem:[%s7969 + $0xe4] sm:$0xf]
        %v8028 = vld [vmem:[%s7969 + $0xe8] sm:$0xf]
        %v8029 = vld [vmem:[%s7969 + $0xec] sm:$0xf]
        %v8030 = vld [vmem:[%s7969 + $0xf0] sm:$0xf]
        %v8031 = vld [vmem:[%s7969 + $0xf4] sm:$0xf]
        %v8032 = vld [vmem:[%s7969 + $0xf8] sm:$0xf]
        %v8033 = vld [vmem:[%s7969 + $0xfc] sm:$0xf]
        %v8035 = vlaneseq
        %v8036 = vshrl.u32 %v8035, 7
        %v8037 = vsub.s32 0, %v8036
        %v8038 = vrot.slane %v5716, %v8037
        %v8104 = vunpack.c.l.b16 %v7970
        %v8105 = vunpack.c.l.b16 %v7971
        %v8106 = vunpack.c.l.b16 %v7972
        %v8107 = vunpack.c.l.b16 %v7973
        %v8108 = vunpack.c.l.b16 %v7974
        %v8109 = vunpack.c.l.b16 %v7975
        %v8110 = vunpack.c.l.b16 %v7976
        %v8111 = vunpack.c.l.b16 %v7977
        %v8112 = vunpack.c.l.b16 %v7978
        %v8113 = vunpack.c.l.b16 %v7979
        %v8114 = vunpack.c.l.b16 %v7980
        %v8115 = vunpack.c.l.b16 %v7981
        %v8116 = vunpack.c.l.b16 %v7982
        %v8117 = vunpack.c.l.b16 %v7983
        %v8118 = vunpack.c.l.b16 %v7984
        %v8119 = vunpack.c.l.b16 %v7985
        %v8120 = vunpack.c.l.b16 %v7986
        %v8121 = vunpack.c.l.b16 %v7987
        %v8122 = vunpack.c.l.b16 %v7988
        %v8123 = vunpack.c.l.b16 %v7989
        %v8124 = vunpack.c.l.b16 %v7990
        %v8125 = vunpack.c.l.b16 %v7991
        %v8126 = vunpack.c.l.b16 %v7992
        %v8127 = vunpack.c.l.b16 %v7993
        %v8128 = vunpack.c.l.b16 %v7994
        %v8129 = vunpack.c.l.b16 %v7995
        %v8130 = vunpack.c.l.b16 %v7996
        %v8131 = vunpack.c.l.b16 %v7997
        %v8132 = vunpack.c.l.b16 %v7998
        %v8133 = vunpack.c.l.b16 %v7999
        %v8134 = vunpack.c.l.b16 %v8000
        %v8135 = vunpack.c.l.b16 %v8001
        %v8136 = vunpack.c.l.b16 %v8002
        %v8137 = vunpack.c.l.b16 %v8003
        %v8138 = vunpack.c.l.b16 %v8004
        %v8139 = vunpack.c.l.b16 %v8005
        %v8140 = vunpack.c.l.b16 %v8006
        %v8141 = vunpack.c.l.b16 %v8007
        %v8142 = vunpack.c.l.b16 %v8008
        %v8143 = vunpack.c.l.b16 %v8009
        %v8144 = vunpack.c.l.b16 %v8010
        %v8145 = vunpack.c.l.b16 %v8011
        %v8146 = vunpack.c.l.b16 %v8012
        %v8147 = vunpack.c.l.b16 %v8013
        %v8148 = vunpack.c.l.b16 %v8014
        %v8149 = vunpack.c.l.b16 %v8015
        %v8150 = vunpack.c.l.b16 %v8016
        %v8151 = vunpack.c.l.b16 %v8017
        %v8152 = vunpack.c.l.b16 %v8018
        %v8153 = vunpack.c.l.b16 %v8019
        %v8154 = vunpack.c.l.b16 %v8020
        %v8155 = vunpack.c.l.b16 %v8021
        %v8156 = vunpack.c.l.b16 %v8022
        %v8157 = vunpack.c.l.b16 %v8023
        %v8158 = vunpack.c.l.b16 %v8024
        %v8159 = vunpack.c.l.b16 %v8025
        %v8160 = vunpack.c.l.b16 %v8026
        %v8161 = vunpack.c.l.b16 %v8027
        %v8162 = vunpack.c.l.b16 %v8028
        %v8163 = vunpack.c.l.b16 %v8029
        %v8164 = vunpack.c.l.b16 %v8030
        %v8165 = vunpack.c.l.b16 %v8031
        %v8166 = vunpack.c.l.b16 %v8032
        %v8167 = vunpack.c.l.b16 %v8033
        %v8168 = vpack.c.b16 %v8105, %v8104
        %v8169 = vpack.c.b16 %v8107, %v8106
        %v8170 = vpack.c.b16 %v8109, %v8108
        %v8171 = vpack.c.b16 %v8111, %v8110
        %v8172 = vpack.c.b16 %v8113, %v8112
        %v8173 = vpack.c.b16 %v8115, %v8114
        %v8174 = vpack.c.b16 %v8117, %v8116
        %v8175 = vpack.c.b16 %v8119, %v8118
        %v8176 = vpack.c.b16 %v8121, %v8120
        %v8177 = vpack.c.b16 %v8123, %v8122
        %v8178 = vpack.c.b16 %v8125, %v8124
        %v8179 = vpack.c.b16 %v8127, %v8126
        %v8180 = vpack.c.b16 %v8129, %v8128
        %v8181 = vpack.c.b16 %v8131, %v8130
        %v8182 = vpack.c.b16 %v8133, %v8132
        %v8183 = vpack.c.b16 %v8135, %v8134
        %v8184 = vpack.c.b16 %v8137, %v8136
        %v8185 = vpack.c.b16 %v8139, %v8138
        %v8186 = vpack.c.b16 %v8141, %v8140
        %v8187 = vpack.c.b16 %v8143, %v8142
        %v8188 = vpack.c.b16 %v8145, %v8144
        %v8189 = vpack.c.b16 %v8147, %v8146
        %v8190 = vpack.c.b16 %v8149, %v8148
        %v8191 = vpack.c.b16 %v8151, %v8150
        %v8192 = vpack.c.b16 %v8153, %v8152
        %v8193 = vpack.c.b16 %v8155, %v8154
        %v8194 = vpack.c.b16 %v8157, %v8156
        %v8195 = vpack.c.b16 %v8159, %v8158
        %v8196 = vpack.c.b16 %v8161, %v8160
        %v8197 = vpack.c.b16 %v8163, %v8162
        %v8198 = vpack.c.b16 %v8165, %v8164
        %v8199 = vpack.c.b16 %v8167, %v8166
        %8232 = vmatprep.subr.bf16.mxu0 0
        %8233 = vmatpush1.bf16.msra.mxu0 %v8175
        %8234 = vmatprep.subr.bf16.mxu0 0
        %8235 = vmatpush1.bf16.msra.mxu0 %v8174
        %8236 = vmatprep.subr.bf16.mxu0 0
        %8237 = vmatpush1.bf16.msra.mxu0 %v8173
        %8238 = vmatprep.subr.bf16.mxu0 0
        %8239 = vmatpush1.bf16.msra.mxu0 %v8172
        %8240 = vmatprep.subr.bf16.mxu0 0
        %8241 = vmatpush1.bf16.msra.mxu0 %v8171
        %8242 = vmatprep.subr.bf16.mxu0 0
        %8243 = vmatpush1.bf16.msra.mxu0 %v8170
        %8244 = vmatprep.subr.bf16.mxu0 0
        %8245 = vmatpush1.bf16.msra.mxu0 %v8169
        %8246 = vmatprep.subr.bf16.mxu0 0
        %8247 = vmatpush1.bf16.msra.mxu0 %v8168
        %8248 = vmatprep.subr.bf16.mxu0 0
        %8249 = vmatpush2.bf16.msra.mxu0 %v8183
        %8250 = vmatprep.subr.bf16.mxu0 0
        %8251 = vmatpush2.bf16.msra.mxu0 %v8182
        %8252 = vmatprep.subr.bf16.mxu0 0
        %8253 = vmatpush2.bf16.msra.mxu0 %v8181
        %8254 = vmatprep.subr.bf16.mxu0 0
        %8255 = vmatpush2.bf16.msra.mxu0 %v8180
        %8256 = vmatprep.subr.bf16.mxu0 0
        %8257 = vmatpush2.bf16.msra.mxu0 %v8179
        %8258 = vmatprep.subr.bf16.mxu0 0
        %8259 = vmatpush2.bf16.msra.mxu0 %v8178
        %8260 = vmatprep.subr.bf16.mxu0 0
        %8261 = vmatpush2.bf16.msra.mxu0 %v8177
        %8262 = vmatprep.subr.bf16.mxu0 0
        %8263 = vmatpush2.bf16.msra.mxu0 %v8176
        %8264 = vmatprep.mubr.bf16.mxu0 %v7962
        %8265 = vmatmul.mubr.bf16.gmra.mxu0 %v7961
        %v8266 = vpop.f32.mrf.mxu0
        %v8267 = vadd.f32 %v8038, %v8266
        %v8268 = vpop.f32.mrf.mxu0
        %v8269 = vpop.f32.mrf.mxu0
        %v8270 = vadd.f32 %v8038, %v8269
        %v8271 = vpop.f32.mrf.mxu0
        %8272 = vmatprep.mubr.bf16.mxu0 %v7966
        %8273 = vmatmul.mubr.bf16.gmra.mxu0 %v7965
        %v8274 = vpop.f32.mrf.mxu0
        %v8275 = vadd.f32 %v8038, %v8274
        %v8276 = vpop.f32.mrf.mxu0
        %v8277 = vpop.f32.mrf.mxu0
        %v8278 = vadd.f32 %v8038, %v8277
        %v8279 = vpop.f32.mrf.mxu0
        %8280 = vdwg.mxu0
        %8281 = vmatprep.subr.bf16.mxu0 0
        %8282 = vmatpush1.bf16.msra.mxu0 %v8191
        %8283 = vmatprep.subr.bf16.mxu0 0
        %8284 = vmatpush1.bf16.msra.mxu0 %v8190
        %8285 = vmatprep.subr.bf16.mxu0 0
        %8286 = vmatpush1.bf16.msra.mxu0 %v8189
        %8287 = vmatprep.subr.bf16.mxu0 0
        %8288 = vmatpush1.bf16.msra.mxu0 %v8188
        %8289 = vmatprep.subr.bf16.mxu0 0
        %8290 = vmatpush1.bf16.msra.mxu0 %v8187
        %8291 = vmatprep.subr.bf16.mxu0 0
        %8292 = vmatpush1.bf16.msra.mxu0 %v8186
        %8293 = vmatprep.subr.bf16.mxu0 0
        %8294 = vmatpush1.bf16.msra.mxu0 %v8185
        %8295 = vmatprep.subr.bf16.mxu0 0
        %8296 = vmatpush1.bf16.msra.mxu0 %v8184
        %8297 = vmatprep.subr.bf16.mxu0 0
        %8298 = vmatpush2.bf16.msra.mxu0 %v8199
        %8299 = vmatprep.subr.bf16.mxu0 0
        %8300 = vmatpush2.bf16.msra.mxu0 %v8198
        %8301 = vmatprep.subr.bf16.mxu0 0
        %8302 = vmatpush2.bf16.msra.mxu0 %v8197
        %8303 = vmatprep.subr.bf16.mxu0 0
        %8304 = vmatpush2.bf16.msra.mxu0 %v8196
        %8305 = vmatprep.subr.bf16.mxu0 0
        %8306 = vmatpush2.bf16.msra.mxu0 %v8195
        %8307 = vmatprep.subr.bf16.mxu0 0
        %8308 = vmatpush2.bf16.msra.mxu0 %v8194
        %8309 = vmatprep.subr.bf16.mxu0 0
        %8310 = vmatpush2.bf16.msra.mxu0 %v8193
        %8311 = vmatprep.subr.bf16.mxu0 0
        %8312 = vmatpush2.bf16.msra.mxu0 %v8192
        %8313 = vmatprep.mubr.bf16.mxu0 %v7964
        %8314 = vmatmul.mubr.bf16.gmra.mxu0 %v7963
        %v8315 = vpop.f32.mrf.mxu0
        %v8316 = vadd.f32 %v8267, %v8315
        %v8317 = vpop.f32.mrf.mxu0
        %v8318 = vpop.f32.mrf.mxu0
        %v8319 = vadd.f32 %v8270, %v8318
        %v8320 = vpop.f32.mrf.mxu0
        %8321 = vmatprep.mubr.bf16.mxu0 %v7968
        %8322 = vmatmul.mubr.bf16.gmra.mxu0 %v7967
        %v8323 = vpop.f32.mrf.mxu0
        %v8324 = vadd.f32 %v8275, %v8323
        %v8325 = vpop.f32.mrf.mxu0
        %v8326 = vpop.f32.mrf.mxu0
        %v8327 = vadd.f32 %v8278, %v8326
        %v8328 = vpop.f32.mrf.mxu0
        %8329 = vdwg.mxu0
        %s8330 = scalar_lea.vmem %s443, 64 [#allocation13]
        %8331 = vst [vmem:[%s8330] sm:$0xff] %v8316
        %8332 = vst [vmem:[%s8330 + $0x8] sm:$0xff] %v8319
        %8333 = vst [vmem:[%s8330 + $0x10] sm:$0xff] %v8324
        %8334 = vst [vmem:[%s8330 + $0x18] sm:$0xff] %v8327
        %s8335 = sand.u32 %s189, 1
        %s8336 = scalar_lea.sflag [#allocation4], %s8335
        %s8337 = sand.u32 %s189, 1
        %s8338 = smul.addr %s8337, 96
        %s8339 = scalar_lea.vmem [#allocation13], %s8338
        // Predicated region
        $region69: #{tpu_custom_call.1} parent=43 // pred_check
          %p8340 = pneg %p199
        $region70: #{tpu_custom_call.1} parent=43 // pred_check_branch
          %8342 = sbr.rel (%p8340) target = $region72
        $region71: #{tpu_custom_call.1} parent=43 // pred_region
          %s8343 = smul.u32 3, %s30
          %s8345 = ssub.s32 1536, 1536
          %8346 = vsyncadd %s8336, %s8345
          %s8347 = smul.addr %s8343, 4
          %s8348 = smul.addr %s8347, 128
          %s8349 = scalar_lea.hbm %s6, %s8348
          %s8350 = sshll.u32 %s8339, 4
          %s8351 = int_to_ptr.vmem [resolvable:$true] %s8350
          %8356 = dma.vmem_to_hbm [thread:$0]  %s8351, 1536, %s8349, %s8336, 128, 128, 8
        $region72: #{tpu_custom_call.1} parent=43 // pred_fallthru
          _
      $region44: #{tpu_custom_call.1} parent=5 // pred_fallthru
        _
      %p8357 = scmp.le.s32.totalorder 2, %s25
      // Predicated region
      $region73: #{tpu_custom_call.1} parent=5 // pred_check
        %p8358 = pneg %p8357
      $region74: #{tpu_custom_call.1} parent=5 // pred_check_branch
        %8360 = sbr.rel (%p8358) target = $region76
      $region75: #{tpu_custom_call.1} parent=5 // pred_region
        %s8361 = ssub.s32 %s25, 2
        // Predicated region
        $region77: #{tpu_custom_call.1} parent=75 // pred_check
          %p8362 = pneg %p205
        $region78: #{tpu_custom_call.1} parent=75 // pred_check_branch
          %8364 = sbr.rel (%p8362) target = $region80
        $region79: #{tpu_custom_call.1} parent=75 // pred_region
          %s8365 = sand.u32 %s190, 1
          %s8366 = scalar_lea.sflag [#allocation4], %s8365
          %s8367 = sand.u32 %s190, 1
          %s8368 = smul.addr %s8367, 96
          %s8369 = scalar_lea.vmem [#allocation13], %s8368
          %8370 = dma.done %s8366, 1536
        $region80: #{tpu_custom_call.1} parent=75 // pred_fallthru
          _
      $region76: #{tpu_custom_call.1} parent=5 // pred_fallthru
        _
    $region6: #{tpu_custom_call.1} parent=1 // loop_footer
      %s29 = sadd.s32 1, %s25
    $region7: #{tpu_custom_call.1} parent=1 // loop_footer_branch
      %24 = sbr.rel target = $region3
    $region8: #{tpu_custom_call.1} parent=1 // loop_exit
      _
    %8371 = vsyncpa [#allocation3], 1
    %s8372 = scalar_lea.sflag [#allocation3], 1
    %8373 = vsyncpa %s8372, 1
    %8374 = vsyncpa [#allocation6], 1
    %s8375 = scalar_lea.sflag [#allocation6], 1
    %8376 = vsyncpa %s8375, 1
    %8377 = vsyncpa [#allocation9], 1
    %s8378 = scalar_lea.sflag [#allocation9], 1
    %8379 = vsyncpa %s8378, 1
    %8380 = vsyncpa [#allocation12], 1
    %s8381 = scalar_lea.sflag [#allocation12], 1
    %8382 = vsyncpa %s8381, 1
    %8383 = vsyncpa [#allocation4], 1
    %s8384 = scalar_lea.sflag [#allocation4], 1
    %8385 = vsyncpa %s8384, 1

</llo_original>
